<compile_context>
chip_gen: v5e
topology: v5e:2x2
jax: 0.10.0
libtpu: 0.0.40
codegen_flags: <defaults>
</compile_context>

<pallas_src>
import functools

import jax
import jax.numpy as jnp
from jax.experimental import pallas as pl
from jax.experimental.pallas import tpu as pltpu


COMPUTE_DTYPE = jnp.bfloat16  # MXU matmul dtype (f32 accumulation everywhere)


def _tpu_generation_config():
    """(row_tile_cap, vmem_limit_bytes) per TPU generation.

    v5e / v6e: 128 MiB VMEM per core  -> 512-row tiles, ~96 MiB scoped VMEM.
    v7x:        64 MiB per TensorCore ->  256-row tiles,  48 MiB scoped VMEM.
    Falls back to the conservative (v7x) setting if the query fails.
    """
    vmem = 64 * 1024 * 1024
    try:
        info = pltpu.get_tpu_info()
        vmem = int(getattr(info, "vmem_capacity_bytes", vmem))
    except Exception:
        pass
    if vmem >= 128 * 1024 * 1024:
        return 512, 96 * 1024 * 1024
    return 256, 48 * 1024 * 1024


_ROW_TILE_CAP, _VMEM_LIMIT = _tpu_generation_config()

# All grids below are rank-1 row grids -> shared compiler params.
_COMPILER_PARAMS = pltpu.CompilerParams(
    dimension_semantics=("parallel",),
    vmem_limit_bytes=_VMEM_LIMIT,
)


def _row_tiling(M):
    """Row tile size + grid.  No input padding / output slicing: Pallas clamps
    the ragged last block (undefined OOB input rows, discarded OOB output
    rows), and all row-wise math here is per-row so garbage never leaks."""
    tm = M if M <= _ROW_TILE_CAP else _ROW_TILE_CAP
    return tm, pl.cdiv(M, tm)


# -----------------------------------------------------------------------------
# Pallas kernels
# -----------------------------------------------------------------------------
def _linear_kernel(*refs, activation, has_add):
    """out = act((x [+ add]) @ w + b); matmul on the MXU, f32 accumulation."""
    if has_add:
        x_ref, a_ref, w_ref, b_ref, o_ref = refs
        x = x_ref[...] + a_ref[...]          # direct add in compute dtype
    else:
        x_ref, w_ref, b_ref, o_ref = refs
        x = x_ref[...]
    acc = jnp.dot(x, w_ref[...], preferred_element_type=jnp.float32)
    acc = acc + b_ref[...].astype(jnp.float32)
    if activation == "relu":
        acc = jnp.maximum(acc, 0.0)
    elif activation == "sigmoid":
        acc = jax.nn.sigmoid(acc)
    o_ref[...] = acc.astype(o_ref.dtype)


def linear(x, w, b, *, activation=None, xadd=None, out_dtype=None):
    """x: [M, K] (+ optional xadd [M, K]), w: [K, N], b: [N] -> [M, N]."""
    M, K = x.shape
    N = w.shape[1]
    out_dtype = out_dtype or x.dtype
    tm, gm = _row_tiling(M)

    inputs = [x]
    in_specs = [pl.BlockSpec((tm, K), lambda i: (i, 0))]
    if xadd is not None:
        inputs.append(xadd)
        in_specs.append(pl.BlockSpec((tm, K), lambda i: (i, 0)))
    inputs += [w, b.reshape(1, N)]
    in_specs += [pl.BlockSpec((K, N), lambda i: (0, 0)),
                 pl.BlockSpec((1, N), lambda i: (0, 0))]

    return pl.pallas_call(
        functools.partial(_linear_kernel, activation=activation,
                          has_add=xadd is not None),
        out_shape=jax.ShapeDtypeStruct((M, N), out_dtype),
        grid=(gm,),
        in_specs=in_specs,
        out_specs=pl.BlockSpec((tm, N), lambda i: (i, 0)),
        compiler_params=_COMPILER_PARAMS,
    )(*inputs)


def _dual_proj_kernel(x_ref, pos_ref, wp_ref, bp_ref, wx_ref, bx_ref, *out_refs,
                      pos_splits):
    """Fused projections from one row tile of x:
       pos branch: (x + pos) @ w_pos + b_pos  (wide, column-concatenated)
       x   branch:        x  @ w_x   + b_x
    The pos-branch accumulator is split along N into the first len(pos_splits)
    outputs (VMEM lane slices); the x branch writes the last output."""
    x = x_ref[...]
    xp = x + pos_ref[...]                    # direct add in compute dtype
    acc_p = jnp.dot(xp, wp_ref[...], preferred_element_type=jnp.float32)
    acc_p = acc_p + bp_ref[...].astype(jnp.float32)
    acc_x = jnp.dot(x, wx_ref[...], preferred_element_type=jnp.float32)
    acc_x = acc_x + bx_ref[...].astype(jnp.float32)
    off = 0
    for i, width in enumerate(pos_splits):
        out_refs[i][...] = acc_p[:, off:off + width].astype(out_refs[i].dtype)
        off += width
    out_refs[len(pos_splits)][...] = acc_x.astype(out_refs[-1].dtype)


def fused_dual_projection(x, pos, w_pos, b_pos, w_x, b_x, *, pos_splits):
    """x, pos: [M, K]; w_pos: [K, sum(pos_splits)]; w_x: [K, Nx].
    Returns tuple(*pos_branch_outputs, x_branch_output)."""
    M, K = x.shape
    Np = w_pos.shape[1]
    Nx = w_x.shape[1]
    assert sum(pos_splits) == Np
    tm, gm = _row_tiling(M)

    out_shape = tuple(jax.ShapeDtypeStruct((M, n), x.dtype) for n in pos_splits)
    out_shape = out_shape + (jax.ShapeDtypeStruct((M, Nx), x.dtype),)
    out_specs = [pl.BlockSpec((tm, n), lambda i: (i, 0)) for n in pos_splits]
    out_specs.append(pl.BlockSpec((tm, Nx), lambda i: (i, 0)))

    return pl.pallas_call(
        functools.partial(_dual_proj_kernel, pos_splits=tuple(pos_splits)),
        out_shape=out_shape,
        grid=(gm,),
        in_specs=[
            pl.BlockSpec((tm, K), lambda i: (i, 0)),
            pl.BlockSpec((tm, K), lambda i: (i, 0)),
            pl.BlockSpec((K, Np), lambda i: (0, 0)),
            pl.BlockSpec((1, Np), lambda i: (0, 0)),
            pl.BlockSpec((K, Nx), lambda i: (0, 0)),
            pl.BlockSpec((1, Nx), lambda i: (0, 0)),
        ],
        out_specs=out_specs,
        compiler_params=_COMPILER_PARAMS,
    )(x, pos, w_pos, b_pos.reshape(1, Np), w_x, b_x.reshape(1, Nx))


def _mha_kernel(q_ref, k_ref, v_ref, o_ref, *, nheads, dh):
    """All heads of one batch element per grid step, merged-head layout
    [rows, H*Dh] in HBM; per-head split happens on VMEM values.  1/sqrt(Dh) is
    folded into the Q weights; softmax in f32; EUP approx reciprocal."""
    q = q_ref[...]                           # (Sq, H*Dh)
    k = k_ref[...]                           # (T,  H*Dh)
    v = v_ref[...]                           # (T,  H*Dh)
    for h in range(nheads):
        sl = slice(h * dh, (h + 1) * dh)
        qh, kh, vh = q[:, sl], k[:, sl], v[:, sl]
        s = jax.lax.dot_general(qh, kh, (((1,), (1,)), ((), ())),
                                preferred_element_type=jnp.float32)
        s = s - jnp.max(s, axis=-1, keepdims=True)
        p = jnp.exp(s)
        p = p * pl.reciprocal(jnp.sum(p, axis=-1, keepdims=True), approx=True)
        oh = jax.lax.dot_general(p.astype(vh.dtype), vh,
                                 (((1,), (0,)), ((), ())),
                                 preferred_element_type=jnp.float32)
        o_ref[:, sl] = oh.astype(o_ref.dtype)


def attention(q, k, v, *, nheads):
    """q: [B, Sq, D], k/v: [B, T, D] (merged heads) -> [B, Sq, D]; grid over B."""
    B, Sq, D = q.shape
    T = k.shape[1]
    dh = D // nheads
    return pl.pallas_call(
        functools.partial(_mha_kernel, nheads=nheads, dh=dh),
        out_shape=jax.ShapeDtypeStruct((B, Sq, D), q.dtype),
        grid=(B,),
        in_specs=[
            pl.BlockSpec((None, Sq, D), lambda b: (b, 0, 0)),
            pl.BlockSpec((None, T, D), lambda b: (b, 0, 0)),
            pl.BlockSpec((None, T, D), lambda b: (b, 0, 0)),
        ],
        out_specs=pl.BlockSpec((None, Sq, D), lambda b: (b, 0, 0)),
        compiler_params=_COMPILER_PARAMS,
    )(q, k, v)


def _outproj_res_ln_kernel(x_ref, r_ref, w_ref, b_ref, g_ref, bt_ref, o_ref,
                           *, eps):
    """out = LayerNorm(residual + x @ w + b); LN statistics in f32 (free
    VPU/EUP work hiding under the MXU matmul)."""
    acc = jnp.dot(x_ref[...], w_ref[...], preferred_element_type=jnp.float32)
    acc = acc + b_ref[...].astype(jnp.float32) + r_ref[...].astype(jnp.float32)
    mu = jnp.mean(acc, axis=-1, keepdims=True)
    var = jnp.mean((acc - mu) ** 2, axis=-1, keepdims=True)
    y = (acc - mu) * jax.lax.rsqrt(var + eps)
    y = y * g_ref[...].astype(jnp.float32) + bt_ref[...].astype(jnp.float32)
    o_ref[...] = y.astype(o_ref.dtype)


def outproj_res_ln(x, res, w, b, gamma, beta, eps=1e-5):
    """x: [M, K], res: [M, N], w: [K, N] -> LayerNorm(res + x @ w + b)."""
    M, K = x.shape
    N = w.shape[1]
    tm, gm = _row_tiling(M)
    return pl.pallas_call(
        functools.partial(_outproj_res_ln_kernel, eps=eps),
        out_shape=jax.ShapeDtypeStruct((M, N), x.dtype),
        grid=(gm,),
        in_specs=[
            pl.BlockSpec((tm, K), lambda i: (i, 0)),
            pl.BlockSpec((tm, N), lambda i: (i, 0)),
            pl.BlockSpec((K, N), lambda i: (0, 0)),
            pl.BlockSpec((1, N), lambda i: (0, 0)),
            pl.BlockSpec((1, N), lambda i: (0, 0)),
            pl.BlockSpec((1, N), lambda i: (0, 0)),
        ],
        out_specs=pl.BlockSpec((tm, N), lambda i: (i, 0)),
        compiler_params=_COMPILER_PARAMS,
    )(x, res, w, b.reshape(1, N), gamma.reshape(1, N), beta.reshape(1, N))


def _ffn_res_ln_kernel(x_ref, w1_ref, b1_ref, w2_ref, b2_ref, g_ref, bt_ref,
                       o_ref, *, eps):
    """out = LayerNorm(x + relu(x@w1+b1)@w2 + b2); the [tm, dff] intermediate
    never leaves VMEM."""
    x = x_ref[...]
    h = jnp.dot(x, w1_ref[...], preferred_element_type=jnp.float32)
    h = jnp.maximum(h + b1_ref[...].astype(jnp.float32), 0.0)
    acc = jnp.dot(h.astype(x.dtype), w2_ref[...],
                  preferred_element_type=jnp.float32)
    acc = acc + b2_ref[...].astype(jnp.float32) + x.astype(jnp.float32)
    mu = jnp.mean(acc, axis=-1, keepdims=True)
    var = jnp.mean((acc - mu) ** 2, axis=-1, keepdims=True)
    y = (acc - mu) * jax.lax.rsqrt(var + eps)
    y = y * g_ref[...].astype(jnp.float32) + bt_ref[...].astype(jnp.float32)
    o_ref[...] = y.astype(o_ref.dtype)


def ffn_res_ln(x, w1, b1, w2, b2, gamma, beta, eps=1e-5):
    """x: [M, D], w1: [D, dff], w2: [dff, D] -> LayerNorm(x + FFN(x))."""
    M, D = x.shape
    dff = w1.shape[1]
    tm, gm = _row_tiling(M)
    return pl.pallas_call(
        functools.partial(_ffn_res_ln_kernel, eps=eps),
        out_shape=jax.ShapeDtypeStruct((M, D), x.dtype),
        grid=(gm,),
        in_specs=[
            pl.BlockSpec((tm, D), lambda i: (i, 0)),
            pl.BlockSpec((D, dff), lambda i: (0, 0)),
            pl.BlockSpec((1, dff), lambda i: (0, 0)),
            pl.BlockSpec((dff, D), lambda i: (0, 0)),
            pl.BlockSpec((1, D), lambda i: (0, 0)),
            pl.BlockSpec((1, D), lambda i: (0, 0)),
            pl.BlockSpec((1, D), lambda i: (0, 0)),
        ],
        out_specs=pl.BlockSpec((tm, D), lambda i: (i, 0)),
        compiler_params=_COMPILER_PARAMS,
    )(x, w1, b1.reshape(1, dff), w2, b2.reshape(1, D),
      gamma.reshape(1, D), beta.reshape(1, D))


def _pred_heads_kernel(x_ref, wc_ref, bc_ref, w1_ref, b1_ref, w2_ref, b2_ref,
                       w3_ref, b3_ref, logits_ref, boxes_ref):
    """Class head + 3-layer bbox MLP (ReLU, ReLU, sigmoid) in one launch."""
    x = x_ref[...]
    cls = jnp.dot(x, wc_ref[...], preferred_element_type=jnp.float32)
    logits_ref[...] = (cls + bc_ref[...].astype(jnp.float32)
                       ).astype(logits_ref.dtype)
    h = jnp.dot(x, w1_ref[...], preferred_element_type=jnp.float32)
    h = jnp.maximum(h + b1_ref[...].astype(jnp.float32), 0.0)
    h = jnp.dot(h.astype(x.dtype), w2_ref[...],
                preferred_element_type=jnp.float32)
    h = jnp.maximum(h + b2_ref[...].astype(jnp.float32), 0.0)
    bx = jnp.dot(h.astype(x.dtype), w3_ref[...],
                 preferred_element_type=jnp.float32)
    bx = jax.nn.sigmoid(bx + b3_ref[...].astype(jnp.float32))
    boxes_ref[...] = bx.astype(boxes_ref.dtype)


def prediction_heads(x, p):
    """x: [M, D] -> (pred_logits [M, nc] f32, pred_boxes [M, 4] f32)."""
    M, D = x.shape
    nc = p["class_embed"]["w"].shape[1]
    d1 = p["bbox1"]["w"].shape[1]
    d2 = p["bbox2"]["w"].shape[1]
    tm, gm = _row_tiling(M)

    def wspec(shape):
        return pl.BlockSpec(shape, lambda i: (0, 0))

    return pl.pallas_call(
        _pred_heads_kernel,
        out_shape=(jax.ShapeDtypeStruct((M, nc), jnp.float32),
                   jax.ShapeDtypeStruct((M, 4), jnp.float32)),
        grid=(gm,),
        in_specs=[
            pl.BlockSpec((tm, D), lambda i: (i, 0)),
            wspec((D, nc)), wspec((1, nc)),
            wspec((D, d1)), wspec((1, d1)),
            wspec((d1, d2)), wspec((1, d2)),
            wspec((d2, 4)), wspec((1, 4)),
        ],
        out_specs=[pl.BlockSpec((tm, nc), lambda i: (i, 0)),
                   pl.BlockSpec((tm, 4), lambda i: (i, 0))],
        compiler_params=_COMPILER_PARAMS,
    )(x,
      p["class_embed"]["w"], p["class_embed"]["b"].reshape(1, nc),
      p["bbox1"]["w"], p["bbox1"]["b"].reshape(1, d1),
      p["bbox2"]["w"], p["bbox2"]["b"].reshape(1, d2),
      p["bbox3"]["w"], p["bbox3"]["b"].reshape(1, 4))


# -----------------------------------------------------------------------------
# Glue (plain JAX): positional encodings
# -----------------------------------------------------------------------------
def sine_pos_embed(h, w, d):
    """DETR 2D sine positional embedding (normalized, 2*pi scaled) -> [h*w, d]."""
    num_pos_feats = d // 2
    temperature = 10000.0
    eps = 1e-6
    scale = 2.0 * jnp.pi
    y = (jnp.arange(h, dtype=jnp.float32)[:, None] + 1.0) / (h + eps) * scale
    x = (jnp.arange(w, dtype=jnp.float32)[None, :] + 1.0) / (w + eps) * scale
    y = jnp.broadcast_to(y, (h, w))
    x = jnp.broadcast_to(x, (h, w))
    dim_t = temperature ** (
        2.0 * (jnp.arange(num_pos_feats, dtype=jnp.float32) // 2) / num_pos_feats
    )
    pos_x = x[..., None] / dim_t
    pos_y = y[..., None] / dim_t

    def interleave(p):
        s = jnp.sin(p[..., 0::2])
        c = jnp.cos(p[..., 1::2])
        return jnp.stack([s, c], axis=-1).reshape(h, w, num_pos_feats)

    pos = jnp.concatenate([interleave(pos_y), interleave(pos_x)], axis=-1)
    return pos.reshape(h * w, d)


# -----------------------------------------------------------------------------
# Parameter initialization (deterministic, synthetic)
# -----------------------------------------------------------------------------
def init_linear(key, din, dout, scale=0.02):
    w = scale * jax.random.normal(key, (din, dout), dtype=jnp.float32)
    return {"w": w.astype(COMPUTE_DTYPE), "b": jnp.zeros((dout,), jnp.float32)}


def _init_qkvo(key, d):
    return [init_linear(k, d, d) for k in jax.random.split(key, 4)]


def init_self_attn(key, d, nheads):
    q, k, v, o = _init_qkvo(key, d)
    # Fold the 1/sqrt(Dh) attention scale into the Q projection (free at runtime).
    q_scale = 1.0 / float(d // nheads) ** 0.5
    wq = (q["w"].astype(jnp.float32) * q_scale).astype(COMPUTE_DTYPE)
    bq = q["b"] * q_scale
    return {
        "wqk": jnp.concatenate([wq, k["w"]], axis=1),     # [D, 2D] wide matmul
        "bqk": jnp.concatenate([bq, k["b"]], axis=0),
        "wv": v["w"], "bv": v["b"],
        "wo": o["w"], "bo": o["b"],
    }


def init_cross_attn(key, d, nheads):
    q, k, v, o = _init_qkvo(key, d)
    q_scale = 1.0 / float(d // nheads) ** 0.5
    return {
        "wq": (q["w"].astype(jnp.float32) * q_scale).astype(COMPUTE_DTYPE),
        "bq": q["b"] * q_scale,
        "wk": k["w"], "bk": k["b"],
        "wv": v["w"], "bv": v["b"],
        "wo": o["w"], "bo": o["b"],
    }


def init_ln(d):
    return {"g": jnp.ones((d,), jnp.float32), "b": jnp.zeros((d,), jnp.float32)}


def init_encoder_layer(key, d, dff, nheads):
    k1, k2, k3 = jax.random.split(key, 3)
    return {
        "self_attn": init_self_attn(k1, d, nheads),
        "ln1": init_ln(d),
        "ffn1": init_linear(k2, d, dff),
        "ffn2": init_linear(k3, dff, d),
        "ln2": init_ln(d),
    }


def init_decoder_layer(key, d, dff, nheads):
    k1, k2, k3, k4 = jax.random.split(key, 4)
    return {
        "self_attn": init_self_attn(k1, d, nheads),
        "ln1": init_ln(d),
        "cross_attn": init_cross_attn(k2, d, nheads),
        "ln2": init_ln(d),
        "ffn1": init_linear(k3, d, dff),
        "ffn2": init_linear(k4, dff, d),
        "ln3": init_ln(d),
    }


def init_motip_params(key, cfg):
    d = cfg["DETR_HIDDEN_DIM"]
    dff = cfg["DETR_DIM_FEEDFORWARD"]
    nh = cfg["DETR_NUM_HEADS"]
    C, P = cfg["IN_CHANNELS"], cfg["PATCH"]
    Q = cfg["DETR_NUM_QUERIES"]
    nc = cfg["NUM_CLASSES"]
    keys = jax.random.split(key, 8)
    return {
        "patch_proj": init_linear(keys[0], C * P * P, d),
        "query_embed": 0.02 * jax.random.normal(keys[1], (Q, 2 * d), jnp.float32),
        "enc": [init_encoder_layer(k, d, dff, nh)
                for k in jax.random.split(keys[2], cfg["DETR_ENC_LAYERS"])],
        "dec": [init_decoder_layer(k, d, dff, nh)
                for k in jax.random.split(keys[3], cfg["DETR_DEC_LAYERS"])],
        "class_embed": init_linear(keys[4], d, nc),
        "bbox1": init_linear(keys[5], d, d),
        "bbox2": init_linear(keys[6], d, d),
        "bbox3": init_linear(keys[7], d, 4),
    }


# -----------------------------------------------------------------------------
# Transformer layers (activations kept flat as [rows, D], heads merged)
# -----------------------------------------------------------------------------
def encoder_layer(src2, pos2, lp, nheads, B, S, D):
    sa = lp["self_attn"]
    q2, k2, v2 = fused_dual_projection(
        src2, pos2, sa["wqk"], sa["bqk"], sa["wv"], sa["bv"], pos_splits=(D, D))
    o3 = attention(q2.reshape(B, S, D), k2.reshape(B, S, D),
                   v2.reshape(B, S, D), nheads=nheads)
    src2 = outproj_res_ln(o3.reshape(B * S, D), src2, sa["wo"], sa["bo"],
                          lp["ln1"]["g"], lp["ln1"]["b"])
    return ffn_res_ln(src2, lp["ffn1"]["w"], lp["ffn1"]["b"],
                      lp["ffn2"]["w"], lp["ffn2"]["b"],
                      lp["ln2"]["g"], lp["ln2"]["b"])


def decoder_layer(tgt2, qpos2, memory2, mem_pos2, lp, nheads, B, Q, S, D):
    # --- self attention over queries ---
    sa = lp["self_attn"]
    q2, k2, v2 = fused_dual_projection(
        tgt2, qpos2, sa["wqk"], sa["bqk"], sa["wv"], sa["bv"], pos_splits=(D, D))
    o3 = attention(q2.reshape(B, Q, D), k2.reshape(B, Q, D),
                   v2.reshape(B, Q, D), nheads=nheads)
    tgt2 = outproj_res_ln(o3.reshape(B * Q, D), tgt2, sa["wo"], sa["bo"],
                          lp["ln1"]["g"], lp["ln1"]["b"])
    # --- cross attention (queries -> encoder memory) ---
    ca = lp["cross_attn"]
    qc = linear(tgt2, ca["wq"], ca["bq"], xadd=qpos2)
    kc, vc = fused_dual_projection(
        memory2, mem_pos2, ca["wk"], ca["bk"], ca["wv"], ca["bv"],
        pos_splits=(D,))
    o3 = attention(qc.reshape(B, Q, D), kc.reshape(B, S, D),
                   vc.reshape(B, S, D), nheads=nheads)
    tgt2 = outproj_res_ln(o3.reshape(B * Q, D), tgt2, ca["wo"], ca["bo"],
                          lp["ln2"]["g"], lp["ln2"]["b"])
    # --- FFN ---
    return ffn_res_ln(tgt2, lp["ffn1"]["w"], lp["ffn1"]["b"],
                      lp["ffn2"]["w"], lp["ffn2"]["b"],
                      lp["ln3"]["g"], lp["ln3"]["b"])


# -----------------------------------------------------------------------------
# MOTIP forward (== self.detr(frames), targets=None path)
# -----------------------------------------------------------------------------
def motip_forward(params, frames, cfg):
    """frames: NCHW [B, C, H, W] (PyTorch convention)."""
    B, C, H, W = frames.shape
    P = cfg["PATCH"]
    D = cfg["DETR_HIDDEN_DIM"]
    nheads = cfg["DETR_NUM_HEADS"]
    Q = cfg["DETR_NUM_QUERIES"]
    Hp, Wp = H // P, W // P
    S = Hp * Wp

    # --- backbone stem: non-overlapping PxP strided conv as unfold + matmul ---
    x = frames.reshape(B, C, Hp, P, Wp, P)
    x = x.transpose(0, 2, 4, 1, 3, 5).reshape(B * S, C * P * P)
    x = x.astype(COMPUTE_DTYPE)
    src2 = linear(x, params["patch_proj"]["w"], params["patch_proj"]["b"])

    pos = sine_pos_embed(Hp, Wp, D).astype(COMPUTE_DTYPE)                 # [S, D]
    pos2 = jnp.broadcast_to(pos[None], (B, S, D)).reshape(B * S, D)

    # --- transformer encoder (post-norm, DETR style) ---
    for lp in params["enc"]:
        src2 = encoder_layer(src2, pos2, lp, nheads, B, S, D)
    memory2 = src2

    # --- decoder: split query embedding into (query_pos, tgt) ---
    query_pos, tgt0 = jnp.split(params["query_embed"], 2, axis=-1)
    qpos2 = jnp.broadcast_to(query_pos[None], (B, Q, D)).reshape(B * Q, D)
    qpos2 = qpos2.astype(COMPUTE_DTYPE)
    tgt2 = jnp.broadcast_to(tgt0[None], (B, Q, D)).reshape(B * Q, D)
    tgt2 = tgt2.astype(COMPUTE_DTYPE)

    for lp in params["dec"]:
        tgt2 = decoder_layer(tgt2, qpos2, memory2, pos2, lp, nheads, B, Q, S, D)

    hs2 = tgt2  # [B*Q, D] final decoder hidden states ("outputs" embeddings)

    # --- prediction heads (class logits + 3-layer bbox MLP) in one launch ---
    pred_logits, pred_boxes = prediction_heads(hs2, params)

    return {
        "pred_logits": pred_logits.reshape(B, Q, -1),          # [B, Q, num_classes]
        "pred_boxes": pred_boxes.reshape(B, Q, 4),              # [B, Q, 4]
        "outputs": hs2.astype(jnp.float32).reshape(B, Q, D),    # [B, Q, D]
    }


# -----------------------------------------------------------------------------
# Main
# -----------------------------------------------------------------------------
if __name__ == "__main__":
    cfg = {
        "NUM_CLASSES": 4,
        "DETR_HIDDEN_DIM": 32,
        "DETR_NUM_HEADS": 4,
        "DETR_ENC_LAYERS": 2,
        "DETR_DEC_LAYERS": 2,
        "DETR_DIM_FEEDFORWARD": 64,
        "DETR_NUM_QUERIES": 8,
        "IN_CHANNELS": 4,
        "PATCH": 4,
    }

    key = jax.random.PRNGKey(0)
    k_param, k_in = jax.random.split(key)
    params = init_motip_params(k_param, cfg)

    # small deterministic NCHW input: [B=2, C=4, H=16, W=16]
    frames = jax.random.normal(k_in, (2, 4, 16, 16), dtype=jnp.float32)

    fwd = jax.jit(functools.partial(motip_forward, cfg=cfg))
    out = fwd(params, frames)
    out = jax.block_until_ready(out)

    assert out["pred_logits"].shape == (2, 8, 4)
    assert out["pred_boxes"].shape == (2, 8, 4)
    assert out["outputs"].shape == (2, 8, 32)
    assert all(bool(jnp.all(jnp.isfinite(v))) for v in out.values())
    print("KERNEL_OK")
</pallas_src>

<mosaic_0001>
module attributes {stable_mosaic.version = 11 : i64} {
  func.func @_dual_proj_kernel(%arg0: i32, %arg1: memref<32x32xbf16, #tpu.memory_space<vmem>>, %arg2: memref<32x32xbf16, #tpu.memory_space<vmem>>, %arg3: memref<32x64xbf16, #tpu.memory_space<vmem>>, %arg4: memref<1x64xf32, #tpu.memory_space<vmem>>, %arg5: memref<32x32xbf16, #tpu.memory_space<vmem>>, %arg6: memref<1x32xf32, #tpu.memory_space<vmem>>, %arg7: memref<32x32xbf16, #tpu.memory_space<vmem>>, %arg8: memref<32x32xbf16, #tpu.memory_space<vmem>>, %arg9: memref<32x32xbf16, #tpu.memory_space<vmem>>) attributes {dimension_semantics = [#tpu.dimension_semantics<parallel>], iteration_bounds = array<i64: 1>, scalar_prefetch = 0 : i64, scratch_operands = 0 : i64, tpu.core_type = #tpu.core_type<tc>, window_params = [{transform_indices = @transform_0, window_bounds = array<i64: 32, 32>}, {transform_indices = @transform_1, window_bounds = array<i64: 32, 32>}, {pipeline_mode = #tpu.pipeline_mode<synchronous>, transform_indices = @transform_2, window_bounds = array<i64: 32, 64>}, {pipeline_mode = #tpu.pipeline_mode<synchronous>, transform_indices = @transform_3, window_bounds = array<i64: 1, 64>}, {pipeline_mode = #tpu.pipeline_mode<synchronous>, transform_indices = @transform_4, window_bounds = array<i64: 32, 32>}, {pipeline_mode = #tpu.pipeline_mode<synchronous>, transform_indices = @transform_5, window_bounds = array<i64: 1, 32>}, {transform_indices = @transform_6, window_bounds = array<i64: 32, 32>}, {transform_indices = @transform_7, window_bounds = array<i64: 32, 32>}, {transform_indices = @transform_8, window_bounds = array<i64: 32, 32>}]} {
    %c0 = arith.constant 0 : index
    %c0_0 = arith.constant 0 : index
    %0 = vector.load %arg1[%c0, %c0_0] : memref<32x32xbf16, #tpu.memory_space<vmem>>, vector<32x32xbf16>
    %c0_1 = arith.constant 0 : index
    %c0_2 = arith.constant 0 : index
    %1 = vector.load %arg2[%c0_1, %c0_2] : memref<32x32xbf16, #tpu.memory_space<vmem>>, vector<32x32xbf16>
    %2 = arith.addf %0, %1 : vector<32x32xbf16>
    %c0_3 = arith.constant 0 : index
    %c0_4 = arith.constant 0 : index
    %3 = vector.load %arg3[%c0_3, %c0_4] : memref<32x64xbf16, #tpu.memory_space<vmem>>, vector<32x64xbf16>
    %cst = arith.constant dense<0.000000e+00> : vector<32x64xf32>
    %4 = tpu.matmul %2, %3, %cst {dimension_numbers = #tpu.dot_dimension_numbers<[1], [0], [0], [1], [0, 0, 1, 1], [], []>} : vector<32x32xbf16>, vector<32x64xbf16>, vector<32x64xf32> -> vector<32x64xf32>
    %c0_5 = arith.constant 0 : index
    %c0_6 = arith.constant 0 : index
    %5 = vector.load %arg4[%c0_5, %c0_6] : memref<1x64xf32, #tpu.memory_space<vmem>>, vector<1x64xf32>
    %6 = vector.broadcast %5 : vector<1x64xf32> to vector<32x64xf32>
    %7 = arith.addf %4, %6 : vector<32x64xf32>
    %c0_7 = arith.constant 0 : index
    %c0_8 = arith.constant 0 : index
    %8 = vector.load %arg5[%c0_7, %c0_8] : memref<32x32xbf16, #tpu.memory_space<vmem>>, vector<32x32xbf16>
    %cst_9 = arith.constant dense<0.000000e+00> : vector<32x32xf32>
    %9 = tpu.matmul %0, %8, %cst_9 {dimension_numbers = #tpu.dot_dimension_numbers<[1], [0], [0], [1], [0, 0, 1, 1], [], []>} : vector<32x32xbf16>, vector<32x32xbf16>, vector<32x32xf32> -> vector<32x32xf32>
    %c0_10 = arith.constant 0 : index
    %c0_11 = arith.constant 0 : index
    %10 = vector.load %arg6[%c0_10, %c0_11] : memref<1x32xf32, #tpu.memory_space<vmem>>, vector<1x32xf32>
    %11 = vector.broadcast %10 : vector<1x32xf32> to vector<32x32xf32>
    %12 = arith.addf %9, %11 : vector<32x32xf32>
    %13 = vector.extract_strided_slice %7 {offsets = [0, 0], sizes = [32, 32], strides = [1, 1]} : vector<32x64xf32> to vector<32x32xf32>
    %14 = arith.truncf %13 : vector<32x32xf32> to vector<32x32xbf16>
    %c0_12 = arith.constant 0 : index
    %c0_13 = arith.constant 0 : index
    %15 = vector.load %arg7[%c0_12, %c0_13] : memref<32x32xbf16, #tpu.memory_space<vmem>>, vector<32x32xbf16>
    tpu.vector_store %arg7[%c0_12, %c0_13], %14 {strides = array<i32>} : memref<32x32xbf16, #tpu.memory_space<vmem>>, vector<32x32xbf16>,
    %16 = vector.extract_strided_slice %7 {offsets = [0, 32], sizes = [32, 32], strides = [1, 1]} : vector<32x64xf32> to vector<32x32xf32>
    %17 = arith.truncf %16 : vector<32x32xf32> to vector<32x32xbf16>
    %c0_14 = arith.constant 0 : index
    %c0_15 = arith.constant 0 : index
    %18 = vector.load %arg8[%c0_14, %c0_15] : memref<32x32xbf16, #tpu.memory_space<vmem>>, vector<32x32xbf16>
    tpu.vector_store %arg8[%c0_14, %c0_15], %17 {strides = array<i32>} : memref<32x32xbf16, #tpu.memory_space<vmem>>, vector<32x32xbf16>,
    %19 = arith.truncf %12 : vector<32x32xf32> to vector<32x32xbf16>
    %c0_16 = arith.constant 0 : index
    %c0_17 = arith.constant 0 : index
    %20 = vector.load %arg9[%c0_16, %c0_17] : memref<32x32xbf16, #tpu.memory_space<vmem>>, vector<32x32xbf16>
    tpu.vector_store %arg9[%c0_16, %c0_17], %19 {strides = array<i32>} : memref<32x32xbf16, #tpu.memory_space<vmem>>, vector<32x32xbf16>,
    return
  }
  func.func @transform_0(%arg0: i32) -> (i32, i32) {
    %c0_i32 = arith.constant 0 : i32
    %c0_i32_0 = arith.constant 0 : i32
    return %arg0, %c0_i32 : i32, i32
  }
  func.func @transform_1(%arg0: i32) -> (i32, i32) {
    %c0_i32 = arith.constant 0 : i32
    %c0_i32_0 = arith.constant 0 : i32
    return %arg0, %c0_i32 : i32, i32
  }
  func.func @transform_2(%arg0: i32) -> (i32, i32) {
    %c0_i32 = arith.constant 0 : i32
    %c0_i32_0 = arith.constant 0 : i32
    %c0_i32_1 = arith.constant 0 : i32
    return %c0_i32, %c0_i32_0 : i32, i32
  }
  func.func @transform_3(%arg0: i32) -> (i32, i32) {
    %c0_i32 = arith.constant 0 : i32
    %c0_i32_0 = arith.constant 0 : i32
    %c0_i32_1 = arith.constant 0 : i32
    return %c0_i32, %c0_i32_0 : i32, i32
  }
  func.func @transform_4(%arg0: i32) -> (i32, i32) {
    %c0_i32 = arith.constant 0 : i32
    %c0_i32_0 = arith.constant 0 : i32
    %c0_i32_1 = arith.constant 0 : i32
    return %c0_i32, %c0_i32_0 : i32, i32
  }
  func.func @transform_5(%arg0: i32) -> (i32, i32) {
    %c0_i32 = arith.constant 0 : i32
    %c0_i32_0 = arith.constant 0 : i32
    %c0_i32_1 = arith.constant 0 : i32
    return %c0_i32, %c0_i32_0 : i32, i32
  }
  func.func @transform_6(%arg0: i32) -> (i32, i32) {
    %c0_i32 = arith.constant 0 : i32
    %c0_i32_0 = arith.constant 0 : i32
    return %arg0, %c0_i32 : i32, i32
  }
  func.func @transform_7(%arg0: i32) -> (i32, i32) {
    %c0_i32 = arith.constant 0 : i32
    %c0_i32_0 = arith.constant 0 : i32
    return %arg0, %c0_i32 : i32, i32
  }
  func.func @transform_8(%arg0: i32) -> (i32, i32) {
    %c0_i32 = arith.constant 0 : i32
    %c0_i32_0 = arith.constant 0 : i32
    return %arg0, %c0_i32 : i32, i32
  }
}

module attributes {stable_mosaic.version = 11 : i64} {
  func.func @_linear_kernel(%arg0: i32, %arg1: memref<32x64xbf16, #tpu.memory_space<vmem>>, %arg2: memref<64x32xbf16, #tpu.memory_space<vmem>>, %arg3: memref<1x32xf32, #tpu.memory_space<vmem>>, %arg4: memref<32x32xbf16, #tpu.memory_space<vmem>>) attributes {dimension_semantics = [#tpu.dimension_semantics<parallel>], iteration_bounds = array<i64: 1>, scalar_prefetch = 0 : i64, scratch_operands = 0 : i64, tpu.core_type = #tpu.core_type<tc>, window_params = [{transform_indices = @transform_0, window_bounds = array<i64: 32, 64>}, {pipeline_mode = #tpu.pipeline_mode<synchronous>, transform_indices = @transform_1, window_bounds = array<i64: 64, 32>}, {pipeline_mode = #tpu.pipeline_mode<synchronous>, transform_indices = @transform_2, window_bounds = array<i64: 1, 32>}, {transform_indices = @transform_3, window_bounds = array<i64: 32, 32>}]} {
    %c0 = arith.constant 0 : index
    %c0_0 = arith.constant 0 : index
    %0 = vector.load %arg1[%c0, %c0_0] : memref<32x64xbf16, #tpu.memory_space<vmem>>, vector<32x64xbf16>
    %c0_1 = arith.constant 0 : index
    %c0_2 = arith.constant 0 : index
    %1 = vector.load %arg2[%c0_1, %c0_2] : memref<64x32xbf16, #tpu.memory_space<vmem>>, vector<64x32xbf16>
    %cst = arith.constant dense<0.000000e+00> : vector<32x32xf32>
    %2 = tpu.matmul %0, %1, %cst {dimension_numbers = #tpu.dot_dimension_numbers<[1], [0], [0], [1], [0, 0, 1, 1], [], []>} : vector<32x64xbf16>, vector<64x32xbf16>, vector<32x32xf32> -> vector<32x32xf32>
    %c0_3 = arith.constant 0 : index
    %c0_4 = arith.constant 0 : index
    %3 = vector.load %arg3[%c0_3, %c0_4] : memref<1x32xf32, #tpu.memory_space<vmem>>, vector<1x32xf32>
    %4 = vector.broadcast %3 : vector<1x32xf32> to vector<32x32xf32>
    %5 = arith.addf %2, %4 : vector<32x32xf32>
    %6 = arith.truncf %5 : vector<32x32xf32> to vector<32x32xbf16>
    %c0_5 = arith.constant 0 : index
    %c0_6 = arith.constant 0 : index
    %7 = vector.load %arg4[%c0_5, %c0_6] : memref<32x32xbf16, #tpu.memory_space<vmem>>, vector<32x32xbf16>
    tpu.vector_store %arg4[%c0_5, %c0_6], %6 {strides = array<i32>} : memref<32x32xbf16, #tpu.memory_space<vmem>>, vector<32x32xbf16>,
    return
  }
  func.func @transform_0(%arg0: i32) -> (i32, i32) {
    %c0_i32 = arith.constant 0 : i32
    %c0_i32_0 = arith.constant 0 : i32
    return %arg0, %c0_i32 : i32, i32
  }
  func.func @transform_1(%arg0: i32) -> (i32, i32) {
    %c0_i32 = arith.constant 0 : i32
    %c0_i32_0 = arith.constant 0 : i32
    %c0_i32_1 = arith.constant 0 : i32
    return %c0_i32, %c0_i32_0 : i32, i32
  }
  func.func @transform_2(%arg0: i32) -> (i32, i32) {
    %c0_i32 = arith.constant 0 : i32
    %c0_i32_0 = arith.constant 0 : i32
    %c0_i32_1 = arith.constant 0 : i32
    return %c0_i32, %c0_i32_0 : i32, i32
  }
  func.func @transform_3(%arg0: i32) -> (i32, i32) {
    %c0_i32 = arith.constant 0 : i32
    %c0_i32_0 = arith.constant 0 : i32
    return %arg0, %c0_i32 : i32, i32
  }
}

module attributes {stable_mosaic.version = 11 : i64} {
  func.func @_mha_kernel(%arg0: i32, %arg1: memref<1x16x32xbf16, #tpu.memory_space<vmem>>, %arg2: memref<1x16x32xbf16, #tpu.memory_space<vmem>>, %arg3: memref<1x16x32xbf16, #tpu.memory_space<vmem>>, %arg4: memref<1x16x32xbf16, #tpu.memory_space<vmem>>) attributes {dimension_semantics = [#tpu.dimension_semantics<parallel>], iteration_bounds = array<i64: 2>, scalar_prefetch = 0 : i64, scratch_operands = 0 : i64, tpu.core_type = #tpu.core_type<tc>, window_params = [{transform_indices = @transform_0, window_bounds = array<i64: 1, 16, 32>}, {transform_indices = @transform_1, window_bounds = array<i64: 1, 16, 32>}, {transform_indices = @transform_2, window_bounds = array<i64: 1, 16, 32>}, {transform_indices = @transform_3, window_bounds = array<i64: 1, 16, 32>}]} {
    %c0 = arith.constant 0 : index
    %c0_0 = arith.constant 0 : index
    %c0_1 = arith.constant 0 : index
    %0 = vector.load %arg1[%c0, %c0_0, %c0_1] : memref<1x16x32xbf16, #tpu.memory_space<vmem>>, vector<1x16x32xbf16>
    %1 = vector.shape_cast %0 : vector<1x16x32xbf16> to vector<16x32xbf16>
    %c0_2 = arith.constant 0 : index
    %c0_3 = arith.constant 0 : index
    %c0_4 = arith.constant 0 : index
    %2 = vector.load %arg2[%c0_2, %c0_3, %c0_4] : memref<1x16x32xbf16, #tpu.memory_space<vmem>>, vector<1x16x32xbf16>
    %3 = vector.shape_cast %2 : vector<1x16x32xbf16> to vector<16x32xbf16>
    %c0_5 = arith.constant 0 : index
    %c0_6 = arith.constant 0 : index
    %c0_7 = arith.constant 0 : index
    %4 = vector.load %arg3[%c0_5, %c0_6, %c0_7] : memref<1x16x32xbf16, #tpu.memory_space<vmem>>, vector<1x16x32xbf16>
    %5 = vector.shape_cast %4 : vector<1x16x32xbf16> to vector<16x32xbf16>
    %6 = vector.extract_strided_slice %1 {offsets = [0, 0], sizes = [16, 8], strides = [1, 1]} : vector<16x32xbf16> to vector<16x8xbf16>
    %7 = vector.extract_strided_slice %3 {offsets = [0, 0], sizes = [16, 8], strides = [1, 1]} : vector<16x32xbf16> to vector<16x8xbf16>
    %8 = vector.extract_strided_slice %5 {offsets = [0, 0], sizes = [16, 8], strides = [1, 1]} : vector<16x32xbf16> to vector<16x8xbf16>
    %cst = arith.constant dense<0.000000e+00> : vector<16x16xf32>
    %9 = tpu.matmul %6, %7, %cst {dimension_numbers = #tpu.dot_dimension_numbers<[1], [1], [0], [0], [0, 0, 1, 0], [], []>} : vector<16x8xbf16>, vector<16x8xbf16>, vector<16x16xf32> -> vector<16x16xf32>
    %cst_8 = arith.constant dense<0xFF800000> : vector<16xf32>
    %10 = vector.multi_reduction <maximumf>, %9, %cst_8 [1] : vector<16x16xf32> to vector<16xf32>
    %11 = vector.shape_cast %10 : vector<16xf32> to vector<16x1xf32>
    %12 = vector.broadcast %11 : vector<16x1xf32> to vector<16x16xf32>
    %13 = arith.subf %9, %12 : vector<16x16xf32>
    %14 = math.exp %13 : vector<16x16xf32>
    %cst_9 = arith.constant dense<0.000000e+00> : vector<16xf32>
    %15 = vector.multi_reduction <add>, %14, %cst_9 [1] : vector<16x16xf32> to vector<16xf32>
    %16 = vector.shape_cast %15 : vector<16xf32> to vector<16x1xf32>
    %17 = tpu.reciprocal %16 {approx = true} : vector<16x1xf32> -> vector<16x1xf32>
    %18 = vector.broadcast %17 : vector<16x1xf32> to vector<16x16xf32>
    %19 = arith.mulf %14, %18 : vector<16x16xf32>
    %20 = arith.truncf %19 : vector<16x16xf32> to vector<16x16xbf16>
    %cst_10 = arith.constant dense<0.000000e+00> : vector<16x8xf32>
    %21 = tpu.matmul %20, %8, %cst_10 {dimension_numbers = #tpu.dot_dimension_numbers<[1], [0], [0], [1], [0, 0, 1, 1], [], []>} : vector<16x16xbf16>, vector<16x8xbf16>, vector<16x8xf32> -> vector<16x8xf32>
    %22 = arith.truncf %21 : vector<16x8xf32> to vector<16x8xbf16>
    %c0_11 = arith.constant 0 : index
    %c0_12 = arith.constant 0 : index
    %c0_13 = arith.constant 0 : index
    %23 = vector.load %arg4[%c0_11, %c0_12, %c0_13] : memref<1x16x32xbf16, #tpu.memory_space<vmem>>, vector<1x16x8xbf16>
    %24 = vector.shape_cast %23 : vector<1x16x8xbf16> to vector<16x8xbf16>
    %25 = vector.shape_cast %22 : vector<16x8xbf16> to vector<1x16x8xbf16>
    tpu.vector_store %arg4[%c0_11, %c0_12, %c0_13], %25 {strides = array<i32>} : memref<1x16x32xbf16, #tpu.memory_space<vmem>>, vector<1x16x8xbf16>,
    %26 = vector.extract_strided_slice %1 {offsets = [0, 8], sizes = [16, 8], strides = [1, 1]} : vector<16x32xbf16> to vector<16x8xbf16>
    %27 = vector.extract_strided_slice %3 {offsets = [0, 8], sizes = [16, 8], strides = [1, 1]} : vector<16x32xbf16> to vector<16x8xbf16>
    %28 = vector.extract_strided_slice %5 {offsets = [0, 8], sizes = [16, 8], strides = [1, 1]} : vector<16x32xbf16> to vector<16x8xbf16>
    %cst_14 = arith.constant dense<0.000000e+00> : vector<16x16xf32>
    %29 = tpu.matmul %26, %27, %cst_14 {dimension_numbers = #tpu.dot_dimension_numbers<[1], [1], [0], [0], [0, 0, 1, 0], [], []>} : vector<16x8xbf16>, vector<16x8xbf16>, vector<16x16xf32> -> vector<16x16xf32>
    %cst_15 = arith.constant dense<0xFF800000> : vector<16xf32>
    %30 = vector.multi_reduction <maximumf>, %29, %cst_15 [1] : vector<16x16xf32> to vector<16xf32>
    %31 = vector.shape_cast %30 : vector<16xf32> to vector<16x1xf32>
    %32 = vector.broadcast %31 : vector<16x1xf32> to vector<16x16xf32>
    %33 = arith.subf %29, %32 : vector<16x16xf32>
    %34 = math.exp %33 : vector<16x16xf32>
    %cst_16 = arith.constant dense<0.000000e+00> : vector<16xf32>
    %35 = vector.multi_reduction <add>, %34, %cst_16 [1] : vector<16x16xf32> to vector<16xf32>
    %36 = vector.shape_cast %35 : vector<16xf32> to vector<16x1xf32>
    %37 = tpu.reciprocal %36 {approx = true} : vector<16x1xf32> -> vector<16x1xf32>
    %38 = vector.broadcast %37 : vector<16x1xf32> to vector<16x16xf32>
    %39 = arith.mulf %34, %38 : vector<16x16xf32>
    %40 = arith.truncf %39 : vector<16x16xf32> to vector<16x16xbf16>
    %cst_17 = arith.constant dense<0.000000e+00> : vector<16x8xf32>
    %41 = tpu.matmul %40, %28, %cst_17 {dimension_numbers = #tpu.dot_dimension_numbers<[1], [0], [0], [1], [0, 0, 1, 1], [], []>} : vector<16x16xbf16>, vector<16x8xbf16>, vector<16x8xf32> -> vector<16x8xf32>
    %42 = arith.truncf %41 : vector<16x8xf32> to vector<16x8xbf16>
    %c0_18 = arith.constant 0 : index
    %c0_19 = arith.constant 0 : index
    %c8 = arith.constant 8 : index
    %43 = vector.load %arg4[%c0_18, %c0_19, %c8] : memref<1x16x32xbf16, #tpu.memory_space<vmem>>, vector<1x16x8xbf16>
    %44 = vector.shape_cast %43 : vector<1x16x8xbf16> to vector<16x8xbf16>
    %45 = vector.shape_cast %42 : vector<16x8xbf16> to vector<1x16x8xbf16>
    tpu.vector_store %arg4[%c0_18, %c0_19, %c8], %45 {strides = array<i32>} : memref<1x16x32xbf16, #tpu.memory_space<vmem>>, vector<1x16x8xbf16>,
    %46 = vector.extract_strided_slice %1 {offsets = [0, 16], sizes = [16, 8], strides = [1, 1]} : vector<16x32xbf16> to vector<16x8xbf16>
    %47 = vector.extract_strided_slice %3 {offsets = [0, 16], sizes = [16, 8], strides = [1, 1]} : vector<16x32xbf16> to vector<16x8xbf16>
    %48 = vector.extract_strided_slice %5 {offsets = [0, 16], sizes = [16, 8], strides = [1, 1]} : vector<16x32xbf16> to vector<16x8xbf16>
    %cst_20 = arith.constant dense<0.000000e+00> : vector<16x16xf32>
    %49 = tpu.matmul %46, %47, %cst_20 {dimension_numbers = #tpu.dot_dimension_numbers<[1], [1], [0], [0], [0, 0, 1, 0], [], []>} : vector<16x8xbf16>, vector<16x8xbf16>, vector<16x16xf32> -> vector<16x16xf32>
    %cst_21 = arith.constant dense<0xFF800000> : vector<16xf32>
    %50 = vector.multi_reduction <maximumf>, %49, %cst_21 [1] : vector<16x16xf32> to vector<16xf32>
    %51 = vector.shape_cast %50 : vector<16xf32> to vector<16x1xf32>
    %52 = vector.broadcast %51 : vector<16x1xf32> to vector<16x16xf32>
    %53 = arith.subf %49, %52 : vector<16x16xf32>
    %54 = math.exp %53 : vector<16x16xf32>
    %cst_22 = arith.constant dense<0.000000e+00> : vector<16xf32>
    %55 = vector.multi_reduction <add>, %54, %cst_22 [1] : vector<16x16xf32> to vector<16xf32>
    %56 = vector.shape_cast %55 : vector<16xf32> to vector<16x1xf32>
    %57 = tpu.reciprocal %56 {approx = true} : vector<16x1xf32> -> vector<16x1xf32>
    %58 = vector.broadcast %57 : vector<16x1xf32> to vector<16x16xf32>
    %59 = arith.mulf %54, %58 : vector<16x16xf32>
    %60 = arith.truncf %59 : vector<16x16xf32> to vector<16x16xbf16>
    %cst_23 = arith.constant dense<0.000000e+00> : vector<16x8xf32>
    %61 = tpu.matmul %60, %48, %cst_23 {dimension_numbers = #tpu.dot_dimension_numbers<[1], [0], [0], [1], [0, 0, 1, 1], [], []>} : vector<16x16xbf16>, vector<16x8xbf16>, vector<16x8xf32> -> vector<16x8xf32>
    %62 = arith.truncf %61 : vector<16x8xf32> to vector<16x8xbf16>
    %c0_24 = arith.constant 0 : index
    %c0_25 = arith.constant 0 : index
    %c16 = arith.constant 16 : index
    %63 = vector.load %arg4[%c0_24, %c0_25, %c16] : memref<1x16x32xbf16, #tpu.memory_space<vmem>>, vector<1x16x8xbf16>
    %64 = vector.shape_cast %63 : vector<1x16x8xbf16> to vector<16x8xbf16>
    %65 = vector.shape_cast %62 : vector<16x8xbf16> to vector<1x16x8xbf16>
    tpu.vector_store %arg4[%c0_24, %c0_25, %c16], %65 {strides = array<i32>} : memref<1x16x32xbf16, #tpu.memory_space<vmem>>, vector<1x16x8xbf16>,
    %66 = vector.extract_strided_slice %1 {offsets = [0, 24], sizes = [16, 8], strides = [1, 1]} : vector<16x32xbf16> to vector<16x8xbf16>
    %67 = vector.extract_strided_slice %3 {offsets = [0, 24], sizes = [16, 8], strides = [1, 1]} : vector<16x32xbf16> to vector<16x8xbf16>
    %68 = vector.extract_strided_slice %5 {offsets = [0, 24], sizes = [16, 8], strides = [1, 1]} : vector<16x32xbf16> to vector<16x8xbf16>
    %cst_26 = arith.constant dense<0.000000e+00> : vector<16x16xf32>
    %69 = tpu.matmul %66, %67, %cst_26 {dimension_numbers = #tpu.dot_dimension_numbers<[1], [1], [0], [0], [0, 0, 1, 0], [], []>} : vector<16x8xbf16>, vector<16x8xbf16>, vector<16x16xf32> -> vector<16x16xf32>
    %cst_27 = arith.constant dense<0xFF800000> : vector<16xf32>
    %70 = vector.multi_reduction <maximumf>, %69, %cst_27 [1] : vector<16x16xf32> to vector<16xf32>
    %71 = vector.shape_cast %70 : vector<16xf32> to vector<16x1xf32>
    %72 = vector.broadcast %71 : vector<16x1xf32> to vector<16x16xf32>
    %73 = arith.subf %69, %72 : vector<16x16xf32>
    %74 = math.exp %73 : vector<16x16xf32>
    %cst_28 = arith.constant dense<0.000000e+00> : vector<16xf32>
    %75 = vector.multi_reduction <add>, %74, %cst_28 [1] : vector<16x16xf32> to vector<16xf32>
    %76 = vector.shape_cast %75 : vector<16xf32> to vector<16x1xf32>
    %77 = tpu.reciprocal %76 {approx = true} : vector<16x1xf32> -> vector<16x1xf32>
    %78 = vector.broadcast %77 : vector<16x1xf32> to vector<16x16xf32>
    %79 = arith.mulf %74, %78 : vector<16x16xf32>
    %80 = arith.truncf %79 : vector<16x16xf32> to vector<16x16xbf16>
    %cst_29 = arith.constant dense<0.000000e+00> : vector<16x8xf32>
    %81 = tpu.matmul %80, %68, %cst_29 {dimension_numbers = #tpu.dot_dimension_numbers<[1], [0], [0], [1], [0, 0, 1, 1], [], []>} : vector<16x16xbf16>, vector<16x8xbf16>, vector<16x8xf32> -> vector<16x8xf32>
    %82 = arith.truncf %81 : vector<16x8xf32> to vector<16x8xbf16>
    %c0_30 = arith.constant 0 : index
    %c0_31 = arith.constant 0 : index
    %c24 = arith.constant 24 : index
    %83 = vector.load %arg4[%c0_30, %c0_31, %c24] : memref<1x16x32xbf16, #tpu.memory_space<vmem>>, vector<1x16x8xbf16>
    %84 = vector.shape_cast %83 : vector<1x16x8xbf16> to vector<16x8xbf16>
    %85 = vector.shape_cast %82 : vector<16x8xbf16> to vector<1x16x8xbf16>
    tpu.vector_store %arg4[%c0_30, %c0_31, %c24], %85 {strides = array<i32>} : memref<1x16x32xbf16, #tpu.memory_space<vmem>>, vector<1x16x8xbf16>,
    return
  }
  func.func @transform_0(%arg0: i32) -> (i32, i32, i32) {
    %c0_i32 = arith.constant 0 : i32
    %c0_i32_0 = arith.constant 0 : i32
    %c0_i32_1 = arith.constant 0 : i32
    return %arg0, %c0_i32, %c0_i32_0 : i32, i32, i32
  }
  func.func @transform_1(%arg0: i32) -> (i32, i32, i32) {
    %c0_i32 = arith.constant 0 : i32
    %c0_i32_0 = arith.constant 0 : i32
    %c0_i32_1 = arith.constant 0 : i32
    return %arg0, %c0_i32, %c0_i32_0 : i32, i32, i32
  }
  func.func @transform_2(%arg0: i32) -> (i32, i32, i32) {
    %c0_i32 = arith.constant 0 : i32
    %c0_i32_0 = arith.constant 0 : i32
    %c0_i32_1 = arith.constant 0 : i32
    return %arg0, %c0_i32, %c0_i32_0 : i32, i32, i32
  }
  func.func @transform_3(%arg0: i32) -> (i32, i32, i32) {
    %c0_i32 = arith.constant 0 : i32
    %c0_i32_0 = arith.constant 0 : i32
    %c0_i32_1 = arith.constant 0 : i32
    return %arg0, %c0_i32, %c0_i32_0 : i32, i32, i32
  }
}

module attributes {stable_mosaic.version = 11 : i64} {
  func.func @_outproj_res_ln_kernel(%arg0: i32, %arg1: memref<32x32xbf16, #tpu.memory_space<vmem>>, %arg2: memref<32x32xbf16, #tpu.memory_space<vmem>>, %arg3: memref<32x32xbf16, #tpu.memory_space<vmem>>, %arg4: memref<1x32xf32, #tpu.memory_space<vmem>>, %arg5: memref<1x32xf32, #tpu.memory_space<vmem>>, %arg6: memref<1x32xf32, #tpu.memory_space<vmem>>, %arg7: memref<32x32xbf16, #tpu.memory_space<vmem>>) attributes {dimension_semantics = [#tpu.dimension_semantics<parallel>], iteration_bounds = array<i64: 1>, scalar_prefetch = 0 : i64, scratch_operands = 0 : i64, tpu.core_type = #tpu.core_type<tc>, window_params = [{transform_indices = @transform_0, window_bounds = array<i64: 32, 32>}, {transform_indices = @transform_1, window_bounds = array<i64: 32, 32>}, {pipeline_mode = #tpu.pipeline_mode<synchronous>, transform_indices = @transform_2, window_bounds = array<i64: 32, 32>}, {pipeline_mode = #tpu.pipeline_mode<synchronous>, transform_indices = @transform_3, window_bounds = array<i64: 1, 32>}, {pipeline_mode = #tpu.pipeline_mode<synchronous>, transform_indices = @transform_4, window_bounds = array<i64: 1, 32>}, {pipeline_mode = #tpu.pipeline_mode<synchronous>, transform_indices = @transform_5, window_bounds = array<i64: 1, 32>}, {transform_indices = @transform_6, window_bounds = array<i64: 32, 32>}]} {
    %c0 = arith.constant 0 : index
    %c0_0 = arith.constant 0 : index
    %0 = vector.load %arg1[%c0, %c0_0] : memref<32x32xbf16, #tpu.memory_space<vmem>>, vector<32x32xbf16>
    %c0_1 = arith.constant 0 : index
    %c0_2 = arith.constant 0 : index
    %1 = vector.load %arg3[%c0_1, %c0_2] : memref<32x32xbf16, #tpu.memory_space<vmem>>, vector<32x32xbf16>
    %cst = arith.constant dense<0.000000e+00> : vector<32x32xf32>
    %2 = tpu.matmul %0, %1, %cst {dimension_numbers = #tpu.dot_dimension_numbers<[1], [0], [0], [1], [0, 0, 1, 1], [], []>} : vector<32x32xbf16>, vector<32x32xbf16>, vector<32x32xf32> -> vector<32x32xf32>
    %c0_3 = arith.constant 0 : index
    %c0_4 = arith.constant 0 : index
    %3 = vector.load %arg4[%c0_3, %c0_4] : memref<1x32xf32, #tpu.memory_space<vmem>>, vector<1x32xf32>
    %4 = vector.broadcast %3 : vector<1x32xf32> to vector<32x32xf32>
    %5 = arith.addf %2, %4 : vector<32x32xf32>
    %c0_5 = arith.constant 0 : index
    %c0_6 = arith.constant 0 : index
    %6 = vector.load %arg2[%c0_5, %c0_6] : memref<32x32xbf16, #tpu.memory_space<vmem>>, vector<32x32xbf16>
    %7 = arith.extf %6 : vector<32x32xbf16> to vector<32x32xf32>
    %8 = arith.addf %5, %7 : vector<32x32xf32>
    %cst_7 = arith.constant dense<0.000000e+00> : vector<32xf32>
    %9 = vector.multi_reduction <add>, %8, %cst_7 [1] : vector<32x32xf32> to vector<32xf32>
    %10 = vector.shape_cast %9 : vector<32xf32> to vector<32x1xf32>
    %cst_8 = arith.constant 3.200000e+01 : f32
    %11 = vector.broadcast %cst_8 : f32 to vector<32x1xf32>
    %12 = arith.divf %10, %11 : vector<32x1xf32>
    %13 = vector.broadcast %12 : vector<32x1xf32> to vector<32x32xf32>
    %14 = arith.subf %8, %13 : vector<32x32xf32>
    %15 = arith.mulf %14, %14 : vector<32x32xf32>
    %cst_9 = arith.constant dense<0.000000e+00> : vector<32xf32>
    %16 = vector.multi_reduction <add>, %15, %cst_9 [1] : vector<32x32xf32> to vector<32xf32>
    %17 = vector.shape_cast %16 : vector<32xf32> to vector<32x1xf32>
    %cst_10 = arith.constant 3.200000e+01 : f32
    %18 = vector.broadcast %cst_10 : f32 to vector<32x1xf32>
    %19 = arith.divf %17, %18 : vector<32x1xf32>
    %20 = vector.broadcast %12 : vector<32x1xf32> to vector<32x32xf32>
    %21 = arith.subf %8, %20 : vector<32x32xf32>
    %cst_11 = arith.constant 9.99999974E-6 : f32
    %22 = vector.broadcast %cst_11 : f32 to vector<32x1xf32>
    %23 = arith.addf %19, %22 : vector<32x1xf32>
    %24 = math.rsqrt %23 : vector<32x1xf32>
    %25 = vector.broadcast %24 : vector<32x1xf32> to vector<32x32xf32>
    %26 = arith.mulf %21, %25 : vector<32x32xf32>
    %c0_12 = arith.constant 0 : index
    %c0_13 = arith.constant 0 : index
    %27 = vector.load %arg5[%c0_12, %c0_13] : memref<1x32xf32, #tpu.memory_space<vmem>>, vector<1x32xf32>
    %28 = vector.broadcast %27 : vector<1x32xf32> to vector<32x32xf32>
    %29 = arith.mulf %26, %28 : vector<32x32xf32>
    %c0_14 = arith.constant 0 : index
    %c0_15 = arith.constant 0 : index
    %30 = vector.load %arg6[%c0_14, %c0_15] : memref<1x32xf32, #tpu.memory_space<vmem>>, vector<1x32xf32>
    %31 = vector.broadcast %30 : vector<1x32xf32> to vector<32x32xf32>
    %32 = arith.addf %29, %31 : vector<32x32xf32>
    %33 = arith.truncf %32 : vector<32x32xf32> to vector<32x32xbf16>
    %c0_16 = arith.constant 0 : index
    %c0_17 = arith.constant 0 : index
    %34 = vector.load %arg7[%c0_16, %c0_17] : memref<32x32xbf16, #tpu.memory_space<vmem>>, vector<32x32xbf16>
    tpu.vector_store %arg7[%c0_16, %c0_17], %33 {strides = array<i32>} : memref<32x32xbf16, #tpu.memory_space<vmem>>, vector<32x32xbf16>,
    return
  }
  func.func @transform_0(%arg0: i32) -> (i32, i32) {
    %c0_i32 = arith.constant 0 : i32
    %c0_i32_0 = arith.constant 0 : i32
    return %arg0, %c0_i32 : i32, i32
  }
  func.func @transform_1(%arg0: i32) -> (i32, i32) {
    %c0_i32 = arith.constant 0 : i32
    %c0_i32_0 = arith.constant 0 : i32
    return %arg0, %c0_i32 : i32, i32
  }
  func.func @transform_2(%arg0: i32) -> (i32, i32) {
    %c0_i32 = arith.constant 0 : i32
    %c0_i32_0 = arith.constant 0 : i32
    %c0_i32_1 = arith.constant 0 : i32
    return %c0_i32, %c0_i32_0 : i32, i32
  }
  func.func @transform_3(%arg0: i32) -> (i32, i32) {
    %c0_i32 = arith.constant 0 : i32
    %c0_i32_0 = arith.constant 0 : i32
    %c0_i32_1 = arith.constant 0 : i32
    return %c0_i32, %c0_i32_0 : i32, i32
  }
  func.func @transform_4(%arg0: i32) -> (i32, i32) {
    %c0_i32 = arith.constant 0 : i32
    %c0_i32_0 = arith.constant 0 : i32
    %c0_i32_1 = arith.constant 0 : i32
    return %c0_i32, %c0_i32_0 : i32, i32
  }
  func.func @transform_5(%arg0: i32) -> (i32, i32) {
    %c0_i32 = arith.constant 0 : i32
    %c0_i32_0 = arith.constant 0 : i32
    %c0_i32_1 = arith.constant 0 : i32
    return %c0_i32, %c0_i32_0 : i32, i32
  }
  func.func @transform_6(%arg0: i32) -> (i32, i32) {
    %c0_i32 = arith.constant 0 : i32
    %c0_i32_0 = arith.constant 0 : i32
    return %arg0, %c0_i32 : i32, i32
  }
}

module attributes {stable_mosaic.version = 11 : i64} {
  func.func @_ffn_res_ln_kernel(%arg0: i32, %arg1: memref<32x32xbf16, #tpu.memory_space<vmem>>, %arg2: memref<32x64xbf16, #tpu.memory_space<vmem>>, %arg3: memref<1x64xf32, #tpu.memory_space<vmem>>, %arg4: memref<64x32xbf16, #tpu.memory_space<vmem>>, %arg5: memref<1x32xf32, #tpu.memory_space<vmem>>, %arg6: memref<1x32xf32, #tpu.memory_space<vmem>>, %arg7: memref<1x32xf32, #tpu.memory_space<vmem>>, %arg8: memref<32x32xbf16, #tpu.memory_space<vmem>>) attributes {dimension_semantics = [#tpu.dimension_semantics<parallel>], iteration_bounds = array<i64: 1>, scalar_prefetch = 0 : i64, scratch_operands = 0 : i64, tpu.core_type = #tpu.core_type<tc>, window_params = [{transform_indices = @transform_0, window_bounds = array<i64: 32, 32>}, {pipeline_mode = #tpu.pipeline_mode<synchronous>, transform_indices = @transform_1, window_bounds = array<i64: 32, 64>}, {pipeline_mode = #tpu.pipeline_mode<synchronous>, transform_indices = @transform_2, window_bounds = array<i64: 1, 64>}, {pipeline_mode = #tpu.pipeline_mode<synchronous>, transform_indices = @transform_3, window_bounds = array<i64: 64, 32>}, {pipeline_mode = #tpu.pipeline_mode<synchronous>, transform_indices = @transform_4, window_bounds = array<i64: 1, 32>}, {pipeline_mode = #tpu.pipeline_mode<synchronous>, transform_indices = @transform_5, window_bounds = array<i64: 1, 32>}, {pipeline_mode = #tpu.pipeline_mode<synchronous>, transform_indices = @transform_6, window_bounds = array<i64: 1, 32>}, {transform_indices = @transform_7, window_bounds = array<i64: 32, 32>}]} {
    %c0 = arith.constant 0 : index
    %c0_0 = arith.constant 0 : index
    %0 = vector.load %arg1[%c0, %c0_0] : memref<32x32xbf16, #tpu.memory_space<vmem>>, vector<32x32xbf16>
    %c0_1 = arith.constant 0 : index
    %c0_2 = arith.constant 0 : index
    %1 = vector.load %arg2[%c0_1, %c0_2] : memref<32x64xbf16, #tpu.memory_space<vmem>>, vector<32x64xbf16>
    %cst = arith.constant dense<0.000000e+00> : vector<32x64xf32>
    %2 = tpu.matmul %0, %1, %cst {dimension_numbers = #tpu.dot_dimension_numbers<[1], [0], [0], [1], [0, 0, 1, 1], [], []>} : vector<32x32xbf16>, vector<32x64xbf16>, vector<32x64xf32> -> vector<32x64xf32>
    %c0_3 = arith.constant 0 : index
    %c0_4 = arith.constant 0 : index
    %3 = vector.load %arg3[%c0_3, %c0_4] : memref<1x64xf32, #tpu.memory_space<vmem>>, vector<1x64xf32>
    %4 = vector.broadcast %3 : vector<1x64xf32> to vector<32x64xf32>
    %5 = arith.addf %2, %4 : vector<32x64xf32>
    %cst_5 = arith.constant 0.000000e+00 : f32
    %6 = vector.broadcast %cst_5 : f32 to vector<32x64xf32>
    %7 = arith.maximumf %5, %6 : vector<32x64xf32>
    %8 = arith.truncf %7 : vector<32x64xf32> to vector<32x64xbf16>
    %c0_6 = arith.constant 0 : index
    %c0_7 = arith.constant 0 : index
    %9 = vector.load %arg4[%c0_6, %c0_7] : memref<64x32xbf16, #tpu.memory_space<vmem>>, vector<64x32xbf16>
    %cst_8 = arith.constant dense<0.000000e+00> : vector<32x32xf32>
    %10 = tpu.matmul %8, %9, %cst_8 {dimension_numbers = #tpu.dot_dimension_numbers<[1], [0], [0], [1], [0, 0, 1, 1], [], []>} : vector<32x64xbf16>, vector<64x32xbf16>, vector<32x32xf32> -> vector<32x32xf32>
    %c0_9 = arith.constant 0 : index
    %c0_10 = arith.constant 0 : index
    %11 = vector.load %arg5[%c0_9, %c0_10] : memref<1x32xf32, #tpu.memory_space<vmem>>, vector<1x32xf32>
    %12 = vector.broadcast %11 : vector<1x32xf32> to vector<32x32xf32>
    %13 = arith.addf %10, %12 : vector<32x32xf32>
    %14 = arith.extf %0 : vector<32x32xbf16> to vector<32x32xf32>
    %15 = arith.addf %13, %14 : vector<32x32xf32>
    %cst_11 = arith.constant dense<0.000000e+00> : vector<32xf32>
    %16 = vector.multi_reduction <add>, %15, %cst_11 [1] : vector<32x32xf32> to vector<32xf32>
    %17 = vector.shape_cast %16 : vector<32xf32> to vector<32x1xf32>
    %cst_12 = arith.constant 3.200000e+01 : f32
    %18 = vector.broadcast %cst_12 : f32 to vector<32x1xf32>
    %19 = arith.divf %17, %18 : vector<32x1xf32>
    %20 = vector.broadcast %19 : vector<32x1xf32> to vector<32x32xf32>
    %21 = arith.subf %15, %20 : vector<32x32xf32>
    %22 = arith.mulf %21, %21 : vector<32x32xf32>
    %cst_13 = arith.constant dense<0.000000e+00> : vector<32xf32>
    %23 = vector.multi_reduction <add>, %22, %cst_13 [1] : vector<32x32xf32> to vector<32xf32>
    %24 = vector.shape_cast %23 : vector<32xf32> to vector<32x1xf32>
    %cst_14 = arith.constant 3.200000e+01 : f32
    %25 = vector.broadcast %cst_14 : f32 to vector<32x1xf32>
    %26 = arith.divf %24, %25 : vector<32x1xf32>
    %27 = vector.broadcast %19 : vector<32x1xf32> to vector<32x32xf32>
    %28 = arith.subf %15, %27 : vector<32x32xf32>
    %cst_15 = arith.constant 9.99999974E-6 : f32
    %29 = vector.broadcast %cst_15 : f32 to vector<32x1xf32>
    %30 = arith.addf %26, %29 : vector<32x1xf32>
    %31 = math.rsqrt %30 : vector<32x1xf32>
    %32 = vector.broadcast %31 : vector<32x1xf32> to vector<32x32xf32>
    %33 = arith.mulf %28, %32 : vector<32x32xf32>
    %c0_16 = arith.constant 0 : index
    %c0_17 = arith.constant 0 : index
    %34 = vector.load %arg6[%c0_16, %c0_17] : memref<1x32xf32, #tpu.memory_space<vmem>>, vector<1x32xf32>
    %35 = vector.broadcast %34 : vector<1x32xf32> to vector<32x32xf32>
    %36 = arith.mulf %33, %35 : vector<32x32xf32>
    %c0_18 = arith.constant 0 : index
    %c0_19 = arith.constant 0 : index
    %37 = vector.load %arg7[%c0_18, %c0_19] : memref<1x32xf32, #tpu.memory_space<vmem>>, vector<1x32xf32>
    %38 = vector.broadcast %37 : vector<1x32xf32> to vector<32x32xf32>
    %39 = arith.addf %36, %38 : vector<32x32xf32>
    %40 = arith.truncf %39 : vector<32x32xf32> to vector<32x32xbf16>
    %c0_20 = arith.constant 0 : index
    %c0_21 = arith.constant 0 : index
    %41 = vector.load %arg8[%c0_20, %c0_21] : memref<32x32xbf16, #tpu.memory_space<vmem>>, vector<32x32xbf16>
    tpu.vector_store %arg8[%c0_20, %c0_21], %40 {strides = array<i32>} : memref<32x32xbf16, #tpu.memory_space<vmem>>, vector<32x32xbf16>,
    return
  }
  func.func @transform_0(%arg0: i32) -> (i32, i32) {
    %c0_i32 = arith.constant 0 : i32
    %c0_i32_0 = arith.constant 0 : i32
    return %arg0, %c0_i32 : i32, i32
  }
  func.func @transform_1(%arg0: i32) -> (i32, i32) {
    %c0_i32 = arith.constant 0 : i32
    %c0_i32_0 = arith.constant 0 : i32
    %c0_i32_1 = arith.constant 0 : i32
    return %c0_i32, %c0_i32_0 : i32, i32
  }
  func.func @transform_2(%arg0: i32) -> (i32, i32) {
    %c0_i32 = arith.constant 0 : i32
    %c0_i32_0 = arith.constant 0 : i32
    %c0_i32_1 = arith.constant 0 : i32
    return %c0_i32, %c0_i32_0 : i32, i32
  }
  func.func @transform_3(%arg0: i32) -> (i32, i32) {
    %c0_i32 = arith.constant 0 : i32
    %c0_i32_0 = arith.constant 0 : i32
    %c0_i32_1 = arith.constant 0 : i32
    return %c0_i32, %c0_i32_0 : i32, i32
  }
  func.func @transform_4(%arg0: i32) -> (i32, i32) {
    %c0_i32 = arith.constant 0 : i32
    %c0_i32_0 = arith.constant 0 : i32
    %c0_i32_1 = arith.constant 0 : i32
    return %c0_i32, %c0_i32_0 : i32, i32
  }
  func.func @transform_5(%arg0: i32) -> (i32, i32) {
    %c0_i32 = arith.constant 0 : i32
    %c0_i32_0 = arith.constant 0 : i32
    %c0_i32_1 = arith.constant 0 : i32
    return %c0_i32, %c0_i32_0 : i32, i32
  }
  func.func @transform_6(%arg0: i32) -> (i32, i32) {
    %c0_i32 = arith.constant 0 : i32
    %c0_i32_0 = arith.constant 0 : i32
    %c0_i32_1 = arith.constant 0 : i32
    return %c0_i32, %c0_i32_0 : i32, i32
  }
  func.func @transform_7(%arg0: i32) -> (i32, i32) {
    %c0_i32 = arith.constant 0 : i32
    %c0_i32_0 = arith.constant 0 : i32
    return %arg0, %c0_i32 : i32, i32
  }
}

module attributes {stable_mosaic.version = 11 : i64} {
  func.func @_dual_proj_kernel(%arg0: i32, %arg1: memref<32x32xbf16, #tpu.memory_space<vmem>>, %arg2: memref<32x32xbf16, #tpu.memory_space<vmem>>, %arg3: memref<32x32xbf16, #tpu.memory_space<vmem>>, %arg4: memref<1x32xf32, #tpu.memory_space<vmem>>, %arg5: memref<32x32xbf16, #tpu.memory_space<vmem>>, %arg6: memref<1x32xf32, #tpu.memory_space<vmem>>, %arg7: memref<32x32xbf16, #tpu.memory_space<vmem>>, %arg8: memref<32x32xbf16, #tpu.memory_space<vmem>>) attributes {dimension_semantics = [#tpu.dimension_semantics<parallel>], iteration_bounds = array<i64: 1>, scalar_prefetch = 0 : i64, scratch_operands = 0 : i64, tpu.core_type = #tpu.core_type<tc>, window_params = [{transform_indices = @transform_0, window_bounds = array<i64: 32, 32>}, {transform_indices = @transform_1, window_bounds = array<i64: 32, 32>}, {pipeline_mode = #tpu.pipeline_mode<synchronous>, transform_indices = @transform_2, window_bounds = array<i64: 32, 32>}, {pipeline_mode = #tpu.pipeline_mode<synchronous>, transform_indices = @transform_3, window_bounds = array<i64: 1, 32>}, {pipeline_mode = #tpu.pipeline_mode<synchronous>, transform_indices = @transform_4, window_bounds = array<i64: 32, 32>}, {pipeline_mode = #tpu.pipeline_mode<synchronous>, transform_indices = @transform_5, window_bounds = array<i64: 1, 32>}, {transform_indices = @transform_6, window_bounds = array<i64: 32, 32>}, {transform_indices = @transform_7, window_bounds = array<i64: 32, 32>}]} {
    %c0 = arith.constant 0 : index
    %c0_0 = arith.constant 0 : index
    %0 = vector.load %arg1[%c0, %c0_0] : memref<32x32xbf16, #tpu.memory_space<vmem>>, vector<32x32xbf16>
    %c0_1 = arith.constant 0 : index
    %c0_2 = arith.constant 0 : index
    %1 = vector.load %arg2[%c0_1, %c0_2] : memref<32x32xbf16, #tpu.memory_space<vmem>>, vector<32x32xbf16>
    %2 = arith.addf %0, %1 : vector<32x32xbf16>
    %c0_3 = arith.constant 0 : index
    %c0_4 = arith.constant 0 : index
    %3 = vector.load %arg3[%c0_3, %c0_4] : memref<32x32xbf16, #tpu.memory_space<vmem>>, vector<32x32xbf16>
    %cst = arith.constant dense<0.000000e+00> : vector<32x32xf32>
    %4 = tpu.matmul %2, %3, %cst {dimension_numbers = #tpu.dot_dimension_numbers<[1], [0], [0], [1], [0, 0, 1, 1], [], []>} : vector<32x32xbf16>, vector<32x32xbf16>, vector<32x32xf32> -> vector<32x32xf32>
    %c0_5 = arith.constant 0 : index
    %c0_6 = arith.constant 0 : index
    %5 = vector.load %arg4[%c0_5, %c0_6] : memref<1x32xf32, #tpu.memory_space<vmem>>, vector<1x32xf32>
    %6 = vector.broadcast %5 : vector<1x32xf32> to vector<32x32xf32>
    %7 = arith.addf %4, %6 : vector<32x32xf32>
    %c0_7 = arith.constant 0 : index
    %c0_8 = arith.constant 0 : index
    %8 = vector.load %arg5[%c0_7, %c0_8] : memref<32x32xbf16, #tpu.memory_space<vmem>>, vector<32x32xbf16>
    %cst_9 = arith.constant dense<0.000000e+00> : vector<32x32xf32>
    %9 = tpu.matmul %0, %8, %cst_9 {dimension_numbers = #tpu.dot_dimension_numbers<[1], [0], [0], [1], [0, 0, 1, 1], [], []>} : vector<32x32xbf16>, vector<32x32xbf16>, vector<32x32xf32> -> vector<32x32xf32>
    %c0_10 = arith.constant 0 : index
    %c0_11 = arith.constant 0 : index
    %10 = vector.load %arg6[%c0_10, %c0_11] : memref<1x32xf32, #tpu.memory_space<vmem>>, vector<1x32xf32>
    %11 = vector.broadcast %10 : vector<1x32xf32> to vector<32x32xf32>
    %12 = arith.addf %9, %11 : vector<32x32xf32>
    %13 = arith.truncf %7 : vector<32x32xf32> to vector<32x32xbf16>
    %c0_12 = arith.constant 0 : index
    %c0_13 = arith.constant 0 : index
    %14 = vector.load %arg7[%c0_12, %c0_13] : memref<32x32xbf16, #tpu.memory_space<vmem>>, vector<32x32xbf16>
    tpu.vector_store %arg7[%c0_12, %c0_13], %13 {strides = array<i32>} : memref<32x32xbf16, #tpu.memory_space<vmem>>, vector<32x32xbf16>,
    %15 = arith.truncf %12 : vector<32x32xf32> to vector<32x32xbf16>
    %c0_14 = arith.constant 0 : index
    %c0_15 = arith.constant 0 : index
    %16 = vector.load %arg8[%c0_14, %c0_15] : memref<32x32xbf16, #tpu.memory_space<vmem>>, vector<32x32xbf16>
    tpu.vector_store %arg8[%c0_14, %c0_15], %15 {strides = array<i32>} : memref<32x32xbf16, #tpu.memory_space<vmem>>, vector<32x32xbf16>,
    return
  }
  func.func @transform_0(%arg0: i32) -> (i32, i32) {
    %c0_i32 = arith.constant 0 : i32
    %c0_i32_0 = arith.constant 0 : i32
    return %arg0, %c0_i32 : i32, i32
  }
  func.func @transform_1(%arg0: i32) -> (i32, i32) {
    %c0_i32 = arith.constant 0 : i32
    %c0_i32_0 = arith.constant 0 : i32
    return %arg0, %c0_i32 : i32, i32
  }
  func.func @transform_2(%arg0: i32) -> (i32, i32) {
    %c0_i32 = arith.constant 0 : i32
    %c0_i32_0 = arith.constant 0 : i32
    %c0_i32_1 = arith.constant 0 : i32
    return %c0_i32, %c0_i32_0 : i32, i32
  }
  func.func @transform_3(%arg0: i32) -> (i32, i32) {
    %c0_i32 = arith.constant 0 : i32
    %c0_i32_0 = arith.constant 0 : i32
    %c0_i32_1 = arith.constant 0 : i32
    return %c0_i32, %c0_i32_0 : i32, i32
  }
  func.func @transform_4(%arg0: i32) -> (i32, i32) {
    %c0_i32 = arith.constant 0 : i32
    %c0_i32_0 = arith.constant 0 : i32
    %c0_i32_1 = arith.constant 0 : i32
    return %c0_i32, %c0_i32_0 : i32, i32
  }
  func.func @transform_5(%arg0: i32) -> (i32, i32) {
    %c0_i32 = arith.constant 0 : i32
    %c0_i32_0 = arith.constant 0 : i32
    %c0_i32_1 = arith.constant 0 : i32
    return %c0_i32, %c0_i32_0 : i32, i32
  }
  func.func @transform_6(%arg0: i32) -> (i32, i32) {
    %c0_i32 = arith.constant 0 : i32
    %c0_i32_0 = arith.constant 0 : i32
    return %arg0, %c0_i32 : i32, i32
  }
  func.func @transform_7(%arg0: i32) -> (i32, i32) {
    %c0_i32 = arith.constant 0 : i32
    %c0_i32_0 = arith.constant 0 : i32
    return %arg0, %c0_i32 : i32, i32
  }
}

module attributes {stable_mosaic.version = 11 : i64} {
  func.func @_dual_proj_kernel(%arg0: i32, %arg1: memref<16x32xbf16, #tpu.memory_space<vmem>>, %arg2: memref<16x32xbf16, #tpu.memory_space<vmem>>, %arg3: memref<32x64xbf16, #tpu.memory_space<vmem>>, %arg4: memref<1x64xf32, #tpu.memory_space<vmem>>, %arg5: memref<32x32xbf16, #tpu.memory_space<vmem>>, %arg6: memref<1x32xf32, #tpu.memory_space<vmem>>, %arg7: memref<16x32xbf16, #tpu.memory_space<vmem>>, %arg8: memref<16x32xbf16, #tpu.memory_space<vmem>>, %arg9: memref<16x32xbf16, #tpu.memory_space<vmem>>) attributes {dimension_semantics = [#tpu.dimension_semantics<parallel>], iteration_bounds = array<i64: 1>, scalar_prefetch = 0 : i64, scratch_operands = 0 : i64, tpu.core_type = #tpu.core_type<tc>, window_params = [{transform_indices = @transform_0, window_bounds = array<i64: 16, 32>}, {transform_indices = @transform_1, window_bounds = array<i64: 16, 32>}, {pipeline_mode = #tpu.pipeline_mode<synchronous>, transform_indices = @transform_2, window_bounds = array<i64: 32, 64>}, {pipeline_mode = #tpu.pipeline_mode<synchronous>, transform_indices = @transform_3, window_bounds = array<i64: 1, 64>}, {pipeline_mode = #tpu.pipeline_mode<synchronous>, transform_indices = @transform_4, window_bounds = array<i64: 32, 32>}, {pipeline_mode = #tpu.pipeline_mode<synchronous>, transform_indices = @transform_5, window_bounds = array<i64: 1, 32>}, {transform_indices = @transform_6, window_bounds = array<i64: 16, 32>}, {transform_indices = @transform_7, window_bounds = array<i64: 16, 32>}, {transform_indices = @transform_8, window_bounds = array<i64: 16, 32>}]} {
    %c0 = arith.constant 0 : index
    %c0_0 = arith.constant 0 : index
    %0 = vector.load %arg1[%c0, %c0_0] : memref<16x32xbf16, #tpu.memory_space<vmem>>, vector<16x32xbf16>
    %c0_1 = arith.constant 0 : index
    %c0_2 = arith.constant 0 : index
    %1 = vector.load %arg2[%c0_1, %c0_2] : memref<16x32xbf16, #tpu.memory_space<vmem>>, vector<16x32xbf16>
    %2 = arith.addf %0, %1 : vector<16x32xbf16>
    %c0_3 = arith.constant 0 : index
    %c0_4 = arith.constant 0 : index
    %3 = vector.load %arg3[%c0_3, %c0_4] : memref<32x64xbf16, #tpu.memory_space<vmem>>, vector<32x64xbf16>
    %cst = arith.constant dense<0.000000e+00> : vector<16x64xf32>
    %4 = tpu.matmul %2, %3, %cst {dimension_numbers = #tpu.dot_dimension_numbers<[1], [0], [0], [1], [0, 0, 1, 1], [], []>} : vector<16x32xbf16>, vector<32x64xbf16>, vector<16x64xf32> -> vector<16x64xf32>
    %c0_5 = arith.constant 0 : index
    %c0_6 = arith.constant 0 : index
    %5 = vector.load %arg4[%c0_5, %c0_6] : memref<1x64xf32, #tpu.memory_space<vmem>>, vector<1x64xf32>
    %6 = vector.broadcast %5 : vector<1x64xf32> to vector<16x64xf32>
    %7 = arith.addf %4, %6 : vector<16x64xf32>
    %c0_7 = arith.constant 0 : index
    %c0_8 = arith.constant 0 : index
    %8 = vector.load %arg5[%c0_7, %c0_8] : memref<32x32xbf16, #tpu.memory_space<vmem>>, vector<32x32xbf16>
    %cst_9 = arith.constant dense<0.000000e+00> : vector<16x32xf32>
    %9 = tpu.matmul %0, %8, %cst_9 {dimension_numbers = #tpu.dot_dimension_numbers<[1], [0], [0], [1], [0, 0, 1, 1], [], []>} : vector<16x32xbf16>, vector<32x32xbf16>, vector<16x32xf32> -> vector<16x32xf32>
    %c0_10 = arith.constant 0 : index
    %c0_11 = arith.constant 0 : index
    %10 = vector.load %arg6[%c0_10, %c0_11] : memref<1x32xf32, #tpu.memory_space<vmem>>, vector<1x32xf32>
    %11 = vector.broadcast %10 : vector<1x32xf32> to vector<16x32xf32>
    %12 = arith.addf %9, %11 : vector<16x32xf32>
    %13 = vector.extract_strided_slice %7 {offsets = [0, 0], sizes = [16, 32], strides = [1, 1]} : vector<16x64xf32> to vector<16x32xf32>
    %14 = arith.truncf %13 : vector<16x32xf32> to vector<16x32xbf16>
    %c0_12 = arith.constant 0 : index
    %c0_13 = arith.constant 0 : index
    %15 = vector.load %arg7[%c0_12, %c0_13] : memref<16x32xbf16, #tpu.memory_space<vmem>>, vector<16x32xbf16>
    tpu.vector_store %arg7[%c0_12, %c0_13], %14 {strides = array<i32>} : memref<16x32xbf16, #tpu.memory_space<vmem>>, vector<16x32xbf16>,
    %16 = vector.extract_strided_slice %7 {offsets = [0, 32], sizes = [16, 32], strides = [1, 1]} : vector<16x64xf32> to vector<16x32xf32>
    %17 = arith.truncf %16 : vector<16x32xf32> to vector<16x32xbf16>
    %c0_14 = arith.constant 0 : index
    %c0_15 = arith.constant 0 : index
    %18 = vector.load %arg8[%c0_14, %c0_15] : memref<16x32xbf16, #tpu.memory_space<vmem>>, vector<16x32xbf16>
    tpu.vector_store %arg8[%c0_14, %c0_15], %17 {strides = array<i32>} : memref<16x32xbf16, #tpu.memory_space<vmem>>, vector<16x32xbf16>,
    %19 = arith.truncf %12 : vector<16x32xf32> to vector<16x32xbf16>
    %c0_16 = arith.constant 0 : index
    %c0_17 = arith.constant 0 : index
    %20 = vector.load %arg9[%c0_16, %c0_17] : memref<16x32xbf16, #tpu.memory_space<vmem>>, vector<16x32xbf16>
    tpu.vector_store %arg9[%c0_16, %c0_17], %19 {strides = array<i32>} : memref<16x32xbf16, #tpu.memory_space<vmem>>, vector<16x32xbf16>,
    return
  }
  func.func @transform_0(%arg0: i32) -> (i32, i32) {
    %c0_i32 = arith.constant 0 : i32
    %c0_i32_0 = arith.constant 0 : i32
    return %arg0, %c0_i32 : i32, i32
  }
  func.func @transform_1(%arg0: i32) -> (i32, i32) {
    %c0_i32 = arith.constant 0 : i32
    %c0_i32_0 = arith.constant 0 : i32
    return %arg0, %c0_i32 : i32, i32
  }
  func.func @transform_2(%arg0: i32) -> (i32, i32) {
    %c0_i32 = arith.constant 0 : i32
    %c0_i32_0 = arith.constant 0 : i32
    %c0_i32_1 = arith.constant 0 : i32
    return %c0_i32, %c0_i32_0 : i32, i32
  }
  func.func @transform_3(%arg0: i32) -> (i32, i32) {
    %c0_i32 = arith.constant 0 : i32
    %c0_i32_0 = arith.constant 0 : i32
    %c0_i32_1 = arith.constant 0 : i32
    return %c0_i32, %c0_i32_0 : i32, i32
  }
  func.func @transform_4(%arg0: i32) -> (i32, i32) {
    %c0_i32 = arith.constant 0 : i32
    %c0_i32_0 = arith.constant 0 : i32
    %c0_i32_1 = arith.constant 0 : i32
    return %c0_i32, %c0_i32_0 : i32, i32
  }
  func.func @transform_5(%arg0: i32) -> (i32, i32) {
    %c0_i32 = arith.constant 0 : i32
    %c0_i32_0 = arith.constant 0 : i32
    %c0_i32_1 = arith.constant 0 : i32
    return %c0_i32, %c0_i32_0 : i32, i32
  }
  func.func @transform_6(%arg0: i32) -> (i32, i32) {
    %c0_i32 = arith.constant 0 : i32
    %c0_i32_0 = arith.constant 0 : i32
    return %arg0, %c0_i32 : i32, i32
  }
  func.func @transform_7(%arg0: i32) -> (i32, i32) {
    %c0_i32 = arith.constant 0 : i32
    %c0_i32_0 = arith.constant 0 : i32
    return %arg0, %c0_i32 : i32, i32
  }
  func.func @transform_8(%arg0: i32) -> (i32, i32) {
    %c0_i32 = arith.constant 0 : i32
    %c0_i32_0 = arith.constant 0 : i32
    return %arg0, %c0_i32 : i32, i32
  }
}

module attributes {stable_mosaic.version = 11 : i64} {
  func.func @_mha_kernel(%arg0: i32, %arg1: memref<1x8x32xbf16, #tpu.memory_space<vmem>>, %arg2: memref<1x8x32xbf16, #tpu.memory_space<vmem>>, %arg3: memref<1x8x32xbf16, #tpu.memory_space<vmem>>, %arg4: memref<1x8x32xbf16, #tpu.memory_space<vmem>>) attributes {dimension_semantics = [#tpu.dimension_semantics<parallel>], iteration_bounds = array<i64: 2>, scalar_prefetch = 0 : i64, scratch_operands = 0 : i64, tpu.core_type = #tpu.core_type<tc>, window_params = [{transform_indices = @transform_0, window_bounds = array<i64: 1, 8, 32>}, {transform_indices = @transform_1, window_bounds = array<i64: 1, 8, 32>}, {transform_indices = @transform_2, window_bounds = array<i64: 1, 8, 32>}, {transform_indices = @transform_3, window_bounds = array<i64: 1, 8, 32>}]} {
    %c0 = arith.constant 0 : index
    %c0_0 = arith.constant 0 : index
    %c0_1 = arith.constant 0 : index
    %0 = vector.load %arg1[%c0, %c0_0, %c0_1] : memref<1x8x32xbf16, #tpu.memory_space<vmem>>, vector<1x8x32xbf16>
    %1 = vector.shape_cast %0 : vector<1x8x32xbf16> to vector<8x32xbf16>
    %c0_2 = arith.constant 0 : index
    %c0_3 = arith.constant 0 : index
    %c0_4 = arith.constant 0 : index
    %2 = vector.load %arg2[%c0_2, %c0_3, %c0_4] : memref<1x8x32xbf16, #tpu.memory_space<vmem>>, vector<1x8x32xbf16>
    %3 = vector.shape_cast %2 : vector<1x8x32xbf16> to vector<8x32xbf16>
    %c0_5 = arith.constant 0 : index
    %c0_6 = arith.constant 0 : index
    %c0_7 = arith.constant 0 : index
    %4 = vector.load %arg3[%c0_5, %c0_6, %c0_7] : memref<1x8x32xbf16, #tpu.memory_space<vmem>>, vector<1x8x32xbf16>
    %5 = vector.shape_cast %4 : vector<1x8x32xbf16> to vector<8x32xbf16>
    %6 = vector.extract_strided_slice %1 {offsets = [0, 0], sizes = [8, 8], strides = [1, 1]} : vector<8x32xbf16> to vector<8x8xbf16>
    %7 = vector.extract_strided_slice %3 {offsets = [0, 0], sizes = [8, 8], strides = [1, 1]} : vector<8x32xbf16> to vector<8x8xbf16>
    %8 = vector.extract_strided_slice %5 {offsets = [0, 0], sizes = [8, 8], strides = [1, 1]} : vector<8x32xbf16> to vector<8x8xbf16>
    %cst = arith.constant dense<0.000000e+00> : vector<8x8xf32>
    %9 = tpu.matmul %6, %7, %cst {dimension_numbers = #tpu.dot_dimension_numbers<[1], [1], [0], [0], [0, 0, 1, 0], [], []>} : vector<8x8xbf16>, vector<8x8xbf16>, vector<8x8xf32> -> vector<8x8xf32>
    %cst_8 = arith.constant dense<0xFF800000> : vector<8xf32>
    %10 = vector.multi_reduction <maximumf>, %9, %cst_8 [1] : vector<8x8xf32> to vector<8xf32>
    %11 = vector.shape_cast %10 : vector<8xf32> to vector<8x1xf32>
    %12 = vector.broadcast %11 : vector<8x1xf32> to vector<8x8xf32>
    %13 = arith.subf %9, %12 : vector<8x8xf32>
    %14 = math.exp %13 : vector<8x8xf32>
    %cst_9 = arith.constant dense<0.000000e+00> : vector<8xf32>
    %15 = vector.multi_reduction <add>, %14, %cst_9 [1] : vector<8x8xf32> to vector<8xf32>
    %16 = vector.shape_cast %15 : vector<8xf32> to vector<8x1xf32>
    %17 = tpu.reciprocal %16 {approx = true} : vector<8x1xf32> -> vector<8x1xf32>
    %18 = vector.broadcast %17 : vector<8x1xf32> to vector<8x8xf32>
    %19 = arith.mulf %14, %18 : vector<8x8xf32>
    %20 = arith.truncf %19 : vector<8x8xf32> to vector<8x8xbf16>
    %cst_10 = arith.constant dense<0.000000e+00> : vector<8x8xf32>
    %21 = tpu.matmul %20, %8, %cst_10 {dimension_numbers = #tpu.dot_dimension_numbers<[1], [0], [0], [1], [0, 0, 1, 1], [], []>} : vector<8x8xbf16>, vector<8x8xbf16>, vector<8x8xf32> -> vector<8x8xf32>
    %22 = arith.truncf %21 : vector<8x8xf32> to vector<8x8xbf16>
    %c0_11 = arith.constant 0 : index
    %c0_12 = arith.constant 0 : index
    %c0_13 = arith.constant 0 : index
    %23 = vector.load %arg4[%c0_11, %c0_12, %c0_13] : memref<1x8x32xbf16, #tpu.memory_space<vmem>>, vector<1x8x8xbf16>
    %24 = vector.shape_cast %23 : vector<1x8x8xbf16> to vector<8x8xbf16>
    %25 = vector.shape_cast %22 : vector<8x8xbf16> to vector<1x8x8xbf16>
    tpu.vector_store %arg4[%c0_11, %c0_12, %c0_13], %25 {strides = array<i32>} : memref<1x8x32xbf16, #tpu.memory_space<vmem>>, vector<1x8x8xbf16>,
    %26 = vector.extract_strided_slice %1 {offsets = [0, 8], sizes = [8, 8], strides = [1, 1]} : vector<8x32xbf16> to vector<8x8xbf16>
    %27 = vector.extract_strided_slice %3 {offsets = [0, 8], sizes = [8, 8], strides = [1, 1]} : vector<8x32xbf16> to vector<8x8xbf16>
    %28 = vector.extract_strided_slice %5 {offsets = [0, 8], sizes = [8, 8], strides = [1, 1]} : vector<8x32xbf16> to vector<8x8xbf16>
    %cst_14 = arith.constant dense<0.000000e+00> : vector<8x8xf32>
    %29 = tpu.matmul %26, %27, %cst_14 {dimension_numbers = #tpu.dot_dimension_numbers<[1], [1], [0], [0], [0, 0, 1, 0], [], []>} : vector<8x8xbf16>, vector<8x8xbf16>, vector<8x8xf32> -> vector<8x8xf32>
    %cst_15 = arith.constant dense<0xFF800000> : vector<8xf32>
    %30 = vector.multi_reduction <maximumf>, %29, %cst_15 [1] : vector<8x8xf32> to vector<8xf32>
    %31 = vector.shape_cast %30 : vector<8xf32> to vector<8x1xf32>
    %32 = vector.broadcast %31 : vector<8x1xf32> to vector<8x8xf32>
    %33 = arith.subf %29, %32 : vector<8x8xf32>
    %34 = math.exp %33 : vector<8x8xf32>
    %cst_16 = arith.constant dense<0.000000e+00> : vector<8xf32>
    %35 = vector.multi_reduction <add>, %34, %cst_16 [1] : vector<8x8xf32> to vector<8xf32>
    %36 = vector.shape_cast %35 : vector<8xf32> to vector<8x1xf32>
    %37 = tpu.reciprocal %36 {approx = true} : vector<8x1xf32> -> vector<8x1xf32>
    %38 = vector.broadcast %37 : vector<8x1xf32> to vector<8x8xf32>
    %39 = arith.mulf %34, %38 : vector<8x8xf32>
    %40 = arith.truncf %39 : vector<8x8xf32> to vector<8x8xbf16>
    %cst_17 = arith.constant dense<0.000000e+00> : vector<8x8xf32>
    %41 = tpu.matmul %40, %28, %cst_17 {dimension_numbers = #tpu.dot_dimension_numbers<[1], [0], [0], [1], [0, 0, 1, 1], [], []>} : vector<8x8xbf16>, vector<8x8xbf16>, vector<8x8xf32> -> vector<8x8xf32>
    %42 = arith.truncf %41 : vector<8x8xf32> to vector<8x8xbf16>
    %c0_18 = arith.constant 0 : index
    %c0_19 = arith.constant 0 : index
    %c8 = arith.constant 8 : index
    %43 = vector.load %arg4[%c0_18, %c0_19, %c8] : memref<1x8x32xbf16, #tpu.memory_space<vmem>>, vector<1x8x8xbf16>
    %44 = vector.shape_cast %43 : vector<1x8x8xbf16> to vector<8x8xbf16>
    %45 = vector.shape_cast %42 : vector<8x8xbf16> to vector<1x8x8xbf16>
    tpu.vector_store %arg4[%c0_18, %c0_19, %c8], %45 {strides = array<i32>} : memref<1x8x32xbf16, #tpu.memory_space<vmem>>, vector<1x8x8xbf16>,
    %46 = vector.extract_strided_slice %1 {offsets = [0, 16], sizes = [8, 8], strides = [1, 1]} : vector<8x32xbf16> to vector<8x8xbf16>
    %47 = vector.extract_strided_slice %3 {offsets = [0, 16], sizes = [8, 8], strides = [1, 1]} : vector<8x32xbf16> to vector<8x8xbf16>
    %48 = vector.extract_strided_slice %5 {offsets = [0, 16], sizes = [8, 8], strides = [1, 1]} : vector<8x32xbf16> to vector<8x8xbf16>
    %cst_20 = arith.constant dense<0.000000e+00> : vector<8x8xf32>
    %49 = tpu.matmul %46, %47, %cst_20 {dimension_numbers = #tpu.dot_dimension_numbers<[1], [1], [0], [0], [0, 0, 1, 0], [], []>} : vector<8x8xbf16>, vector<8x8xbf16>, vector<8x8xf32> -> vector<8x8xf32>
    %cst_21 = arith.constant dense<0xFF800000> : vector<8xf32>
    %50 = vector.multi_reduction <maximumf>, %49, %cst_21 [1] : vector<8x8xf32> to vector<8xf32>
    %51 = vector.shape_cast %50 : vector<8xf32> to vector<8x1xf32>
    %52 = vector.broadcast %51 : vector<8x1xf32> to vector<8x8xf32>
    %53 = arith.subf %49, %52 : vector<8x8xf32>
    %54 = math.exp %53 : vector<8x8xf32>
    %cst_22 = arith.constant dense<0.000000e+00> : vector<8xf32>
    %55 = vector.multi_reduction <add>, %54, %cst_22 [1] : vector<8x8xf32> to vector<8xf32>
    %56 = vector.shape_cast %55 : vector<8xf32> to vector<8x1xf32>
    %57 = tpu.reciprocal %56 {approx = true} : vector<8x1xf32> -> vector<8x1xf32>
    %58 = vector.broadcast %57 : vector<8x1xf32> to vector<8x8xf32>
    %59 = arith.mulf %54, %58 : vector<8x8xf32>
    %60 = arith.truncf %59 : vector<8x8xf32> to vector<8x8xbf16>
    %cst_23 = arith.constant dense<0.000000e+00> : vector<8x8xf32>
    %61 = tpu.matmul %60, %48, %cst_23 {dimension_numbers = #tpu.dot_dimension_numbers<[1], [0], [0], [1], [0, 0, 1, 1], [], []>} : vector<8x8xbf16>, vector<8x8xbf16>, vector<8x8xf32> -> vector<8x8xf32>
    %62 = arith.truncf %61 : vector<8x8xf32> to vector<8x8xbf16>
    %c0_24 = arith.constant 0 : index
    %c0_25 = arith.constant 0 : index
    %c16 = arith.constant 16 : index
    %63 = vector.load %arg4[%c0_24, %c0_25, %c16] : memref<1x8x32xbf16, #tpu.memory_space<vmem>>, vector<1x8x8xbf16>
    %64 = vector.shape_cast %63 : vector<1x8x8xbf16> to vector<8x8xbf16>
    %65 = vector.shape_cast %62 : vector<8x8xbf16> to vector<1x8x8xbf16>
    tpu.vector_store %arg4[%c0_24, %c0_25, %c16], %65 {strides = array<i32>} : memref<1x8x32xbf16, #tpu.memory_space<vmem>>, vector<1x8x8xbf16>,
    %66 = vector.extract_strided_slice %1 {offsets = [0, 24], sizes = [8, 8], strides = [1, 1]} : vector<8x32xbf16> to vector<8x8xbf16>
    %67 = vector.extract_strided_slice %3 {offsets = [0, 24], sizes = [8, 8], strides = [1, 1]} : vector<8x32xbf16> to vector<8x8xbf16>
    %68 = vector.extract_strided_slice %5 {offsets = [0, 24], sizes = [8, 8], strides = [1, 1]} : vector<8x32xbf16> to vector<8x8xbf16>
    %cst_26 = arith.constant dense<0.000000e+00> : vector<8x8xf32>
    %69 = tpu.matmul %66, %67, %cst_26 {dimension_numbers = #tpu.dot_dimension_numbers<[1], [1], [0], [0], [0, 0, 1, 0], [], []>} : vector<8x8xbf16>, vector<8x8xbf16>, vector<8x8xf32> -> vector<8x8xf32>
    %cst_27 = arith.constant dense<0xFF800000> : vector<8xf32>
    %70 = vector.multi_reduction <maximumf>, %69, %cst_27 [1] : vector<8x8xf32> to vector<8xf32>
    %71 = vector.shape_cast %70 : vector<8xf32> to vector<8x1xf32>
    %72 = vector.broadcast %71 : vector<8x1xf32> to vector<8x8xf32>
    %73 = arith.subf %69, %72 : vector<8x8xf32>
    %74 = math.exp %73 : vector<8x8xf32>
    %cst_28 = arith.constant dense<0.000000e+00> : vector<8xf32>
    %75 = vector.multi_reduction <add>, %74, %cst_28 [1] : vector<8x8xf32> to vector<8xf32>
    %76 = vector.shape_cast %75 : vector<8xf32> to vector<8x1xf32>
    %77 = tpu.reciprocal %76 {approx = true} : vector<8x1xf32> -> vector<8x1xf32>
    %78 = vector.broadcast %77 : vector<8x1xf32> to vector<8x8xf32>
    %79 = arith.mulf %74, %78 : vector<8x8xf32>
    %80 = arith.truncf %79 : vector<8x8xf32> to vector<8x8xbf16>
    %cst_29 = arith.constant dense<0.000000e+00> : vector<8x8xf32>
    %81 = tpu.matmul %80, %68, %cst_29 {dimension_numbers = #tpu.dot_dimension_numbers<[1], [0], [0], [1], [0, 0, 1, 1], [], []>} : vector<8x8xbf16>, vector<8x8xbf16>, vector<8x8xf32> -> vector<8x8xf32>
    %82 = arith.truncf %81 : vector<8x8xf32> to vector<8x8xbf16>
    %c0_30 = arith.constant 0 : index
    %c0_31 = arith.constant 0 : index
    %c24 = arith.constant 24 : index
    %83 = vector.load %arg4[%c0_30, %c0_31, %c24] : memref<1x8x32xbf16, #tpu.memory_space<vmem>>, vector<1x8x8xbf16>
    %84 = vector.shape_cast %83 : vector<1x8x8xbf16> to vector<8x8xbf16>
    %85 = vector.shape_cast %82 : vector<8x8xbf16> to vector<1x8x8xbf16>
    tpu.vector_store %arg4[%c0_30, %c0_31, %c24], %85 {strides = array<i32>} : memref<1x8x32xbf16, #tpu.memory_space<vmem>>, vector<1x8x8xbf16>,
    return
  }
  func.func @transform_0(%arg0: i32) -> (i32, i32, i32) {
    %c0_i32 = arith.constant 0 : i32
    %c0_i32_0 = arith.constant 0 : i32
    %c0_i32_1 = arith.constant 0 : i32
    return %arg0, %c0_i32, %c0_i32_0 : i32, i32, i32
  }
  func.func @transform_1(%arg0: i32) -> (i32, i32, i32) {
    %c0_i32 = arith.constant 0 : i32
    %c0_i32_0 = arith.constant 0 : i32
    %c0_i32_1 = arith.constant 0 : i32
    return %arg0, %c0_i32, %c0_i32_0 : i32, i32, i32
  }
  func.func @transform_2(%arg0: i32) -> (i32, i32, i32) {
    %c0_i32 = arith.constant 0 : i32
    %c0_i32_0 = arith.constant 0 : i32
    %c0_i32_1 = arith.constant 0 : i32
    return %arg0, %c0_i32, %c0_i32_0 : i32, i32, i32
  }
  func.func @transform_3(%arg0: i32) -> (i32, i32, i32) {
    %c0_i32 = arith.constant 0 : i32
    %c0_i32_0 = arith.constant 0 : i32
    %c0_i32_1 = arith.constant 0 : i32
    return %arg0, %c0_i32, %c0_i32_0 : i32, i32, i32
  }
}

module attributes {stable_mosaic.version = 11 : i64} {
  func.func @_outproj_res_ln_kernel(%arg0: i32, %arg1: memref<16x32xbf16, #tpu.memory_space<vmem>>, %arg2: memref<16x32xbf16, #tpu.memory_space<vmem>>, %arg3: memref<32x32xbf16, #tpu.memory_space<vmem>>, %arg4: memref<1x32xf32, #tpu.memory_space<vmem>>, %arg5: memref<1x32xf32, #tpu.memory_space<vmem>>, %arg6: memref<1x32xf32, #tpu.memory_space<vmem>>, %arg7: memref<16x32xbf16, #tpu.memory_space<vmem>>) attributes {dimension_semantics = [#tpu.dimension_semantics<parallel>], iteration_bounds = array<i64: 1>, scalar_prefetch = 0 : i64, scratch_operands = 0 : i64, tpu.core_type = #tpu.core_type<tc>, window_params = [{transform_indices = @transform_0, window_bounds = array<i64: 16, 32>}, {transform_indices = @transform_1, window_bounds = array<i64: 16, 32>}, {pipeline_mode = #tpu.pipeline_mode<synchronous>, transform_indices = @transform_2, window_bounds = array<i64: 32, 32>}, {pipeline_mode = #tpu.pipeline_mode<synchronous>, transform_indices = @transform_3, window_bounds = array<i64: 1, 32>}, {pipeline_mode = #tpu.pipeline_mode<synchronous>, transform_indices = @transform_4, window_bounds = array<i64: 1, 32>}, {pipeline_mode = #tpu.pipeline_mode<synchronous>, transform_indices = @transform_5, window_bounds = array<i64: 1, 32>}, {transform_indices = @transform_6, window_bounds = array<i64: 16, 32>}]} {
    %c0 = arith.constant 0 : index
    %c0_0 = arith.constant 0 : index
    %0 = vector.load %arg1[%c0, %c0_0] : memref<16x32xbf16, #tpu.memory_space<vmem>>, vector<16x32xbf16>
    %c0_1 = arith.constant 0 : index
    %c0_2 = arith.constant 0 : index
    %1 = vector.load %arg3[%c0_1, %c0_2] : memref<32x32xbf16, #tpu.memory_space<vmem>>, vector<32x32xbf16>
    %cst = arith.constant dense<0.000000e+00> : vector<16x32xf32>
    %2 = tpu.matmul %0, %1, %cst {dimension_numbers = #tpu.dot_dimension_numbers<[1], [0], [0], [1], [0, 0, 1, 1], [], []>} : vector<16x32xbf16>, vector<32x32xbf16>, vector<16x32xf32> -> vector<16x32xf32>
    %c0_3 = arith.constant 0 : index
    %c0_4 = arith.constant 0 : index
    %3 = vector.load %arg4[%c0_3, %c0_4] : memref<1x32xf32, #tpu.memory_space<vmem>>, vector<1x32xf32>
    %4 = vector.broadcast %3 : vector<1x32xf32> to vector<16x32xf32>
    %5 = arith.addf %2, %4 : vector<16x32xf32>
    %c0_5 = arith.constant 0 : index
    %c0_6 = arith.constant 0 : index
    %6 = vector.load %arg2[%c0_5, %c0_6] : memref<16x32xbf16, #tpu.memory_space<vmem>>, vector<16x32xbf16>
    %7 = arith.extf %6 : vector<16x32xbf16> to vector<16x32xf32>
    %8 = arith.addf %5, %7 : vector<16x32xf32>
    %cst_7 = arith.constant dense<0.000000e+00> : vector<16xf32>
    %9 = vector.multi_reduction <add>, %8, %cst_7 [1] : vector<16x32xf32> to vector<16xf32>
    %10 = vector.shape_cast %9 : vector<16xf32> to vector<16x1xf32>
    %cst_8 = arith.constant 3.200000e+01 : f32
    %11 = vector.broadcast %cst_8 : f32 to vector<16x1xf32>
    %12 = arith.divf %10, %11 : vector<16x1xf32>
    %13 = vector.broadcast %12 : vector<16x1xf32> to vector<16x32xf32>
    %14 = arith.subf %8, %13 : vector<16x32xf32>
    %15 = arith.mulf %14, %14 : vector<16x32xf32>
    %cst_9 = arith.constant dense<0.000000e+00> : vector<16xf32>
    %16 = vector.multi_reduction <add>, %15, %cst_9 [1] : vector<16x32xf32> to vector<16xf32>
    %17 = vector.shape_cast %16 : vector<16xf32> to vector<16x1xf32>
    %cst_10 = arith.constant 3.200000e+01 : f32
    %18 = vector.broadcast %cst_10 : f32 to vector<16x1xf32>
    %19 = arith.divf %17, %18 : vector<16x1xf32>
    %20 = vector.broadcast %12 : vector<16x1xf32> to vector<16x32xf32>
    %21 = arith.subf %8, %20 : vector<16x32xf32>
    %cst_11 = arith.constant 9.99999974E-6 : f32
    %22 = vector.broadcast %cst_11 : f32 to vector<16x1xf32>
    %23 = arith.addf %19, %22 : vector<16x1xf32>
    %24 = math.rsqrt %23 : vector<16x1xf32>
    %25 = vector.broadcast %24 : vector<16x1xf32> to vector<16x32xf32>
    %26 = arith.mulf %21, %25 : vector<16x32xf32>
    %c0_12 = arith.constant 0 : index
    %c0_13 = arith.constant 0 : index
    %27 = vector.load %arg5[%c0_12, %c0_13] : memref<1x32xf32, #tpu.memory_space<vmem>>, vector<1x32xf32>
    %28 = vector.broadcast %27 : vector<1x32xf32> to vector<16x32xf32>
    %29 = arith.mulf %26, %28 : vector<16x32xf32>
    %c0_14 = arith.constant 0 : index
    %c0_15 = arith.constant 0 : index
    %30 = vector.load %arg6[%c0_14, %c0_15] : memref<1x32xf32, #tpu.memory_space<vmem>>, vector<1x32xf32>
    %31 = vector.broadcast %30 : vector<1x32xf32> to vector<16x32xf32>
    %32 = arith.addf %29, %31 : vector<16x32xf32>
    %33 = arith.truncf %32 : vector<16x32xf32> to vector<16x32xbf16>
    %c0_16 = arith.constant 0 : index
    %c0_17 = arith.constant 0 : index
    %34 = vector.load %arg7[%c0_16, %c0_17] : memref<16x32xbf16, #tpu.memory_space<vmem>>, vector<16x32xbf16>
    tpu.vector_store %arg7[%c0_16, %c0_17], %33 {strides = array<i32>} : memref<16x32xbf16, #tpu.memory_space<vmem>>, vector<16x32xbf16>,
    return
  }
  func.func @transform_0(%arg0: i32) -> (i32, i32) {
    %c0_i32 = arith.constant 0 : i32
    %c0_i32_0 = arith.constant 0 : i32
    return %arg0, %c0_i32 : i32, i32
  }
  func.func @transform_1(%arg0: i32) -> (i32, i32) {
    %c0_i32 = arith.constant 0 : i32
    %c0_i32_0 = arith.constant 0 : i32
    return %arg0, %c0_i32 : i32, i32
  }
  func.func @transform_2(%arg0: i32) -> (i32, i32) {
    %c0_i32 = arith.constant 0 : i32
    %c0_i32_0 = arith.constant 0 : i32
    %c0_i32_1 = arith.constant 0 : i32
    return %c0_i32, %c0_i32_0 : i32, i32
  }
  func.func @transform_3(%arg0: i32) -> (i32, i32) {
    %c0_i32 = arith.constant 0 : i32
    %c0_i32_0 = arith.constant 0 : i32
    %c0_i32_1 = arith.constant 0 : i32
    return %c0_i32, %c0_i32_0 : i32, i32
  }
  func.func @transform_4(%arg0: i32) -> (i32, i32) {
    %c0_i32 = arith.constant 0 : i32
    %c0_i32_0 = arith.constant 0 : i32
    %c0_i32_1 = arith.constant 0 : i32
    return %c0_i32, %c0_i32_0 : i32, i32
  }
  func.func @transform_5(%arg0: i32) -> (i32, i32) {
    %c0_i32 = arith.constant 0 : i32
    %c0_i32_0 = arith.constant 0 : i32
    %c0_i32_1 = arith.constant 0 : i32
    return %c0_i32, %c0_i32_0 : i32, i32
  }
  func.func @transform_6(%arg0: i32) -> (i32, i32) {
    %c0_i32 = arith.constant 0 : i32
    %c0_i32_0 = arith.constant 0 : i32
    return %arg0, %c0_i32 : i32, i32
  }
}

module attributes {stable_mosaic.version = 11 : i64} {
  func.func @_linear_kernel(%arg0: i32, %arg1: memref<16x32xbf16, #tpu.memory_space<vmem>>, %arg2: memref<16x32xbf16, #tpu.memory_space<vmem>>, %arg3: memref<32x32xbf16, #tpu.memory_space<vmem>>, %arg4: memref<1x32xf32, #tpu.memory_space<vmem>>, %arg5: memref<16x32xbf16, #tpu.memory_space<vmem>>) attributes {dimension_semantics = [#tpu.dimension_semantics<parallel>], iteration_bounds = array<i64: 1>, scalar_prefetch = 0 : i64, scratch_operands = 0 : i64, tpu.core_type = #tpu.core_type<tc>, window_params = [{transform_indices = @transform_0, window_bounds = array<i64: 16, 32>}, {transform_indices = @transform_1, window_bounds = array<i64: 16, 32>}, {pipeline_mode = #tpu.pipeline_mode<synchronous>, transform_indices = @transform_2, window_bounds = array<i64: 32, 32>}, {pipeline_mode = #tpu.pipeline_mode<synchronous>, transform_indices = @transform_3, window_bounds = array<i64: 1, 32>}, {transform_indices = @transform_4, window_bounds = array<i64: 16, 32>}]} {
    %c0 = arith.constant 0 : index
    %c0_0 = arith.constant 0 : index
    %0 = vector.load %arg1[%c0, %c0_0] : memref<16x32xbf16, #tpu.memory_space<vmem>>, vector<16x32xbf16>
    %c0_1 = arith.constant 0 : index
    %c0_2 = arith.constant 0 : index
    %1 = vector.load %arg2[%c0_1, %c0_2] : memref<16x32xbf16, #tpu.memory_space<vmem>>, vector<16x32xbf16>
    %2 = arith.addf %0, %1 : vector<16x32xbf16>
    %c0_3 = arith.constant 0 : index
    %c0_4 = arith.constant 0 : index
    %3 = vector.load %arg3[%c0_3, %c0_4] : memref<32x32xbf16, #tpu.memory_space<vmem>>, vector<32x32xbf16>
    %cst = arith.constant dense<0.000000e+00> : vector<16x32xf32>
    %4 = tpu.matmul %2, %3, %cst {dimension_numbers = #tpu.dot_dimension_numbers<[1], [0], [0], [1], [0, 0, 1, 1], [], []>} : vector<16x32xbf16>, vector<32x32xbf16>, vector<16x32xf32> -> vector<16x32xf32>
    %c0_5 = arith.constant 0 : index
    %c0_6 = arith.constant 0 : index
    %5 = vector.load %arg4[%c0_5, %c0_6] : memref<1x32xf32, #tpu.memory_space<vmem>>, vector<1x32xf32>
    %6 = vector.broadcast %5 : vector<1x32xf32> to vector<16x32xf32>
    %7 = arith.addf %4, %6 : vector<16x32xf32>
    %8 = arith.truncf %7 : vector<16x32xf32> to vector<16x32xbf16>
    %c0_7 = arith.constant 0 : index
    %c0_8 = arith.constant 0 : index
    %9 = vector.load %arg5[%c0_7, %c0_8] : memref<16x32xbf16, #tpu.memory_space<vmem>>, vector<16x32xbf16>
    tpu.vector_store %arg5[%c0_7, %c0_8], %8 {strides = array<i32>} : memref<16x32xbf16, #tpu.memory_space<vmem>>, vector<16x32xbf16>,
    return
  }
  func.func @transform_0(%arg0: i32) -> (i32, i32) {
    %c0_i32 = arith.constant 0 : i32
    %c0_i32_0 = arith.constant 0 : i32
    return %arg0, %c0_i32 : i32, i32
  }
  func.func @transform_1(%arg0: i32) -> (i32, i32) {
    %c0_i32 = arith.constant 0 : i32
    %c0_i32_0 = arith.constant 0 : i32
    return %arg0, %c0_i32 : i32, i32
  }
  func.func @transform_2(%arg0: i32) -> (i32, i32) {
    %c0_i32 = arith.constant 0 : i32
    %c0_i32_0 = arith.constant 0 : i32
    %c0_i32_1 = arith.constant 0 : i32
    return %c0_i32, %c0_i32_0 : i32, i32
  }
  func.func @transform_3(%arg0: i32) -> (i32, i32) {
    %c0_i32 = arith.constant 0 : i32
    %c0_i32_0 = arith.constant 0 : i32
    %c0_i32_1 = arith.constant 0 : i32
    return %c0_i32, %c0_i32_0 : i32, i32
  }
  func.func @transform_4(%arg0: i32) -> (i32, i32) {
    %c0_i32 = arith.constant 0 : i32
    %c0_i32_0 = arith.constant 0 : i32
    return %arg0, %c0_i32 : i32, i32
  }
}

module attributes {stable_mosaic.version = 11 : i64} {
  func.func @_mha_kernel(%arg0: i32, %arg1: memref<1x8x32xbf16, #tpu.memory_space<vmem>>, %arg2: memref<1x16x32xbf16, #tpu.memory_space<vmem>>, %arg3: memref<1x16x32xbf16, #tpu.memory_space<vmem>>, %arg4: memref<1x8x32xbf16, #tpu.memory_space<vmem>>) attributes {dimension_semantics = [#tpu.dimension_semantics<parallel>], iteration_bounds = array<i64: 2>, scalar_prefetch = 0 : i64, scratch_operands = 0 : i64, tpu.core_type = #tpu.core_type<tc>, window_params = [{transform_indices = @transform_0, window_bounds = array<i64: 1, 8, 32>}, {transform_indices = @transform_1, window_bounds = array<i64: 1, 16, 32>}, {transform_indices = @transform_2, window_bounds = array<i64: 1, 16, 32>}, {transform_indices = @transform_3, window_bounds = array<i64: 1, 8, 32>}]} {
    %c0 = arith.constant 0 : index
    %c0_0 = arith.constant 0 : index
    %c0_1 = arith.constant 0 : index
    %0 = vector.load %arg1[%c0, %c0_0, %c0_1] : memref<1x8x32xbf16, #tpu.memory_space<vmem>>, vector<1x8x32xbf16>
    %1 = vector.shape_cast %0 : vector<1x8x32xbf16> to vector<8x32xbf16>
    %c0_2 = arith.constant 0 : index
    %c0_3 = arith.constant 0 : index
    %c0_4 = arith.constant 0 : index
    %2 = vector.load %arg2[%c0_2, %c0_3, %c0_4] : memref<1x16x32xbf16, #tpu.memory_space<vmem>>, vector<1x16x32xbf16>
    %3 = vector.shape_cast %2 : vector<1x16x32xbf16> to vector<16x32xbf16>
    %c0_5 = arith.constant 0 : index
    %c0_6 = arith.constant 0 : index
    %c0_7 = arith.constant 0 : index
    %4 = vector.load %arg3[%c0_5, %c0_6, %c0_7] : memref<1x16x32xbf16, #tpu.memory_space<vmem>>, vector<1x16x32xbf16>
    %5 = vector.shape_cast %4 : vector<1x16x32xbf16> to vector<16x32xbf16>
    %6 = vector.extract_strided_slice %1 {offsets = [0, 0], sizes = [8, 8], strides = [1, 1]} : vector<8x32xbf16> to vector<8x8xbf16>
    %7 = vector.extract_strided_slice %3 {offsets = [0, 0], sizes = [16, 8], strides = [1, 1]} : vector<16x32xbf16> to vector<16x8xbf16>
    %8 = vector.extract_strided_slice %5 {offsets = [0, 0], sizes = [16, 8], strides = [1, 1]} : vector<16x32xbf16> to vector<16x8xbf16>
    %cst = arith.constant dense<0.000000e+00> : vector<8x16xf32>
    %9 = tpu.matmul %6, %7, %cst {dimension_numbers = #tpu.dot_dimension_numbers<[1], [1], [0], [0], [0, 0, 1, 0], [], []>} : vector<8x8xbf16>, vector<16x8xbf16>, vector<8x16xf32> -> vector<8x16xf32>
    %cst_8 = arith.constant dense<0xFF800000> : vector<8xf32>
    %10 = vector.multi_reduction <maximumf>, %9, %cst_8 [1] : vector<8x16xf32> to vector<8xf32>
    %11 = vector.shape_cast %10 : vector<8xf32> to vector<8x1xf32>
    %12 = vector.broadcast %11 : vector<8x1xf32> to vector<8x16xf32>
    %13 = arith.subf %9, %12 : vector<8x16xf32>
    %14 = math.exp %13 : vector<8x16xf32>
    %cst_9 = arith.constant dense<0.000000e+00> : vector<8xf32>
    %15 = vector.multi_reduction <add>, %14, %cst_9 [1] : vector<8x16xf32> to vector<8xf32>
    %16 = vector.shape_cast %15 : vector<8xf32> to vector<8x1xf32>
    %17 = tpu.reciprocal %16 {approx = true} : vector<8x1xf32> -> vector<8x1xf32>
    %18 = vector.broadcast %17 : vector<8x1xf32> to vector<8x16xf32>
    %19 = arith.mulf %14, %18 : vector<8x16xf32>
    %20 = arith.truncf %19 : vector<8x16xf32> to vector<8x16xbf16>
    %cst_10 = arith.constant dense<0.000000e+00> : vector<8x8xf32>
    %21 = tpu.matmul %20, %8, %cst_10 {dimension_numbers = #tpu.dot_dimension_numbers<[1], [0], [0], [1], [0, 0, 1, 1], [], []>} : vector<8x16xbf16>, vector<16x8xbf16>, vector<8x8xf32> -> vector<8x8xf32>
    %22 = arith.truncf %21 : vector<8x8xf32> to vector<8x8xbf16>
    %c0_11 = arith.constant 0 : index
    %c0_12 = arith.constant 0 : index
    %c0_13 = arith.constant 0 : index
    %23 = vector.load %arg4[%c0_11, %c0_12, %c0_13] : memref<1x8x32xbf16, #tpu.memory_space<vmem>>, vector<1x8x8xbf16>
    %24 = vector.shape_cast %23 : vector<1x8x8xbf16> to vector<8x8xbf16>
    %25 = vector.shape_cast %22 : vector<8x8xbf16> to vector<1x8x8xbf16>
    tpu.vector_store %arg4[%c0_11, %c0_12, %c0_13], %25 {strides = array<i32>} : memref<1x8x32xbf16, #tpu.memory_space<vmem>>, vector<1x8x8xbf16>,
    %26 = vector.extract_strided_slice %1 {offsets = [0, 8], sizes = [8, 8], strides = [1, 1]} : vector<8x32xbf16> to vector<8x8xbf16>
    %27 = vector.extract_strided_slice %3 {offsets = [0, 8], sizes = [16, 8], strides = [1, 1]} : vector<16x32xbf16> to vector<16x8xbf16>
    %28 = vector.extract_strided_slice %5 {offsets = [0, 8], sizes = [16, 8], strides = [1, 1]} : vector<16x32xbf16> to vector<16x8xbf16>
    %cst_14 = arith.constant dense<0.000000e+00> : vector<8x16xf32>
    %29 = tpu.matmul %26, %27, %cst_14 {dimension_numbers = #tpu.dot_dimension_numbers<[1], [1], [0], [0], [0, 0, 1, 0], [], []>} : vector<8x8xbf16>, vector<16x8xbf16>, vector<8x16xf32> -> vector<8x16xf32>
    %cst_15 = arith.constant dense<0xFF800000> : vector<8xf32>
    %30 = vector.multi_reduction <maximumf>, %29, %cst_15 [1] : vector<8x16xf32> to vector<8xf32>
    %31 = vector.shape_cast %30 : vector<8xf32> to vector<8x1xf32>
    %32 = vector.broadcast %31 : vector<8x1xf32> to vector<8x16xf32>
    %33 = arith.subf %29, %32 : vector<8x16xf32>
    %34 = math.exp %33 : vector<8x16xf32>
    %cst_16 = arith.constant dense<0.000000e+00> : vector<8xf32>
    %35 = vector.multi_reduction <add>, %34, %cst_16 [1] : vector<8x16xf32> to vector<8xf32>
    %36 = vector.shape_cast %35 : vector<8xf32> to vector<8x1xf32>
    %37 = tpu.reciprocal %36 {approx = true} : vector<8x1xf32> -> vector<8x1xf32>
    %38 = vector.broadcast %37 : vector<8x1xf32> to vector<8x16xf32>
    %39 = arith.mulf %34, %38 : vector<8x16xf32>
    %40 = arith.truncf %39 : vector<8x16xf32> to vector<8x16xbf16>
    %cst_17 = arith.constant dense<0.000000e+00> : vector<8x8xf32>
    %41 = tpu.matmul %40, %28, %cst_17 {dimension_numbers = #tpu.dot_dimension_numbers<[1], [0], [0], [1], [0, 0, 1, 1], [], []>} : vector<8x16xbf16>, vector<16x8xbf16>, vector<8x8xf32> -> vector<8x8xf32>
    %42 = arith.truncf %41 : vector<8x8xf32> to vector<8x8xbf16>
    %c0_18 = arith.constant 0 : index
    %c0_19 = arith.constant 0 : index
    %c8 = arith.constant 8 : index
    %43 = vector.load %arg4[%c0_18, %c0_19, %c8] : memref<1x8x32xbf16, #tpu.memory_space<vmem>>, vector<1x8x8xbf16>
    %44 = vector.shape_cast %43 : vector<1x8x8xbf16> to vector<8x8xbf16>
    %45 = vector.shape_cast %42 : vector<8x8xbf16> to vector<1x8x8xbf16>
    tpu.vector_store %arg4[%c0_18, %c0_19, %c8], %45 {strides = array<i32>} : memref<1x8x32xbf16, #tpu.memory_space<vmem>>, vector<1x8x8xbf16>,
    %46 = vector.extract_strided_slice %1 {offsets = [0, 16], sizes = [8, 8], strides = [1, 1]} : vector<8x32xbf16> to vector<8x8xbf16>
    %47 = vector.extract_strided_slice %3 {offsets = [0, 16], sizes = [16, 8], strides = [1, 1]} : vector<16x32xbf16> to vector<16x8xbf16>
    %48 = vector.extract_strided_slice %5 {offsets = [0, 16], sizes = [16, 8], strides = [1, 1]} : vector<16x32xbf16> to vector<16x8xbf16>
    %cst_20 = arith.constant dense<0.000000e+00> : vector<8x16xf32>
    %49 = tpu.matmul %46, %47, %cst_20 {dimension_numbers = #tpu.dot_dimension_numbers<[1], [1], [0], [0], [0, 0, 1, 0], [], []>} : vector<8x8xbf16>, vector<16x8xbf16>, vector<8x16xf32> -> vector<8x16xf32>
    %cst_21 = arith.constant dense<0xFF800000> : vector<8xf32>
    %50 = vector.multi_reduction <maximumf>, %49, %cst_21 [1] : vector<8x16xf32> to vector<8xf32>
    %51 = vector.shape_cast %50 : vector<8xf32> to vector<8x1xf32>
    %52 = vector.broadcast %51 : vector<8x1xf32> to vector<8x16xf32>
    %53 = arith.subf %49, %52 : vector<8x16xf32>
    %54 = math.exp %53 : vector<8x16xf32>
    %cst_22 = arith.constant dense<0.000000e+00> : vector<8xf32>
    %55 = vector.multi_reduction <add>, %54, %cst_22 [1] : vector<8x16xf32> to vector<8xf32>
    %56 = vector.shape_cast %55 : vector<8xf32> to vector<8x1xf32>
    %57 = tpu.reciprocal %56 {approx = true} : vector<8x1xf32> -> vector<8x1xf32>
    %58 = vector.broadcast %57 : vector<8x1xf32> to vector<8x16xf32>
    %59 = arith.mulf %54, %58 : vector<8x16xf32>
    %60 = arith.truncf %59 : vector<8x16xf32> to vector<8x16xbf16>
    %cst_23 = arith.constant dense<0.000000e+00> : vector<8x8xf32>
    %61 = tpu.matmul %60, %48, %cst_23 {dimension_numbers = #tpu.dot_dimension_numbers<[1], [0], [0], [1], [0, 0, 1, 1], [], []>} : vector<8x16xbf16>, vector<16x8xbf16>, vector<8x8xf32> -> vector<8x8xf32>
    %62 = arith.truncf %61 : vector<8x8xf32> to vector<8x8xbf16>
    %c0_24 = arith.constant 0 : index
    %c0_25 = arith.constant 0 : index
    %c16 = arith.constant 16 : index
    %63 = vector.load %arg4[%c0_24, %c0_25, %c16] : memref<1x8x32xbf16, #tpu.memory_space<vmem>>, vector<1x8x8xbf16>
    %64 = vector.shape_cast %63 : vector<1x8x8xbf16> to vector<8x8xbf16>
    %65 = vector.shape_cast %62 : vector<8x8xbf16> to vector<1x8x8xbf16>
    tpu.vector_store %arg4[%c0_24, %c0_25, %c16], %65 {strides = array<i32>} : memref<1x8x32xbf16, #tpu.memory_space<vmem>>, vector<1x8x8xbf16>,
    %66 = vector.extract_strided_slice %1 {offsets = [0, 24], sizes = [8, 8], strides = [1, 1]} : vector<8x32xbf16> to vector<8x8xbf16>
    %67 = vector.extract_strided_slice %3 {offsets = [0, 24], sizes = [16, 8], strides = [1, 1]} : vector<16x32xbf16> to vector<16x8xbf16>
    %68 = vector.extract_strided_slice %5 {offsets = [0, 24], sizes = [16, 8], strides = [1, 1]} : vector<16x32xbf16> to vector<16x8xbf16>
    %cst_26 = arith.constant dense<0.000000e+00> : vector<8x16xf32>
    %69 = tpu.matmul %66, %67, %cst_26 {dimension_numbers = #tpu.dot_dimension_numbers<[1], [1], [0], [0], [0, 0, 1, 0], [], []>} : vector<8x8xbf16>, vector<16x8xbf16>, vector<8x16xf32> -> vector<8x16xf32>
    %cst_27 = arith.constant dense<0xFF800000> : vector<8xf32>
    %70 = vector.multi_reduction <maximumf>, %69, %cst_27 [1] : vector<8x16xf32> to vector<8xf32>
    %71 = vector.shape_cast %70 : vector<8xf32> to vector<8x1xf32>
    %72 = vector.broadcast %71 : vector<8x1xf32> to vector<8x16xf32>
    %73 = arith.subf %69, %72 : vector<8x16xf32>
    %74 = math.exp %73 : vector<8x16xf32>
    %cst_28 = arith.constant dense<0.000000e+00> : vector<8xf32>
    %75 = vector.multi_reduction <add>, %74, %cst_28 [1] : vector<8x16xf32> to vector<8xf32>
    %76 = vector.shape_cast %75 : vector<8xf32> to vector<8x1xf32>
    %77 = tpu.reciprocal %76 {approx = true} : vector<8x1xf32> -> vector<8x1xf32>
    %78 = vector.broadcast %77 : vector<8x1xf32> to vector<8x16xf32>
    %79 = arith.mulf %74, %78 : vector<8x16xf32>
    %80 = arith.truncf %79 : vector<8x16xf32> to vector<8x16xbf16>
    %cst_29 = arith.constant dense<0.000000e+00> : vector<8x8xf32>
    %81 = tpu.matmul %80, %68, %cst_29 {dimension_numbers = #tpu.dot_dimension_numbers<[1], [0], [0], [1], [0, 0, 1, 1], [], []>} : vector<8x16xbf16>, vector<16x8xbf16>, vector<8x8xf32> -> vector<8x8xf32>
    %82 = arith.truncf %81 : vector<8x8xf32> to vector<8x8xbf16>
    %c0_30 = arith.constant 0 : index
    %c0_31 = arith.constant 0 : index
    %c24 = arith.constant 24 : index
    %83 = vector.load %arg4[%c0_30, %c0_31, %c24] : memref<1x8x32xbf16, #tpu.memory_space<vmem>>, vector<1x8x8xbf16>
    %84 = vector.shape_cast %83 : vector<1x8x8xbf16> to vector<8x8xbf16>
    %85 = vector.shape_cast %82 : vector<8x8xbf16> to vector<1x8x8xbf16>
    tpu.vector_store %arg4[%c0_30, %c0_31, %c24], %85 {strides = array<i32>} : memref<1x8x32xbf16, #tpu.memory_space<vmem>>, vector<1x8x8xbf16>,
    return
  }
  func.func @transform_0(%arg0: i32) -> (i32, i32, i32) {
    %c0_i32 = arith.constant 0 : i32
    %c0_i32_0 = arith.constant 0 : i32
    %c0_i32_1 = arith.constant 0 : i32
    return %arg0, %c0_i32, %c0_i32_0 : i32, i32, i32
  }
  func.func @transform_1(%arg0: i32) -> (i32, i32, i32) {
    %c0_i32 = arith.constant 0 : i32
    %c0_i32_0 = arith.constant 0 : i32
    %c0_i32_1 = arith.constant 0 : i32
    return %arg0, %c0_i32, %c0_i32_0 : i32, i32, i32
  }
  func.func @transform_2(%arg0: i32) -> (i32, i32, i32) {
    %c0_i32 = arith.constant 0 : i32
    %c0_i32_0 = arith.constant 0 : i32
    %c0_i32_1 = arith.constant 0 : i32
    return %arg0, %c0_i32, %c0_i32_0 : i32, i32, i32
  }
  func.func @transform_3(%arg0: i32) -> (i32, i32, i32) {
    %c0_i32 = arith.constant 0 : i32
    %c0_i32_0 = arith.constant 0 : i32
    %c0_i32_1 = arith.constant 0 : i32
    return %arg0, %c0_i32, %c0_i32_0 : i32, i32, i32
  }
}

module attributes {stable_mosaic.version = 11 : i64} {
  func.func @_ffn_res_ln_kernel(%arg0: i32, %arg1: memref<16x32xbf16, #tpu.memory_space<vmem>>, %arg2: memref<32x64xbf16, #tpu.memory_space<vmem>>, %arg3: memref<1x64xf32, #tpu.memory_space<vmem>>, %arg4: memref<64x32xbf16, #tpu.memory_space<vmem>>, %arg5: memref<1x32xf32, #tpu.memory_space<vmem>>, %arg6: memref<1x32xf32, #tpu.memory_space<vmem>>, %arg7: memref<1x32xf32, #tpu.memory_space<vmem>>, %arg8: memref<16x32xbf16, #tpu.memory_space<vmem>>) attributes {dimension_semantics = [#tpu.dimension_semantics<parallel>], iteration_bounds = array<i64: 1>, scalar_prefetch = 0 : i64, scratch_operands = 0 : i64, tpu.core_type = #tpu.core_type<tc>, window_params = [{transform_indices = @transform_0, window_bounds = array<i64: 16, 32>}, {pipeline_mode = #tpu.pipeline_mode<synchronous>, transform_indices = @transform_1, window_bounds = array<i64: 32, 64>}, {pipeline_mode = #tpu.pipeline_mode<synchronous>, transform_indices = @transform_2, window_bounds = array<i64: 1, 64>}, {pipeline_mode = #tpu.pipeline_mode<synchronous>, transform_indices = @transform_3, window_bounds = array<i64: 64, 32>}, {pipeline_mode = #tpu.pipeline_mode<synchronous>, transform_indices = @transform_4, window_bounds = array<i64: 1, 32>}, {pipeline_mode = #tpu.pipeline_mode<synchronous>, transform_indices = @transform_5, window_bounds = array<i64: 1, 32>}, {pipeline_mode = #tpu.pipeline_mode<synchronous>, transform_indices = @transform_6, window_bounds = array<i64: 1, 32>}, {transform_indices = @transform_7, window_bounds = array<i64: 16, 32>}]} {
    %c0 = arith.constant 0 : index
    %c0_0 = arith.constant 0 : index
    %0 = vector.load %arg1[%c0, %c0_0] : memref<16x32xbf16, #tpu.memory_space<vmem>>, vector<16x32xbf16>
    %c0_1 = arith.constant 0 : index
    %c0_2 = arith.constant 0 : index
    %1 = vector.load %arg2[%c0_1, %c0_2] : memref<32x64xbf16, #tpu.memory_space<vmem>>, vector<32x64xbf16>
    %cst = arith.constant dense<0.000000e+00> : vector<16x64xf32>
    %2 = tpu.matmul %0, %1, %cst {dimension_numbers = #tpu.dot_dimension_numbers<[1], [0], [0], [1], [0, 0, 1, 1], [], []>} : vector<16x32xbf16>, vector<32x64xbf16>, vector<16x64xf32> -> vector<16x64xf32>
    %c0_3 = arith.constant 0 : index
    %c0_4 = arith.constant 0 : index
    %3 = vector.load %arg3[%c0_3, %c0_4] : memref<1x64xf32, #tpu.memory_space<vmem>>, vector<1x64xf32>
    %4 = vector.broadcast %3 : vector<1x64xf32> to vector<16x64xf32>
    %5 = arith.addf %2, %4 : vector<16x64xf32>
    %cst_5 = arith.constant 0.000000e+00 : f32
    %6 = vector.broadcast %cst_5 : f32 to vector<16x64xf32>
    %7 = arith.maximumf %5, %6 : vector<16x64xf32>
    %8 = arith.truncf %7 : vector<16x64xf32> to vector<16x64xbf16>
    %c0_6 = arith.constant 0 : index
    %c0_7 = arith.constant 0 : index
    %9 = vector.load %arg4[%c0_6, %c0_7] : memref<64x32xbf16, #tpu.memory_space<vmem>>, vector<64x32xbf16>
    %cst_8 = arith.constant dense<0.000000e+00> : vector<16x32xf32>
    %10 = tpu.matmul %8, %9, %cst_8 {dimension_numbers = #tpu.dot_dimension_numbers<[1], [0], [0], [1], [0, 0, 1, 1], [], []>} : vector<16x64xbf16>, vector<64x32xbf16>, vector<16x32xf32> -> vector<16x32xf32>
    %c0_9 = arith.constant 0 : index
    %c0_10 = arith.constant 0 : index
    %11 = vector.load %arg5[%c0_9, %c0_10] : memref<1x32xf32, #tpu.memory_space<vmem>>, vector<1x32xf32>
    %12 = vector.broadcast %11 : vector<1x32xf32> to vector<16x32xf32>
    %13 = arith.addf %10, %12 : vector<16x32xf32>
    %14 = arith.extf %0 : vector<16x32xbf16> to vector<16x32xf32>
    %15 = arith.addf %13, %14 : vector<16x32xf32>
    %cst_11 = arith.constant dense<0.000000e+00> : vector<16xf32>
    %16 = vector.multi_reduction <add>, %15, %cst_11 [1] : vector<16x32xf32> to vector<16xf32>
    %17 = vector.shape_cast %16 : vector<16xf32> to vector<16x1xf32>
    %cst_12 = arith.constant 3.200000e+01 : f32
    %18 = vector.broadcast %cst_12 : f32 to vector<16x1xf32>
    %19 = arith.divf %17, %18 : vector<16x1xf32>
    %20 = vector.broadcast %19 : vector<16x1xf32> to vector<16x32xf32>
    %21 = arith.subf %15, %20 : vector<16x32xf32>
    %22 = arith.mulf %21, %21 : vector<16x32xf32>
    %cst_13 = arith.constant dense<0.000000e+00> : vector<16xf32>
    %23 = vector.multi_reduction <add>, %22, %cst_13 [1] : vector<16x32xf32> to vector<16xf32>
    %24 = vector.shape_cast %23 : vector<16xf32> to vector<16x1xf32>
    %cst_14 = arith.constant 3.200000e+01 : f32
    %25 = vector.broadcast %cst_14 : f32 to vector<16x1xf32>
    %26 = arith.divf %24, %25 : vector<16x1xf32>
    %27 = vector.broadcast %19 : vector<16x1xf32> to vector<16x32xf32>
    %28 = arith.subf %15, %27 : vector<16x32xf32>
    %cst_15 = arith.constant 9.99999974E-6 : f32
    %29 = vector.broadcast %cst_15 : f32 to vector<16x1xf32>
    %30 = arith.addf %26, %29 : vector<16x1xf32>
    %31 = math.rsqrt %30 : vector<16x1xf32>
    %32 = vector.broadcast %31 : vector<16x1xf32> to vector<16x32xf32>
    %33 = arith.mulf %28, %32 : vector<16x32xf32>
    %c0_16 = arith.constant 0 : index
    %c0_17 = arith.constant 0 : index
    %34 = vector.load %arg6[%c0_16, %c0_17] : memref<1x32xf32, #tpu.memory_space<vmem>>, vector<1x32xf32>
    %35 = vector.broadcast %34 : vector<1x32xf32> to vector<16x32xf32>
    %36 = arith.mulf %33, %35 : vector<16x32xf32>
    %c0_18 = arith.constant 0 : index
    %c0_19 = arith.constant 0 : index
    %37 = vector.load %arg7[%c0_18, %c0_19] : memref<1x32xf32, #tpu.memory_space<vmem>>, vector<1x32xf32>
    %38 = vector.broadcast %37 : vector<1x32xf32> to vector<16x32xf32>
    %39 = arith.addf %36, %38 : vector<16x32xf32>
    %40 = arith.truncf %39 : vector<16x32xf32> to vector<16x32xbf16>
    %c0_20 = arith.constant 0 : index
    %c0_21 = arith.constant 0 : index
    %41 = vector.load %arg8[%c0_20, %c0_21] : memref<16x32xbf16, #tpu.memory_space<vmem>>, vector<16x32xbf16>
    tpu.vector_store %arg8[%c0_20, %c0_21], %40 {strides = array<i32>} : memref<16x32xbf16, #tpu.memory_space<vmem>>, vector<16x32xbf16>,
    return
  }
  func.func @transform_0(%arg0: i32) -> (i32, i32) {
    %c0_i32 = arith.constant 0 : i32
    %c0_i32_0 = arith.constant 0 : i32
    return %arg0, %c0_i32 : i32, i32
  }
  func.func @transform_1(%arg0: i32) -> (i32, i32) {
    %c0_i32 = arith.constant 0 : i32
    %c0_i32_0 = arith.constant 0 : i32
    %c0_i32_1 = arith.constant 0 : i32
    return %c0_i32, %c0_i32_0 : i32, i32
  }
  func.func @transform_2(%arg0: i32) -> (i32, i32) {
    %c0_i32 = arith.constant 0 : i32
    %c0_i32_0 = arith.constant 0 : i32
    %c0_i32_1 = arith.constant 0 : i32
    return %c0_i32, %c0_i32_0 : i32, i32
  }
  func.func @transform_3(%arg0: i32) -> (i32, i32) {
    %c0_i32 = arith.constant 0 : i32
    %c0_i32_0 = arith.constant 0 : i32
    %c0_i32_1 = arith.constant 0 : i32
    return %c0_i32, %c0_i32_0 : i32, i32
  }
  func.func @transform_4(%arg0: i32) -> (i32, i32) {
    %c0_i32 = arith.constant 0 : i32
    %c0_i32_0 = arith.constant 0 : i32
    %c0_i32_1 = arith.constant 0 : i32
    return %c0_i32, %c0_i32_0 : i32, i32
  }
  func.func @transform_5(%arg0: i32) -> (i32, i32) {
    %c0_i32 = arith.constant 0 : i32
    %c0_i32_0 = arith.constant 0 : i32
    %c0_i32_1 = arith.constant 0 : i32
    return %c0_i32, %c0_i32_0 : i32, i32
  }
  func.func @transform_6(%arg0: i32) -> (i32, i32) {
    %c0_i32 = arith.constant 0 : i32
    %c0_i32_0 = arith.constant 0 : i32
    %c0_i32_1 = arith.constant 0 : i32
    return %c0_i32, %c0_i32_0 : i32, i32
  }
  func.func @transform_7(%arg0: i32) -> (i32, i32) {
    %c0_i32 = arith.constant 0 : i32
    %c0_i32_0 = arith.constant 0 : i32
    return %arg0, %c0_i32 : i32, i32
  }
}

module attributes {stable_mosaic.version = 11 : i64} {
  func.func @_dual_proj_kernel(%arg0: i32, %arg1: memref<32x32xbf16, #tpu.memory_space<vmem>>, %arg2: memref<32x32xbf16, #tpu.memory_space<vmem>>, %arg3: memref<32x32xbf16, #tpu.memory_space<vmem>>, %arg4: memref<1x32xf32, #tpu.memory_space<vmem>>, %arg5: memref<32x32xbf16, #tpu.memory_space<vmem>>, %arg6: memref<1x32xf32, #tpu.memory_space<vmem>>, %arg7: memref<32x32xbf16, #tpu.memory_space<vmem>>, %arg8: memref<32x32xbf16, #tpu.memory_space<vmem>>) attributes {dimension_semantics = [#tpu.dimension_semantics<parallel>], iteration_bounds = array<i64: 1>, scalar_prefetch = 0 : i64, scratch_operands = 0 : i64, tpu.core_type = #tpu.core_type<tc>, window_params = [{transform_indices = @transform_0, window_bounds = array<i64: 32, 32>}, {transform_indices = @transform_1, window_bounds = array<i64: 32, 32>}, {pipeline_mode = #tpu.pipeline_mode<synchronous>, transform_indices = @transform_2, window_bounds = array<i64: 32, 32>}, {pipeline_mode = #tpu.pipeline_mode<synchronous>, transform_indices = @transform_3, window_bounds = array<i64: 1, 32>}, {pipeline_mode = #tpu.pipeline_mode<synchronous>, transform_indices = @transform_4, window_bounds = array<i64: 32, 32>}, {pipeline_mode = #tpu.pipeline_mode<synchronous>, transform_indices = @transform_5, window_bounds = array<i64: 1, 32>}, {transform_indices = @transform_6, window_bounds = array<i64: 32, 32>}, {transform_indices = @transform_7, window_bounds = array<i64: 32, 32>}]} {
    %c0 = arith.constant 0 : index
    %c0_0 = arith.constant 0 : index
    %0 = vector.load %arg1[%c0, %c0_0] : memref<32x32xbf16, #tpu.memory_space<vmem>>, vector<32x32xbf16>
    %c0_1 = arith.constant 0 : index
    %c0_2 = arith.constant 0 : index
    %1 = vector.load %arg2[%c0_1, %c0_2] : memref<32x32xbf16, #tpu.memory_space<vmem>>, vector<32x32xbf16>
    %2 = arith.addf %0, %1 : vector<32x32xbf16>
    %c0_3 = arith.constant 0 : index
    %c0_4 = arith.constant 0 : index
    %3 = vector.load %arg3[%c0_3, %c0_4] : memref<32x32xbf16, #tpu.memory_space<vmem>>, vector<32x32xbf16>
    %cst = arith.constant dense<0.000000e+00> : vector<32x32xf32>
    %4 = tpu.matmul %2, %3, %cst {dimension_numbers = #tpu.dot_dimension_numbers<[1], [0], [0], [1], [0, 0, 1, 1], [], []>} : vector<32x32xbf16>, vector<32x32xbf16>, vector<32x32xf32> -> vector<32x32xf32>
    %c0_5 = arith.constant 0 : index
    %c0_6 = arith.constant 0 : index
    %5 = vector.load %arg4[%c0_5, %c0_6] : memref<1x32xf32, #tpu.memory_space<vmem>>, vector<1x32xf32>
    %6 = vector.broadcast %5 : vector<1x32xf32> to vector<32x32xf32>
    %7 = arith.addf %4, %6 : vector<32x32xf32>
    %c0_7 = arith.constant 0 : index
    %c0_8 = arith.constant 0 : index
    %8 = vector.load %arg5[%c0_7, %c0_8] : memref<32x32xbf16, #tpu.memory_space<vmem>>, vector<32x32xbf16>
    %cst_9 = arith.constant dense<0.000000e+00> : vector<32x32xf32>
    %9 = tpu.matmul %0, %8, %cst_9 {dimension_numbers = #tpu.dot_dimension_numbers<[1], [0], [0], [1], [0, 0, 1, 1], [], []>} : vector<32x32xbf16>, vector<32x32xbf16>, vector<32x32xf32> -> vector<32x32xf32>
    %c0_10 = arith.constant 0 : index
    %c0_11 = arith.constant 0 : index
    %10 = vector.load %arg6[%c0_10, %c0_11] : memref<1x32xf32, #tpu.memory_space<vmem>>, vector<1x32xf32>
    %11 = vector.broadcast %10 : vector<1x32xf32> to vector<32x32xf32>
    %12 = arith.addf %9, %11 : vector<32x32xf32>
    %13 = arith.truncf %7 : vector<32x32xf32> to vector<32x32xbf16>
    %c0_12 = arith.constant 0 : index
    %c0_13 = arith.constant 0 : index
    %14 = vector.load %arg7[%c0_12, %c0_13] : memref<32x32xbf16, #tpu.memory_space<vmem>>, vector<32x32xbf16>
    tpu.vector_store %arg7[%c0_12, %c0_13], %13 {strides = array<i32>} : memref<32x32xbf16, #tpu.memory_space<vmem>>, vector<32x32xbf16>,
    %15 = arith.truncf %12 : vector<32x32xf32> to vector<32x32xbf16>
    %c0_14 = arith.constant 0 : index
    %c0_15 = arith.constant 0 : index
    %16 = vector.load %arg8[%c0_14, %c0_15] : memref<32x32xbf16, #tpu.memory_space<vmem>>, vector<32x32xbf16>
    tpu.vector_store %arg8[%c0_14, %c0_15], %15 {strides = array<i32>} : memref<32x32xbf16, #tpu.memory_space<vmem>>, vector<32x32xbf16>,
    return
  }
  func.func @transform_0(%arg0: i32) -> (i32, i32) {
    %c0_i32 = arith.constant 0 : i32
    %c0_i32_0 = arith.constant 0 : i32
    return %arg0, %c0_i32 : i32, i32
  }
  func.func @transform_1(%arg0: i32) -> (i32, i32) {
    %c0_i32 = arith.constant 0 : i32
    %c0_i32_0 = arith.constant 0 : i32
    return %arg0, %c0_i32 : i32, i32
  }
  func.func @transform_2(%arg0: i32) -> (i32, i32) {
    %c0_i32 = arith.constant 0 : i32
    %c0_i32_0 = arith.constant 0 : i32
    %c0_i32_1 = arith.constant 0 : i32
    return %c0_i32, %c0_i32_0 : i32, i32
  }
  func.func @transform_3(%arg0: i32) -> (i32, i32) {
    %c0_i32 = arith.constant 0 : i32
    %c0_i32_0 = arith.constant 0 : i32
    %c0_i32_1 = arith.constant 0 : i32
    return %c0_i32, %c0_i32_0 : i32, i32
  }
  func.func @transform_4(%arg0: i32) -> (i32, i32) {
    %c0_i32 = arith.constant 0 : i32
    %c0_i32_0 = arith.constant 0 : i32
    %c0_i32_1 = arith.constant 0 : i32
    return %c0_i32, %c0_i32_0 : i32, i32
  }
  func.func @transform_5(%arg0: i32) -> (i32, i32) {
    %c0_i32 = arith.constant 0 : i32
    %c0_i32_0 = arith.constant 0 : i32
    %c0_i32_1 = arith.constant 0 : i32
    return %c0_i32, %c0_i32_0 : i32, i32
  }
  func.func @transform_6(%arg0: i32) -> (i32, i32) {
    %c0_i32 = arith.constant 0 : i32
    %c0_i32_0 = arith.constant 0 : i32
    return %arg0, %c0_i32 : i32, i32
  }
  func.func @transform_7(%arg0: i32) -> (i32, i32) {
    %c0_i32 = arith.constant 0 : i32
    %c0_i32_0 = arith.constant 0 : i32
    return %arg0, %c0_i32 : i32, i32
  }
}

module attributes {stable_mosaic.version = 11 : i64} {
  func.func @_ffn_res_ln_kernel(%arg0: i32, %arg1: memref<16x32xbf16, #tpu.memory_space<vmem>>, %arg2: memref<32x64xbf16, #tpu.memory_space<vmem>>, %arg3: memref<1x64xf32, #tpu.memory_space<vmem>>, %arg4: memref<64x32xbf16, #tpu.memory_space<vmem>>, %arg5: memref<1x32xf32, #tpu.memory_space<vmem>>, %arg6: memref<1x32xf32, #tpu.memory_space<vmem>>, %arg7: memref<1x32xf32, #tpu.memory_space<vmem>>, %arg8: memref<16x32xbf16, #tpu.memory_space<vmem>>) attributes {dimension_semantics = [#tpu.dimension_semantics<parallel>], iteration_bounds = array<i64: 1>, scalar_prefetch = 0 : i64, scratch_operands = 0 : i64, tpu.core_type = #tpu.core_type<tc>, window_params = [{transform_indices = @transform_0, window_bounds = array<i64: 16, 32>}, {pipeline_mode = #tpu.pipeline_mode<synchronous>, transform_indices = @transform_1, window_bounds = array<i64: 32, 64>}, {pipeline_mode = #tpu.pipeline_mode<synchronous>, transform_indices = @transform_2, window_bounds = array<i64: 1, 64>}, {pipeline_mode = #tpu.pipeline_mode<synchronous>, transform_indices = @transform_3, window_bounds = array<i64: 64, 32>}, {pipeline_mode = #tpu.pipeline_mode<synchronous>, transform_indices = @transform_4, window_bounds = array<i64: 1, 32>}, {pipeline_mode = #tpu.pipeline_mode<synchronous>, transform_indices = @transform_5, window_bounds = array<i64: 1, 32>}, {pipeline_mode = #tpu.pipeline_mode<synchronous>, transform_indices = @transform_6, window_bounds = array<i64: 1, 32>}, {transform_indices = @transform_7, window_bounds = array<i64: 16, 32>}]} {
    %c0 = arith.constant 0 : index
    %c0_0 = arith.constant 0 : index
    %0 = vector.load %arg1[%c0, %c0_0] : memref<16x32xbf16, #tpu.memory_space<vmem>>, vector<16x32xbf16>
    %c0_1 = arith.constant 0 : index
    %c0_2 = arith.constant 0 : index
    %1 = vector.load %arg2[%c0_1, %c0_2] : memref<32x64xbf16, #tpu.memory_space<vmem>>, vector<32x64xbf16>
    %cst = arith.constant dense<0.000000e+00> : vector<16x64xf32>
    %2 = tpu.matmul %0, %1, %cst {dimension_numbers = #tpu.dot_dimension_numbers<[1], [0], [0], [1], [0, 0, 1, 1], [], []>} : vector<16x32xbf16>, vector<32x64xbf16>, vector<16x64xf32> -> vector<16x64xf32>
    %c0_3 = arith.constant 0 : index
    %c0_4 = arith.constant 0 : index
    %3 = vector.load %arg3[%c0_3, %c0_4] : memref<1x64xf32, #tpu.memory_space<vmem>>, vector<1x64xf32>
    %4 = vector.broadcast %3 : vector<1x64xf32> to vector<16x64xf32>
    %5 = arith.addf %2, %4 : vector<16x64xf32>
    %cst_5 = arith.constant 0.000000e+00 : f32
    %6 = vector.broadcast %cst_5 : f32 to vector<16x64xf32>
    %7 = arith.maximumf %5, %6 : vector<16x64xf32>
    %8 = arith.truncf %7 : vector<16x64xf32> to vector<16x64xbf16>
    %c0_6 = arith.constant 0 : index
    %c0_7 = arith.constant 0 : index
    %9 = vector.load %arg4[%c0_6, %c0_7] : memref<64x32xbf16, #tpu.memory_space<vmem>>, vector<64x32xbf16>
    %cst_8 = arith.constant dense<0.000000e+00> : vector<16x32xf32>
    %10 = tpu.matmul %8, %9, %cst_8 {dimension_numbers = #tpu.dot_dimension_numbers<[1], [0], [0], [1], [0, 0, 1, 1], [], []>} : vector<16x64xbf16>, vector<64x32xbf16>, vector<16x32xf32> -> vector<16x32xf32>
    %c0_9 = arith.constant 0 : index
    %c0_10 = arith.constant 0 : index
    %11 = vector.load %arg5[%c0_9, %c0_10] : memref<1x32xf32, #tpu.memory_space<vmem>>, vector<1x32xf32>
    %12 = vector.broadcast %11 : vector<1x32xf32> to vector<16x32xf32>
    %13 = arith.addf %10, %12 : vector<16x32xf32>
    %14 = arith.extf %0 : vector<16x32xbf16> to vector<16x32xf32>
    %15 = arith.addf %13, %14 : vector<16x32xf32>
    %cst_11 = arith.constant dense<0.000000e+00> : vector<16xf32>
    %16 = vector.multi_reduction <add>, %15, %cst_11 [1] : vector<16x32xf32> to vector<16xf32>
    %17 = vector.shape_cast %16 : vector<16xf32> to vector<16x1xf32>
    %cst_12 = arith.constant 3.200000e+01 : f32
    %18 = vector.broadcast %cst_12 : f32 to vector<16x1xf32>
    %19 = arith.divf %17, %18 : vector<16x1xf32>
    %20 = vector.broadcast %19 : vector<16x1xf32> to vector<16x32xf32>
    %21 = arith.subf %15, %20 : vector<16x32xf32>
    %22 = arith.mulf %21, %21 : vector<16x32xf32>
    %cst_13 = arith.constant dense<0.000000e+00> : vector<16xf32>
    %23 = vector.multi_reduction <add>, %22, %cst_13 [1] : vector<16x32xf32> to vector<16xf32>
    %24 = vector.shape_cast %23 : vector<16xf32> to vector<16x1xf32>
    %cst_14 = arith.constant 3.200000e+01 : f32
    %25 = vector.broadcast %cst_14 : f32 to vector<16x1xf32>
    %26 = arith.divf %24, %25 : vector<16x1xf32>
    %27 = vector.broadcast %19 : vector<16x1xf32> to vector<16x32xf32>
    %28 = arith.subf %15, %27 : vector<16x32xf32>
    %cst_15 = arith.constant 9.99999974E-6 : f32
    %29 = vector.broadcast %cst_15 : f32 to vector<16x1xf32>
    %30 = arith.addf %26, %29 : vector<16x1xf32>
    %31 = math.rsqrt %30 : vector<16x1xf32>
    %32 = vector.broadcast %31 : vector<16x1xf32> to vector<16x32xf32>
    %33 = arith.mulf %28, %32 : vector<16x32xf32>
    %c0_16 = arith.constant 0 : index
    %c0_17 = arith.constant 0 : index
    %34 = vector.load %arg6[%c0_16, %c0_17] : memref<1x32xf32, #tpu.memory_space<vmem>>, vector<1x32xf32>
    %35 = vector.broadcast %34 : vector<1x32xf32> to vector<16x32xf32>
    %36 = arith.mulf %33, %35 : vector<16x32xf32>
    %c0_18 = arith.constant 0 : index
    %c0_19 = arith.constant 0 : index
    %37 = vector.load %arg7[%c0_18, %c0_19] : memref<1x32xf32, #tpu.memory_space<vmem>>, vector<1x32xf32>
    %38 = vector.broadcast %37 : vector<1x32xf32> to vector<16x32xf32>
    %39 = arith.addf %36, %38 : vector<16x32xf32>
    %40 = arith.truncf %39 : vector<16x32xf32> to vector<16x32xbf16>
    %c0_20 = arith.constant 0 : index
    %c0_21 = arith.constant 0 : index
    %41 = vector.load %arg8[%c0_20, %c0_21] : memref<16x32xbf16, #tpu.memory_space<vmem>>, vector<16x32xbf16>
    tpu.vector_store %arg8[%c0_20, %c0_21], %40 {strides = array<i32>} : memref<16x32xbf16, #tpu.memory_space<vmem>>, vector<16x32xbf16>,
    return
  }
  func.func @transform_0(%arg0: i32) -> (i32, i32) {
    %c0_i32 = arith.constant 0 : i32
    %c0_i32_0 = arith.constant 0 : i32
    return %arg0, %c0_i32 : i32, i32
  }
  func.func @transform_1(%arg0: i32) -> (i32, i32) {
    %c0_i32 = arith.constant 0 : i32
    %c0_i32_0 = arith.constant 0 : i32
    %c0_i32_1 = arith.constant 0 : i32
    return %c0_i32, %c0_i32_0 : i32, i32
  }
  func.func @transform_2(%arg0: i32) -> (i32, i32) {
    %c0_i32 = arith.constant 0 : i32
    %c0_i32_0 = arith.constant 0 : i32
    %c0_i32_1 = arith.constant 0 : i32
    return %c0_i32, %c0_i32_0 : i32, i32
  }
  func.func @transform_3(%arg0: i32) -> (i32, i32) {
    %c0_i32 = arith.constant 0 : i32
    %c0_i32_0 = arith.constant 0 : i32
    %c0_i32_1 = arith.constant 0 : i32
    return %c0_i32, %c0_i32_0 : i32, i32
  }
  func.func @transform_4(%arg0: i32) -> (i32, i32) {
    %c0_i32 = arith.constant 0 : i32
    %c0_i32_0 = arith.constant 0 : i32
    %c0_i32_1 = arith.constant 0 : i32
    return %c0_i32, %c0_i32_0 : i32, i32
  }
  func.func @transform_5(%arg0: i32) -> (i32, i32) {
    %c0_i32 = arith.constant 0 : i32
    %c0_i32_0 = arith.constant 0 : i32
    %c0_i32_1 = arith.constant 0 : i32
    return %c0_i32, %c0_i32_0 : i32, i32
  }
  func.func @transform_6(%arg0: i32) -> (i32, i32) {
    %c0_i32 = arith.constant 0 : i32
    %c0_i32_0 = arith.constant 0 : i32
    %c0_i32_1 = arith.constant 0 : i32
    return %c0_i32, %c0_i32_0 : i32, i32
  }
  func.func @transform_7(%arg0: i32) -> (i32, i32) {
    %c0_i32 = arith.constant 0 : i32
    %c0_i32_0 = arith.constant 0 : i32
    return %arg0, %c0_i32 : i32, i32
  }
}

module attributes {stable_mosaic.version = 11 : i64} {
  func.func @_pred_heads_kernel(%arg0: i32, %arg1: memref<16x32xbf16, #tpu.memory_space<vmem>>, %arg2: memref<32x4xbf16, #tpu.memory_space<vmem>>, %arg3: memref<1x4xf32, #tpu.memory_space<vmem>>, %arg4: memref<32x32xbf16, #tpu.memory_space<vmem>>, %arg5: memref<1x32xf32, #tpu.memory_space<vmem>>, %arg6: memref<32x32xbf16, #tpu.memory_space<vmem>>, %arg7: memref<1x32xf32, #tpu.memory_space<vmem>>, %arg8: memref<32x4xbf16, #tpu.memory_space<vmem>>, %arg9: memref<1x4xf32, #tpu.memory_space<vmem>>, %arg10: memref<16x4xf32, #tpu.memory_space<vmem>>, %arg11: memref<16x4xf32, #tpu.memory_space<vmem>>) attributes {dimension_semantics = [#tpu.dimension_semantics<parallel>], iteration_bounds = array<i64: 1>, scalar_prefetch = 0 : i64, scratch_operands = 0 : i64, tpu.core_type = #tpu.core_type<tc>, window_params = [{transform_indices = @transform_0, window_bounds = array<i64: 16, 32>}, {pipeline_mode = #tpu.pipeline_mode<synchronous>, transform_indices = @transform_1, window_bounds = array<i64: 32, 4>}, {pipeline_mode = #tpu.pipeline_mode<synchronous>, transform_indices = @transform_2, window_bounds = array<i64: 1, 4>}, {pipeline_mode = #tpu.pipeline_mode<synchronous>, transform_indices = @transform_3, window_bounds = array<i64: 32, 32>}, {pipeline_mode = #tpu.pipeline_mode<synchronous>, transform_indices = @transform_4, window_bounds = array<i64: 1, 32>}, {pipeline_mode = #tpu.pipeline_mode<synchronous>, transform_indices = @transform_5, window_bounds = array<i64: 32, 32>}, {pipeline_mode = #tpu.pipeline_mode<synchronous>, transform_indices = @transform_6, window_bounds = array<i64: 1, 32>}, {pipeline_mode = #tpu.pipeline_mode<synchronous>, transform_indices = @transform_7, window_bounds = array<i64: 32, 4>}, {pipeline_mode = #tpu.pipeline_mode<synchronous>, transform_indices = @transform_8, window_bounds = array<i64: 1, 4>}, {transform_indices = @transform_9, window_bounds = array<i64: 16, 4>}, {transform_indices = @transform_10, window_bounds = array<i64: 16, 4>}]} {
    %c0 = arith.constant 0 : index
    %c0_0 = arith.constant 0 : index
    %0 = vector.load %arg1[%c0, %c0_0] : memref<16x32xbf16, #tpu.memory_space<vmem>>, vector<16x32xbf16>
    %c0_1 = arith.constant 0 : index
    %c0_2 = arith.constant 0 : index
    %1 = vector.load %arg2[%c0_1, %c0_2] : memref<32x4xbf16, #tpu.memory_space<vmem>>, vector<32x4xbf16>
    %cst = arith.constant dense<0.000000e+00> : vector<16x4xf32>
    %2 = tpu.matmul %0, %1, %cst {dimension_numbers = #tpu.dot_dimension_numbers<[1], [0], [0], [1], [0, 0, 1, 1], [], []>} : vector<16x32xbf16>, vector<32x4xbf16>, vector<16x4xf32> -> vector<16x4xf32>
    %c0_3 = arith.constant 0 : index
    %c0_4 = arith.constant 0 : index
    %3 = vector.load %arg3[%c0_3, %c0_4] : memref<1x4xf32, #tpu.memory_space<vmem>>, vector<1x4xf32>
    %4 = vector.broadcast %3 : vector<1x4xf32> to vector<16x4xf32>
    %5 = arith.addf %2, %4 : vector<16x4xf32>
    %c0_5 = arith.constant 0 : index
    %c0_6 = arith.constant 0 : index
    %6 = vector.load %arg10[%c0_5, %c0_6] : memref<16x4xf32, #tpu.memory_space<vmem>>, vector<16x4xf32>
    tpu.vector_store %arg10[%c0_5, %c0_6], %5 {strides = array<i32>} : memref<16x4xf32, #tpu.memory_space<vmem>>, vector<16x4xf32>,
    %c0_7 = arith.constant 0 : index
    %c0_8 = arith.constant 0 : index
    %7 = vector.load %arg4[%c0_7, %c0_8] : memref<32x32xbf16, #tpu.memory_space<vmem>>, vector<32x32xbf16>
    %cst_9 = arith.constant dense<0.000000e+00> : vector<16x32xf32>
    %8 = tpu.matmul %0, %7, %cst_9 {dimension_numbers = #tpu.dot_dimension_numbers<[1], [0], [0], [1], [0, 0, 1, 1], [], []>} : vector<16x32xbf16>, vector<32x32xbf16>, vector<16x32xf32> -> vector<16x32xf32>
    %c0_10 = arith.constant 0 : index
    %c0_11 = arith.constant 0 : index
    %9 = vector.load %arg5[%c0_10, %c0_11] : memref<1x32xf32, #tpu.memory_space<vmem>>, vector<1x32xf32>
    %10 = vector.broadcast %9 : vector<1x32xf32> to vector<16x32xf32>
    %11 = arith.addf %8, %10 : vector<16x32xf32>
    %cst_12 = arith.constant 0.000000e+00 : f32
    %12 = vector.broadcast %cst_12 : f32 to vector<16x32xf32>
    %13 = arith.maximumf %11, %12 : vector<16x32xf32>
    %14 = arith.truncf %13 : vector<16x32xf32> to vector<16x32xbf16>
    %c0_13 = arith.constant 0 : index
    %c0_14 = arith.constant 0 : index
    %15 = vector.load %arg6[%c0_13, %c0_14] : memref<32x32xbf16, #tpu.memory_space<vmem>>, vector<32x32xbf16>
    %cst_15 = arith.constant dense<0.000000e+00> : vector<16x32xf32>
    %16 = tpu.matmul %14, %15, %cst_15 {dimension_numbers = #tpu.dot_dimension_numbers<[1], [0], [0], [1], [0, 0, 1, 1], [], []>} : vector<16x32xbf16>, vector<32x32xbf16>, vector<16x32xf32> -> vector<16x32xf32>
    %c0_16 = arith.constant 0 : index
    %c0_17 = arith.constant 0 : index
    %17 = vector.load %arg7[%c0_16, %c0_17] : memref<1x32xf32, #tpu.memory_space<vmem>>, vector<1x32xf32>
    %18 = vector.broadcast %17 : vector<1x32xf32> to vector<16x32xf32>
    %19 = arith.addf %16, %18 : vector<16x32xf32>
    %cst_18 = arith.constant 0.000000e+00 : f32
    %20 = vector.broadcast %cst_18 : f32 to vector<16x32xf32>
    %21 = arith.maximumf %19, %20 : vector<16x32xf32>
    %22 = arith.truncf %21 : vector<16x32xf32> to vector<16x32xbf16>
    %c0_19 = arith.constant 0 : index
    %c0_20 = arith.constant 0 : index
    %23 = vector.load %arg8[%c0_19, %c0_20] : memref<32x4xbf16, #tpu.memory_space<vmem>>, vector<32x4xbf16>
    %cst_21 = arith.constant dense<0.000000e+00> : vector<16x4xf32>
    %24 = tpu.matmul %22, %23, %cst_21 {dimension_numbers = #tpu.dot_dimension_numbers<[1], [0], [0], [1], [0, 0, 1, 1], [], []>} : vector<16x32xbf16>, vector<32x4xbf16>, vector<16x4xf32> -> vector<16x4xf32>
    %c0_22 = arith.constant 0 : index
    %c0_23 = arith.constant 0 : index
    %25 = vector.load %arg9[%c0_22, %c0_23] : memref<1x4xf32, #tpu.memory_space<vmem>>, vector<1x4xf32>
    %26 = vector.broadcast %25 : vector<1x4xf32> to vector<16x4xf32>
    %27 = arith.addf %24, %26 : vector<16x4xf32>
    %28 = arith.negf %27 : vector<16x4xf32>
    %29 = math.exp %28 : vector<16x4xf32>
    %cst_24 = arith.constant 1.000000e+00 : f32
    %30 = vector.broadcast %cst_24 : f32 to vector<16x4xf32>
    %31 = arith.addf %30, %29 : vector<16x4xf32>
    %32 = arith.divf %30, %31 : vector<16x4xf32>
    %c0_25 = arith.constant 0 : index
    %c0_26 = arith.constant 0 : index
    %33 = vector.load %arg11[%c0_25, %c0_26] : memref<16x4xf32, #tpu.memory_space<vmem>>, vector<16x4xf32>
    tpu.vector_store %arg11[%c0_25, %c0_26], %32 {strides = array<i32>} : memref<16x4xf32, #tpu.memory_space<vmem>>, vector<16x4xf32>,
    return
  }
  func.func @transform_0(%arg0: i32) -> (i32, i32) {
    %c0_i32 = arith.constant 0 : i32
    %c0_i32_0 = arith.constant 0 : i32
    return %arg0, %c0_i32 : i32, i32
  }
  func.func @transform_1(%arg0: i32) -> (i32, i32) {
    %c0_i32 = arith.constant 0 : i32
    %c0_i32_0 = arith.constant 0 : i32
    %c0_i32_1 = arith.constant 0 : i32
    return %c0_i32, %c0_i32_0 : i32, i32
  }
  func.func @transform_2(%arg0: i32) -> (i32, i32) {
    %c0_i32 = arith.constant 0 : i32
    %c0_i32_0 = arith.constant 0 : i32
    %c0_i32_1 = arith.constant 0 : i32
    return %c0_i32, %c0_i32_0 : i32, i32
  }
  func.func @transform_3(%arg0: i32) -> (i32, i32) {
    %c0_i32 = arith.constant 0 : i32
    %c0_i32_0 = arith.constant 0 : i32
    %c0_i32_1 = arith.constant 0 : i32
    return %c0_i32, %c0_i32_0 : i32, i32
  }
  func.func @transform_4(%arg0: i32) -> (i32, i32) {
    %c0_i32 = arith.constant 0 : i32
    %c0_i32_0 = arith.constant 0 : i32
    %c0_i32_1 = arith.constant 0 : i32
    return %c0_i32, %c0_i32_0 : i32, i32
  }
  func.func @transform_5(%arg0: i32) -> (i32, i32) {
    %c0_i32 = arith.constant 0 : i32
    %c0_i32_0 = arith.constant 0 : i32
    %c0_i32_1 = arith.constant 0 : i32
    return %c0_i32, %c0_i32_0 : i32, i32
  }
  func.func @transform_6(%arg0: i32) -> (i32, i32) {
    %c0_i32 = arith.constant 0 : i32
    %c0_i32_0 = arith.constant 0 : i32
    %c0_i32_1 = arith.constant 0 : i32
    return %c0_i32, %c0_i32_0 : i32, i32
  }
  func.func @transform_7(%arg0: i32) -> (i32, i32) {
    %c0_i32 = arith.constant 0 : i32
    %c0_i32_0 = arith.constant 0 : i32
    %c0_i32_1 = arith.constant 0 : i32
    return %c0_i32, %c0_i32_0 : i32, i32
  }
  func.func @transform_8(%arg0: i32) -> (i32, i32) {
    %c0_i32 = arith.constant 0 : i32
    %c0_i32_0 = arith.constant 0 : i32
    %c0_i32_1 = arith.constant 0 : i32
    return %c0_i32, %c0_i32_0 : i32, i32
  }
  func.func @transform_9(%arg0: i32) -> (i32, i32) {
    %c0_i32 = arith.constant 0 : i32
    %c0_i32_0 = arith.constant 0 : i32
    return %arg0, %c0_i32 : i32, i32
  }
  func.func @transform_10(%arg0: i32) -> (i32, i32) {
    %c0_i32 = arith.constant 0 : i32
    %c0_i32_0 = arith.constant 0 : i32
    return %arg0, %c0_i32 : i32, i32
  }
}

</mosaic_0001>

<llo_original>
// kernel: motip_forward.26
$region0: #{motip_forward.26}
  #allocation0 [shape = 'u32[]', space=smem, size = 0x4, offset = 0x4, fixed_abs, tag = 'smem constant byte address 0x4 - core index']
  #allocation1 [shape = 'u32[72,128]{1,0:T(1,128)}', space=vmem, size = 0x9000, scoped, tag = 'internal scratch']
  %s0 = inlined_call_operand.vmem [shape: bf16[32,64], index: 0, kind: input, shape index: {}]
  %s1 = inlined_call_operand.vmem [shape: bf16[64,32], index: 1, kind: input, shape index: {}]
  %s2 = inlined_call_operand.vmem [shape: f32[1,32], index: 2, kind: input, shape index: {}]
  %s3 = inlined_call_operand.vmem [shape: bf16[32,32], index: 3, kind: output, shape index: {}]
  %s4 = sld [smem:[#allocation0]]
  $region22: #{motip_forward.26} parent=0
    _
  %s6 = ssub.s32 1, %s4
  %s7 = scalar_select 0, %s6, %s4
  // Predicated region
  $region2: #{motip_forward.26} parent=0 // pred_check
    _
  $region3: #{motip_forward.26} parent=0 // pred_check_branch
    %9 = sbr.rel (0) target = $region5
  $region4: #{motip_forward.26} parent=0 // pred_region
    _
  $region5: #{motip_forward.26} parent=0 // pred_fallthru
    _
  // Predicated region
  $region6: #{motip_forward.26} parent=0 // pred_check
    _
  $region7: #{motip_forward.26} parent=0 // pred_check_branch
    %11 = sbr.rel (0) target = $region9
  $region8: #{motip_forward.26} parent=0 // pred_region
    _
  $region9: #{motip_forward.26} parent=0 // pred_fallthru
    _
  // Predicated region
  $region10: #{motip_forward.26} parent=0 // pred_check
    _
  $region11: #{motip_forward.26} parent=0 // pred_check_branch
    %13 = sbr.rel (0) target = $region13
  $region12: #{motip_forward.26} parent=0 // pred_region
    _
  $region13: #{motip_forward.26} parent=0 // pred_fallthru
    _
  %v15 = vld [vmem:[%s0] sm:$0xf]
  %v16 = vld [vmem:[%s0 + $0x4] sm:$0xf]
  %v17 = vld [vmem:[%s0 + $0x8] sm:$0xf]
  %v18 = vld [vmem:[%s0 + $0xc] sm:$0xf]
  %v19 = vld [vmem:[%s1] sm:$0xf]
  %v20 = vld [vmem:[%s1 + $0x4] sm:$0xf]
  %v21 = vld [vmem:[%s1 + $0x8] sm:$0xf]
  %v22 = vld [vmem:[%s1 + $0xc] sm:$0xf]
  %v23 = vld [vmem:[%s1 + $0x10] sm:$0xf]
  %v24 = vld [vmem:[%s1 + $0x14] sm:$0xf]
  %v25 = vld [vmem:[%s1 + $0x18] sm:$0xf]
  %v26 = vld [vmem:[%s1 + $0x1c] sm:$0xf]
  %v27 = vld [vmem:[%s2] sm:$0x1]
  %v29 = vperm.slane %v27, 0
  %v35 = vunpack.c.l.b16 %v15
  %v36 = vunpack.c.l.b16 %v16
  %v37 = vunpack.c.l.b16 %v17
  %v38 = vunpack.c.l.b16 %v18
  %v39 = vpack.c.b16 %v36, %v35
  %v40 = vpack.c.b16 %v38, %v37
  %v49 = vunpack.c.l.b16 %v19
  %v50 = vunpack.c.l.b16 %v20
  %v51 = vunpack.c.l.b16 %v21
  %v52 = vunpack.c.l.b16 %v22
  %v53 = vunpack.c.l.b16 %v23
  %v54 = vunpack.c.l.b16 %v24
  %v55 = vunpack.c.l.b16 %v25
  %v56 = vunpack.c.l.b16 %v26
  %v57 = vpack.c.b16 %v50, %v49
  %v58 = vpack.c.b16 %v52, %v51
  %v59 = vpack.c.b16 %v54, %v53
  %v60 = vpack.c.b16 %v56, %v55
  %vm65 = vcmask 523264
  %v67 = vsel %vm65, %v39, 0
  %v70 = vsel %vm65, %v40, 0
  %72 = vmatpush.bf16.msra.mxu0 0
  %73 = vmatpush.bf16.msra.mxu0 0
  %74 = vmatpush.bf16.msra.mxu0 0
  %75 = vmatpush.bf16.msra.mxu0 0
  %76 = vmatpush.bf16.msra.mxu0 %v60
  %77 = vmatpush.bf16.msra.mxu0 %v59
  %78 = vmatpush.bf16.msra.mxu0 %v58
  %79 = vmatpush.bf16.msra.mxu0 %v57
  %80 = vmatmul.bf16.gmra.mxu0 %v67
  %v81 = vpop.f32.mrf.mxu0
  %v82 = vadd.f32 %v29, %v81
  %v83 = vpop.f32.mrf.mxu0
  %v84 = vadd.f32 %v29, %v83
  %85 = vmatmul.bf16.gmra.mxu0 %v70
  %v86 = vpop.f32.mrf.mxu0
  %v87 = vadd.f32 %v29, %v86
  %v88 = vpop.f32.mrf.mxu0
  %v89 = vadd.f32 %v29, %v88
  %90 = vdwg.mxu0
  %v91 = vpack.c.bf16 %v82, %v82
  %v92 = vpack.c.bf16 %v84, %v84
  %v93 = vpack.c.bf16 %v87, %v87
  %v94 = vpack.c.bf16 %v89, %v89
  %vm95 = vcmask 257024
  %96 = vst.msk [vmem:[%s3] sm:$0xf] %vm95, %v91
  %97 = vst.msk [vmem:[%s3 + $0x4] sm:$0xf] %vm95, %v92
  %98 = vst.msk [vmem:[%s3 + $0x8] sm:$0xf] %vm95, %v93
  %99 = vst.msk [vmem:[%s3 + $0xc] sm:$0xf] %vm95, %v94
  // Predicated region
  $region14: #{motip_forward.26} parent=0 // pred_check
    _
  $region15: #{motip_forward.26} parent=0 // pred_check_branch
    %101 = sbr.rel (0) target = $region17
  $region16: #{motip_forward.26} parent=0 // pred_region
    _
  $region17: #{motip_forward.26} parent=0 // pred_fallthru
    _
  // Predicated region
  $region18: #{motip_forward.26} parent=0 // pred_check
    _
  $region19: #{motip_forward.26} parent=0 // pred_check_branch
    %103 = sbr.rel (0) target = $region21
  $region20: #{motip_forward.26} parent=0 // pred_region
    _
  $region21: #{motip_forward.26} parent=0 // pred_fallthru
    _

// kernel: motip_forward.27
$region0: #{motip_forward.27}
  #allocation0 [shape = 'u32[]', space=smem, size = 0x4, offset = 0x4, fixed_abs, tag = 'smem constant byte address 0x4 - core index']
  #allocation1 [shape = 'u32[72,128]{1,0:T(1,128)}', space=vmem, size = 0x9000, scoped, tag = 'internal scratch']
  %s0 = inlined_call_operand.vmem [shape: bf16[32,32], index: 0, kind: input, shape index: {}]
  %s1 = inlined_call_operand.vmem [shape: bf16[32,32], index: 1, kind: input, shape index: {}]
  %s2 = inlined_call_operand.vmem [shape: bf16[32,64], index: 2, kind: input, shape index: {}]
  %s3 = inlined_call_operand.vmem [shape: f32[1,64], index: 3, kind: input, shape index: {}]
  %s4 = inlined_call_operand.vmem [shape: bf16[32,32], index: 4, kind: input, shape index: {}]
  %s5 = inlined_call_operand.vmem [shape: f32[1,32], index: 5, kind: input, shape index: {}]
  %s6 = inlined_call_operand.vmem [shape: bf16[32,32], index: 6, kind: output, shape index: {0}]
  %s7 = inlined_call_operand.vmem [shape: bf16[32,32], index: 7, kind: output, shape index: {1}]
  %s8 = inlined_call_operand.vmem [shape: bf16[32,32], index: 8, kind: output, shape index: {2}]
  %9 = xla_tuple %s6, %s7, %s8
  %s10 = sld [smem:[#allocation0]]
  $region50: #{motip_forward.27} parent=0
    _
  %s12 = ssub.s32 1, %s10
  %s13 = scalar_select 0, %s12, %s10
  // Predicated region
  $region2: #{motip_forward.27} parent=0 // pred_check
    _
  $region3: #{motip_forward.27} parent=0 // pred_check_branch
    %15 = sbr.rel (0) target = $region5
  $region4: #{motip_forward.27} parent=0 // pred_region
    _
  $region5: #{motip_forward.27} parent=0 // pred_fallthru
    _
  // Predicated region
  $region6: #{motip_forward.27} parent=0 // pred_check
    _
  $region7: #{motip_forward.27} parent=0 // pred_check_branch
    %17 = sbr.rel (0) target = $region9
  $region8: #{motip_forward.27} parent=0 // pred_region
    _
  $region9: #{motip_forward.27} parent=0 // pred_fallthru
    _
  // Predicated region
  $region10: #{motip_forward.27} parent=0 // pred_check
    _
  $region11: #{motip_forward.27} parent=0 // pred_check_branch
    %19 = sbr.rel (0) target = $region13
  $region12: #{motip_forward.27} parent=0 // pred_region
    _
  $region13: #{motip_forward.27} parent=0 // pred_fallthru
    _
  // Predicated region
  $region14: #{motip_forward.27} parent=0 // pred_check
    _
  $region15: #{motip_forward.27} parent=0 // pred_check_branch
    %21 = sbr.rel (0) target = $region17
  $region16: #{motip_forward.27} parent=0 // pred_region
    _
  $region17: #{motip_forward.27} parent=0 // pred_fallthru
    _
  // Predicated region
  $region18: #{motip_forward.27} parent=0 // pred_check
    _
  $region19: #{motip_forward.27} parent=0 // pred_check_branch
    %23 = sbr.rel (0) target = $region21
  $region20: #{motip_forward.27} parent=0 // pred_region
    _
  $region21: #{motip_forward.27} parent=0 // pred_fallthru
    _
  // Predicated region
  $region22: #{motip_forward.27} parent=0 // pred_check
    _
  $region23: #{motip_forward.27} parent=0 // pred_check_branch
    %25 = sbr.rel (0) target = $region25
  $region24: #{motip_forward.27} parent=0 // pred_region
    _
  $region25: #{motip_forward.27} parent=0 // pred_fallthru
    _
  %v27 = vld [vmem:[%s0] sm:$0xf]
  %v28 = vld [vmem:[%s0 + $0x4] sm:$0xf]
  %v29 = vld [vmem:[%s0 + $0x8] sm:$0xf]
  %v30 = vld [vmem:[%s0 + $0xc] sm:$0xf]
  %v31 = vld [vmem:[%s1] sm:$0xf]
  %v32 = vld [vmem:[%s1 + $0x4] sm:$0xf]
  %v33 = vld [vmem:[%s1 + $0x8] sm:$0xf]
  %v34 = vld [vmem:[%s1 + $0xc] sm:$0xf]
  %v35 = vunpack.c.l.bf16 %v27
  %v36 = vunpack.c.l.bf16 %v28
  %v37 = vunpack.c.l.bf16 %v29
  %v38 = vunpack.c.l.bf16 %v30
  %v39 = vunpack.c.l.bf16 %v31
  %v40 = vunpack.c.l.bf16 %v32
  %v41 = vunpack.c.l.bf16 %v33
  %v42 = vunpack.c.l.bf16 %v34
  %v43 = vadd.f32 %v35, %v39
  %v44 = vadd.f32 %v36, %v40
  %v45 = vadd.f32 %v37, %v41
  %v46 = vadd.f32 %v38, %v42
  %v47 = vpack.c.bf16 %v44, %v43
  %v48 = vpack.c.bf16 %v46, %v45
  %v49 = vld [vmem:[%s2] sm:$0xf]
  %v50 = vld [vmem:[%s2 + $0x4] sm:$0xf]
  %v51 = vld [vmem:[%s2 + $0x8] sm:$0xf]
  %v52 = vld [vmem:[%s2 + $0xc] sm:$0xf]
  %v53 = vld [vmem:[%s3] sm:$0x1]
  %v55 = vperm.slane %v53, 0
  %v61 = vunpack.c.l.b16 %v49
  %v62 = vunpack.c.l.b16 %v50
  %v63 = vunpack.c.l.b16 %v51
  %v64 = vunpack.c.l.b16 %v52
  %v65 = vpack.c.b16 %v62, %v61
  %v66 = vpack.c.b16 %v64, %v63
  %vm69 = vcmask 261120
  %v71 = vsel %vm69, %v47, 0
  %v74 = vsel %vm69, %v48, 0
  %76 = vmatpush.bf16.msra.mxu0 0
  %77 = vmatpush.bf16.msra.mxu0 0
  %78 = vmatpush.bf16.msra.mxu0 0
  %79 = vmatpush.bf16.msra.mxu0 0
  %80 = vmatpush.bf16.msra.mxu0 0
  %81 = vmatpush.bf16.msra.mxu0 0
  %82 = vmatpush.bf16.msra.mxu0 %v66
  %83 = vmatpush.bf16.msra.mxu0 %v65
  %84 = vmatmul.bf16.gmra.mxu0 %v71
  %v85 = vpop.f32.mrf.mxu0
  %v86 = vadd.f32 %v55, %v85
  %v87 = vpop.f32.mrf.mxu0
  %v88 = vadd.f32 %v55, %v87
  %89 = vmatmul.bf16.gmra.mxu0 %v74
  %v90 = vpop.f32.mrf.mxu0
  %v91 = vadd.f32 %v55, %v90
  %v92 = vpop.f32.mrf.mxu0
  %v93 = vadd.f32 %v55, %v92
  %94 = vdwg.mxu0
  %v95 = vld [vmem:[%s4] sm:$0xf]
  %v96 = vld [vmem:[%s4 + $0x4] sm:$0xf]
  %v97 = vld [vmem:[%s4 + $0x8] sm:$0xf]
  %v98 = vld [vmem:[%s4 + $0xc] sm:$0xf]
  %v99 = vld [vmem:[%s5] sm:$0x1]
  %v101 = vperm.slane %v99, 0
  %v107 = vunpack.c.l.b16 %v27
  %v108 = vunpack.c.l.b16 %v28
  %v109 = vunpack.c.l.b16 %v29
  %v110 = vunpack.c.l.b16 %v30
  %v111 = vpack.c.b16 %v108, %v107
  %v112 = vpack.c.b16 %v110, %v109
  %v117 = vunpack.c.l.b16 %v95
  %v118 = vunpack.c.l.b16 %v96
  %v119 = vunpack.c.l.b16 %v97
  %v120 = vunpack.c.l.b16 %v98
  %v121 = vpack.c.b16 %v118, %v117
  %v122 = vpack.c.b16 %v120, %v119
  %v126 = vsel %vm69, %v111, 0
  %v129 = vsel %vm69, %v112, 0
  %131 = vmatpush.bf16.msra.mxu0 0
  %132 = vmatpush.bf16.msra.mxu0 0
  %133 = vmatpush.bf16.msra.mxu0 0
  %134 = vmatpush.bf16.msra.mxu0 0
  %135 = vmatpush.bf16.msra.mxu0 0
  %136 = vmatpush.bf16.msra.mxu0 0
  %137 = vmatpush.bf16.msra.mxu0 %v122
  %138 = vmatpush.bf16.msra.mxu0 %v121
  %139 = vmatmul.bf16.gmra.mxu0 %v126
  %v140 = vpop.f32.mrf.mxu0
  %v141 = vadd.f32 %v101, %v140
  %v142 = vpop.f32.mrf.mxu0
  %v143 = vadd.f32 %v101, %v142
  %144 = vmatmul.bf16.gmra.mxu0 %v129
  %v145 = vpop.f32.mrf.mxu0
  %v146 = vadd.f32 %v101, %v145
  %v147 = vpop.f32.mrf.mxu0
  %v148 = vadd.f32 %v101, %v147
  %149 = vdwg.mxu0
  %v150 = vpack.c.bf16 %v86, %v86
  %v151 = vpack.c.bf16 %v88, %v88
  %v152 = vpack.c.bf16 %v91, %v91
  %v153 = vpack.c.bf16 %v93, %v93
  %vm154 = vcmask 257024
  %155 = vst.msk [vmem:[%s6] sm:$0xf] %vm154, %v150
  %156 = vst.msk [vmem:[%s6 + $0x4] sm:$0xf] %vm154, %v151
  %157 = vst.msk [vmem:[%s6 + $0x8] sm:$0xf] %vm154, %v152
  %158 = vst.msk [vmem:[%s6 + $0xc] sm:$0xf] %vm154, %v153
  %163 = vrot.lane.b32.xlu0 %v150, 96
  %v164 = vpop.permute.xlu0 %163
  %165 = vrot.lane.b32.xlu0 %v151, 96
  %v166 = vpop.permute.xlu0 %165
  %167 = vrot.lane.b32.xlu0 %v152, 96
  %v168 = vpop.permute.xlu0 %167
  %169 = vrot.lane.b32.xlu0 %v153, 96
  %v170 = vpop.permute.xlu0 %169
  %175 = vst.msk [vmem:[%s7] sm:$0xf] %vm154, %v164
  %176 = vst.msk [vmem:[%s7 + $0x4] sm:$0xf] %vm154, %v166
  %177 = vst.msk [vmem:[%s7 + $0x8] sm:$0xf] %vm154, %v168
  %178 = vst.msk [vmem:[%s7 + $0xc] sm:$0xf] %vm154, %v170
  %v179 = vpack.c.bf16 %v141, %v141
  %v180 = vpack.c.bf16 %v143, %v143
  %v181 = vpack.c.bf16 %v146, %v146
  %v182 = vpack.c.bf16 %v148, %v148
  %183 = vst.msk [vmem:[%s8] sm:$0xf] %vm154, %v179
  %184 = vst.msk [vmem:[%s8 + $0x4] sm:$0xf] %vm154, %v180
  %185 = vst.msk [vmem:[%s8 + $0x8] sm:$0xf] %vm154, %v181
  %186 = vst.msk [vmem:[%s8 + $0xc] sm:$0xf] %vm154, %v182
  // Predicated region
  $region26: #{motip_forward.27} parent=0 // pred_check
    _
  $region27: #{motip_forward.27} parent=0 // pred_check_branch
    %188 = sbr.rel (0) target = $region29
  $region28: #{motip_forward.27} parent=0 // pred_region
    _
  $region29: #{motip_forward.27} parent=0 // pred_fallthru
    _
  // Predicated region
  $region30: #{motip_forward.27} parent=0 // pred_check
    _
  $region31: #{motip_forward.27} parent=0 // pred_check_branch
    %190 = sbr.rel (0) target = $region33
  $region32: #{motip_forward.27} parent=0 // pred_region
    _
  $region33: #{motip_forward.27} parent=0 // pred_fallthru
    _
  // Predicated region
  $region34: #{motip_forward.27} parent=0 // pred_check
    _
  $region35: #{motip_forward.27} parent=0 // pred_check_branch
    %192 = sbr.rel (0) target = $region37
  $region36: #{motip_forward.27} parent=0 // pred_region
    _
  $region37: #{motip_forward.27} parent=0 // pred_fallthru
    _
  // Predicated region
  $region38: #{motip_forward.27} parent=0 // pred_check
    _
  $region39: #{motip_forward.27} parent=0 // pred_check_branch
    %194 = sbr.rel (0) target = $region41
  $region40: #{motip_forward.27} parent=0 // pred_region
    _
  $region41: #{motip_forward.27} parent=0 // pred_fallthru
    _
  // Predicated region
  $region42: #{motip_forward.27} parent=0 // pred_check
    _
  $region43: #{motip_forward.27} parent=0 // pred_check_branch
    %196 = sbr.rel (0) target = $region45
  $region44: #{motip_forward.27} parent=0 // pred_region
    _
  $region45: #{motip_forward.27} parent=0 // pred_fallthru
    _
  // Predicated region
  $region46: #{motip_forward.27} parent=0 // pred_check
    _
  $region47: #{motip_forward.27} parent=0 // pred_check_branch
    %198 = sbr.rel (0) target = $region49
  $region48: #{motip_forward.27} parent=0 // pred_region
    _
  $region49: #{motip_forward.27} parent=0 // pred_fallthru
    _

// kernel: motip_forward.28
$region0: #{motip_forward.28}
  #allocation0 [shape = 'u32[]', space=smem, size = 0x4, offset = 0x4, fixed_abs, tag = 'smem constant byte address 0x4 - core index']
  #allocation1 [shape = 'u32[72,128]{1,0:T(1,128)}', space=vmem, size = 0x9000, scoped, tag = 'internal scratch']
  %s0 = inlined_call_operand.vmem [shape: bf16[2,16,32], index: 0, kind: input, shape index: {}]
  %s1 = inlined_call_operand.vmem [shape: bf16[2,16,32], index: 1, kind: input, shape index: {}]
  %s2 = inlined_call_operand.vmem [shape: bf16[2,16,32], index: 2, kind: input, shape index: {}]
  %s3 = inlined_call_operand.vmem [shape: bf16[2,16,32], index: 3, kind: output, shape index: {}]
  %s4 = sld [smem:[#allocation0]]
  $region45: #{motip_forward.28} parent=0
    _
  %s6 = ssub.s32 1, %s4
  %s7 = scalar_select 0, %s6, %s4
  loop: start=0, step=1, limit=4
  $region2: #{motip_forward.28} parent=0 // loop_pre_header
    _
  $region3: #{motip_forward.28} parent=0 // loop_header
    %s9 = sphi 0, %s13
    %p10 = scmp.ge.s32.totalorder %s9, 4
    %s19 = sphi 0, %s21
    %s22 = sphi 0, %s19
    %s23 = sphi 0, %s22
    %s39 = sphi 0, %s23
    %s45 = sphi 0, %s47
    %s48 = sphi 0, %s45
    %s49 = sphi 0, %s48
    %s65 = sphi 0, %s49
    %s71 = sphi 0, %s73
    %s74 = sphi 0, %s71
    %s75 = sphi 0, %s74
    %s91 = sphi 0, %s75
    %s97 = sphi 0, %s99
    %s100 = sphi 0, %s97
    %s101 = sphi 0, %s100
    %s117 = sphi 0, %s101
  $region4: #{motip_forward.28} parent=0 // loop_header_branch
    %12 = sbr.rel (%p10) target = $region8
  $region5: #{motip_forward.28} parent=0 // loop_body
    %s14 = ssub.s32 %s9, 1
    %s15 = ssub.s32 %s9, 2
    %s16 = sadd.s32 %s9, 1
    %s17 = ssub.s32 %s9, %s16
    %p18 = scmp.eq.s32.totalorder %s17, 0
    %s20 = sadd.s32 %s19, 1
    %s21 = scalar_select %p18, %s19, %s20
    %p24 = pneg %p18
    %p25 = scmp.eq.s32.totalorder %s9, 1
    %p26 = por %p24, %p25
    %p27 = scmp.ne.s32.totalorder %s19, %s22
    %p28 = scmp.eq.s32.totalorder %s9, 0
    %p29 = por %p27, %p28
    %p30 = scmp.ne.s32.totalorder %s19, %s22
    %p31 = scmp.eq.s32.totalorder %s14, 1
    %p32 = por %p30, %p31
    %p33 = scmp.ne.s32.totalorder %s22, %s23
    %p34 = scmp.eq.s32.totalorder %s14, 0
    %p35 = por %p33, %p34
    %p36 = scmp.ne.s32.totalorder %s22, %s23
    %p37 = scmp.eq.s32.totalorder %s15, 1
    %p38 = por %p36, %p37
    %p40 = scmp.ne.s32.totalorder %s23, %s39
    %p41 = scmp.eq.s32.totalorder %s15, 0
    %p42 = por %p40, %p41
    %s43 = ssub.s32 %s9, %s16
    %p44 = scmp.eq.s32.totalorder %s43, 0
    %s46 = sadd.s32 %s45, 1
    %s47 = scalar_select %p44, %s45, %s46
    %p50 = pneg %p44
    %p51 = scmp.eq.s32.totalorder %s9, 1
    %p52 = por %p50, %p51
    %p53 = scmp.ne.s32.totalorder %s45, %s48
    %p54 = scmp.eq.s32.totalorder %s9, 0
    %p55 = por %p53, %p54
    %p56 = scmp.ne.s32.totalorder %s45, %s48
    %p57 = scmp.eq.s32.totalorder %s14, 1
    %p58 = por %p56, %p57
    %p59 = scmp.ne.s32.totalorder %s48, %s49
    %p60 = scmp.eq.s32.totalorder %s14, 0
    %p61 = por %p59, %p60
    %p62 = scmp.ne.s32.totalorder %s48, %s49
    %p63 = scmp.eq.s32.totalorder %s15, 1
    %p64 = por %p62, %p63
    %p66 = scmp.ne.s32.totalorder %s49, %s65
    %p67 = scmp.eq.s32.totalorder %s15, 0
    %p68 = por %p66, %p67
    %s69 = ssub.s32 %s9, %s16
    %p70 = scmp.eq.s32.totalorder %s69, 0
    %s72 = sadd.s32 %s71, 1
    %s73 = scalar_select %p70, %s71, %s72
    %p76 = pneg %p70
    %p77 = scmp.eq.s32.totalorder %s9, 1
    %p78 = por %p76, %p77
    %p79 = scmp.ne.s32.totalorder %s71, %s74
    %p80 = scmp.eq.s32.totalorder %s9, 0
    %p81 = por %p79, %p80
    %p82 = scmp.ne.s32.totalorder %s71, %s74
    %p83 = scmp.eq.s32.totalorder %s14, 1
    %p84 = por %p82, %p83
    %p85 = scmp.ne.s32.totalorder %s74, %s75
    %p86 = scmp.eq.s32.totalorder %s14, 0
    %p87 = por %p85, %p86
    %p88 = scmp.ne.s32.totalorder %s74, %s75
    %p89 = scmp.eq.s32.totalorder %s15, 1
    %p90 = por %p88, %p89
    %p92 = scmp.ne.s32.totalorder %s75, %s91
    %p93 = scmp.eq.s32.totalorder %s15, 0
    %p94 = por %p92, %p93
    %s95 = ssub.s32 %s9, %s16
    %p96 = scmp.eq.s32.totalorder %s95, 0
    %s98 = sadd.s32 %s97, 1
    %s99 = scalar_select %p96, %s97, %s98
    %p102 = pneg %p96
    %p103 = scmp.eq.s32.totalorder %s9, 1
    %p104 = por %p102, %p103
    %p105 = scmp.ne.s32.totalorder %s97, %s100
    %p106 = scmp.eq.s32.totalorder %s9, 0
    %p107 = por %p105, %p106
    %p108 = scmp.ne.s32.totalorder %s97, %s100
    %p109 = scmp.eq.s32.totalorder %s14, 1
    %p110 = por %p108, %p109
    %p111 = scmp.ne.s32.totalorder %s100, %s101
    %p112 = scmp.eq.s32.totalorder %s14, 0
    %p113 = por %p111, %p112
    %p114 = scmp.ne.s32.totalorder %s100, %s101
    %p115 = scmp.eq.s32.totalorder %s15, 1
    %p116 = por %p114, %p115
    %p118 = scmp.ne.s32.totalorder %s101, %s117
    %p119 = scmp.eq.s32.totalorder %s15, 0
    %p120 = por %p118, %p119
    %p121 = scmp.le.s32.totalorder 1, %s9
    %p122 = scmp.lt.s32.totalorder %s9, 3
    %p123 = pnand %p121, %p122
    %p124 = pneg %p123
    // Predicated region
    $region9: #{motip_forward.28} parent=5 // pred_check
      _
    $region10: #{motip_forward.28} parent=5 // pred_check_branch
      %126 = sbr.rel (%p123) target = $region12
    $region11: #{motip_forward.28} parent=5 // pred_region
      %s127 = ssub.s32 %s9, 1
    $region12: #{motip_forward.28} parent=5 // pred_fallthru
      _
    %p128 = scmp.lt.s32.totalorder %s9, 2
    // Predicated region
    $region13: #{motip_forward.28} parent=5 // pred_check
      %p129 = pneg %p128
    $region14: #{motip_forward.28} parent=5 // pred_check_branch
      %131 = sbr.rel (%p129) target = $region16
    $region15: #{motip_forward.28} parent=5 // pred_region
      // Predicated region
      $region17: #{motip_forward.28} parent=15 // pred_check
        %p132 = pneg %p29
      $region18: #{motip_forward.28} parent=15 // pred_check_branch
        %134 = sbr.rel (%p132) target = $region20
      $region19: #{motip_forward.28} parent=15 // pred_region
        %p135 = scmp.lt.s32.totalorder %s9, 1
        %s136 = scalar_select %p135, %s9, 1
        %s137 = smul.addr %s136, 2
        %s138 = smul.addr %s137, 4
        %s139 = scalar_lea.vmem %s0, %s138
      $region20: #{motip_forward.28} parent=15 // pred_fallthru
        _
      // Predicated region
      $region21: #{motip_forward.28} parent=15 // pred_check
        %p140 = pneg %p55
      $region22: #{motip_forward.28} parent=15 // pred_check_branch
        %142 = sbr.rel (%p140) target = $region24
      $region23: #{motip_forward.28} parent=15 // pred_region
        %p143 = scmp.lt.s32.totalorder %s9, 1
        %s144 = scalar_select %p143, %s9, 1
        %s145 = smul.addr %s144, 2
        %s146 = smul.addr %s145, 4
        %s147 = scalar_lea.vmem %s1, %s146
      $region24: #{motip_forward.28} parent=15 // pred_fallthru
        _
      // Predicated region
      $region25: #{motip_forward.28} parent=15 // pred_check
        %p148 = pneg %p81
      $region26: #{motip_forward.28} parent=15 // pred_check_branch
        %150 = sbr.rel (%p148) target = $region28
      $region27: #{motip_forward.28} parent=15 // pred_region
        %p151 = scmp.lt.s32.totalorder %s9, 1
        %s152 = scalar_select %p151, %s9, 1
        %s153 = smul.addr %s152, 2
        %s154 = smul.addr %s153, 4
        %s155 = scalar_lea.vmem %s2, %s154
      $region28: #{motip_forward.28} parent=15 // pred_fallthru
        _
    $region16: #{motip_forward.28} parent=5 // pred_fallthru
      _
    %p156 = scmp.le.s32.totalorder 1, %s9
    %p157 = scmp.lt.s32.totalorder %s9, 3
    %p158 = pnand %p156, %p157
    %p159 = pneg %p158
    // Predicated region
    $region29: #{motip_forward.28} parent=5 // pred_check
      _
    $region30: #{motip_forward.28} parent=5 // pred_check_branch
      %161 = sbr.rel (%p158) target = $region32
    $region31: #{motip_forward.28} parent=5 // pred_region
      %s162 = ssub.s32 %s9, 1
      %p163 = scmp.lt.s32.totalorder %s14, 1
      %s164 = scalar_select %p163, %s14, 1
      %s165 = smul.addr %s164, 2
      %s166 = smul.addr %s165, 4
      %s167 = scalar_lea.vmem %s0, %s166
      %p168 = pneg %p35
      %p169 = pneg %p32
      %p170 = scmp.lt.s32.totalorder %s14, 1
      %s171 = scalar_select %p170, %s14, 1
      %s172 = smul.addr %s171, 2
      %s173 = smul.addr %s172, 4
      %s174 = scalar_lea.vmem %s1, %s173
      %p175 = pneg %p61
      %p176 = pneg %p58
      %p177 = scmp.lt.s32.totalorder %s14, 1
      %s178 = scalar_select %p177, %s14, 1
      %s179 = smul.addr %s178, 2
      %s180 = smul.addr %s179, 4
      %s181 = scalar_lea.vmem %s2, %s180
      %p182 = pneg %p87
      %p183 = pneg %p84
      %p184 = pneg %p113
      %p185 = pneg %p110
      %p186 = scmp.lt.s32.totalorder %s14, 1
      %s187 = scalar_select %p186, %s14, 1
      %s188 = smul.addr %s187, 2
      %s189 = smul.addr %s188, 4
      %s190 = scalar_lea.vmem %s3, %s189
      %p191 = scmp.lt.s32.totalorder %s14, 1
      %s192 = scalar_select %p191, %s14, 1
      %s193 = smul.addr %s192, 2
      %s194 = smul.addr %s193, 4
      %s195 = scalar_lea.vmem %s0, %s194
      %p196 = scmp.lt.s32.totalorder %s14, 1
      %s197 = scalar_select %p196, %s14, 1
      %s198 = smul.addr %s197, 2
      %s199 = smul.addr %s198, 4
      %s200 = scalar_lea.vmem %s1, %s199
      %p201 = scmp.lt.s32.totalorder %s14, 1
      %s202 = scalar_select %p201, %s14, 1
      %s203 = smul.addr %s202, 2
      %s204 = smul.addr %s203, 4
      %s205 = scalar_lea.vmem %s2, %s204
      %p206 = scmp.lt.s32.totalorder %s14, 1
      %s207 = scalar_select %p206, %s14, 1
      %s208 = smul.addr %s207, 2
      %s209 = smul.addr %s208, 4
      %s210 = scalar_lea.vmem %s3, %s209
      %v212 = vld [vmem:[%s195] sm:$0xf]
      %v213 = vld [vmem:[%s195 + $0x4] sm:$0xf]
      %v214 = vld [vmem:[%s200] sm:$0xf]
      %v215 = vld [vmem:[%s200 + $0x4] sm:$0xf]
      %v216 = vld [vmem:[%s205] sm:$0xf]
      %v217 = vld [vmem:[%s205 + $0x4] sm:$0xf]
      %v220 = vunpack.c.l.b16 %v212
      %v221 = vunpack.c.l.b16 %v213
      %v222 = vpack.c.b16 %v221, %v220
      %v225 = vunpack.c.l.b16 %v214
      %v226 = vunpack.c.l.b16 %v215
      %v227 = vpack.c.b16 %v226, %v225
      %vm228 = vcmask 64512
      %v230 = vsel %vm228, %v222, 0
      %v233 = vsel %vm228, %v227, 0
      %235 = vmatpush.bf16.xpose.msra.mxu0 0
      %236 = vmatpush.bf16.xpose.msra.mxu0 0
      %237 = vmatpush.bf16.xpose.msra.mxu0 0
      %238 = vmatpush.bf16.xpose.msra.mxu0 0
      %239 = vmatpush.bf16.xpose.msra.mxu0 0
      %240 = vmatpush.bf16.xpose.msra.mxu0 0
      %241 = vmatpush.bf16.xpose.msra.mxu0 0
      %242 = vmatpush.bf16.xpose.msra.mxu0 %v233
      %243 = vmatmul.bf16.gmra.mxu0 %v230
      %v244 = vpop.f32.mrf.mxu0
      %v245 = vadd.f32 0.0, %v244
      %v246 = vpop.f32.mrf.mxu0
      %v247 = vadd.f32 0.0, %v246
      %248 = vdwg.mxu0
      %vm249 = vcmask 130048
      %v250 = vsel %vm249, %v245, -inf
      %251 = vmax.xlane.f32.xlu0 %v250
      %v252 = vpop.xlane.xlu0 %251
      %v253 = vsel %vm249, %v247, -inf
      %254 = vmax.xlane.f32.xlu0 %v253
      %v255 = vpop.xlane.xlu0 %254
      %v256 = vsub.f32 %v245, %v252
      %v257 = vsub.f32 %v247, %v255
      %v258 = vmul.f32 %v256, 1.442695
      %v259 = vpow.pop %v258
      %v260 = vmul.f32 %v257, 1.442695
      %v261 = vpow.pop %v260
      %v262 = vsel %vm249, %v259, 0.0
      %263 = vadd.xlane.f32.xlu0 %v262
      %v264 = vpop.xlane.xlu0 %263
      %v265 = vsel %vm249, %v261, 0.0
      %266 = vadd.xlane.f32.xlu0 %v265
      %v267 = vpop.xlane.xlu0 %266
      %v268 = vrcp.pop %v264
      %v269 = vrcp.pop %v267
      %v270 = vmul.f32 %v259, %v268
      %v271 = vmul.f32 %v261, %v269
      %v272 = vpack.c.bf16 %v271, %v270
      %v275 = vunpack.c.l.b16 %v216
      %v276 = vunpack.c.l.b16 %v217
      %v277 = vpack.c.b16 %v276, %v275
      %v280 = vsel %vm249, %v272, 0
      %282 = vmatpush.bf16.msra.mxu0 0
      %283 = vmatpush.bf16.msra.mxu0 0
      %284 = vmatpush.bf16.msra.mxu0 0
      %285 = vmatpush.bf16.msra.mxu0 0
      %286 = vmatpush.bf16.msra.mxu0 0
      %287 = vmatpush.bf16.msra.mxu0 0
      %288 = vmatpush.bf16.msra.mxu0 0
      %289 = vmatpush.bf16.msra.mxu0 %v277
      %290 = vmatmul.bf16.gmra.mxu0 %v280
      %v291 = vpop.f32.mrf.mxu0
      %v292 = vadd.f32 0.0, %v291
      %v293 = vpop.f32.mrf.mxu0
      %v294 = vadd.f32 0.0, %v293
      %295 = vdwg.mxu0
      %v296 = vpack.c.bf16 %v292, %v292
      %v297 = vpack.c.bf16 %v294, %v294
      %vm298 = vcmask 60416
      %299 = vst.msk [vmem:[%s210] sm:$0xf] %vm298, %v296
      %300 = vst.msk [vmem:[%s210 + $0x4] sm:$0xf] %vm298, %v297
      %301 = vrot.lane.b32.xlu0 %v222, 120
      %v302 = vpop.permute.xlu0 %301
      %303 = vrot.lane.b32.xlu0 %v227, 120
      %v304 = vpop.permute.xlu0 %303
      %v306 = vsel %vm228, %v302, 0
      %v309 = vsel %vm228, %v304, 0
      %311 = vmatpush.bf16.xpose.msra.mxu0 0
      %312 = vmatpush.bf16.xpose.msra.mxu0 0
      %313 = vmatpush.bf16.xpose.msra.mxu0 0
      %314 = vmatpush.bf16.xpose.msra.mxu0 0
      %315 = vmatpush.bf16.xpose.msra.mxu0 0
      %316 = vmatpush.bf16.xpose.msra.mxu0 0
      %317 = vmatpush.bf16.xpose.msra.mxu0 0
      %318 = vmatpush.bf16.xpose.msra.mxu0 %v309
      %319 = vmatmul.bf16.gmra.mxu0 %v306
      %v320 = vpop.f32.mrf.mxu0
      %v321 = vadd.f32 0.0, %v320
      %v322 = vpop.f32.mrf.mxu0
      %v323 = vadd.f32 0.0, %v322
      %324 = vdwg.mxu0
      %v325 = vsel %vm249, %v321, -inf
      %326 = vmax.xlane.f32.xlu0 %v325
      %v327 = vpop.xlane.xlu0 %326
      %v328 = vsel %vm249, %v323, -inf
      %329 = vmax.xlane.f32.xlu0 %v328
      %v330 = vpop.xlane.xlu0 %329
      %v331 = vsub.f32 %v321, %v327
      %v332 = vsub.f32 %v323, %v330
      %v333 = vmul.f32 %v331, 1.442695
      %v334 = vpow.pop %v333
      %v335 = vmul.f32 %v332, 1.442695
      %v336 = vpow.pop %v335
      %v337 = vsel %vm249, %v334, 0.0
      %338 = vadd.xlane.f32.xlu0 %v337
      %v339 = vpop.xlane.xlu0 %338
      %v340 = vsel %vm249, %v336, 0.0
      %341 = vadd.xlane.f32.xlu0 %v340
      %v342 = vpop.xlane.xlu0 %341
      %v343 = vrcp.pop %v339
      %v344 = vrcp.pop %v342
      %v345 = vmul.f32 %v334, %v343
      %v346 = vmul.f32 %v336, %v344
      %v347 = vpack.c.bf16 %v346, %v345
      %348 = vrot.lane.b32.xlu0 %v277, 120
      %v349 = vpop.permute.xlu0 %348
      %v352 = vsel %vm249, %v347, 0
      %354 = vmatpush.bf16.msra.mxu0 0
      %355 = vmatpush.bf16.msra.mxu0 0
      %356 = vmatpush.bf16.msra.mxu0 0
      %357 = vmatpush.bf16.msra.mxu0 0
      %358 = vmatpush.bf16.msra.mxu0 0
      %359 = vmatpush.bf16.msra.mxu0 0
      %360 = vmatpush.bf16.msra.mxu0 0
      %361 = vmatpush.bf16.msra.mxu0 %v349
      %362 = vmatmul.bf16.gmra.mxu0 %v352
      %v363 = vpop.f32.mrf.mxu0
      %v364 = vadd.f32 0.0, %v363
      %v365 = vpop.f32.mrf.mxu0
      %v366 = vadd.f32 0.0, %v365
      %367 = vdwg.mxu0
      %v368 = vpack.c.bf16 %v364, %v364
      %v369 = vpack.c.bf16 %v366, %v366
      %372 = vrot.lane.b32.xlu0 %v368, 8
      %v373 = vpop.permute.xlu0 %372
      %374 = vrot.lane.b32.xlu0 %v369, 8
      %v375 = vpop.permute.xlu0 %374
      %vm378 = vcmask 126016
      %379 = vst.msk [vmem:[%s210] sm:$0xf] %vm378, %v373
      %380 = vst.msk [vmem:[%s210 + $0x4] sm:$0xf] %vm378, %v375
      %381 = vrot.lane.b32.xlu0 %v222, 112
      %v382 = vpop.permute.xlu0 %381
      %383 = vrot.lane.b32.xlu0 %v227, 112
      %v384 = vpop.permute.xlu0 %383
      %v386 = vsel %vm228, %v382, 0
      %v389 = vsel %vm228, %v384, 0
      %391 = vmatpush.bf16.xpose.msra.mxu0 0
      %392 = vmatpush.bf16.xpose.msra.mxu0 0
      %393 = vmatpush.bf16.xpose.msra.mxu0 0
      %394 = vmatpush.bf16.xpose.msra.mxu0 0
      %395 = vmatpush.bf16.xpose.msra.mxu0 0
      %396 = vmatpush.bf16.xpose.msra.mxu0 0
      %397 = vmatpush.bf16.xpose.msra.mxu0 0
      %398 = vmatpush.bf16.xpose.msra.mxu0 %v389
      %399 = vmatmul.bf16.gmra.mxu0 %v386
      %v400 = vpop.f32.mrf.mxu0
      %v401 = vadd.f32 0.0, %v400
      %v402 = vpop.f32.mrf.mxu0
      %v403 = vadd.f32 0.0, %v402
      %404 = vdwg.mxu0
      %v405 = vsel %vm249, %v401, -inf
      %406 = vmax.xlane.f32.xlu0 %v405
      %v407 = vpop.xlane.xlu0 %406
      %v408 = vsel %vm249, %v403, -inf
      %409 = vmax.xlane.f32.xlu0 %v408
      %v410 = vpop.xlane.xlu0 %409
      %v411 = vsub.f32 %v401, %v407
      %v412 = vsub.f32 %v403, %v410
      %v413 = vmul.f32 %v411, 1.442695
      %v414 = vpow.pop %v413
      %v415 = vmul.f32 %v412, 1.442695
      %v416 = vpow.pop %v415
      %v417 = vsel %vm249, %v414, 0.0
      %418 = vadd.xlane.f32.xlu0 %v417
      %v419 = vpop.xlane.xlu0 %418
      %v420 = vsel %vm249, %v416, 0.0
      %421 = vadd.xlane.f32.xlu0 %v420
      %v422 = vpop.xlane.xlu0 %421
      %v423 = vrcp.pop %v419
      %v424 = vrcp.pop %v422
      %v425 = vmul.f32 %v414, %v423
      %v426 = vmul.f32 %v416, %v424
      %v427 = vpack.c.bf16 %v426, %v425
      %428 = vrot.lane.b32.xlu0 %v277, 112
      %v429 = vpop.permute.xlu0 %428
      %v432 = vsel %vm249, %v427, 0
      %434 = vmatpush.bf16.msra.mxu0 0
      %435 = vmatpush.bf16.msra.mxu0 0
      %436 = vmatpush.bf16.msra.mxu0 0
      %437 = vmatpush.bf16.msra.mxu0 0
      %438 = vmatpush.bf16.msra.mxu0 0
      %439 = vmatpush.bf16.msra.mxu0 0
      %440 = vmatpush.bf16.msra.mxu0 0
      %441 = vmatpush.bf16.msra.mxu0 %v429
      %442 = vmatmul.bf16.gmra.mxu0 %v432
      %v443 = vpop.f32.mrf.mxu0
      %v444 = vadd.f32 0.0, %v443
      %v445 = vpop.f32.mrf.mxu0
      %v446 = vadd.f32 0.0, %v445
      %447 = vdwg.mxu0
      %v448 = vpack.c.bf16 %v444, %v444
      %v449 = vpack.c.bf16 %v446, %v446
      %452 = vrot.lane.b32.xlu0 %v448, 16
      %v453 = vpop.permute.xlu0 %452
      %454 = vrot.lane.b32.xlu0 %v449, 16
      %v455 = vpop.permute.xlu0 %454
      %vm458 = vcmask 191616
      %459 = vst.msk [vmem:[%s210] sm:$0xf] %vm458, %v453
      %460 = vst.msk [vmem:[%s210 + $0x4] sm:$0xf] %vm458, %v455
      %461 = vrot.lane.b32.xlu0 %v222, 104
      %v462 = vpop.permute.xlu0 %461
      %463 = vrot.lane.b32.xlu0 %v227, 104
      %v464 = vpop.permute.xlu0 %463
      %v466 = vsel %vm228, %v462, 0
      %v469 = vsel %vm228, %v464, 0
      %471 = vmatpush.bf16.xpose.msra.mxu0 0
      %472 = vmatpush.bf16.xpose.msra.mxu0 0
      %473 = vmatpush.bf16.xpose.msra.mxu0 0
      %474 = vmatpush.bf16.xpose.msra.mxu0 0
      %475 = vmatpush.bf16.xpose.msra.mxu0 0
      %476 = vmatpush.bf16.xpose.msra.mxu0 0
      %477 = vmatpush.bf16.xpose.msra.mxu0 0
      %478 = vmatpush.bf16.xpose.msra.mxu0 %v469
      %479 = vmatmul.bf16.gmra.mxu0 %v466
      %v480 = vpop.f32.mrf.mxu0
      %v481 = vadd.f32 0.0, %v480
      %v482 = vpop.f32.mrf.mxu0
      %v483 = vadd.f32 0.0, %v482
      %484 = vdwg.mxu0
      %v485 = vsel %vm249, %v481, -inf
      %486 = vmax.xlane.f32.xlu0 %v485
      %v487 = vpop.xlane.xlu0 %486
      %v488 = vsel %vm249, %v483, -inf
      %489 = vmax.xlane.f32.xlu0 %v488
      %v490 = vpop.xlane.xlu0 %489
      %v491 = vsub.f32 %v481, %v487
      %v492 = vsub.f32 %v483, %v490
      %v493 = vmul.f32 %v491, 1.442695
      %v494 = vpow.pop %v493
      %v495 = vmul.f32 %v492, 1.442695
      %v496 = vpow.pop %v495
      %v497 = vsel %vm249, %v494, 0.0
      %498 = vadd.xlane.f32.xlu0 %v497
      %v499 = vpop.xlane.xlu0 %498
      %v500 = vsel %vm249, %v496, 0.0
      %501 = vadd.xlane.f32.xlu0 %v500
      %v502 = vpop.xlane.xlu0 %501
      %v503 = vrcp.pop %v499
      %v504 = vrcp.pop %v502
      %v505 = vmul.f32 %v494, %v503
      %v506 = vmul.f32 %v496, %v504
      %v507 = vpack.c.bf16 %v506, %v505
      %508 = vrot.lane.b32.xlu0 %v277, 104
      %v509 = vpop.permute.xlu0 %508
      %v512 = vsel %vm249, %v507, 0
      %514 = vmatpush.bf16.msra.mxu0 0
      %515 = vmatpush.bf16.msra.mxu0 0
      %516 = vmatpush.bf16.msra.mxu0 0
      %517 = vmatpush.bf16.msra.mxu0 0
      %518 = vmatpush.bf16.msra.mxu0 0
      %519 = vmatpush.bf16.msra.mxu0 0
      %520 = vmatpush.bf16.msra.mxu0 0
      %521 = vmatpush.bf16.msra.mxu0 %v509
      %522 = vmatmul.bf16.gmra.mxu0 %v512
      %v523 = vpop.f32.mrf.mxu0
      %v524 = vadd.f32 0.0, %v523
      %v525 = vpop.f32.mrf.mxu0
      %v526 = vadd.f32 0.0, %v525
      %527 = vdwg.mxu0
      %v528 = vpack.c.bf16 %v524, %v524
      %v529 = vpack.c.bf16 %v526, %v526
      %532 = vrot.lane.b32.xlu0 %v528, 24
      %v533 = vpop.permute.xlu0 %532
      %534 = vrot.lane.b32.xlu0 %v529, 24
      %v535 = vpop.permute.xlu0 %534
      %vm538 = vcmask 257216
      %539 = vst.msk [vmem:[%s210] sm:$0xf] %vm538, %v533
      %540 = vst.msk [vmem:[%s210 + $0x4] sm:$0xf] %vm538, %v535
      %p541 = scmp.lt.s32.totalorder %s14, 1
      %s542 = scalar_select %p541, %s14, 1
      %s543 = smul.addr %s542, 2
      %s544 = smul.addr %s543, 4
      %s545 = scalar_lea.vmem %s3, %s544
      // Predicated region
      $region33: #{motip_forward.28} parent=31 // pred_check
        %p546 = pneg %p110
      $region34: #{motip_forward.28} parent=31 // pred_check_branch
        %548 = sbr.rel (%p546) target = $region36
      $region35: #{motip_forward.28} parent=31 // pred_region
        _
      $region36: #{motip_forward.28} parent=31 // pred_fallthru
        _
    $region32: #{motip_forward.28} parent=5 // pred_fallthru
      _
    %p549 = scmp.le.s32.totalorder 2, %s9
    // Predicated region
    $region37: #{motip_forward.28} parent=5 // pred_check
      %p550 = pneg %p549
    $region38: #{motip_forward.28} parent=5 // pred_check_branch
      %552 = sbr.rel (%p550) target = $region40
    $region39: #{motip_forward.28} parent=5 // pred_region
      %s553 = ssub.s32 %s9, 2
      // Predicated region
      $region41: #{motip_forward.28} parent=39 // pred_check
        %p554 = pneg %p116
      $region42: #{motip_forward.28} parent=39 // pred_check_branch
        %556 = sbr.rel (%p554) target = $region44
      $region43: #{motip_forward.28} parent=39 // pred_region
        %p557 = scmp.lt.s32.totalorder %s15, 1
        %s558 = scalar_select %p557, %s15, 1
        %s559 = smul.addr %s558, 2
        %s560 = smul.addr %s559, 4
        %s561 = scalar_lea.vmem %s3, %s560
      $region44: #{motip_forward.28} parent=39 // pred_fallthru
        _
    $region40: #{motip_forward.28} parent=5 // pred_fallthru
      _
  $region6: #{motip_forward.28} parent=0 // loop_footer
    %s13 = sadd.s32 1, %s9
  $region7: #{motip_forward.28} parent=0 // loop_footer_branch
    %8 = sbr.rel target = $region3
  $region8: #{motip_forward.28} parent=0 // loop_exit
    _

// kernel: motip_forward.29
$region0: #{motip_forward.29}
  #allocation0 [shape = 'u32[]', space=smem, size = 0x4, offset = 0x4, fixed_abs, tag = 'smem constant byte address 0x4 - core index']
  #allocation1 [shape = 'u32[72,128]{1,0:T(1,128)}', space=vmem, size = 0x9000, scoped, tag = 'internal scratch']
  %s0 = inlined_call_operand.vmem [shape: bf16[32,32], index: 0, kind: input, shape index: {}]
  %s1 = inlined_call_operand.vmem [shape: bf16[32,32], index: 1, kind: input, shape index: {}]
  %s2 = inlined_call_operand.vmem [shape: bf16[32,32], index: 2, kind: input, shape index: {}]
  %s3 = inlined_call_operand.vmem [shape: f32[1,32], index: 3, kind: input, shape index: {}]
  %s4 = inlined_call_operand.vmem [shape: f32[1,32], index: 4, kind: input, shape index: {}]
  %s5 = inlined_call_operand.vmem [shape: f32[1,32], index: 5, kind: input, shape index: {}]
  %s6 = inlined_call_operand.vmem [shape: bf16[32,32], index: 6, kind: output, shape index: {}]
  %s7 = sld [smem:[#allocation0]]
  $region34: #{motip_forward.29} parent=0
    _
  %s9 = ssub.s32 1, %s7
  %s10 = scalar_select 0, %s9, %s7
  // Predicated region
  $region2: #{motip_forward.29} parent=0 // pred_check
    _
  $region3: #{motip_forward.29} parent=0 // pred_check_branch
    %12 = sbr.rel (0) target = $region5
  $region4: #{motip_forward.29} parent=0 // pred_region
    _
  $region5: #{motip_forward.29} parent=0 // pred_fallthru
    _
  // Predicated region
  $region6: #{motip_forward.29} parent=0 // pred_check
    _
  $region7: #{motip_forward.29} parent=0 // pred_check_branch
    %14 = sbr.rel (0) target = $region9
  $region8: #{motip_forward.29} parent=0 // pred_region
    _
  $region9: #{motip_forward.29} parent=0 // pred_fallthru
    _
  // Predicated region
  $region10: #{motip_forward.29} parent=0 // pred_check
    _
  $region11: #{motip_forward.29} parent=0 // pred_check_branch
    %16 = sbr.rel (0) target = $region13
  $region12: #{motip_forward.29} parent=0 // pred_region
    _
  $region13: #{motip_forward.29} parent=0 // pred_fallthru
    _
  // Predicated region
  $region14: #{motip_forward.29} parent=0 // pred_check
    _
  $region15: #{motip_forward.29} parent=0 // pred_check_branch
    %18 = sbr.rel (0) target = $region17
  $region16: #{motip_forward.29} parent=0 // pred_region
    _
  $region17: #{motip_forward.29} parent=0 // pred_fallthru
    _
  // Predicated region
  $region18: #{motip_forward.29} parent=0 // pred_check
    _
  $region19: #{motip_forward.29} parent=0 // pred_check_branch
    %20 = sbr.rel (0) target = $region21
  $region20: #{motip_forward.29} parent=0 // pred_region
    _
  $region21: #{motip_forward.29} parent=0 // pred_fallthru
    _
  // Predicated region
  $region22: #{motip_forward.29} parent=0 // pred_check
    _
  $region23: #{motip_forward.29} parent=0 // pred_check_branch
    %22 = sbr.rel (0) target = $region25
  $region24: #{motip_forward.29} parent=0 // pred_region
    _
  $region25: #{motip_forward.29} parent=0 // pred_fallthru
    _
  %v24 = vld [vmem:[%s0] sm:$0xf]
  %v25 = vld [vmem:[%s0 + $0x4] sm:$0xf]
  %v26 = vld [vmem:[%s0 + $0x8] sm:$0xf]
  %v27 = vld [vmem:[%s0 + $0xc] sm:$0xf]
  %v28 = vld [vmem:[%s2] sm:$0xf]
  %v29 = vld [vmem:[%s2 + $0x4] sm:$0xf]
  %v30 = vld [vmem:[%s2 + $0x8] sm:$0xf]
  %v31 = vld [vmem:[%s2 + $0xc] sm:$0xf]
  %v32 = vld [vmem:[%s3] sm:$0x1]
  %v34 = vperm.slane %v32, 0
  %v40 = vunpack.c.l.b16 %v24
  %v41 = vunpack.c.l.b16 %v25
  %v42 = vunpack.c.l.b16 %v26
  %v43 = vunpack.c.l.b16 %v27
  %v44 = vpack.c.b16 %v41, %v40
  %v45 = vpack.c.b16 %v43, %v42
  %v50 = vunpack.c.l.b16 %v28
  %v51 = vunpack.c.l.b16 %v29
  %v52 = vunpack.c.l.b16 %v30
  %v53 = vunpack.c.l.b16 %v31
  %v54 = vpack.c.b16 %v51, %v50
  %v55 = vpack.c.b16 %v53, %v52
  %vm58 = vcmask 261120
  %v60 = vsel %vm58, %v44, 0
  %v63 = vsel %vm58, %v45, 0
  %65 = vmatpush.bf16.msra.mxu0 0
  %66 = vmatpush.bf16.msra.mxu0 0
  %67 = vmatpush.bf16.msra.mxu0 0
  %68 = vmatpush.bf16.msra.mxu0 0
  %69 = vmatpush.bf16.msra.mxu0 0
  %70 = vmatpush.bf16.msra.mxu0 0
  %71 = vmatpush.bf16.msra.mxu0 %v55
  %72 = vmatpush.bf16.msra.mxu0 %v54
  %73 = vmatmul.bf16.gmra.mxu0 %v60
  %v74 = vpop.f32.mrf.mxu0
  %v75 = vadd.f32 %v34, %v74
  %v76 = vpop.f32.mrf.mxu0
  %v77 = vadd.f32 %v34, %v76
  %78 = vmatmul.bf16.gmra.mxu0 %v63
  %v79 = vpop.f32.mrf.mxu0
  %v80 = vadd.f32 %v34, %v79
  %v81 = vpop.f32.mrf.mxu0
  %v82 = vadd.f32 %v34, %v81
  %83 = vdwg.mxu0
  %v84 = vld [vmem:[%s1] sm:$0xf]
  %v85 = vld [vmem:[%s1 + $0x4] sm:$0xf]
  %v86 = vld [vmem:[%s1 + $0x8] sm:$0xf]
  %v87 = vld [vmem:[%s1 + $0xc] sm:$0xf]
  %v88 = vunpack.c.l.bf16 %v84
  %v89 = vunpack.c.l.bf16 %v85
  %v90 = vunpack.c.l.bf16 %v86
  %v91 = vunpack.c.l.bf16 %v87
  %v92 = vadd.f32 %v75, %v88
  %v93 = vadd.f32 %v77, %v89
  %v94 = vadd.f32 %v80, %v90
  %v95 = vadd.f32 %v82, %v91
  %v96 = vsel %vm58, %v92, 0.0
  %97 = vadd.xlane.f32.xlu0 %v96
  %v98 = vpop.xlane.xlu0 %97
  %v99 = vsel %vm58, %v93, 0.0
  %100 = vadd.xlane.f32.xlu0 %v99
  %v101 = vpop.xlane.xlu0 %100
  %v102 = vsel %vm58, %v94, 0.0
  %103 = vadd.xlane.f32.xlu0 %v102
  %v104 = vpop.xlane.xlu0 %103
  %v105 = vsel %vm58, %v95, 0.0
  %106 = vadd.xlane.f32.xlu0 %v105
  %v107 = vpop.xlane.xlu0 %106
  %v108 = vrcp.pop 32.0
  %v109 = vmul.f32 32.0, %v108
  %v110 = vsub.f32 1.0, %v109
  %v111 = vmul.f32 %v108, %v110
  %v112 = vadd.f32 %v108, %v111
  %vm113 = vweird.f32 %v108
  %v114 = vsel %vm113, %v108, %v112
  %v115 = vmul.f32 %v98, %v114
  %v116 = vmul.f32 %v101, %v114
  %v117 = vmul.f32 %v104, %v114
  %v118 = vmul.f32 %v107, %v114
  %v119 = vsub.f32 %v92, %v115
  %v120 = vsub.f32 %v93, %v116
  %v121 = vsub.f32 %v94, %v117
  %v122 = vsub.f32 %v95, %v118
  %v123 = vmul.f32 %v119, %v119
  %v124 = vmul.f32 %v120, %v120
  %v125 = vmul.f32 %v121, %v121
  %v126 = vmul.f32 %v122, %v122
  %v127 = vsel %vm58, %v123, 0.0
  %128 = vadd.xlane.f32.xlu0 %v127
  %v129 = vpop.xlane.xlu0 %128
  %v130 = vsel %vm58, %v124, 0.0
  %131 = vadd.xlane.f32.xlu0 %v130
  %v132 = vpop.xlane.xlu0 %131
  %v133 = vsel %vm58, %v125, 0.0
  %134 = vadd.xlane.f32.xlu0 %v133
  %v135 = vpop.xlane.xlu0 %134
  %v136 = vsel %vm58, %v126, 0.0
  %137 = vadd.xlane.f32.xlu0 %v136
  %v138 = vpop.xlane.xlu0 %137
  %v139 = vmul.f32 %v129, %v114
  %v140 = vmul.f32 %v132, %v114
  %v141 = vmul.f32 %v135, %v114
  %v142 = vmul.f32 %v138, %v114
  %v143 = vadd.f32 %v139, 1e-05
  %v144 = vadd.f32 %v140, 1e-05
  %v145 = vadd.f32 %v141, 1e-05
  %v146 = vadd.f32 %v142, 1e-05
  %v147 = vrsqrt.pop %v143
  %v148 = vmul.f32 %v147, %v143
  %v149 = vmul.f32 %v148, %v147
  %v150 = vmul.f32 0.5, %v149
  %v151 = vsub.f32 1.5, %v150
  %v152 = vmul.f32 %v147, %v151
  %vm153 = vweird.f32 %v143
  %vm154 = vweird.f32 %v147
  %vm155 = vmor %vm153, %vm154
  %v156 = vsel %vm155, %v147, %v152
  %v157 = vrsqrt.pop %v144
  %v158 = vmul.f32 %v157, %v144
  %v159 = vmul.f32 %v158, %v157
  %v160 = vmul.f32 0.5, %v159
  %v161 = vsub.f32 1.5, %v160
  %v162 = vmul.f32 %v157, %v161
  %vm163 = vweird.f32 %v144
  %vm164 = vweird.f32 %v157
  %vm165 = vmor %vm163, %vm164
  %v166 = vsel %vm165, %v157, %v162
  %v167 = vrsqrt.pop %v145
  %v168 = vmul.f32 %v167, %v145
  %v169 = vmul.f32 %v168, %v167
  %v170 = vmul.f32 0.5, %v169
  %v171 = vsub.f32 1.5, %v170
  %v172 = vmul.f32 %v167, %v171
  %vm173 = vweird.f32 %v145
  %vm174 = vweird.f32 %v167
  %vm175 = vmor %vm173, %vm174
  %v176 = vsel %vm175, %v167, %v172
  %v177 = vrsqrt.pop %v146
  %v178 = vmul.f32 %v177, %v146
  %v179 = vmul.f32 %v178, %v177
  %v180 = vmul.f32 0.5, %v179
  %v181 = vsub.f32 1.5, %v180
  %v182 = vmul.f32 %v177, %v181
  %vm183 = vweird.f32 %v146
  %vm184 = vweird.f32 %v177
  %vm185 = vmor %vm183, %vm184
  %v186 = vsel %vm185, %v177, %v182
  %v187 = vmul.f32 %v119, %v156
  %v188 = vmul.f32 %v120, %v166
  %v189 = vmul.f32 %v121, %v176
  %v190 = vmul.f32 %v122, %v186
  %v191 = vld [vmem:[%s4] sm:$0x1]
  %v193 = vperm.slane %v191, 0
  %v195 = vmul.f32 %v187, %v193
  %v196 = vmul.f32 %v188, %v193
  %v197 = vmul.f32 %v189, %v193
  %v198 = vmul.f32 %v190, %v193
  %v199 = vld [vmem:[%s5] sm:$0x1]
  %v201 = vperm.slane %v199, 0
  %v203 = vadd.f32 %v195, %v201
  %v204 = vadd.f32 %v196, %v201
  %v205 = vadd.f32 %v197, %v201
  %v206 = vadd.f32 %v198, %v201
  %v207 = vpack.c.bf16 %v203, %v203
  %v208 = vpack.c.bf16 %v204, %v204
  %v209 = vpack.c.bf16 %v205, %v205
  %v210 = vpack.c.bf16 %v206, %v206
  %vm211 = vcmask 257024
  %212 = vst.msk [vmem:[%s6] sm:$0xf] %vm211, %v207
  %213 = vst.msk [vmem:[%s6 + $0x4] sm:$0xf] %vm211, %v208
  %214 = vst.msk [vmem:[%s6 + $0x8] sm:$0xf] %vm211, %v209
  %215 = vst.msk [vmem:[%s6 + $0xc] sm:$0xf] %vm211, %v210
  // Predicated region
  $region26: #{motip_forward.29} parent=0 // pred_check
    _
  $region27: #{motip_forward.29} parent=0 // pred_check_branch
    %217 = sbr.rel (0) target = $region29
  $region28: #{motip_forward.29} parent=0 // pred_region
    _
  $region29: #{motip_forward.29} parent=0 // pred_fallthru
    _
  // Predicated region
  $region30: #{motip_forward.29} parent=0 // pred_check
    _
  $region31: #{motip_forward.29} parent=0 // pred_check_branch
    %219 = sbr.rel (0) target = $region33
  $region32: #{motip_forward.29} parent=0 // pred_region
    _
  $region33: #{motip_forward.29} parent=0 // pred_fallthru
    _

// kernel: motip_forward.30
$region0: #{motip_forward.30}
  #allocation0 [shape = 'u32[]', space=smem, size = 0x4, offset = 0x4, fixed_abs, tag = 'smem constant byte address 0x4 - core index']
  #allocation1 [shape = 'u32[72,128]{1,0:T(1,128)}', space=vmem, size = 0x9000, scoped, tag = 'internal scratch']
  %s0 = inlined_call_operand.vmem [shape: bf16[32,32], index: 0, kind: input, shape index: {}]
  %s1 = inlined_call_operand.vmem [shape: bf16[32,64], index: 1, kind: input, shape index: {}]
  %s2 = inlined_call_operand.vmem [shape: f32[1,64], index: 2, kind: input, shape index: {}]
  %s3 = inlined_call_operand.vmem [shape: bf16[64,32], index: 3, kind: input, shape index: {}]
  %s4 = inlined_call_operand.vmem [shape: f32[1,32], index: 4, kind: input, shape index: {}]
  %s5 = inlined_call_operand.vmem [shape: f32[1,32], index: 5, kind: input, shape index: {}]
  %s6 = inlined_call_operand.vmem [shape: f32[1,32], index: 6, kind: input, shape index: {}]
  %s7 = inlined_call_operand.vmem [shape: bf16[32,32], index: 7, kind: output, shape index: {}]
  %s8 = sld [smem:[#allocation0]]
  $region38: #{motip_forward.30} parent=0
    _
  %s10 = ssub.s32 1, %s8
  %s11 = scalar_select 0, %s10, %s8
  // Predicated region
  $region2: #{motip_forward.30} parent=0 // pred_check
    _
  $region3: #{motip_forward.30} parent=0 // pred_check_branch
    %13 = sbr.rel (0) target = $region5
  $region4: #{motip_forward.30} parent=0 // pred_region
    _
  $region5: #{motip_forward.30} parent=0 // pred_fallthru
    _
  // Predicated region
  $region6: #{motip_forward.30} parent=0 // pred_check
    _
  $region7: #{motip_forward.30} parent=0 // pred_check_branch
    %15 = sbr.rel (0) target = $region9
  $region8: #{motip_forward.30} parent=0 // pred_region
    _
  $region9: #{motip_forward.30} parent=0 // pred_fallthru
    _
  // Predicated region
  $region10: #{motip_forward.30} parent=0 // pred_check
    _
  $region11: #{motip_forward.30} parent=0 // pred_check_branch
    %17 = sbr.rel (0) target = $region13
  $region12: #{motip_forward.30} parent=0 // pred_region
    _
  $region13: #{motip_forward.30} parent=0 // pred_fallthru
    _
  // Predicated region
  $region14: #{motip_forward.30} parent=0 // pred_check
    _
  $region15: #{motip_forward.30} parent=0 // pred_check_branch
    %19 = sbr.rel (0) target = $region17
  $region16: #{motip_forward.30} parent=0 // pred_region
    _
  $region17: #{motip_forward.30} parent=0 // pred_fallthru
    _
  // Predicated region
  $region18: #{motip_forward.30} parent=0 // pred_check
    _
  $region19: #{motip_forward.30} parent=0 // pred_check_branch
    %21 = sbr.rel (0) target = $region21
  $region20: #{motip_forward.30} parent=0 // pred_region
    _
  $region21: #{motip_forward.30} parent=0 // pred_fallthru
    _
  // Predicated region
  $region22: #{motip_forward.30} parent=0 // pred_check
    _
  $region23: #{motip_forward.30} parent=0 // pred_check_branch
    %23 = sbr.rel (0) target = $region25
  $region24: #{motip_forward.30} parent=0 // pred_region
    _
  $region25: #{motip_forward.30} parent=0 // pred_fallthru
    _
  // Predicated region
  $region26: #{motip_forward.30} parent=0 // pred_check
    _
  $region27: #{motip_forward.30} parent=0 // pred_check_branch
    %25 = sbr.rel (0) target = $region29
  $region28: #{motip_forward.30} parent=0 // pred_region
    _
  $region29: #{motip_forward.30} parent=0 // pred_fallthru
    _
  %v27 = vld [vmem:[%s0] sm:$0xf]
  %v28 = vld [vmem:[%s0 + $0x4] sm:$0xf]
  %v29 = vld [vmem:[%s0 + $0x8] sm:$0xf]
  %v30 = vld [vmem:[%s0 + $0xc] sm:$0xf]
  %v31 = vld [vmem:[%s1] sm:$0xf]
  %v32 = vld [vmem:[%s1 + $0x4] sm:$0xf]
  %v33 = vld [vmem:[%s1 + $0x8] sm:$0xf]
  %v34 = vld [vmem:[%s1 + $0xc] sm:$0xf]
  %v35 = vld [vmem:[%s2] sm:$0x1]
  %v37 = vperm.slane %v35, 0
  %v43 = vunpack.c.l.b16 %v27
  %v44 = vunpack.c.l.b16 %v28
  %v45 = vunpack.c.l.b16 %v29
  %v46 = vunpack.c.l.b16 %v30
  %v47 = vpack.c.b16 %v44, %v43
  %v48 = vpack.c.b16 %v46, %v45
  %v53 = vunpack.c.l.b16 %v31
  %v54 = vunpack.c.l.b16 %v32
  %v55 = vunpack.c.l.b16 %v33
  %v56 = vunpack.c.l.b16 %v34
  %v57 = vpack.c.b16 %v54, %v53
  %v58 = vpack.c.b16 %v56, %v55
  %vm61 = vcmask 261120
  %v63 = vsel %vm61, %v47, 0
  %v66 = vsel %vm61, %v48, 0
  %68 = vmatpush.bf16.msra.mxu0 0
  %69 = vmatpush.bf16.msra.mxu0 0
  %70 = vmatpush.bf16.msra.mxu0 0
  %71 = vmatpush.bf16.msra.mxu0 0
  %72 = vmatpush.bf16.msra.mxu0 0
  %73 = vmatpush.bf16.msra.mxu0 0
  %74 = vmatpush.bf16.msra.mxu0 %v58
  %75 = vmatpush.bf16.msra.mxu0 %v57
  %76 = vmatmul.bf16.gmra.mxu0 %v63
  %v77 = vpop.f32.mrf.mxu0
  %v78 = vadd.f32 %v37, %v77
  %v79 = vpop.f32.mrf.mxu0
  %v80 = vadd.f32 %v37, %v79
  %81 = vmatmul.bf16.gmra.mxu0 %v66
  %v82 = vpop.f32.mrf.mxu0
  %v83 = vadd.f32 %v37, %v82
  %v84 = vpop.f32.mrf.mxu0
  %v85 = vadd.f32 %v37, %v84
  %86 = vdwg.mxu0
  %v87 = vmax.f32 %v78, 0.0
  %v88 = vmax.f32 %v80, 0.0
  %v89 = vmax.f32 %v83, 0.0
  %v90 = vmax.f32 %v85, 0.0
  %v91 = vpack.c.bf16 %v88, %v87
  %v92 = vpack.c.bf16 %v90, %v89
  %v93 = vld [vmem:[%s3] sm:$0xf]
  %v94 = vld [vmem:[%s3 + $0x4] sm:$0xf]
  %v95 = vld [vmem:[%s3 + $0x8] sm:$0xf]
  %v96 = vld [vmem:[%s3 + $0xc] sm:$0xf]
  %v97 = vld [vmem:[%s3 + $0x10] sm:$0xf]
  %v98 = vld [vmem:[%s3 + $0x14] sm:$0xf]
  %v99 = vld [vmem:[%s3 + $0x18] sm:$0xf]
  %v100 = vld [vmem:[%s3 + $0x1c] sm:$0xf]
  %v101 = vld [vmem:[%s4] sm:$0x1]
  %v103 = vperm.slane %v101, 0
  %v113 = vunpack.c.l.b16 %v93
  %v114 = vunpack.c.l.b16 %v94
  %v115 = vunpack.c.l.b16 %v95
  %v116 = vunpack.c.l.b16 %v96
  %v117 = vunpack.c.l.b16 %v97
  %v118 = vunpack.c.l.b16 %v98
  %v119 = vunpack.c.l.b16 %v99
  %v120 = vunpack.c.l.b16 %v100
  %v121 = vpack.c.b16 %v114, %v113
  %v122 = vpack.c.b16 %v116, %v115
  %v123 = vpack.c.b16 %v118, %v117
  %v124 = vpack.c.b16 %v120, %v119
  %vm129 = vcmask 523264
  %v131 = vsel %vm129, %v91, 0
  %v134 = vsel %vm129, %v92, 0
  %136 = vmatpush.bf16.msra.mxu0 0
  %137 = vmatpush.bf16.msra.mxu0 0
  %138 = vmatpush.bf16.msra.mxu0 0
  %139 = vmatpush.bf16.msra.mxu0 0
  %140 = vmatpush.bf16.msra.mxu0 %v124
  %141 = vmatpush.bf16.msra.mxu0 %v123
  %142 = vmatpush.bf16.msra.mxu0 %v122
  %143 = vmatpush.bf16.msra.mxu0 %v121
  %144 = vmatmul.bf16.gmra.mxu0 %v131
  %v145 = vpop.f32.mrf.mxu0
  %v146 = vadd.f32 %v103, %v145
  %v147 = vpop.f32.mrf.mxu0
  %v148 = vadd.f32 %v103, %v147
  %149 = vmatmul.bf16.gmra.mxu0 %v134
  %v150 = vpop.f32.mrf.mxu0
  %v151 = vadd.f32 %v103, %v150
  %v152 = vpop.f32.mrf.mxu0
  %v153 = vadd.f32 %v103, %v152
  %154 = vdwg.mxu0
  %v155 = vunpack.c.l.bf16 %v27
  %v156 = vunpack.c.l.bf16 %v28
  %v157 = vunpack.c.l.bf16 %v29
  %v158 = vunpack.c.l.bf16 %v30
  %v159 = vadd.f32 %v146, %v155
  %v160 = vadd.f32 %v148, %v156
  %v161 = vadd.f32 %v151, %v157
  %v162 = vadd.f32 %v153, %v158
  %v163 = vsel %vm61, %v159, 0.0
  %164 = vadd.xlane.f32.xlu0 %v163
  %v165 = vpop.xlane.xlu0 %164
  %v166 = vsel %vm61, %v160, 0.0
  %167 = vadd.xlane.f32.xlu0 %v166
  %v168 = vpop.xlane.xlu0 %167
  %v169 = vsel %vm61, %v161, 0.0
  %170 = vadd.xlane.f32.xlu0 %v169
  %v171 = vpop.xlane.xlu0 %170
  %v172 = vsel %vm61, %v162, 0.0
  %173 = vadd.xlane.f32.xlu0 %v172
  %v174 = vpop.xlane.xlu0 %173
  %v175 = vrcp.pop 32.0
  %v176 = vmul.f32 32.0, %v175
  %v177 = vsub.f32 1.0, %v176
  %v178 = vmul.f32 %v175, %v177
  %v179 = vadd.f32 %v175, %v178
  %vm180 = vweird.f32 %v175
  %v181 = vsel %vm180, %v175, %v179
  %v182 = vmul.f32 %v165, %v181
  %v183 = vmul.f32 %v168, %v181
  %v184 = vmul.f32 %v171, %v181
  %v185 = vmul.f32 %v174, %v181
  %v186 = vsub.f32 %v159, %v182
  %v187 = vsub.f32 %v160, %v183
  %v188 = vsub.f32 %v161, %v184
  %v189 = vsub.f32 %v162, %v185
  %v190 = vmul.f32 %v186, %v186
  %v191 = vmul.f32 %v187, %v187
  %v192 = vmul.f32 %v188, %v188
  %v193 = vmul.f32 %v189, %v189
  %v194 = vsel %vm61, %v190, 0.0
  %195 = vadd.xlane.f32.xlu0 %v194
  %v196 = vpop.xlane.xlu0 %195
  %v197 = vsel %vm61, %v191, 0.0
  %198 = vadd.xlane.f32.xlu0 %v197
  %v199 = vpop.xlane.xlu0 %198
  %v200 = vsel %vm61, %v192, 0.0
  %201 = vadd.xlane.f32.xlu0 %v200
  %v202 = vpop.xlane.xlu0 %201
  %v203 = vsel %vm61, %v193, 0.0
  %204 = vadd.xlane.f32.xlu0 %v203
  %v205 = vpop.xlane.xlu0 %204
  %v206 = vmul.f32 %v196, %v181
  %v207 = vmul.f32 %v199, %v181
  %v208 = vmul.f32 %v202, %v181
  %v209 = vmul.f32 %v205, %v181
  %v210 = vadd.f32 %v206, 1e-05
  %v211 = vadd.f32 %v207, 1e-05
  %v212 = vadd.f32 %v208, 1e-05
  %v213 = vadd.f32 %v209, 1e-05
  %v214 = vrsqrt.pop %v210
  %v215 = vmul.f32 %v214, %v210
  %v216 = vmul.f32 %v215, %v214
  %v217 = vmul.f32 0.5, %v216
  %v218 = vsub.f32 1.5, %v217
  %v219 = vmul.f32 %v214, %v218
  %vm220 = vweird.f32 %v210
  %vm221 = vweird.f32 %v214
  %vm222 = vmor %vm220, %vm221
  %v223 = vsel %vm222, %v214, %v219
  %v224 = vrsqrt.pop %v211
  %v225 = vmul.f32 %v224, %v211
  %v226 = vmul.f32 %v225, %v224
  %v227 = vmul.f32 0.5, %v226
  %v228 = vsub.f32 1.5, %v227
  %v229 = vmul.f32 %v224, %v228
  %vm230 = vweird.f32 %v211
  %vm231 = vweird.f32 %v224
  %vm232 = vmor %vm230, %vm231
  %v233 = vsel %vm232, %v224, %v229
  %v234 = vrsqrt.pop %v212
  %v235 = vmul.f32 %v234, %v212
  %v236 = vmul.f32 %v235, %v234
  %v237 = vmul.f32 0.5, %v236
  %v238 = vsub.f32 1.5, %v237
  %v239 = vmul.f32 %v234, %v238
  %vm240 = vweird.f32 %v212
  %vm241 = vweird.f32 %v234
  %vm242 = vmor %vm240, %vm241
  %v243 = vsel %vm242, %v234, %v239
  %v244 = vrsqrt.pop %v213
  %v245 = vmul.f32 %v244, %v213
  %v246 = vmul.f32 %v245, %v244
  %v247 = vmul.f32 0.5, %v246
  %v248 = vsub.f32 1.5, %v247
  %v249 = vmul.f32 %v244, %v248
  %vm250 = vweird.f32 %v213
  %vm251 = vweird.f32 %v244
  %vm252 = vmor %vm250, %vm251
  %v253 = vsel %vm252, %v244, %v249
  %v254 = vmul.f32 %v186, %v223
  %v255 = vmul.f32 %v187, %v233
  %v256 = vmul.f32 %v188, %v243
  %v257 = vmul.f32 %v189, %v253
  %v258 = vld [vmem:[%s5] sm:$0x1]
  %v260 = vperm.slane %v258, 0
  %v262 = vmul.f32 %v254, %v260
  %v263 = vmul.f32 %v255, %v260
  %v264 = vmul.f32 %v256, %v260
  %v265 = vmul.f32 %v257, %v260
  %v266 = vld [vmem:[%s6] sm:$0x1]
  %v268 = vperm.slane %v266, 0
  %v270 = vadd.f32 %v262, %v268
  %v271 = vadd.f32 %v263, %v268
  %v272 = vadd.f32 %v264, %v268
  %v273 = vadd.f32 %v265, %v268
  %v274 = vpack.c.bf16 %v270, %v270
  %v275 = vpack.c.bf16 %v271, %v271
  %v276 = vpack.c.bf16 %v272, %v272
  %v277 = vpack.c.bf16 %v273, %v273
  %vm278 = vcmask 257024
  %279 = vst.msk [vmem:[%s7] sm:$0xf] %vm278, %v274
  %280 = vst.msk [vmem:[%s7 + $0x4] sm:$0xf] %vm278, %v275
  %281 = vst.msk [vmem:[%s7 + $0x8] sm:$0xf] %vm278, %v276
  %282 = vst.msk [vmem:[%s7 + $0xc] sm:$0xf] %vm278, %v277
  // Predicated region
  $region30: #{motip_forward.30} parent=0 // pred_check
    _
  $region31: #{motip_forward.30} parent=0 // pred_check_branch
    %284 = sbr.rel (0) target = $region33
  $region32: #{motip_forward.30} parent=0 // pred_region
    _
  $region33: #{motip_forward.30} parent=0 // pred_fallthru
    _
  // Predicated region
  $region34: #{motip_forward.30} parent=0 // pred_check
    _
  $region35: #{motip_forward.30} parent=0 // pred_check_branch
    %286 = sbr.rel (0) target = $region37
  $region36: #{motip_forward.30} parent=0 // pred_region
    _
  $region37: #{motip_forward.30} parent=0 // pred_fallthru
    _

// kernel: motip_forward.39
$region0: #{motip_forward.39}
  #allocation0 [shape = 'u32[]', space=smem, size = 0x4, offset = 0x4, fixed_abs, tag = 'smem constant byte address 0x4 - core index']
  #allocation1 [shape = 'u32[72,128]{1,0:T(1,128)}', space=vmem, size = 0x9000, scoped, tag = 'internal scratch']
  %s0 = inlined_call_operand.vmem [shape: bf16[32,32], index: 0, kind: input, shape index: {}]
  %s1 = inlined_call_operand.vmem [shape: bf16[32,32], index: 1, kind: input, shape index: {}]
  %s2 = inlined_call_operand.vmem [shape: bf16[32,32], index: 2, kind: input, shape index: {}]
  %s3 = inlined_call_operand.vmem [shape: f32[1,32], index: 3, kind: input, shape index: {}]
  %s4 = inlined_call_operand.vmem [shape: bf16[32,32], index: 4, kind: input, shape index: {}]
  %s5 = inlined_call_operand.hbm [shape: f32[1,32], index: 5, kind: input, shape index: {}]
  %s6 = inlined_call_operand.vmem [shape: bf16[32,32], index: 6, kind: output, shape index: {0}]
  %s7 = inlined_call_operand.vmem [shape: bf16[32,32], index: 7, kind: output, shape index: {1}]
  %8 = xla_tuple %s6, %s7
  %s9 = sld [smem:[#allocation0]]
  $region46: #{motip_forward.39} parent=0
    _
  %s11 = ssub.s32 1, %s9
  %s12 = scalar_select 0, %s11, %s9
  $region1: #{motip_forward.39} parent=0
    #allocation2 [shape = 'u8[512]{0}', space=vmem, size = 0x400, scoped, tag = 'input window, operand 5, single buffered']
    #allocation3 [shape = 's32[1]{0}', space=sflag, size = 0x4, scoped, tag = 'scoped memory for motip_forward.39']
    %13 = vsyncpa [#allocation3], 0
    // Predicated region
    $region2: #{motip_forward.39} parent=1 // pred_check
      _
    $region3: #{motip_forward.39} parent=1 // pred_check_branch
      %15 = sbr.rel (0) target = $region5
    $region4: #{motip_forward.39} parent=1 // pred_region
      _
    $region5: #{motip_forward.39} parent=1 // pred_fallthru
      _
    // Predicated region
    $region6: #{motip_forward.39} parent=1 // pred_check
      _
    $region7: #{motip_forward.39} parent=1 // pred_check_branch
      %17 = sbr.rel (0) target = $region9
    $region8: #{motip_forward.39} parent=1 // pred_region
      _
    $region9: #{motip_forward.39} parent=1 // pred_fallthru
      _
    // Predicated region
    $region10: #{motip_forward.39} parent=1 // pred_check
      _
    $region11: #{motip_forward.39} parent=1 // pred_check_branch
      %19 = sbr.rel (0) target = $region13
    $region12: #{motip_forward.39} parent=1 // pred_region
      _
    $region13: #{motip_forward.39} parent=1 // pred_fallthru
      _
    // Predicated region
    $region14: #{motip_forward.39} parent=1 // pred_check
      _
    $region15: #{motip_forward.39} parent=1 // pred_check_branch
      %21 = sbr.rel (0) target = $region17
    $region16: #{motip_forward.39} parent=1 // pred_region
      _
    $region17: #{motip_forward.39} parent=1 // pred_fallthru
      _
    // Predicated region
    $region18: #{motip_forward.39} parent=1 // pred_check
      _
    $region19: #{motip_forward.39} parent=1 // pred_check_branch
      %23 = sbr.rel (0) target = $region21
    $region20: #{motip_forward.39} parent=1 // pred_region
      _
    $region21: #{motip_forward.39} parent=1 // pred_fallthru
      _
    // Predicated region
    $region22: #{motip_forward.39} parent=1 // pred_check
      _
    $region23: #{motip_forward.39} parent=1 // pred_check_branch
      %25 = sbr.rel (0) target = $region25
    $region24: #{motip_forward.39} parent=1 // pred_region
      %27 = vsyncadd [#allocation3], 0
      %s29 = sshll.u32 %s5, 4
      %s30 = int_to_ptr.hbm [resolvable:$true] %s29
      %s31 = sshll.u32 [#allocation2], 4
      %s32 = int_to_ptr.vmem [resolvable:$true] %s31
      %34 = dma.hbm_to_vmem [thread:$0]  %s30, 16, %s32, [#allocation3]
    $region25: #{motip_forward.39} parent=1 // pred_fallthru
      _
    // Predicated region
    $region26: #{motip_forward.39} parent=1 // pred_check
      _
    $region27: #{motip_forward.39} parent=1 // pred_check_branch
      %36 = sbr.rel (0) target = $region29
    $region28: #{motip_forward.39} parent=1 // pred_region
      %38 = dma.done [#allocation3], 16
    $region29: #{motip_forward.39} parent=1 // pred_fallthru
      _
    %v40 = vld [vmem:[%s0] sm:$0xf]
    %v41 = vld [vmem:[%s0 + $0x4] sm:$0xf]
    %v42 = vld [vmem:[%s0 + $0x8] sm:$0xf]
    %v43 = vld [vmem:[%s0 + $0xc] sm:$0xf]
    %v44 = vld [vmem:[%s1] sm:$0xf]
    %v45 = vld [vmem:[%s1 + $0x4] sm:$0xf]
    %v46 = vld [vmem:[%s1 + $0x8] sm:$0xf]
    %v47 = vld [vmem:[%s1 + $0xc] sm:$0xf]
    %v48 = vunpack.c.l.bf16 %v40
    %v49 = vunpack.c.l.bf16 %v41
    %v50 = vunpack.c.l.bf16 %v42
    %v51 = vunpack.c.l.bf16 %v43
    %v52 = vunpack.c.l.bf16 %v44
    %v53 = vunpack.c.l.bf16 %v45
    %v54 = vunpack.c.l.bf16 %v46
    %v55 = vunpack.c.l.bf16 %v47
    %v56 = vadd.f32 %v48, %v52
    %v57 = vadd.f32 %v49, %v53
    %v58 = vadd.f32 %v50, %v54
    %v59 = vadd.f32 %v51, %v55
    %v60 = vpack.c.bf16 %v57, %v56
    %v61 = vpack.c.bf16 %v59, %v58
    %v62 = vld [vmem:[%s2] sm:$0xf]
    %v63 = vld [vmem:[%s2 + $0x4] sm:$0xf]
    %v64 = vld [vmem:[%s2 + $0x8] sm:$0xf]
    %v65 = vld [vmem:[%s2 + $0xc] sm:$0xf]
    %v66 = vld [vmem:[%s3] sm:$0x1]
    %v68 = vperm.slane %v66, 0
    %v74 = vunpack.c.l.b16 %v62
    %v75 = vunpack.c.l.b16 %v63
    %v76 = vunpack.c.l.b16 %v64
    %v77 = vunpack.c.l.b16 %v65
    %v78 = vpack.c.b16 %v75, %v74
    %v79 = vpack.c.b16 %v77, %v76
    %vm82 = vcmask 261120
    %v84 = vsel %vm82, %v60, 0
    %v87 = vsel %vm82, %v61, 0
    %89 = vmatpush.bf16.msra.mxu0 0
    %90 = vmatpush.bf16.msra.mxu0 0
    %91 = vmatpush.bf16.msra.mxu0 0
    %92 = vmatpush.bf16.msra.mxu0 0
    %93 = vmatpush.bf16.msra.mxu0 0
    %94 = vmatpush.bf16.msra.mxu0 0
    %95 = vmatpush.bf16.msra.mxu0 %v79
    %96 = vmatpush.bf16.msra.mxu0 %v78
    %97 = vmatmul.bf16.gmra.mxu0 %v84
    %v98 = vpop.f32.mrf.mxu0
    %v99 = vadd.f32 %v68, %v98
    %v100 = vpop.f32.mrf.mxu0
    %v101 = vadd.f32 %v68, %v100
    %102 = vmatmul.bf16.gmra.mxu0 %v87
    %v103 = vpop.f32.mrf.mxu0
    %v104 = vadd.f32 %v68, %v103
    %v105 = vpop.f32.mrf.mxu0
    %v106 = vadd.f32 %v68, %v105
    %107 = vdwg.mxu0
    %v108 = vld [vmem:[%s4] sm:$0xf]
    %v109 = vld [vmem:[%s4 + $0x4] sm:$0xf]
    %v110 = vld [vmem:[%s4 + $0x8] sm:$0xf]
    %v111 = vld [vmem:[%s4 + $0xc] sm:$0xf]
    %v112 = vld [vmem:[#allocation2] sm:$0x1]
    %v114 = vperm.slane %v112, 0
    %v120 = vunpack.c.l.b16 %v40
    %v121 = vunpack.c.l.b16 %v41
    %v122 = vunpack.c.l.b16 %v42
    %v123 = vunpack.c.l.b16 %v43
    %v124 = vpack.c.b16 %v121, %v120
    %v125 = vpack.c.b16 %v123, %v122
    %v130 = vunpack.c.l.b16 %v108
    %v131 = vunpack.c.l.b16 %v109
    %v132 = vunpack.c.l.b16 %v110
    %v133 = vunpack.c.l.b16 %v111
    %v134 = vpack.c.b16 %v131, %v130
    %v135 = vpack.c.b16 %v133, %v132
    %v139 = vsel %vm82, %v124, 0
    %v142 = vsel %vm82, %v125, 0
    %144 = vmatpush.bf16.msra.mxu0 0
    %145 = vmatpush.bf16.msra.mxu0 0
    %146 = vmatpush.bf16.msra.mxu0 0
    %147 = vmatpush.bf16.msra.mxu0 0
    %148 = vmatpush.bf16.msra.mxu0 0
    %149 = vmatpush.bf16.msra.mxu0 0
    %150 = vmatpush.bf16.msra.mxu0 %v135
    %151 = vmatpush.bf16.msra.mxu0 %v134
    %152 = vmatmul.bf16.gmra.mxu0 %v139
    %v153 = vpop.f32.mrf.mxu0
    %v154 = vadd.f32 %v114, %v153
    %v155 = vpop.f32.mrf.mxu0
    %v156 = vadd.f32 %v114, %v155
    %157 = vmatmul.bf16.gmra.mxu0 %v142
    %v158 = vpop.f32.mrf.mxu0
    %v159 = vadd.f32 %v114, %v158
    %v160 = vpop.f32.mrf.mxu0
    %v161 = vadd.f32 %v114, %v160
    %162 = vdwg.mxu0
    %v163 = vpack.c.bf16 %v99, %v99
    %v164 = vpack.c.bf16 %v101, %v101
    %v165 = vpack.c.bf16 %v104, %v104
    %v166 = vpack.c.bf16 %v106, %v106
    %vm167 = vcmask 257024
    %168 = vst.msk [vmem:[%s6] sm:$0xf] %vm167, %v163
    %169 = vst.msk [vmem:[%s6 + $0x4] sm:$0xf] %vm167, %v164
    %170 = vst.msk [vmem:[%s6 + $0x8] sm:$0xf] %vm167, %v165
    %171 = vst.msk [vmem:[%s6 + $0xc] sm:$0xf] %vm167, %v166
    %v172 = vpack.c.bf16 %v154, %v154
    %v173 = vpack.c.bf16 %v156, %v156
    %v174 = vpack.c.bf16 %v159, %v159
    %v175 = vpack.c.bf16 %v161, %v161
    %176 = vst.msk [vmem:[%s7] sm:$0xf] %vm167, %v172
    %177 = vst.msk [vmem:[%s7 + $0x4] sm:$0xf] %vm167, %v173
    %178 = vst.msk [vmem:[%s7 + $0x8] sm:$0xf] %vm167, %v174
    %179 = vst.msk [vmem:[%s7 + $0xc] sm:$0xf] %vm167, %v175
    // Predicated region
    $region30: #{motip_forward.39} parent=1 // pred_check
      _
    $region31: #{motip_forward.39} parent=1 // pred_check_branch
      %181 = sbr.rel (0) target = $region33
    $region32: #{motip_forward.39} parent=1 // pred_region
      _
    $region33: #{motip_forward.39} parent=1 // pred_fallthru
      _
    // Predicated region
    $region34: #{motip_forward.39} parent=1 // pred_check
      _
    $region35: #{motip_forward.39} parent=1 // pred_check_branch
      %183 = sbr.rel (0) target = $region37
    $region36: #{motip_forward.39} parent=1 // pred_region
      _
    $region37: #{motip_forward.39} parent=1 // pred_fallthru
      _
    // Predicated region
    $region38: #{motip_forward.39} parent=1 // pred_check
      _
    $region39: #{motip_forward.39} parent=1 // pred_check_branch
      %185 = sbr.rel (0) target = $region41
    $region40: #{motip_forward.39} parent=1 // pred_region
      _
    $region41: #{motip_forward.39} parent=1 // pred_fallthru
      _
    // Predicated region
    $region42: #{motip_forward.39} parent=1 // pred_check
      _
    $region43: #{motip_forward.39} parent=1 // pred_check_branch
      %187 = sbr.rel (0) target = $region45
    $region44: #{motip_forward.39} parent=1 // pred_region
      _
    $region45: #{motip_forward.39} parent=1 // pred_fallthru
      _
    %188 = vsyncpa [#allocation3], 1

// kernel: motip_forward.35
$region0: #{motip_forward.35}
  #allocation0 [shape = 'u32[]', space=smem, size = 0x4, offset = 0x4, fixed_abs, tag = 'smem constant byte address 0x4 - core index']
  #allocation1 [shape = 'u32[72,128]{1,0:T(1,128)}', space=vmem, size = 0x9000, scoped, tag = 'internal scratch']
  %s0 = inlined_call_operand.vmem [shape: bf16[16,32], index: 0, kind: input, shape index: {}]
  %s1 = inlined_call_operand.vmem [shape: bf16[16,32], index: 1, kind: input, shape index: {}]
  %s2 = inlined_call_operand.vmem [shape: bf16[32,64], index: 2, kind: input, shape index: {}]
  %s3 = inlined_call_operand.hbm [shape: f32[1,64], index: 3, kind: input, shape index: {}]
  %s4 = inlined_call_operand.vmem [shape: bf16[32,32], index: 4, kind: input, shape index: {}]
  %s5 = inlined_call_operand.hbm [shape: f32[1,32], index: 5, kind: input, shape index: {}]
  %s6 = inlined_call_operand.vmem [shape: bf16[16,32], index: 6, kind: output, shape index: {0}]
  %s7 = inlined_call_operand.vmem [shape: bf16[16,32], index: 7, kind: output, shape index: {1}]
  %s8 = inlined_call_operand.vmem [shape: bf16[16,32], index: 8, kind: output, shape index: {2}]
  %9 = xla_tuple %s6, %s7, %s8
  %s10 = sld [smem:[#allocation0]]
  $region58: #{motip_forward.35} parent=0
    _
  %s12 = ssub.s32 1, %s10
  %s13 = scalar_select 0, %s12, %s10
  $region1: #{motip_forward.35} parent=0
    #allocation2 [shape = 'u8[512]{0}', space=vmem, size = 0x400, scoped, tag = 'input window, operand 3, single buffered']
    #allocation3 [shape = 's32[1]{0}', space=sflag, size = 0x4, scoped, tag = 'scoped memory for motip_forward.35']
    #allocation4 [shape = 'u8[512]{0}', space=vmem, size = 0x400, scoped, tag = 'input window, operand 5, single buffered']
    #allocation5 [shape = 's32[1]{0}', space=sflag, size = 0x4, scoped, tag = 'scoped memory for motip_forward.35']
    %14 = vsyncpa [#allocation3], 0
    %15 = vsyncpa [#allocation5], 0
    // Predicated region
    $region2: #{motip_forward.35} parent=1 // pred_check
      _
    $region3: #{motip_forward.35} parent=1 // pred_check_branch
      %17 = sbr.rel (0) target = $region5
    $region4: #{motip_forward.35} parent=1 // pred_region
      _
    $region5: #{motip_forward.35} parent=1 // pred_fallthru
      _
    // Predicated region
    $region6: #{motip_forward.35} parent=1 // pred_check
      _
    $region7: #{motip_forward.35} parent=1 // pred_check_branch
      %19 = sbr.rel (0) target = $region9
    $region8: #{motip_forward.35} parent=1 // pred_region
      _
    $region9: #{motip_forward.35} parent=1 // pred_fallthru
      _
    // Predicated region
    $region10: #{motip_forward.35} parent=1 // pred_check
      _
    $region11: #{motip_forward.35} parent=1 // pred_check_branch
      %21 = sbr.rel (0) target = $region13
    $region12: #{motip_forward.35} parent=1 // pred_region
      _
    $region13: #{motip_forward.35} parent=1 // pred_fallthru
      _
    // Predicated region
    $region14: #{motip_forward.35} parent=1 // pred_check
      _
    $region15: #{motip_forward.35} parent=1 // pred_check_branch
      %23 = sbr.rel (0) target = $region17
    $region16: #{motip_forward.35} parent=1 // pred_region
      %25 = vsyncadd [#allocation3], 0
      %s27 = sshll.u32 %s3, 4
      %s28 = int_to_ptr.hbm [resolvable:$true] %s27
      %s29 = sshll.u32 [#allocation2], 4
      %s30 = int_to_ptr.vmem [resolvable:$true] %s29
      %32 = dma.hbm_to_vmem [thread:$0]  %s28, 16, %s30, [#allocation3]
    $region17: #{motip_forward.35} parent=1 // pred_fallthru
      _
    // Predicated region
    $region18: #{motip_forward.35} parent=1 // pred_check
      _
    $region19: #{motip_forward.35} parent=1 // pred_check_branch
      %34 = sbr.rel (0) target = $region21
    $region20: #{motip_forward.35} parent=1 // pred_region
      _
    $region21: #{motip_forward.35} parent=1 // pred_fallthru
      _
    // Predicated region
    $region22: #{motip_forward.35} parent=1 // pred_check
      _
    $region23: #{motip_forward.35} parent=1 // pred_check_branch
      %36 = sbr.rel (0) target = $region25
    $region24: #{motip_forward.35} parent=1 // pred_region
      %38 = vsyncadd [#allocation5], 0
      %s40 = sshll.u32 %s5, 4
      %s41 = int_to_ptr.hbm [resolvable:$true] %s40
      %s42 = sshll.u32 [#allocation4], 4
      %s43 = int_to_ptr.vmem [resolvable:$true] %s42
      %45 = dma.hbm_to_vmem [thread:$0]  %s41, 16, %s43, [#allocation5]
    $region25: #{motip_forward.35} parent=1 // pred_fallthru
      _
    // Predicated region
    $region26: #{motip_forward.35} parent=1 // pred_check
      _
    $region27: #{motip_forward.35} parent=1 // pred_check_branch
      %47 = sbr.rel (0) target = $region29
    $region28: #{motip_forward.35} parent=1 // pred_region
      %49 = dma.done [#allocation3], 16
    $region29: #{motip_forward.35} parent=1 // pred_fallthru
      _
    // Predicated region
    $region30: #{motip_forward.35} parent=1 // pred_check
      _
    $region31: #{motip_forward.35} parent=1 // pred_check_branch
      %51 = sbr.rel (0) target = $region33
    $region32: #{motip_forward.35} parent=1 // pred_region
      %53 = dma.done [#allocation5], 16
    $region33: #{motip_forward.35} parent=1 // pred_fallthru
      _
    %v55 = vld [vmem:[%s0] sm:$0xf]
    %v56 = vld [vmem:[%s0 + $0x4] sm:$0xf]
    %v57 = vld [vmem:[%s1] sm:$0xf]
    %v58 = vld [vmem:[%s1 + $0x4] sm:$0xf]
    %v59 = vunpack.c.l.bf16 %v55
    %v60 = vunpack.c.l.bf16 %v56
    %v61 = vunpack.c.l.bf16 %v57
    %v62 = vunpack.c.l.bf16 %v58
    %v63 = vadd.f32 %v59, %v61
    %v64 = vadd.f32 %v60, %v62
    %v65 = vpack.c.bf16 %v64, %v63
    %v66 = vld [vmem:[%s2] sm:$0xf]
    %v67 = vld [vmem:[%s2 + $0x4] sm:$0xf]
    %v68 = vld [vmem:[%s2 + $0x8] sm:$0xf]
    %v69 = vld [vmem:[%s2 + $0xc] sm:$0xf]
    %v70 = vld [vmem:[#allocation2] sm:$0x1]
    %v72 = vperm.slane %v70, 0
    %v78 = vunpack.c.l.b16 %v66
    %v79 = vunpack.c.l.b16 %v67
    %v80 = vunpack.c.l.b16 %v68
    %v81 = vunpack.c.l.b16 %v69
    %v82 = vpack.c.b16 %v79, %v78
    %v83 = vpack.c.b16 %v81, %v80
    %vm86 = vcmask 261120
    %v88 = vsel %vm86, %v65, 0
    %90 = vmatpush.bf16.msra.mxu0 0
    %91 = vmatpush.bf16.msra.mxu0 0
    %92 = vmatpush.bf16.msra.mxu0 0
    %93 = vmatpush.bf16.msra.mxu0 0
    %94 = vmatpush.bf16.msra.mxu0 0
    %95 = vmatpush.bf16.msra.mxu0 0
    %96 = vmatpush.bf16.msra.mxu0 %v83
    %97 = vmatpush.bf16.msra.mxu0 %v82
    %98 = vmatmul.bf16.gmra.mxu0 %v88
    %v99 = vpop.f32.mrf.mxu0
    %v100 = vadd.f32 %v72, %v99
    %v101 = vpop.f32.mrf.mxu0
    %v102 = vadd.f32 %v72, %v101
    %103 = vdwg.mxu0
    %v104 = vld [vmem:[%s4] sm:$0xf]
    %v105 = vld [vmem:[%s4 + $0x4] sm:$0xf]
    %v106 = vld [vmem:[%s4 + $0x8] sm:$0xf]
    %v107 = vld [vmem:[%s4 + $0xc] sm:$0xf]
    %v108 = vld [vmem:[#allocation4] sm:$0x1]
    %v110 = vperm.slane %v108, 0
    %v114 = vunpack.c.l.b16 %v55
    %v115 = vunpack.c.l.b16 %v56
    %v116 = vpack.c.b16 %v115, %v114
    %v121 = vunpack.c.l.b16 %v104
    %v122 = vunpack.c.l.b16 %v105
    %v123 = vunpack.c.l.b16 %v106
    %v124 = vunpack.c.l.b16 %v107
    %v125 = vpack.c.b16 %v122, %v121
    %v126 = vpack.c.b16 %v124, %v123
    %v130 = vsel %vm86, %v116, 0
    %132 = vmatpush.bf16.msra.mxu0 0
    %133 = vmatpush.bf16.msra.mxu0 0
    %134 = vmatpush.bf16.msra.mxu0 0
    %135 = vmatpush.bf16.msra.mxu0 0
    %136 = vmatpush.bf16.msra.mxu0 0
    %137 = vmatpush.bf16.msra.mxu0 0
    %138 = vmatpush.bf16.msra.mxu0 %v126
    %139 = vmatpush.bf16.msra.mxu0 %v125
    %140 = vmatmul.bf16.gmra.mxu0 %v130
    %v141 = vpop.f32.mrf.mxu0
    %v142 = vadd.f32 %v110, %v141
    %v143 = vpop.f32.mrf.mxu0
    %v144 = vadd.f32 %v110, %v143
    %145 = vdwg.mxu0
    %v146 = vpack.c.bf16 %v100, %v100
    %v147 = vpack.c.bf16 %v102, %v102
    %vm148 = vcmask 257024
    %149 = vst.msk [vmem:[%s6] sm:$0xf] %vm148, %v146
    %150 = vst.msk [vmem:[%s6 + $0x4] sm:$0xf] %vm148, %v147
    %153 = vrot.lane.b32.xlu0 %v146, 96
    %v154 = vpop.permute.xlu0 %153
    %155 = vrot.lane.b32.xlu0 %v147, 96
    %v156 = vpop.permute.xlu0 %155
    %159 = vst.msk [vmem:[%s7] sm:$0xf] %vm148, %v154
    %160 = vst.msk [vmem:[%s7 + $0x4] sm:$0xf] %vm148, %v156
    %v161 = vpack.c.bf16 %v142, %v142
    %v162 = vpack.c.bf16 %v144, %v144
    %163 = vst.msk [vmem:[%s8] sm:$0xf] %vm148, %v161
    %164 = vst.msk [vmem:[%s8 + $0x4] sm:$0xf] %vm148, %v162
    // Predicated region
    $region34: #{motip_forward.35} parent=1 // pred_check
      _
    $region35: #{motip_forward.35} parent=1 // pred_check_branch
      %166 = sbr.rel (0) target = $region37
    $region36: #{motip_forward.35} parent=1 // pred_region
      _
    $region37: #{motip_forward.35} parent=1 // pred_fallthru
      _
    // Predicated region
    $region38: #{motip_forward.35} parent=1 // pred_check
      _
    $region39: #{motip_forward.35} parent=1 // pred_check_branch
      %168 = sbr.rel (0) target = $region41
    $region40: #{motip_forward.35} parent=1 // pred_region
      _
    $region41: #{motip_forward.35} parent=1 // pred_fallthru
      _
    // Predicated region
    $region42: #{motip_forward.35} parent=1 // pred_check
      _
    $region43: #{motip_forward.35} parent=1 // pred_check_branch
      %170 = sbr.rel (0) target = $region45
    $region44: #{motip_forward.35} parent=1 // pred_region
      _
    $region45: #{motip_forward.35} parent=1 // pred_fallthru
      _
    // Predicated region
    $region46: #{motip_forward.35} parent=1 // pred_check
      _
    $region47: #{motip_forward.35} parent=1 // pred_check_branch
      %172 = sbr.rel (0) target = $region49
    $region48: #{motip_forward.35} parent=1 // pred_region
      _
    $region49: #{motip_forward.35} parent=1 // pred_fallthru
      _
    // Predicated region
    $region50: #{motip_forward.35} parent=1 // pred_check
      _
    $region51: #{motip_forward.35} parent=1 // pred_check_branch
      %174 = sbr.rel (0) target = $region53
    $region52: #{motip_forward.35} parent=1 // pred_region
      _
    $region53: #{motip_forward.35} parent=1 // pred_fallthru
      _
    // Predicated region
    $region54: #{motip_forward.35} parent=1 // pred_check
      _
    $region55: #{motip_forward.35} parent=1 // pred_check_branch
      %176 = sbr.rel (0) target = $region57
    $region56: #{motip_forward.35} parent=1 // pred_region
      _
    $region57: #{motip_forward.35} parent=1 // pred_fallthru
      _
    %177 = vsyncpa [#allocation3], 1
    %178 = vsyncpa [#allocation5], 1

// kernel: motip_forward.37
$region0: #{motip_forward.37}
  #allocation0 [shape = 'u32[]', space=smem, size = 0x4, offset = 0x4, fixed_abs, tag = 'smem constant byte address 0x4 - core index']
  #allocation1 [shape = 'u32[72,128]{1,0:T(1,128)}', space=vmem, size = 0x9000, scoped, tag = 'internal scratch']
  %s0 = inlined_call_operand.vmem [shape: bf16[16,32], index: 0, kind: input, shape index: {}]
  %s1 = inlined_call_operand.vmem [shape: bf16[16,32], index: 1, kind: input, shape index: {}]
  %s2 = inlined_call_operand.vmem [shape: bf16[32,32], index: 2, kind: input, shape index: {}]
  %s3 = inlined_call_operand.hbm [shape: f32[1,32], index: 3, kind: input, shape index: {}]
  %s4 = inlined_call_operand.hbm [shape: f32[1,32], index: 4, kind: input, shape index: {}]
  %s5 = inlined_call_operand.hbm [shape: f32[1,32], index: 5, kind: input, shape index: {}]
  %s6 = inlined_call_operand.vmem [shape: bf16[16,32], index: 6, kind: output, shape index: {}]
  %s7 = sld [smem:[#allocation0]]
  $region46: #{motip_forward.37} parent=0
    _
  %s9 = ssub.s32 1, %s7
  %s10 = scalar_select 0, %s9, %s7
  $region1: #{motip_forward.37} parent=0
    #allocation2 [shape = 'u8[512]{0}', space=vmem, size = 0x400, scoped, tag = 'input window, operand 3, single buffered']
    #allocation3 [shape = 's32[1]{0}', space=sflag, size = 0x4, scoped, tag = 'scoped memory for motip_forward.37']
    #allocation4 [shape = 'u8[512]{0}', space=vmem, size = 0x400, scoped, tag = 'input window, operand 4, single buffered']
    #allocation5 [shape = 's32[1]{0}', space=sflag, size = 0x4, scoped, tag = 'scoped memory for motip_forward.37']
    #allocation6 [shape = 'u8[512]{0}', space=vmem, size = 0x400, scoped, tag = 'input window, operand 5, single buffered']
    %11 = vsyncpa [#allocation3], 0
    %12 = vsyncpa [#allocation5], 0
    // Predicated region
    $region2: #{motip_forward.37} parent=1 // pred_check
      _
    $region3: #{motip_forward.37} parent=1 // pred_check_branch
      %14 = sbr.rel (0) target = $region5
    $region4: #{motip_forward.37} parent=1 // pred_region
      _
    $region5: #{motip_forward.37} parent=1 // pred_fallthru
      _
    // Predicated region
    $region6: #{motip_forward.37} parent=1 // pred_check
      _
    $region7: #{motip_forward.37} parent=1 // pred_check_branch
      %16 = sbr.rel (0) target = $region9
    $region8: #{motip_forward.37} parent=1 // pred_region
      _
    $region9: #{motip_forward.37} parent=1 // pred_fallthru
      _
    // Predicated region
    $region10: #{motip_forward.37} parent=1 // pred_check
      _
    $region11: #{motip_forward.37} parent=1 // pred_check_branch
      %18 = sbr.rel (0) target = $region13
    $region12: #{motip_forward.37} parent=1 // pred_region
      _
    $region13: #{motip_forward.37} parent=1 // pred_fallthru
      _
    // Predicated region
    $region14: #{motip_forward.37} parent=1 // pred_check
      _
    $region15: #{motip_forward.37} parent=1 // pred_check_branch
      %20 = sbr.rel (0) target = $region17
    $region16: #{motip_forward.37} parent=1 // pred_region
      %22 = vsyncadd [#allocation3], 0
      %s24 = sshll.u32 %s3, 4
      %s25 = int_to_ptr.hbm [resolvable:$true] %s24
      %s26 = sshll.u32 [#allocation2], 4
      %s27 = int_to_ptr.vmem [resolvable:$true] %s26
      %29 = dma.hbm_to_vmem [thread:$0]  %s25, 16, %s27, [#allocation3]
    $region17: #{motip_forward.37} parent=1 // pred_fallthru
      _
    // Predicated region
    $region18: #{motip_forward.37} parent=1 // pred_check
      _
    $region19: #{motip_forward.37} parent=1 // pred_check_branch
      %31 = sbr.rel (0) target = $region21
    $region20: #{motip_forward.37} parent=1 // pred_region
      %33 = vsyncadd [#allocation5], 0
      %s35 = sshll.u32 %s4, 4
      %s36 = int_to_ptr.hbm [resolvable:$true] %s35
      %s37 = sshll.u32 [#allocation4], 4
      %s38 = int_to_ptr.vmem [resolvable:$true] %s37
      %40 = dma.hbm_to_vmem [thread:$0]  %s36, 16, %s38, [#allocation5]
    $region21: #{motip_forward.37} parent=1 // pred_fallthru
      _
    // Predicated region
    $region22: #{motip_forward.37} parent=1 // pred_check
      _
    $region23: #{motip_forward.37} parent=1 // pred_check_branch
      %42 = sbr.rel (0) target = $region25
    $region24: #{motip_forward.37} parent=1 // pred_region
      %44 = vsyncadd [#allocation5], 0
      %s46 = sshll.u32 %s5, 4
      %s47 = int_to_ptr.hbm [resolvable:$true] %s46
      %s48 = sshll.u32 [#allocation6], 4
      %s49 = int_to_ptr.vmem [resolvable:$true] %s48
      %51 = dma.hbm_to_vmem [thread:$0]  %s47, 16, %s49, [#allocation5]
    $region25: #{motip_forward.37} parent=1 // pred_fallthru
      _
    // Predicated region
    $region26: #{motip_forward.37} parent=1 // pred_check
      _
    $region27: #{motip_forward.37} parent=1 // pred_check_branch
      %53 = sbr.rel (0) target = $region29
    $region28: #{motip_forward.37} parent=1 // pred_region
      %55 = dma.done [#allocation3], 16
    $region29: #{motip_forward.37} parent=1 // pred_fallthru
      _
    // Predicated region
    $region30: #{motip_forward.37} parent=1 // pred_check
      _
    $region31: #{motip_forward.37} parent=1 // pred_check_branch
      %57 = sbr.rel (0) target = $region33
    $region32: #{motip_forward.37} parent=1 // pred_region
      %59 = dma.done [#allocation5], 16
    $region33: #{motip_forward.37} parent=1 // pred_fallthru
      _
    // Predicated region
    $region34: #{motip_forward.37} parent=1 // pred_check
      _
    $region35: #{motip_forward.37} parent=1 // pred_check_branch
      %61 = sbr.rel (0) target = $region37
    $region36: #{motip_forward.37} parent=1 // pred_region
      %63 = dma.done [#allocation5], 16
    $region37: #{motip_forward.37} parent=1 // pred_fallthru
      _
    %v65 = vld [vmem:[%s0] sm:$0xf]
    %v66 = vld [vmem:[%s0 + $0x4] sm:$0xf]
    %v67 = vld [vmem:[%s2] sm:$0xf]
    %v68 = vld [vmem:[%s2 + $0x4] sm:$0xf]
    %v69 = vld [vmem:[%s2 + $0x8] sm:$0xf]
    %v70 = vld [vmem:[%s2 + $0xc] sm:$0xf]
    %v71 = vld [vmem:[#allocation2] sm:$0x1]
    %v73 = vperm.slane %v71, 0
    %v77 = vunpack.c.l.b16 %v65
    %v78 = vunpack.c.l.b16 %v66
    %v79 = vpack.c.b16 %v78, %v77
    %v84 = vunpack.c.l.b16 %v67
    %v85 = vunpack.c.l.b16 %v68
    %v86 = vunpack.c.l.b16 %v69
    %v87 = vunpack.c.l.b16 %v70
    %v88 = vpack.c.b16 %v85, %v84
    %v89 = vpack.c.b16 %v87, %v86
    %vm92 = vcmask 261120
    %v94 = vsel %vm92, %v79, 0
    %96 = vmatpush.bf16.msra.mxu0 0
    %97 = vmatpush.bf16.msra.mxu0 0
    %98 = vmatpush.bf16.msra.mxu0 0
    %99 = vmatpush.bf16.msra.mxu0 0
    %100 = vmatpush.bf16.msra.mxu0 0
    %101 = vmatpush.bf16.msra.mxu0 0
    %102 = vmatpush.bf16.msra.mxu0 %v89
    %103 = vmatpush.bf16.msra.mxu0 %v88
    %104 = vmatmul.bf16.gmra.mxu0 %v94
    %v105 = vpop.f32.mrf.mxu0
    %v106 = vadd.f32 %v73, %v105
    %v107 = vpop.f32.mrf.mxu0
    %v108 = vadd.f32 %v73, %v107
    %109 = vdwg.mxu0
    %v110 = vld [vmem:[%s1] sm:$0xf]
    %v111 = vld [vmem:[%s1 + $0x4] sm:$0xf]
    %v112 = vunpack.c.l.bf16 %v110
    %v113 = vunpack.c.l.bf16 %v111
    %v114 = vadd.f32 %v106, %v112
    %v115 = vadd.f32 %v108, %v113
    %v116 = vsel %vm92, %v114, 0.0
    %117 = vadd.xlane.f32.xlu0 %v116
    %v118 = vpop.xlane.xlu0 %117
    %v119 = vsel %vm92, %v115, 0.0
    %120 = vadd.xlane.f32.xlu0 %v119
    %v121 = vpop.xlane.xlu0 %120
    %v122 = vrcp.pop 32.0
    %v123 = vmul.f32 32.0, %v122
    %v124 = vsub.f32 1.0, %v123
    %v125 = vmul.f32 %v122, %v124
    %v126 = vadd.f32 %v122, %v125
    %vm127 = vweird.f32 %v122
    %v128 = vsel %vm127, %v122, %v126
    %v129 = vmul.f32 %v118, %v128
    %v130 = vmul.f32 %v121, %v128
    %v131 = vsub.f32 %v114, %v129
    %v132 = vsub.f32 %v115, %v130
    %v133 = vmul.f32 %v131, %v131
    %v134 = vmul.f32 %v132, %v132
    %v135 = vsel %vm92, %v133, 0.0
    %136 = vadd.xlane.f32.xlu0 %v135
    %v137 = vpop.xlane.xlu0 %136
    %v138 = vsel %vm92, %v134, 0.0
    %139 = vadd.xlane.f32.xlu0 %v138
    %v140 = vpop.xlane.xlu0 %139
    %v141 = vmul.f32 %v137, %v128
    %v142 = vmul.f32 %v140, %v128
    %v143 = vadd.f32 %v141, 1e-05
    %v144 = vadd.f32 %v142, 1e-05
    %v145 = vrsqrt.pop %v143
    %v146 = vmul.f32 %v145, %v143
    %v147 = vmul.f32 %v146, %v145
    %v148 = vmul.f32 0.5, %v147
    %v149 = vsub.f32 1.5, %v148
    %v150 = vmul.f32 %v145, %v149
    %vm151 = vweird.f32 %v143
    %vm152 = vweird.f32 %v145
    %vm153 = vmor %vm151, %vm152
    %v154 = vsel %vm153, %v145, %v150
    %v155 = vrsqrt.pop %v144
    %v156 = vmul.f32 %v155, %v144
    %v157 = vmul.f32 %v156, %v155
    %v158 = vmul.f32 0.5, %v157
    %v159 = vsub.f32 1.5, %v158
    %v160 = vmul.f32 %v155, %v159
    %vm161 = vweird.f32 %v144
    %vm162 = vweird.f32 %v155
    %vm163 = vmor %vm161, %vm162
    %v164 = vsel %vm163, %v155, %v160
    %v165 = vmul.f32 %v131, %v154
    %v166 = vmul.f32 %v132, %v164
    %v167 = vld [vmem:[#allocation4] sm:$0x1]
    %v169 = vperm.slane %v167, 0
    %v171 = vmul.f32 %v165, %v169
    %v172 = vmul.f32 %v166, %v169
    %v173 = vld [vmem:[#allocation6] sm:$0x1]
    %v175 = vperm.slane %v173, 0
    %v177 = vadd.f32 %v171, %v175
    %v178 = vadd.f32 %v172, %v175
    %v179 = vpack.c.bf16 %v177, %v177
    %v180 = vpack.c.bf16 %v178, %v178
    %vm181 = vcmask 257024
    %182 = vst.msk [vmem:[%s6] sm:$0xf] %vm181, %v179
    %183 = vst.msk [vmem:[%s6 + $0x4] sm:$0xf] %vm181, %v180
    // Predicated region
    $region38: #{motip_forward.37} parent=1 // pred_check
      _
    $region39: #{motip_forward.37} parent=1 // pred_check_branch
      %185 = sbr.rel (0) target = $region41
    $region40: #{motip_forward.37} parent=1 // pred_region
      _
    $region41: #{motip_forward.37} parent=1 // pred_fallthru
      _
    // Predicated region
    $region42: #{motip_forward.37} parent=1 // pred_check
      _
    $region43: #{motip_forward.37} parent=1 // pred_check_branch
      %187 = sbr.rel (0) target = $region45
    $region44: #{motip_forward.37} parent=1 // pred_region
      _
    $region45: #{motip_forward.37} parent=1 // pred_fallthru
      _
    %188 = vsyncpa [#allocation3], 1
    %189 = vsyncpa [#allocation5], 1

// kernel: motip_forward.36
$region0: #{motip_forward.36}
  #allocation0 [shape = 'u32[]', space=smem, size = 0x4, offset = 0x4, fixed_abs, tag = 'smem constant byte address 0x4 - core index']
  #allocation1 [shape = 'u32[72,128]{1,0:T(1,128)}', space=vmem, size = 0x9000, scoped, tag = 'internal scratch']
  %s0 = inlined_call_operand.vmem [shape: bf16[2,8,32], index: 0, kind: input, shape index: {}]
  %s1 = inlined_call_operand.vmem [shape: bf16[2,8,32], index: 1, kind: input, shape index: {}]
  %s2 = inlined_call_operand.vmem [shape: bf16[2,8,32], index: 2, kind: input, shape index: {}]
  %s3 = inlined_call_operand.vmem [shape: bf16[2,8,32], index: 3, kind: output, shape index: {}]
  %s4 = sld [smem:[#allocation0]]
  $region45: #{motip_forward.36} parent=0
    _
  %s6 = ssub.s32 1, %s4
  %s7 = scalar_select 0, %s6, %s4
  loop: start=0, step=1, limit=4
  $region2: #{motip_forward.36} parent=0 // loop_pre_header
    _
  $region3: #{motip_forward.36} parent=0 // loop_header
    %s9 = sphi 0, %s13
    %p10 = scmp.ge.s32.totalorder %s9, 4
    %s19 = sphi 0, %s21
    %s22 = sphi 0, %s19
    %s23 = sphi 0, %s22
    %s39 = sphi 0, %s23
    %s45 = sphi 0, %s47
    %s48 = sphi 0, %s45
    %s49 = sphi 0, %s48
    %s65 = sphi 0, %s49
    %s71 = sphi 0, %s73
    %s74 = sphi 0, %s71
    %s75 = sphi 0, %s74
    %s91 = sphi 0, %s75
    %s97 = sphi 0, %s99
    %s100 = sphi 0, %s97
    %s101 = sphi 0, %s100
    %s117 = sphi 0, %s101
  $region4: #{motip_forward.36} parent=0 // loop_header_branch
    %12 = sbr.rel (%p10) target = $region8
  $region5: #{motip_forward.36} parent=0 // loop_body
    %s14 = ssub.s32 %s9, 1
    %s15 = ssub.s32 %s9, 2
    %s16 = sadd.s32 %s9, 1
    %s17 = ssub.s32 %s9, %s16
    %p18 = scmp.eq.s32.totalorder %s17, 0
    %s20 = sadd.s32 %s19, 1
    %s21 = scalar_select %p18, %s19, %s20
    %p24 = pneg %p18
    %p25 = scmp.eq.s32.totalorder %s9, 1
    %p26 = por %p24, %p25
    %p27 = scmp.ne.s32.totalorder %s19, %s22
    %p28 = scmp.eq.s32.totalorder %s9, 0
    %p29 = por %p27, %p28
    %p30 = scmp.ne.s32.totalorder %s19, %s22
    %p31 = scmp.eq.s32.totalorder %s14, 1
    %p32 = por %p30, %p31
    %p33 = scmp.ne.s32.totalorder %s22, %s23
    %p34 = scmp.eq.s32.totalorder %s14, 0
    %p35 = por %p33, %p34
    %p36 = scmp.ne.s32.totalorder %s22, %s23
    %p37 = scmp.eq.s32.totalorder %s15, 1
    %p38 = por %p36, %p37
    %p40 = scmp.ne.s32.totalorder %s23, %s39
    %p41 = scmp.eq.s32.totalorder %s15, 0
    %p42 = por %p40, %p41
    %s43 = ssub.s32 %s9, %s16
    %p44 = scmp.eq.s32.totalorder %s43, 0
    %s46 = sadd.s32 %s45, 1
    %s47 = scalar_select %p44, %s45, %s46
    %p50 = pneg %p44
    %p51 = scmp.eq.s32.totalorder %s9, 1
    %p52 = por %p50, %p51
    %p53 = scmp.ne.s32.totalorder %s45, %s48
    %p54 = scmp.eq.s32.totalorder %s9, 0
    %p55 = por %p53, %p54
    %p56 = scmp.ne.s32.totalorder %s45, %s48
    %p57 = scmp.eq.s32.totalorder %s14, 1
    %p58 = por %p56, %p57
    %p59 = scmp.ne.s32.totalorder %s48, %s49
    %p60 = scmp.eq.s32.totalorder %s14, 0
    %p61 = por %p59, %p60
    %p62 = scmp.ne.s32.totalorder %s48, %s49
    %p63 = scmp.eq.s32.totalorder %s15, 1
    %p64 = por %p62, %p63
    %p66 = scmp.ne.s32.totalorder %s49, %s65
    %p67 = scmp.eq.s32.totalorder %s15, 0
    %p68 = por %p66, %p67
    %s69 = ssub.s32 %s9, %s16
    %p70 = scmp.eq.s32.totalorder %s69, 0
    %s72 = sadd.s32 %s71, 1
    %s73 = scalar_select %p70, %s71, %s72
    %p76 = pneg %p70
    %p77 = scmp.eq.s32.totalorder %s9, 1
    %p78 = por %p76, %p77
    %p79 = scmp.ne.s32.totalorder %s71, %s74
    %p80 = scmp.eq.s32.totalorder %s9, 0
    %p81 = por %p79, %p80
    %p82 = scmp.ne.s32.totalorder %s71, %s74
    %p83 = scmp.eq.s32.totalorder %s14, 1
    %p84 = por %p82, %p83
    %p85 = scmp.ne.s32.totalorder %s74, %s75
    %p86 = scmp.eq.s32.totalorder %s14, 0
    %p87 = por %p85, %p86
    %p88 = scmp.ne.s32.totalorder %s74, %s75
    %p89 = scmp.eq.s32.totalorder %s15, 1
    %p90 = por %p88, %p89
    %p92 = scmp.ne.s32.totalorder %s75, %s91
    %p93 = scmp.eq.s32.totalorder %s15, 0
    %p94 = por %p92, %p93
    %s95 = ssub.s32 %s9, %s16
    %p96 = scmp.eq.s32.totalorder %s95, 0
    %s98 = sadd.s32 %s97, 1
    %s99 = scalar_select %p96, %s97, %s98
    %p102 = pneg %p96
    %p103 = scmp.eq.s32.totalorder %s9, 1
    %p104 = por %p102, %p103
    %p105 = scmp.ne.s32.totalorder %s97, %s100
    %p106 = scmp.eq.s32.totalorder %s9, 0
    %p107 = por %p105, %p106
    %p108 = scmp.ne.s32.totalorder %s97, %s100
    %p109 = scmp.eq.s32.totalorder %s14, 1
    %p110 = por %p108, %p109
    %p111 = scmp.ne.s32.totalorder %s100, %s101
    %p112 = scmp.eq.s32.totalorder %s14, 0
    %p113 = por %p111, %p112
    %p114 = scmp.ne.s32.totalorder %s100, %s101
    %p115 = scmp.eq.s32.totalorder %s15, 1
    %p116 = por %p114, %p115
    %p118 = scmp.ne.s32.totalorder %s101, %s117
    %p119 = scmp.eq.s32.totalorder %s15, 0
    %p120 = por %p118, %p119
    %p121 = scmp.le.s32.totalorder 1, %s9
    %p122 = scmp.lt.s32.totalorder %s9, 3
    %p123 = pnand %p121, %p122
    %p124 = pneg %p123
    // Predicated region
    $region9: #{motip_forward.36} parent=5 // pred_check
      _
    $region10: #{motip_forward.36} parent=5 // pred_check_branch
      %126 = sbr.rel (%p123) target = $region12
    $region11: #{motip_forward.36} parent=5 // pred_region
      %s127 = ssub.s32 %s9, 1
    $region12: #{motip_forward.36} parent=5 // pred_fallthru
      _
    %p128 = scmp.lt.s32.totalorder %s9, 2
    // Predicated region
    $region13: #{motip_forward.36} parent=5 // pred_check
      %p129 = pneg %p128
    $region14: #{motip_forward.36} parent=5 // pred_check_branch
      %131 = sbr.rel (%p129) target = $region16
    $region15: #{motip_forward.36} parent=5 // pred_region
      // Predicated region
      $region17: #{motip_forward.36} parent=15 // pred_check
        %p132 = pneg %p29
      $region18: #{motip_forward.36} parent=15 // pred_check_branch
        %134 = sbr.rel (%p132) target = $region20
      $region19: #{motip_forward.36} parent=15 // pred_region
        %p135 = scmp.lt.s32.totalorder %s9, 1
        %s136 = scalar_select %p135, %s9, 1
        %s137 = smul.addr %s136, 4
        %s138 = scalar_lea.vmem %s0, %s137
      $region20: #{motip_forward.36} parent=15 // pred_fallthru
        _
      // Predicated region
      $region21: #{motip_forward.36} parent=15 // pred_check
        %p139 = pneg %p55
      $region22: #{motip_forward.36} parent=15 // pred_check_branch
        %141 = sbr.rel (%p139) target = $region24
      $region23: #{motip_forward.36} parent=15 // pred_region
        %p142 = scmp.lt.s32.totalorder %s9, 1
        %s143 = scalar_select %p142, %s9, 1
        %s144 = smul.addr %s143, 4
        %s145 = scalar_lea.vmem %s1, %s144
      $region24: #{motip_forward.36} parent=15 // pred_fallthru
        _
      // Predicated region
      $region25: #{motip_forward.36} parent=15 // pred_check
        %p146 = pneg %p81
      $region26: #{motip_forward.36} parent=15 // pred_check_branch
        %148 = sbr.rel (%p146) target = $region28
      $region27: #{motip_forward.36} parent=15 // pred_region
        %p149 = scmp.lt.s32.totalorder %s9, 1
        %s150 = scalar_select %p149, %s9, 1
        %s151 = smul.addr %s150, 4
        %s152 = scalar_lea.vmem %s2, %s151
      $region28: #{motip_forward.36} parent=15 // pred_fallthru
        _
    $region16: #{motip_forward.36} parent=5 // pred_fallthru
      _
    %p153 = scmp.le.s32.totalorder 1, %s9
    %p154 = scmp.lt.s32.totalorder %s9, 3
    %p155 = pnand %p153, %p154
    %p156 = pneg %p155
    // Predicated region
    $region29: #{motip_forward.36} parent=5 // pred_check
      _
    $region30: #{motip_forward.36} parent=5 // pred_check_branch
      %158 = sbr.rel (%p155) target = $region32
    $region31: #{motip_forward.36} parent=5 // pred_region
      %s159 = ssub.s32 %s9, 1
      %p160 = scmp.lt.s32.totalorder %s14, 1
      %s161 = scalar_select %p160, %s14, 1
      %s162 = smul.addr %s161, 4
      %s163 = scalar_lea.vmem %s0, %s162
      %p164 = pneg %p35
      %p165 = pneg %p32
      %p166 = scmp.lt.s32.totalorder %s14, 1
      %s167 = scalar_select %p166, %s14, 1
      %s168 = smul.addr %s167, 4
      %s169 = scalar_lea.vmem %s1, %s168
      %p170 = pneg %p61
      %p171 = pneg %p58
      %p172 = scmp.lt.s32.totalorder %s14, 1
      %s173 = scalar_select %p172, %s14, 1
      %s174 = smul.addr %s173, 4
      %s175 = scalar_lea.vmem %s2, %s174
      %p176 = pneg %p87
      %p177 = pneg %p84
      %p178 = pneg %p113
      %p179 = pneg %p110
      %p180 = scmp.lt.s32.totalorder %s14, 1
      %s181 = scalar_select %p180, %s14, 1
      %s182 = smul.addr %s181, 4
      %s183 = scalar_lea.vmem %s3, %s182
      %p184 = scmp.lt.s32.totalorder %s14, 1
      %s185 = scalar_select %p184, %s14, 1
      %s186 = smul.addr %s185, 4
      %s187 = scalar_lea.vmem %s0, %s186
      %p188 = scmp.lt.s32.totalorder %s14, 1
      %s189 = scalar_select %p188, %s14, 1
      %s190 = smul.addr %s189, 4
      %s191 = scalar_lea.vmem %s1, %s190
      %p192 = scmp.lt.s32.totalorder %s14, 1
      %s193 = scalar_select %p192, %s14, 1
      %s194 = smul.addr %s193, 4
      %s195 = scalar_lea.vmem %s2, %s194
      %p196 = scmp.lt.s32.totalorder %s14, 1
      %s197 = scalar_select %p196, %s14, 1
      %s198 = smul.addr %s197, 4
      %s199 = scalar_lea.vmem %s3, %s198
      %v201 = vld [vmem:[%s187] sm:$0xf]
      %v202 = vld [vmem:[%s191] sm:$0xf]
      %v203 = vld [vmem:[%s195] sm:$0xf]
      %vm204 = vcmask 64512
      %v206 = vsel %vm204, %v201, 0
      %v209 = vsel %vm204, %v202, 0
      %211 = vmatpush.bf16.xpose.msra.mxu0 0
      %212 = vmatpush.bf16.xpose.msra.mxu0 0
      %213 = vmatpush.bf16.xpose.msra.mxu0 0
      %214 = vmatpush.bf16.xpose.msra.mxu0 0
      %215 = vmatpush.bf16.xpose.msra.mxu0 0
      %216 = vmatpush.bf16.xpose.msra.mxu0 0
      %217 = vmatpush.bf16.xpose.msra.mxu0 0
      %218 = vmatpush.bf16.xpose.msra.mxu0 %v209
      %219 = vmatmul.bf16.gmra.mxu0 %v206
      %v220 = vpop.f32.mrf.mxu0
      %v221 = vadd.f32 0.0, %v220
      %v222 = vpop.f32.mrf.mxu0
      %223 = vdwg.mxu0
      %v224 = vsel %vm204, %v221, -inf
      %225 = vmax.xlane.f32.xlu0 %v224
      %v226 = vpop.xlane.xlu0 %225
      %v227 = vsub.f32 %v221, %v226
      %v228 = vmul.f32 %v227, 1.442695
      %v229 = vpow.pop %v228
      %v230 = vsel %vm204, %v229, 0.0
      %231 = vadd.xlane.f32.xlu0 %v230
      %v232 = vpop.xlane.xlu0 %231
      %v233 = vrcp.pop %v232
      %v234 = vmul.f32 %v229, %v233
      %v235 = vpack.c.bf16 %v234, %v234
      %v237 = vsel %vm204, %v235, 0
      %vm239 = vcmask 1043456
      %v241 = vsel %vm239, %v203, 0
      %243 = vmatpush.bf16.msra.mxu0 0
      %244 = vmatpush.bf16.msra.mxu0 0
      %245 = vmatpush.bf16.msra.mxu0 0
      %246 = vmatpush.bf16.msra.mxu0 0
      %247 = vmatpush.bf16.msra.mxu0 0
      %248 = vmatpush.bf16.msra.mxu0 0
      %249 = vmatpush.bf16.msra.mxu0 0
      %250 = vmatpush.bf16.msra.mxu0 %v241
      %251 = vmatmul.bf16.gmra.mxu0 %v237
      %v252 = vpop.f32.mrf.mxu0
      %v253 = vadd.f32 0.0, %v252
      %v254 = vpop.f32.mrf.mxu0
      %255 = vdwg.mxu0
      %v256 = vpack.c.bf16 %v253, %v253
      %vm257 = vcmask 60416
      %258 = vst.msk [vmem:[%s199] sm:$0xf] %vm257, %v256
      %v260 = vunpack.c.l.b16 %v201
      %v261 = vpack.c.b16 %v260, %v260
      %262 = vrot.lane.b32.xlu0 %v261, 120
      %v263 = vpop.permute.xlu0 %262
      %v265 = vunpack.c.l.b16 %v202
      %v266 = vpack.c.b16 %v265, %v265
      %267 = vrot.lane.b32.xlu0 %v266, 120
      %v268 = vpop.permute.xlu0 %267
      %v270 = vsel %vm204, %v263, 0
      %v273 = vsel %vm204, %v268, 0
      %275 = vmatpush.bf16.xpose.msra.mxu0 0
      %276 = vmatpush.bf16.xpose.msra.mxu0 0
      %277 = vmatpush.bf16.xpose.msra.mxu0 0
      %278 = vmatpush.bf16.xpose.msra.mxu0 0
      %279 = vmatpush.bf16.xpose.msra.mxu0 0
      %280 = vmatpush.bf16.xpose.msra.mxu0 0
      %281 = vmatpush.bf16.xpose.msra.mxu0 0
      %282 = vmatpush.bf16.xpose.msra.mxu0 %v273
      %283 = vmatmul.bf16.gmra.mxu0 %v270
      %v284 = vpop.f32.mrf.mxu0
      %v285 = vadd.f32 0.0, %v284
      %v286 = vpop.f32.mrf.mxu0
      %287 = vdwg.mxu0
      %v288 = vsel %vm204, %v285, -inf
      %289 = vmax.xlane.f32.xlu0 %v288
      %v290 = vpop.xlane.xlu0 %289
      %v291 = vsub.f32 %v285, %v290
      %v292 = vmul.f32 %v291, 1.442695
      %v293 = vpow.pop %v292
      %v294 = vsel %vm204, %v293, 0.0
      %295 = vadd.xlane.f32.xlu0 %v294
      %v296 = vpop.xlane.xlu0 %295
      %v297 = vrcp.pop %v296
      %v298 = vmul.f32 %v293, %v297
      %v299 = vpack.c.bf16 %v298, %v298
      %v301 = vunpack.c.l.b16 %v203
      %v302 = vpack.c.b16 %v301, %v301
      %303 = vrot.lane.b32.xlu0 %v302, 120
      %v304 = vpop.permute.xlu0 %303
      %v306 = vsel %vm204, %v299, 0
      %v309 = vsel %vm239, %v304, 0
      %311 = vmatpush.bf16.msra.mxu0 0
      %312 = vmatpush.bf16.msra.mxu0 0
      %313 = vmatpush.bf16.msra.mxu0 0
      %314 = vmatpush.bf16.msra.mxu0 0
      %315 = vmatpush.bf16.msra.mxu0 0
      %316 = vmatpush.bf16.msra.mxu0 0
      %317 = vmatpush.bf16.msra.mxu0 0
      %318 = vmatpush.bf16.msra.mxu0 %v309
      %319 = vmatmul.bf16.gmra.mxu0 %v306
      %v320 = vpop.f32.mrf.mxu0
      %v321 = vadd.f32 0.0, %v320
      %v322 = vpop.f32.mrf.mxu0
      %323 = vdwg.mxu0
      %v324 = vpack.c.bf16 %v321, %v321
      %326 = vrot.lane.b32.xlu0 %v324, 8
      %v327 = vpop.permute.xlu0 %326
      %vm329 = vcmask 126016
      %330 = vst.msk [vmem:[%s199] sm:$0xf] %vm329, %v327
      %331 = vrot.lane.b32.xlu0 %v261, 112
      %v332 = vpop.permute.xlu0 %331
      %333 = vrot.lane.b32.xlu0 %v266, 112
      %v334 = vpop.permute.xlu0 %333
      %v336 = vsel %vm204, %v332, 0
      %v339 = vsel %vm204, %v334, 0
      %341 = vmatpush.bf16.xpose.msra.mxu0 0
      %342 = vmatpush.bf16.xpose.msra.mxu0 0
      %343 = vmatpush.bf16.xpose.msra.mxu0 0
      %344 = vmatpush.bf16.xpose.msra.mxu0 0
      %345 = vmatpush.bf16.xpose.msra.mxu0 0
      %346 = vmatpush.bf16.xpose.msra.mxu0 0
      %347 = vmatpush.bf16.xpose.msra.mxu0 0
      %348 = vmatpush.bf16.xpose.msra.mxu0 %v339
      %349 = vmatmul.bf16.gmra.mxu0 %v336
      %v350 = vpop.f32.mrf.mxu0
      %v351 = vadd.f32 0.0, %v350
      %v352 = vpop.f32.mrf.mxu0
      %353 = vdwg.mxu0
      %v354 = vsel %vm204, %v351, -inf
      %355 = vmax.xlane.f32.xlu0 %v354
      %v356 = vpop.xlane.xlu0 %355
      %v357 = vsub.f32 %v351, %v356
      %v358 = vmul.f32 %v357, 1.442695
      %v359 = vpow.pop %v358
      %v360 = vsel %vm204, %v359, 0.0
      %361 = vadd.xlane.f32.xlu0 %v360
      %v362 = vpop.xlane.xlu0 %361
      %v363 = vrcp.pop %v362
      %v364 = vmul.f32 %v359, %v363
      %v365 = vpack.c.bf16 %v364, %v364
      %366 = vrot.lane.b32.xlu0 %v302, 112
      %v367 = vpop.permute.xlu0 %366
      %v369 = vsel %vm204, %v365, 0
      %v372 = vsel %vm239, %v367, 0
      %374 = vmatpush.bf16.msra.mxu0 0
      %375 = vmatpush.bf16.msra.mxu0 0
      %376 = vmatpush.bf16.msra.mxu0 0
      %377 = vmatpush.bf16.msra.mxu0 0
      %378 = vmatpush.bf16.msra.mxu0 0
      %379 = vmatpush.bf16.msra.mxu0 0
      %380 = vmatpush.bf16.msra.mxu0 0
      %381 = vmatpush.bf16.msra.mxu0 %v372
      %382 = vmatmul.bf16.gmra.mxu0 %v369
      %v383 = vpop.f32.mrf.mxu0
      %v384 = vadd.f32 0.0, %v383
      %v385 = vpop.f32.mrf.mxu0
      %386 = vdwg.mxu0
      %v387 = vpack.c.bf16 %v384, %v384
      %389 = vrot.lane.b32.xlu0 %v387, 16
      %v390 = vpop.permute.xlu0 %389
      %vm392 = vcmask 191616
      %393 = vst.msk [vmem:[%s199] sm:$0xf] %vm392, %v390
      %394 = vrot.lane.b32.xlu0 %v261, 104
      %v395 = vpop.permute.xlu0 %394
      %396 = vrot.lane.b32.xlu0 %v266, 104
      %v397 = vpop.permute.xlu0 %396
      %v399 = vsel %vm204, %v395, 0
      %v402 = vsel %vm204, %v397, 0
      %404 = vmatpush.bf16.xpose.msra.mxu0 0
      %405 = vmatpush.bf16.xpose.msra.mxu0 0
      %406 = vmatpush.bf16.xpose.msra.mxu0 0
      %407 = vmatpush.bf16.xpose.msra.mxu0 0
      %408 = vmatpush.bf16.xpose.msra.mxu0 0
      %409 = vmatpush.bf16.xpose.msra.mxu0 0
      %410 = vmatpush.bf16.xpose.msra.mxu0 0
      %411 = vmatpush.bf16.xpose.msra.mxu0 %v402
      %412 = vmatmul.bf16.gmra.mxu0 %v399
      %v413 = vpop.f32.mrf.mxu0
      %v414 = vadd.f32 0.0, %v413
      %v415 = vpop.f32.mrf.mxu0
      %416 = vdwg.mxu0
      %v417 = vsel %vm204, %v414, -inf
      %418 = vmax.xlane.f32.xlu0 %v417
      %v419 = vpop.xlane.xlu0 %418
      %v420 = vsub.f32 %v414, %v419
      %v421 = vmul.f32 %v420, 1.442695
      %v422 = vpow.pop %v421
      %v423 = vsel %vm204, %v422, 0.0
      %424 = vadd.xlane.f32.xlu0 %v423
      %v425 = vpop.xlane.xlu0 %424
      %v426 = vrcp.pop %v425
      %v427 = vmul.f32 %v422, %v426
      %v428 = vpack.c.bf16 %v427, %v427
      %429 = vrot.lane.b32.xlu0 %v302, 104
      %v430 = vpop.permute.xlu0 %429
      %v432 = vsel %vm204, %v428, 0
      %v435 = vsel %vm239, %v430, 0
      %437 = vmatpush.bf16.msra.mxu0 0
      %438 = vmatpush.bf16.msra.mxu0 0
      %439 = vmatpush.bf16.msra.mxu0 0
      %440 = vmatpush.bf16.msra.mxu0 0
      %441 = vmatpush.bf16.msra.mxu0 0
      %442 = vmatpush.bf16.msra.mxu0 0
      %443 = vmatpush.bf16.msra.mxu0 0
      %444 = vmatpush.bf16.msra.mxu0 %v435
      %445 = vmatmul.bf16.gmra.mxu0 %v432
      %v446 = vpop.f32.mrf.mxu0
      %v447 = vadd.f32 0.0, %v446
      %v448 = vpop.f32.mrf.mxu0
      %449 = vdwg.mxu0
      %v450 = vpack.c.bf16 %v447, %v447
      %452 = vrot.lane.b32.xlu0 %v450, 24
      %v453 = vpop.permute.xlu0 %452
      %vm455 = vcmask 257216
      %456 = vst.msk [vmem:[%s199] sm:$0xf] %vm455, %v453
      %p457 = scmp.lt.s32.totalorder %s14, 1
      %s458 = scalar_select %p457, %s14, 1
      %s459 = smul.addr %s458, 4
      %s460 = scalar_lea.vmem %s3, %s459
      // Predicated region
      $region33: #{motip_forward.36} parent=31 // pred_check
        %p461 = pneg %p110
      $region34: #{motip_forward.36} parent=31 // pred_check_branch
        %463 = sbr.rel (%p461) target = $region36
      $region35: #{motip_forward.36} parent=31 // pred_region
        _
      $region36: #{motip_forward.36} parent=31 // pred_fallthru
        _
    $region32: #{motip_forward.36} parent=5 // pred_fallthru
      _
    %p464 = scmp.le.s32.totalorder 2, %s9
    // Predicated region
    $region37: #{motip_forward.36} parent=5 // pred_check
      %p465 = pneg %p464
    $region38: #{motip_forward.36} parent=5 // pred_check_branch
      %467 = sbr.rel (%p465) target = $region40
    $region39: #{motip_forward.36} parent=5 // pred_region
      %s468 = ssub.s32 %s9, 2
      // Predicated region
      $region41: #{motip_forward.36} parent=39 // pred_check
        %p469 = pneg %p116
      $region42: #{motip_forward.36} parent=39 // pred_check_branch
        %471 = sbr.rel (%p469) target = $region44
      $region43: #{motip_forward.36} parent=39 // pred_region
        %p472 = scmp.lt.s32.totalorder %s15, 1
        %s473 = scalar_select %p472, %s15, 1
        %s474 = smul.addr %s473, 4
        %s475 = scalar_lea.vmem %s3, %s474
      $region44: #{motip_forward.36} parent=39 // pred_fallthru
        _
    $region40: #{motip_forward.36} parent=5 // pred_fallthru
      _
  $region6: #{motip_forward.36} parent=0 // loop_footer
    %s13 = sadd.s32 1, %s9
  $region7: #{motip_forward.36} parent=0 // loop_footer_branch
    %8 = sbr.rel target = $region3
  $region8: #{motip_forward.36} parent=0 // loop_exit
    _

// kernel: motip_forward.38
$region0: #{motip_forward.38}
  #allocation0 [shape = 'u32[]', space=smem, size = 0x4, offset = 0x4, fixed_abs, tag = 'smem constant byte address 0x4 - core index']
  #allocation1 [shape = 'u32[72,128]{1,0:T(1,128)}', space=vmem, size = 0x9000, scoped, tag = 'internal scratch']
  %s0 = inlined_call_operand.vmem [shape: bf16[16,32], index: 0, kind: input, shape index: {}]
  %s1 = inlined_call_operand.vmem [shape: bf16[16,32], index: 1, kind: input, shape index: {}]
  %s2 = inlined_call_operand.vmem [shape: bf16[32,32], index: 2, kind: input, shape index: {}]
  %s3 = inlined_call_operand.hbm [shape: f32[1,32], index: 3, kind: input, shape index: {}]
  %s4 = inlined_call_operand.vmem [shape: bf16[16,32], index: 4, kind: output, shape index: {}]
  %s5 = sld [smem:[#allocation0]]
  $region30: #{motip_forward.38} parent=0
    _
  %s7 = ssub.s32 1, %s5
  %s8 = scalar_select 0, %s7, %s5
  $region1: #{motip_forward.38} parent=0
    #allocation2 [shape = 'u8[512]{0}', space=vmem, size = 0x400, scoped, tag = 'input window, operand 3, single buffered']
    #allocation3 [shape = 's32[1]{0}', space=sflag, size = 0x4, scoped, tag = 'scoped memory for motip_forward.38']
    %9 = vsyncpa [#allocation3], 0
    // Predicated region
    $region2: #{motip_forward.38} parent=1 // pred_check
      _
    $region3: #{motip_forward.38} parent=1 // pred_check_branch
      %11 = sbr.rel (0) target = $region5
    $region4: #{motip_forward.38} parent=1 // pred_region
      _
    $region5: #{motip_forward.38} parent=1 // pred_fallthru
      _
    // Predicated region
    $region6: #{motip_forward.38} parent=1 // pred_check
      _
    $region7: #{motip_forward.38} parent=1 // pred_check_branch
      %13 = sbr.rel (0) target = $region9
    $region8: #{motip_forward.38} parent=1 // pred_region
      _
    $region9: #{motip_forward.38} parent=1 // pred_fallthru
      _
    // Predicated region
    $region10: #{motip_forward.38} parent=1 // pred_check
      _
    $region11: #{motip_forward.38} parent=1 // pred_check_branch
      %15 = sbr.rel (0) target = $region13
    $region12: #{motip_forward.38} parent=1 // pred_region
      _
    $region13: #{motip_forward.38} parent=1 // pred_fallthru
      _
    // Predicated region
    $region14: #{motip_forward.38} parent=1 // pred_check
      _
    $region15: #{motip_forward.38} parent=1 // pred_check_branch
      %17 = sbr.rel (0) target = $region17
    $region16: #{motip_forward.38} parent=1 // pred_region
      %19 = vsyncadd [#allocation3], 0
      %s21 = sshll.u32 %s3, 4
      %s22 = int_to_ptr.hbm [resolvable:$true] %s21
      %s23 = sshll.u32 [#allocation2], 4
      %s24 = int_to_ptr.vmem [resolvable:$true] %s23
      %26 = dma.hbm_to_vmem [thread:$0]  %s22, 16, %s24, [#allocation3]
    $region17: #{motip_forward.38} parent=1 // pred_fallthru
      _
    // Predicated region
    $region18: #{motip_forward.38} parent=1 // pred_check
      _
    $region19: #{motip_forward.38} parent=1 // pred_check_branch
      %28 = sbr.rel (0) target = $region21
    $region20: #{motip_forward.38} parent=1 // pred_region
      %30 = dma.done [#allocation3], 16
    $region21: #{motip_forward.38} parent=1 // pred_fallthru
      _
    %v32 = vld [vmem:[%s0] sm:$0xf]
    %v33 = vld [vmem:[%s0 + $0x4] sm:$0xf]
    %v34 = vld [vmem:[%s1] sm:$0xf]
    %v35 = vld [vmem:[%s1 + $0x4] sm:$0xf]
    %v36 = vunpack.c.l.bf16 %v32
    %v37 = vunpack.c.l.bf16 %v33
    %v38 = vunpack.c.l.bf16 %v34
    %v39 = vunpack.c.l.bf16 %v35
    %v40 = vadd.f32 %v36, %v38
    %v41 = vadd.f32 %v37, %v39
    %v42 = vpack.c.bf16 %v41, %v40
    %v43 = vld [vmem:[%s2] sm:$0xf]
    %v44 = vld [vmem:[%s2 + $0x4] sm:$0xf]
    %v45 = vld [vmem:[%s2 + $0x8] sm:$0xf]
    %v46 = vld [vmem:[%s2 + $0xc] sm:$0xf]
    %v47 = vld [vmem:[#allocation2] sm:$0x1]
    %v49 = vperm.slane %v47, 0
    %v55 = vunpack.c.l.b16 %v43
    %v56 = vunpack.c.l.b16 %v44
    %v57 = vunpack.c.l.b16 %v45
    %v58 = vunpack.c.l.b16 %v46
    %v59 = vpack.c.b16 %v56, %v55
    %v60 = vpack.c.b16 %v58, %v57
    %vm63 = vcmask 261120
    %v65 = vsel %vm63, %v42, 0
    %67 = vmatpush.bf16.msra.mxu0 0
    %68 = vmatpush.bf16.msra.mxu0 0
    %69 = vmatpush.bf16.msra.mxu0 0
    %70 = vmatpush.bf16.msra.mxu0 0
    %71 = vmatpush.bf16.msra.mxu0 0
    %72 = vmatpush.bf16.msra.mxu0 0
    %73 = vmatpush.bf16.msra.mxu0 %v60
    %74 = vmatpush.bf16.msra.mxu0 %v59
    %75 = vmatmul.bf16.gmra.mxu0 %v65
    %v76 = vpop.f32.mrf.mxu0
    %v77 = vadd.f32 %v49, %v76
    %v78 = vpop.f32.mrf.mxu0
    %v79 = vadd.f32 %v49, %v78
    %80 = vdwg.mxu0
    %v81 = vpack.c.bf16 %v77, %v77
    %v82 = vpack.c.bf16 %v79, %v79
    %vm83 = vcmask 257024
    %84 = vst.msk [vmem:[%s4] sm:$0xf] %vm83, %v81
    %85 = vst.msk [vmem:[%s4 + $0x4] sm:$0xf] %vm83, %v82
    // Predicated region
    $region22: #{motip_forward.38} parent=1 // pred_check
      _
    $region23: #{motip_forward.38} parent=1 // pred_check_branch
      %87 = sbr.rel (0) target = $region25
    $region24: #{motip_forward.38} parent=1 // pred_region
      _
    $region25: #{motip_forward.38} parent=1 // pred_fallthru
      _
    // Predicated region
    $region26: #{motip_forward.38} parent=1 // pred_check
      _
    $region27: #{motip_forward.38} parent=1 // pred_check_branch
      %89 = sbr.rel (0) target = $region29
    $region28: #{motip_forward.38} parent=1 // pred_region
      _
    $region29: #{motip_forward.38} parent=1 // pred_fallthru
      _
    %90 = vsyncpa [#allocation3], 1

// kernel: motip_forward.40
$region0: #{motip_forward.40}
  #allocation0 [shape = 'u32[]', space=smem, size = 0x4, offset = 0x4, fixed_abs, tag = 'smem constant byte address 0x4 - core index']
  #allocation1 [shape = 'u32[72,128]{1,0:T(1,128)}', space=vmem, size = 0x9000, scoped, tag = 'internal scratch']
  %s0 = inlined_call_operand.vmem [shape: bf16[2,8,32], index: 0, kind: input, shape index: {}]
  %s1 = inlined_call_operand.vmem [shape: bf16[2,16,32], index: 1, kind: input, shape index: {}]
  %s2 = inlined_call_operand.vmem [shape: bf16[2,16,32], index: 2, kind: input, shape index: {}]
  %s3 = inlined_call_operand.vmem [shape: bf16[2,8,32], index: 3, kind: output, shape index: {}]
  %s4 = sld [smem:[#allocation0]]
  $region45: #{motip_forward.40} parent=0
    _
  %s6 = ssub.s32 1, %s4
  %s7 = scalar_select 0, %s6, %s4
  loop: start=0, step=1, limit=4
  $region2: #{motip_forward.40} parent=0 // loop_pre_header
    _
  $region3: #{motip_forward.40} parent=0 // loop_header
    %s9 = sphi 0, %s13
    %p10 = scmp.ge.s32.totalorder %s9, 4
    %s19 = sphi 0, %s21
    %s22 = sphi 0, %s19
    %s23 = sphi 0, %s22
    %s39 = sphi 0, %s23
    %s45 = sphi 0, %s47
    %s48 = sphi 0, %s45
    %s49 = sphi 0, %s48
    %s65 = sphi 0, %s49
    %s71 = sphi 0, %s73
    %s74 = sphi 0, %s71
    %s75 = sphi 0, %s74
    %s91 = sphi 0, %s75
    %s97 = sphi 0, %s99
    %s100 = sphi 0, %s97
    %s101 = sphi 0, %s100
    %s117 = sphi 0, %s101
  $region4: #{motip_forward.40} parent=0 // loop_header_branch
    %12 = sbr.rel (%p10) target = $region8
  $region5: #{motip_forward.40} parent=0 // loop_body
    %s14 = ssub.s32 %s9, 1
    %s15 = ssub.s32 %s9, 2
    %s16 = sadd.s32 %s9, 1
    %s17 = ssub.s32 %s9, %s16
    %p18 = scmp.eq.s32.totalorder %s17, 0
    %s20 = sadd.s32 %s19, 1
    %s21 = scalar_select %p18, %s19, %s20
    %p24 = pneg %p18
    %p25 = scmp.eq.s32.totalorder %s9, 1
    %p26 = por %p24, %p25
    %p27 = scmp.ne.s32.totalorder %s19, %s22
    %p28 = scmp.eq.s32.totalorder %s9, 0
    %p29 = por %p27, %p28
    %p30 = scmp.ne.s32.totalorder %s19, %s22
    %p31 = scmp.eq.s32.totalorder %s14, 1
    %p32 = por %p30, %p31
    %p33 = scmp.ne.s32.totalorder %s22, %s23
    %p34 = scmp.eq.s32.totalorder %s14, 0
    %p35 = por %p33, %p34
    %p36 = scmp.ne.s32.totalorder %s22, %s23
    %p37 = scmp.eq.s32.totalorder %s15, 1
    %p38 = por %p36, %p37
    %p40 = scmp.ne.s32.totalorder %s23, %s39
    %p41 = scmp.eq.s32.totalorder %s15, 0
    %p42 = por %p40, %p41
    %s43 = ssub.s32 %s9, %s16
    %p44 = scmp.eq.s32.totalorder %s43, 0
    %s46 = sadd.s32 %s45, 1
    %s47 = scalar_select %p44, %s45, %s46
    %p50 = pneg %p44
    %p51 = scmp.eq.s32.totalorder %s9, 1
    %p52 = por %p50, %p51
    %p53 = scmp.ne.s32.totalorder %s45, %s48
    %p54 = scmp.eq.s32.totalorder %s9, 0
    %p55 = por %p53, %p54
    %p56 = scmp.ne.s32.totalorder %s45, %s48
    %p57 = scmp.eq.s32.totalorder %s14, 1
    %p58 = por %p56, %p57
    %p59 = scmp.ne.s32.totalorder %s48, %s49
    %p60 = scmp.eq.s32.totalorder %s14, 0
    %p61 = por %p59, %p60
    %p62 = scmp.ne.s32.totalorder %s48, %s49
    %p63 = scmp.eq.s32.totalorder %s15, 1
    %p64 = por %p62, %p63
    %p66 = scmp.ne.s32.totalorder %s49, %s65
    %p67 = scmp.eq.s32.totalorder %s15, 0
    %p68 = por %p66, %p67
    %s69 = ssub.s32 %s9, %s16
    %p70 = scmp.eq.s32.totalorder %s69, 0
    %s72 = sadd.s32 %s71, 1
    %s73 = scalar_select %p70, %s71, %s72
    %p76 = pneg %p70
    %p77 = scmp.eq.s32.totalorder %s9, 1
    %p78 = por %p76, %p77
    %p79 = scmp.ne.s32.totalorder %s71, %s74
    %p80 = scmp.eq.s32.totalorder %s9, 0
    %p81 = por %p79, %p80
    %p82 = scmp.ne.s32.totalorder %s71, %s74
    %p83 = scmp.eq.s32.totalorder %s14, 1
    %p84 = por %p82, %p83
    %p85 = scmp.ne.s32.totalorder %s74, %s75
    %p86 = scmp.eq.s32.totalorder %s14, 0
    %p87 = por %p85, %p86
    %p88 = scmp.ne.s32.totalorder %s74, %s75
    %p89 = scmp.eq.s32.totalorder %s15, 1
    %p90 = por %p88, %p89
    %p92 = scmp.ne.s32.totalorder %s75, %s91
    %p93 = scmp.eq.s32.totalorder %s15, 0
    %p94 = por %p92, %p93
    %s95 = ssub.s32 %s9, %s16
    %p96 = scmp.eq.s32.totalorder %s95, 0
    %s98 = sadd.s32 %s97, 1
    %s99 = scalar_select %p96, %s97, %s98
    %p102 = pneg %p96
    %p103 = scmp.eq.s32.totalorder %s9, 1
    %p104 = por %p102, %p103
    %p105 = scmp.ne.s32.totalorder %s97, %s100
    %p106 = scmp.eq.s32.totalorder %s9, 0
    %p107 = por %p105, %p106
    %p108 = scmp.ne.s32.totalorder %s97, %s100
    %p109 = scmp.eq.s32.totalorder %s14, 1
    %p110 = por %p108, %p109
    %p111 = scmp.ne.s32.totalorder %s100, %s101
    %p112 = scmp.eq.s32.totalorder %s14, 0
    %p113 = por %p111, %p112
    %p114 = scmp.ne.s32.totalorder %s100, %s101
    %p115 = scmp.eq.s32.totalorder %s15, 1
    %p116 = por %p114, %p115
    %p118 = scmp.ne.s32.totalorder %s101, %s117
    %p119 = scmp.eq.s32.totalorder %s15, 0
    %p120 = por %p118, %p119
    %p121 = scmp.le.s32.totalorder 1, %s9
    %p122 = scmp.lt.s32.totalorder %s9, 3
    %p123 = pnand %p121, %p122
    %p124 = pneg %p123
    // Predicated region
    $region9: #{motip_forward.40} parent=5 // pred_check
      _
    $region10: #{motip_forward.40} parent=5 // pred_check_branch
      %126 = sbr.rel (%p123) target = $region12
    $region11: #{motip_forward.40} parent=5 // pred_region
      %s127 = ssub.s32 %s9, 1
    $region12: #{motip_forward.40} parent=5 // pred_fallthru
      _
    %p128 = scmp.lt.s32.totalorder %s9, 2
    // Predicated region
    $region13: #{motip_forward.40} parent=5 // pred_check
      %p129 = pneg %p128
    $region14: #{motip_forward.40} parent=5 // pred_check_branch
      %131 = sbr.rel (%p129) target = $region16
    $region15: #{motip_forward.40} parent=5 // pred_region
      // Predicated region
      $region17: #{motip_forward.40} parent=15 // pred_check
        %p132 = pneg %p29
      $region18: #{motip_forward.40} parent=15 // pred_check_branch
        %134 = sbr.rel (%p132) target = $region20
      $region19: #{motip_forward.40} parent=15 // pred_region
        %p135 = scmp.lt.s32.totalorder %s9, 1
        %s136 = scalar_select %p135, %s9, 1
        %s137 = smul.addr %s136, 4
        %s138 = scalar_lea.vmem %s0, %s137
      $region20: #{motip_forward.40} parent=15 // pred_fallthru
        _
      // Predicated region
      $region21: #{motip_forward.40} parent=15 // pred_check
        %p139 = pneg %p55
      $region22: #{motip_forward.40} parent=15 // pred_check_branch
        %141 = sbr.rel (%p139) target = $region24
      $region23: #{motip_forward.40} parent=15 // pred_region
        %p142 = scmp.lt.s32.totalorder %s9, 1
        %s143 = scalar_select %p142, %s9, 1
        %s144 = smul.addr %s143, 2
        %s145 = smul.addr %s144, 4
        %s146 = scalar_lea.vmem %s1, %s145
      $region24: #{motip_forward.40} parent=15 // pred_fallthru
        _
      // Predicated region
      $region25: #{motip_forward.40} parent=15 // pred_check
        %p147 = pneg %p81
      $region26: #{motip_forward.40} parent=15 // pred_check_branch
        %149 = sbr.rel (%p147) target = $region28
      $region27: #{motip_forward.40} parent=15 // pred_region
        %p150 = scmp.lt.s32.totalorder %s9, 1
        %s151 = scalar_select %p150, %s9, 1
        %s152 = smul.addr %s151, 2
        %s153 = smul.addr %s152, 4
        %s154 = scalar_lea.vmem %s2, %s153
      $region28: #{motip_forward.40} parent=15 // pred_fallthru
        _
    $region16: #{motip_forward.40} parent=5 // pred_fallthru
      _
    %p155 = scmp.le.s32.totalorder 1, %s9
    %p156 = scmp.lt.s32.totalorder %s9, 3
    %p157 = pnand %p155, %p156
    %p158 = pneg %p157
    // Predicated region
    $region29: #{motip_forward.40} parent=5 // pred_check
      _
    $region30: #{motip_forward.40} parent=5 // pred_check_branch
      %160 = sbr.rel (%p157) target = $region32
    $region31: #{motip_forward.40} parent=5 // pred_region
      %s161 = ssub.s32 %s9, 1
      %p162 = scmp.lt.s32.totalorder %s14, 1
      %s163 = scalar_select %p162, %s14, 1
      %s164 = smul.addr %s163, 4
      %s165 = scalar_lea.vmem %s0, %s164
      %p166 = pneg %p35
      %p167 = pneg %p32
      %p168 = scmp.lt.s32.totalorder %s14, 1
      %s169 = scalar_select %p168, %s14, 1
      %s170 = smul.addr %s169, 2
      %s171 = smul.addr %s170, 4
      %s172 = scalar_lea.vmem %s1, %s171
      %p173 = pneg %p61
      %p174 = pneg %p58
      %p175 = scmp.lt.s32.totalorder %s14, 1
      %s176 = scalar_select %p175, %s14, 1
      %s177 = smul.addr %s176, 2
      %s178 = smul.addr %s177, 4
      %s179 = scalar_lea.vmem %s2, %s178
      %p180 = pneg %p87
      %p181 = pneg %p84
      %p182 = pneg %p113
      %p183 = pneg %p110
      %p184 = scmp.lt.s32.totalorder %s14, 1
      %s185 = scalar_select %p184, %s14, 1
      %s186 = smul.addr %s185, 4
      %s187 = scalar_lea.vmem %s3, %s186
      %p188 = scmp.lt.s32.totalorder %s14, 1
      %s189 = scalar_select %p188, %s14, 1
      %s190 = smul.addr %s189, 4
      %s191 = scalar_lea.vmem %s0, %s190
      %p192 = scmp.lt.s32.totalorder %s14, 1
      %s193 = scalar_select %p192, %s14, 1
      %s194 = smul.addr %s193, 2
      %s195 = smul.addr %s194, 4
      %s196 = scalar_lea.vmem %s1, %s195
      %p197 = scmp.lt.s32.totalorder %s14, 1
      %s198 = scalar_select %p197, %s14, 1
      %s199 = smul.addr %s198, 2
      %s200 = smul.addr %s199, 4
      %s201 = scalar_lea.vmem %s2, %s200
      %p202 = scmp.lt.s32.totalorder %s14, 1
      %s203 = scalar_select %p202, %s14, 1
      %s204 = smul.addr %s203, 4
      %s205 = scalar_lea.vmem %s3, %s204
      %v207 = vld [vmem:[%s191] sm:$0xf]
      %v208 = vld [vmem:[%s196] sm:$0xf]
      %v209 = vld [vmem:[%s196 + $0x4] sm:$0xf]
      %v210 = vld [vmem:[%s201] sm:$0xf]
      %v211 = vld [vmem:[%s201 + $0x4] sm:$0xf]
      %v214 = vunpack.c.l.b16 %v208
      %v215 = vunpack.c.l.b16 %v209
      %v216 = vpack.c.b16 %v215, %v214
      %vm217 = vcmask 64512
      %v219 = vsel %vm217, %v207, 0
      %v222 = vsel %vm217, %v216, 0
      %224 = vmatpush.bf16.xpose.msra.mxu0 0
      %225 = vmatpush.bf16.xpose.msra.mxu0 0
      %226 = vmatpush.bf16.xpose.msra.mxu0 0
      %227 = vmatpush.bf16.xpose.msra.mxu0 0
      %228 = vmatpush.bf16.xpose.msra.mxu0 0
      %229 = vmatpush.bf16.xpose.msra.mxu0 0
      %230 = vmatpush.bf16.xpose.msra.mxu0 0
      %231 = vmatpush.bf16.xpose.msra.mxu0 %v222
      %232 = vmatmul.bf16.gmra.mxu0 %v219
      %v233 = vpop.f32.mrf.mxu0
      %v234 = vadd.f32 0.0, %v233
      %v235 = vpop.f32.mrf.mxu0
      %236 = vdwg.mxu0
      %vm237 = vcmask 130048
      %v238 = vsel %vm237, %v234, -inf
      %239 = vmax.xlane.f32.xlu0 %v238
      %v240 = vpop.xlane.xlu0 %239
      %v241 = vsub.f32 %v234, %v240
      %v242 = vmul.f32 %v241, 1.442695
      %v243 = vpow.pop %v242
      %v244 = vsel %vm237, %v243, 0.0
      %245 = vadd.xlane.f32.xlu0 %v244
      %v246 = vpop.xlane.xlu0 %245
      %v247 = vrcp.pop %v246
      %v248 = vmul.f32 %v243, %v247
      %v249 = vpack.c.bf16 %v248, %v248
      %v252 = vunpack.c.l.b16 %v210
      %v253 = vunpack.c.l.b16 %v211
      %v254 = vpack.c.b16 %v253, %v252
      %v257 = vsel %vm237, %v249, 0
      %259 = vmatpush.bf16.msra.mxu0 0
      %260 = vmatpush.bf16.msra.mxu0 0
      %261 = vmatpush.bf16.msra.mxu0 0
      %262 = vmatpush.bf16.msra.mxu0 0
      %263 = vmatpush.bf16.msra.mxu0 0
      %264 = vmatpush.bf16.msra.mxu0 0
      %265 = vmatpush.bf16.msra.mxu0 0
      %266 = vmatpush.bf16.msra.mxu0 %v254
      %267 = vmatmul.bf16.gmra.mxu0 %v257
      %v268 = vpop.f32.mrf.mxu0
      %v269 = vadd.f32 0.0, %v268
      %v270 = vpop.f32.mrf.mxu0
      %271 = vdwg.mxu0
      %v272 = vpack.c.bf16 %v269, %v269
      %vm273 = vcmask 60416
      %274 = vst.msk [vmem:[%s205] sm:$0xf] %vm273, %v272
      %v276 = vunpack.c.l.b16 %v207
      %v277 = vpack.c.b16 %v276, %v276
      %278 = vrot.lane.b32.xlu0 %v277, 120
      %v279 = vpop.permute.xlu0 %278
      %280 = vrot.lane.b32.xlu0 %v216, 120
      %v281 = vpop.permute.xlu0 %280
      %v283 = vsel %vm217, %v279, 0
      %v286 = vsel %vm217, %v281, 0
      %288 = vmatpush.bf16.xpose.msra.mxu0 0
      %289 = vmatpush.bf16.xpose.msra.mxu0 0
      %290 = vmatpush.bf16.xpose.msra.mxu0 0
      %291 = vmatpush.bf16.xpose.msra.mxu0 0
      %292 = vmatpush.bf16.xpose.msra.mxu0 0
      %293 = vmatpush.bf16.xpose.msra.mxu0 0
      %294 = vmatpush.bf16.xpose.msra.mxu0 0
      %295 = vmatpush.bf16.xpose.msra.mxu0 %v286
      %296 = vmatmul.bf16.gmra.mxu0 %v283
      %v297 = vpop.f32.mrf.mxu0
      %v298 = vadd.f32 0.0, %v297
      %v299 = vpop.f32.mrf.mxu0
      %300 = vdwg.mxu0
      %v301 = vsel %vm237, %v298, -inf
      %302 = vmax.xlane.f32.xlu0 %v301
      %v303 = vpop.xlane.xlu0 %302
      %v304 = vsub.f32 %v298, %v303
      %v305 = vmul.f32 %v304, 1.442695
      %v306 = vpow.pop %v305
      %v307 = vsel %vm237, %v306, 0.0
      %308 = vadd.xlane.f32.xlu0 %v307
      %v309 = vpop.xlane.xlu0 %308
      %v310 = vrcp.pop %v309
      %v311 = vmul.f32 %v306, %v310
      %v312 = vpack.c.bf16 %v311, %v311
      %313 = vrot.lane.b32.xlu0 %v254, 120
      %v314 = vpop.permute.xlu0 %313
      %v317 = vsel %vm237, %v312, 0
      %319 = vmatpush.bf16.msra.mxu0 0
      %320 = vmatpush.bf16.msra.mxu0 0
      %321 = vmatpush.bf16.msra.mxu0 0
      %322 = vmatpush.bf16.msra.mxu0 0
      %323 = vmatpush.bf16.msra.mxu0 0
      %324 = vmatpush.bf16.msra.mxu0 0
      %325 = vmatpush.bf16.msra.mxu0 0
      %326 = vmatpush.bf16.msra.mxu0 %v314
      %327 = vmatmul.bf16.gmra.mxu0 %v317
      %v328 = vpop.f32.mrf.mxu0
      %v329 = vadd.f32 0.0, %v328
      %v330 = vpop.f32.mrf.mxu0
      %331 = vdwg.mxu0
      %v332 = vpack.c.bf16 %v329, %v329
      %334 = vrot.lane.b32.xlu0 %v332, 8
      %v335 = vpop.permute.xlu0 %334
      %vm337 = vcmask 126016
      %338 = vst.msk [vmem:[%s205] sm:$0xf] %vm337, %v335
      %339 = vrot.lane.b32.xlu0 %v277, 112
      %v340 = vpop.permute.xlu0 %339
      %341 = vrot.lane.b32.xlu0 %v216, 112
      %v342 = vpop.permute.xlu0 %341
      %v344 = vsel %vm217, %v340, 0
      %v347 = vsel %vm217, %v342, 0
      %349 = vmatpush.bf16.xpose.msra.mxu0 0
      %350 = vmatpush.bf16.xpose.msra.mxu0 0
      %351 = vmatpush.bf16.xpose.msra.mxu0 0
      %352 = vmatpush.bf16.xpose.msra.mxu0 0
      %353 = vmatpush.bf16.xpose.msra.mxu0 0
      %354 = vmatpush.bf16.xpose.msra.mxu0 0
      %355 = vmatpush.bf16.xpose.msra.mxu0 0
      %356 = vmatpush.bf16.xpose.msra.mxu0 %v347
      %357 = vmatmul.bf16.gmra.mxu0 %v344
      %v358 = vpop.f32.mrf.mxu0
      %v359 = vadd.f32 0.0, %v358
      %v360 = vpop.f32.mrf.mxu0
      %361 = vdwg.mxu0
      %v362 = vsel %vm237, %v359, -inf
      %363 = vmax.xlane.f32.xlu0 %v362
      %v364 = vpop.xlane.xlu0 %363
      %v365 = vsub.f32 %v359, %v364
      %v366 = vmul.f32 %v365, 1.442695
      %v367 = vpow.pop %v366
      %v368 = vsel %vm237, %v367, 0.0
      %369 = vadd.xlane.f32.xlu0 %v368
      %v370 = vpop.xlane.xlu0 %369
      %v371 = vrcp.pop %v370
      %v372 = vmul.f32 %v367, %v371
      %v373 = vpack.c.bf16 %v372, %v372
      %374 = vrot.lane.b32.xlu0 %v254, 112
      %v375 = vpop.permute.xlu0 %374
      %v378 = vsel %vm237, %v373, 0
      %380 = vmatpush.bf16.msra.mxu0 0
      %381 = vmatpush.bf16.msra.mxu0 0
      %382 = vmatpush.bf16.msra.mxu0 0
      %383 = vmatpush.bf16.msra.mxu0 0
      %384 = vmatpush.bf16.msra.mxu0 0
      %385 = vmatpush.bf16.msra.mxu0 0
      %386 = vmatpush.bf16.msra.mxu0 0
      %387 = vmatpush.bf16.msra.mxu0 %v375
      %388 = vmatmul.bf16.gmra.mxu0 %v378
      %v389 = vpop.f32.mrf.mxu0
      %v390 = vadd.f32 0.0, %v389
      %v391 = vpop.f32.mrf.mxu0
      %392 = vdwg.mxu0
      %v393 = vpack.c.bf16 %v390, %v390
      %395 = vrot.lane.b32.xlu0 %v393, 16
      %v396 = vpop.permute.xlu0 %395
      %vm398 = vcmask 191616
      %399 = vst.msk [vmem:[%s205] sm:$0xf] %vm398, %v396
      %400 = vrot.lane.b32.xlu0 %v277, 104
      %v401 = vpop.permute.xlu0 %400
      %402 = vrot.lane.b32.xlu0 %v216, 104
      %v403 = vpop.permute.xlu0 %402
      %v405 = vsel %vm217, %v401, 0
      %v408 = vsel %vm217, %v403, 0
      %410 = vmatpush.bf16.xpose.msra.mxu0 0
      %411 = vmatpush.bf16.xpose.msra.mxu0 0
      %412 = vmatpush.bf16.xpose.msra.mxu0 0
      %413 = vmatpush.bf16.xpose.msra.mxu0 0
      %414 = vmatpush.bf16.xpose.msra.mxu0 0
      %415 = vmatpush.bf16.xpose.msra.mxu0 0
      %416 = vmatpush.bf16.xpose.msra.mxu0 0
      %417 = vmatpush.bf16.xpose.msra.mxu0 %v408
      %418 = vmatmul.bf16.gmra.mxu0 %v405
      %v419 = vpop.f32.mrf.mxu0
      %v420 = vadd.f32 0.0, %v419
      %v421 = vpop.f32.mrf.mxu0
      %422 = vdwg.mxu0
      %v423 = vsel %vm237, %v420, -inf
      %424 = vmax.xlane.f32.xlu0 %v423
      %v425 = vpop.xlane.xlu0 %424
      %v426 = vsub.f32 %v420, %v425
      %v427 = vmul.f32 %v426, 1.442695
      %v428 = vpow.pop %v427
      %v429 = vsel %vm237, %v428, 0.0
      %430 = vadd.xlane.f32.xlu0 %v429
      %v431 = vpop.xlane.xlu0 %430
      %v432 = vrcp.pop %v431
      %v433 = vmul.f32 %v428, %v432
      %v434 = vpack.c.bf16 %v433, %v433
      %435 = vrot.lane.b32.xlu0 %v254, 104
      %v436 = vpop.permute.xlu0 %435
      %v439 = vsel %vm237, %v434, 0
      %441 = vmatpush.bf16.msra.mxu0 0
      %442 = vmatpush.bf16.msra.mxu0 0
      %443 = vmatpush.bf16.msra.mxu0 0
      %444 = vmatpush.bf16.msra.mxu0 0
      %445 = vmatpush.bf16.msra.mxu0 0
      %446 = vmatpush.bf16.msra.mxu0 0
      %447 = vmatpush.bf16.msra.mxu0 0
      %448 = vmatpush.bf16.msra.mxu0 %v436
      %449 = vmatmul.bf16.gmra.mxu0 %v439
      %v450 = vpop.f32.mrf.mxu0
      %v451 = vadd.f32 0.0, %v450
      %v452 = vpop.f32.mrf.mxu0
      %453 = vdwg.mxu0
      %v454 = vpack.c.bf16 %v451, %v451
      %456 = vrot.lane.b32.xlu0 %v454, 24
      %v457 = vpop.permute.xlu0 %456
      %vm459 = vcmask 257216
      %460 = vst.msk [vmem:[%s205] sm:$0xf] %vm459, %v457
      %p461 = scmp.lt.s32.totalorder %s14, 1
      %s462 = scalar_select %p461, %s14, 1
      %s463 = smul.addr %s462, 4
      %s464 = scalar_lea.vmem %s3, %s463
      // Predicated region
      $region33: #{motip_forward.40} parent=31 // pred_check
        %p465 = pneg %p110
      $region34: #{motip_forward.40} parent=31 // pred_check_branch
        %467 = sbr.rel (%p465) target = $region36
      $region35: #{motip_forward.40} parent=31 // pred_region
        _
      $region36: #{motip_forward.40} parent=31 // pred_fallthru
        _
    $region32: #{motip_forward.40} parent=5 // pred_fallthru
      _
    %p468 = scmp.le.s32.totalorder 2, %s9
    // Predicated region
    $region37: #{motip_forward.40} parent=5 // pred_check
      %p469 = pneg %p468
    $region38: #{motip_forward.40} parent=5 // pred_check_branch
      %471 = sbr.rel (%p469) target = $region40
    $region39: #{motip_forward.40} parent=5 // pred_region
      %s472 = ssub.s32 %s9, 2
      // Predicated region
      $region41: #{motip_forward.40} parent=39 // pred_check
        %p473 = pneg %p116
      $region42: #{motip_forward.40} parent=39 // pred_check_branch
        %475 = sbr.rel (%p473) target = $region44
      $region43: #{motip_forward.40} parent=39 // pred_region
        %p476 = scmp.lt.s32.totalorder %s15, 1
        %s477 = scalar_select %p476, %s15, 1
        %s478 = smul.addr %s477, 4
        %s479 = scalar_lea.vmem %s3, %s478
      $region44: #{motip_forward.40} parent=39 // pred_fallthru
        _
    $region40: #{motip_forward.40} parent=5 // pred_fallthru
      _
  $region6: #{motip_forward.40} parent=0 // loop_footer
    %s13 = sadd.s32 1, %s9
  $region7: #{motip_forward.40} parent=0 // loop_footer_branch
    %8 = sbr.rel target = $region3
  $region8: #{motip_forward.40} parent=0 // loop_exit
    _

// kernel: motip_forward.42
$region0: #{motip_forward.42}
  #allocation0 [shape = 'u32[]', space=smem, size = 0x4, offset = 0x4, fixed_abs, tag = 'smem constant byte address 0x4 - core index']
  #allocation1 [shape = 'u32[72,128]{1,0:T(1,128)}', space=vmem, size = 0x9000, scoped, tag = 'internal scratch']
  %s0 = inlined_call_operand.vmem [shape: bf16[16,32], index: 0, kind: input, shape index: {}]
  %s1 = inlined_call_operand.vmem [shape: bf16[32,64], index: 1, kind: input, shape index: {}]
  %s2 = inlined_call_operand.vmem [shape: f32[1,64], index: 2, kind: input, shape index: {}]
  %s3 = inlined_call_operand.vmem [shape: bf16[64,32], index: 3, kind: input, shape index: {}]
  %s4 = inlined_call_operand.vmem [shape: f32[1,32], index: 4, kind: input, shape index: {}]
  %s5 = inlined_call_operand.hbm [shape: f32[1,32], index: 5, kind: input, shape index: {}]
  %s6 = inlined_call_operand.hbm [shape: f32[1,32], index: 6, kind: input, shape index: {}]
  %s7 = inlined_call_operand.vmem [shape: bf16[16,32], index: 7, kind: output, shape index: {}]
  %s8 = sld [smem:[#allocation0]]
  $region46: #{motip_forward.42} parent=0
    _
  %s10 = ssub.s32 1, %s8
  %s11 = scalar_select 0, %s10, %s8
  $region1: #{motip_forward.42} parent=0
    #allocation2 [shape = 'u8[512]{0}', space=vmem, size = 0x400, scoped, tag = 'input window, operand 5, single buffered']
    #allocation3 [shape = 's32[1]{0}', space=sflag, size = 0x4, scoped, tag = 'scoped memory for motip_forward.42']
    #allocation4 [shape = 'u8[512]{0}', space=vmem, size = 0x400, scoped, tag = 'input window, operand 6, single buffered']
    #allocation5 [shape = 's32[1]{0}', space=sflag, size = 0x4, scoped, tag = 'scoped memory for motip_forward.42']
    %12 = vsyncpa [#allocation3], 0
    %13 = vsyncpa [#allocation5], 0
    // Predicated region
    $region2: #{motip_forward.42} parent=1 // pred_check
      _
    $region3: #{motip_forward.42} parent=1 // pred_check_branch
      %15 = sbr.rel (0) target = $region5
    $region4: #{motip_forward.42} parent=1 // pred_region
      _
    $region5: #{motip_forward.42} parent=1 // pred_fallthru
      _
    // Predicated region
    $region6: #{motip_forward.42} parent=1 // pred_check
      _
    $region7: #{motip_forward.42} parent=1 // pred_check_branch
      %17 = sbr.rel (0) target = $region9
    $region8: #{motip_forward.42} parent=1 // pred_region
      _
    $region9: #{motip_forward.42} parent=1 // pred_fallthru
      _
    // Predicated region
    $region10: #{motip_forward.42} parent=1 // pred_check
      _
    $region11: #{motip_forward.42} parent=1 // pred_check_branch
      %19 = sbr.rel (0) target = $region13
    $region12: #{motip_forward.42} parent=1 // pred_region
      _
    $region13: #{motip_forward.42} parent=1 // pred_fallthru
      _
    // Predicated region
    $region14: #{motip_forward.42} parent=1 // pred_check
      _
    $region15: #{motip_forward.42} parent=1 // pred_check_branch
      %21 = sbr.rel (0) target = $region17
    $region16: #{motip_forward.42} parent=1 // pred_region
      _
    $region17: #{motip_forward.42} parent=1 // pred_fallthru
      _
    // Predicated region
    $region18: #{motip_forward.42} parent=1 // pred_check
      _
    $region19: #{motip_forward.42} parent=1 // pred_check_branch
      %23 = sbr.rel (0) target = $region21
    $region20: #{motip_forward.42} parent=1 // pred_region
      _
    $region21: #{motip_forward.42} parent=1 // pred_fallthru
      _
    // Predicated region
    $region22: #{motip_forward.42} parent=1 // pred_check
      _
    $region23: #{motip_forward.42} parent=1 // pred_check_branch
      %25 = sbr.rel (0) target = $region25
    $region24: #{motip_forward.42} parent=1 // pred_region
      %27 = vsyncadd [#allocation3], 0
      %s29 = sshll.u32 %s5, 4
      %s30 = int_to_ptr.hbm [resolvable:$true] %s29
      %s31 = sshll.u32 [#allocation2], 4
      %s32 = int_to_ptr.vmem [resolvable:$true] %s31
      %34 = dma.hbm_to_vmem [thread:$0]  %s30, 16, %s32, [#allocation3]
    $region25: #{motip_forward.42} parent=1 // pred_fallthru
      _
    // Predicated region
    $region26: #{motip_forward.42} parent=1 // pred_check
      _
    $region27: #{motip_forward.42} parent=1 // pred_check_branch
      %36 = sbr.rel (0) target = $region29
    $region28: #{motip_forward.42} parent=1 // pred_region
      %38 = vsyncadd [#allocation5], 0
      %s40 = sshll.u32 %s6, 4
      %s41 = int_to_ptr.hbm [resolvable:$true] %s40
      %s42 = sshll.u32 [#allocation4], 4
      %s43 = int_to_ptr.vmem [resolvable:$true] %s42
      %45 = dma.hbm_to_vmem [thread:$0]  %s41, 16, %s43, [#allocation5]
    $region29: #{motip_forward.42} parent=1 // pred_fallthru
      _
    // Predicated region
    $region30: #{motip_forward.42} parent=1 // pred_check
      _
    $region31: #{motip_forward.42} parent=1 // pred_check_branch
      %47 = sbr.rel (0) target = $region33
    $region32: #{motip_forward.42} parent=1 // pred_region
      %49 = dma.done [#allocation3], 16
    $region33: #{motip_forward.42} parent=1 // pred_fallthru
      _
    // Predicated region
    $region34: #{motip_forward.42} parent=1 // pred_check
      _
    $region35: #{motip_forward.42} parent=1 // pred_check_branch
      %51 = sbr.rel (0) target = $region37
    $region36: #{motip_forward.42} parent=1 // pred_region
      %53 = dma.done [#allocation5], 16
    $region37: #{motip_forward.42} parent=1 // pred_fallthru
      _
    %v55 = vld [vmem:[%s0] sm:$0xf]
    %v56 = vld [vmem:[%s0 + $0x4] sm:$0xf]
    %v57 = vld [vmem:[%s1] sm:$0xf]
    %v58 = vld [vmem:[%s1 + $0x4] sm:$0xf]
    %v59 = vld [vmem:[%s1 + $0x8] sm:$0xf]
    %v60 = vld [vmem:[%s1 + $0xc] sm:$0xf]
    %v61 = vld [vmem:[%s2] sm:$0x1]
    %v63 = vperm.slane %v61, 0
    %v67 = vunpack.c.l.b16 %v55
    %v68 = vunpack.c.l.b16 %v56
    %v69 = vpack.c.b16 %v68, %v67
    %v74 = vunpack.c.l.b16 %v57
    %v75 = vunpack.c.l.b16 %v58
    %v76 = vunpack.c.l.b16 %v59
    %v77 = vunpack.c.l.b16 %v60
    %v78 = vpack.c.b16 %v75, %v74
    %v79 = vpack.c.b16 %v77, %v76
    %vm82 = vcmask 261120
    %v84 = vsel %vm82, %v69, 0
    %86 = vmatpush.bf16.msra.mxu0 0
    %87 = vmatpush.bf16.msra.mxu0 0
    %88 = vmatpush.bf16.msra.mxu0 0
    %89 = vmatpush.bf16.msra.mxu0 0
    %90 = vmatpush.bf16.msra.mxu0 0
    %91 = vmatpush.bf16.msra.mxu0 0
    %92 = vmatpush.bf16.msra.mxu0 %v79
    %93 = vmatpush.bf16.msra.mxu0 %v78
    %94 = vmatmul.bf16.gmra.mxu0 %v84
    %v95 = vpop.f32.mrf.mxu0
    %v96 = vadd.f32 %v63, %v95
    %v97 = vpop.f32.mrf.mxu0
    %v98 = vadd.f32 %v63, %v97
    %99 = vdwg.mxu0
    %v100 = vmax.f32 %v96, 0.0
    %v101 = vmax.f32 %v98, 0.0
    %v102 = vpack.c.bf16 %v101, %v100
    %v103 = vld [vmem:[%s3] sm:$0xf]
    %v104 = vld [vmem:[%s3 + $0x4] sm:$0xf]
    %v105 = vld [vmem:[%s3 + $0x8] sm:$0xf]
    %v106 = vld [vmem:[%s3 + $0xc] sm:$0xf]
    %v107 = vld [vmem:[%s3 + $0x10] sm:$0xf]
    %v108 = vld [vmem:[%s3 + $0x14] sm:$0xf]
    %v109 = vld [vmem:[%s3 + $0x18] sm:$0xf]
    %v110 = vld [vmem:[%s3 + $0x1c] sm:$0xf]
    %v111 = vld [vmem:[%s4] sm:$0x1]
    %v113 = vperm.slane %v111, 0
    %v123 = vunpack.c.l.b16 %v103
    %v124 = vunpack.c.l.b16 %v104
    %v125 = vunpack.c.l.b16 %v105
    %v126 = vunpack.c.l.b16 %v106
    %v127 = vunpack.c.l.b16 %v107
    %v128 = vunpack.c.l.b16 %v108
    %v129 = vunpack.c.l.b16 %v109
    %v130 = vunpack.c.l.b16 %v110
    %v131 = vpack.c.b16 %v124, %v123
    %v132 = vpack.c.b16 %v126, %v125
    %v133 = vpack.c.b16 %v128, %v127
    %v134 = vpack.c.b16 %v130, %v129
    %vm139 = vcmask 523264
    %v141 = vsel %vm139, %v102, 0
    %143 = vmatpush.bf16.msra.mxu0 0
    %144 = vmatpush.bf16.msra.mxu0 0
    %145 = vmatpush.bf16.msra.mxu0 0
    %146 = vmatpush.bf16.msra.mxu0 0
    %147 = vmatpush.bf16.msra.mxu0 %v134
    %148 = vmatpush.bf16.msra.mxu0 %v133
    %149 = vmatpush.bf16.msra.mxu0 %v132
    %150 = vmatpush.bf16.msra.mxu0 %v131
    %151 = vmatmul.bf16.gmra.mxu0 %v141
    %v152 = vpop.f32.mrf.mxu0
    %v153 = vadd.f32 %v113, %v152
    %v154 = vpop.f32.mrf.mxu0
    %v155 = vadd.f32 %v113, %v154
    %156 = vdwg.mxu0
    %v157 = vunpack.c.l.bf16 %v55
    %v158 = vunpack.c.l.bf16 %v56
    %v159 = vadd.f32 %v153, %v157
    %v160 = vadd.f32 %v155, %v158
    %v161 = vsel %vm82, %v159, 0.0
    %162 = vadd.xlane.f32.xlu0 %v161
    %v163 = vpop.xlane.xlu0 %162
    %v164 = vsel %vm82, %v160, 0.0
    %165 = vadd.xlane.f32.xlu0 %v164
    %v166 = vpop.xlane.xlu0 %165
    %v167 = vrcp.pop 32.0
    %v168 = vmul.f32 32.0, %v167
    %v169 = vsub.f32 1.0, %v168
    %v170 = vmul.f32 %v167, %v169
    %v171 = vadd.f32 %v167, %v170
    %vm172 = vweird.f32 %v167
    %v173 = vsel %vm172, %v167, %v171
    %v174 = vmul.f32 %v163, %v173
    %v175 = vmul.f32 %v166, %v173
    %v176 = vsub.f32 %v159, %v174
    %v177 = vsub.f32 %v160, %v175
    %v178 = vmul.f32 %v176, %v176
    %v179 = vmul.f32 %v177, %v177
    %v180 = vsel %vm82, %v178, 0.0
    %181 = vadd.xlane.f32.xlu0 %v180
    %v182 = vpop.xlane.xlu0 %181
    %v183 = vsel %vm82, %v179, 0.0
    %184 = vadd.xlane.f32.xlu0 %v183
    %v185 = vpop.xlane.xlu0 %184
    %v186 = vmul.f32 %v182, %v173
    %v187 = vmul.f32 %v185, %v173
    %v188 = vadd.f32 %v186, 1e-05
    %v189 = vadd.f32 %v187, 1e-05
    %v190 = vrsqrt.pop %v188
    %v191 = vmul.f32 %v190, %v188
    %v192 = vmul.f32 %v191, %v190
    %v193 = vmul.f32 0.5, %v192
    %v194 = vsub.f32 1.5, %v193
    %v195 = vmul.f32 %v190, %v194
    %vm196 = vweird.f32 %v188
    %vm197 = vweird.f32 %v190
    %vm198 = vmor %vm196, %vm197
    %v199 = vsel %vm198, %v190, %v195
    %v200 = vrsqrt.pop %v189
    %v201 = vmul.f32 %v200, %v189
    %v202 = vmul.f32 %v201, %v200
    %v203 = vmul.f32 0.5, %v202
    %v204 = vsub.f32 1.5, %v203
    %v205 = vmul.f32 %v200, %v204
    %vm206 = vweird.f32 %v189
    %vm207 = vweird.f32 %v200
    %vm208 = vmor %vm206, %vm207
    %v209 = vsel %vm208, %v200, %v205
    %v210 = vmul.f32 %v176, %v199
    %v211 = vmul.f32 %v177, %v209
    %v212 = vld [vmem:[#allocation2] sm:$0x1]
    %v214 = vperm.slane %v212, 0
    %v216 = vmul.f32 %v210, %v214
    %v217 = vmul.f32 %v211, %v214
    %v218 = vld [vmem:[#allocation4] sm:$0x1]
    %v220 = vperm.slane %v218, 0
    %v222 = vadd.f32 %v216, %v220
    %v223 = vadd.f32 %v217, %v220
    %v224 = vpack.c.bf16 %v222, %v222
    %v225 = vpack.c.bf16 %v223, %v223
    %vm226 = vcmask 257024
    %227 = vst.msk [vmem:[%s7] sm:$0xf] %vm226, %v224
    %228 = vst.msk [vmem:[%s7 + $0x4] sm:$0xf] %vm226, %v225
    // Predicated region
    $region38: #{motip_forward.42} parent=1 // pred_check
      _
    $region39: #{motip_forward.42} parent=1 // pred_check_branch
      %230 = sbr.rel (0) target = $region41
    $region40: #{motip_forward.42} parent=1 // pred_region
      _
    $region41: #{motip_forward.42} parent=1 // pred_fallthru
      _
    // Predicated region
    $region42: #{motip_forward.42} parent=1 // pred_check
      _
    $region43: #{motip_forward.42} parent=1 // pred_check_branch
      %232 = sbr.rel (0) target = $region45
    $region44: #{motip_forward.42} parent=1 // pred_region
      _
    $region45: #{motip_forward.42} parent=1 // pred_fallthru
      _
    %233 = vsyncpa [#allocation3], 1
    %234 = vsyncpa [#allocation5], 1

// kernel: motip_forward.47
$region0: #{motip_forward.47}
  #allocation0 [shape = 'u32[]', space=smem, size = 0x4, offset = 0x4, fixed_abs, tag = 'smem constant byte address 0x4 - core index']
  #allocation1 [shape = 'u32[72,128]{1,0:T(1,128)}', space=vmem, size = 0x9000, scoped, tag = 'internal scratch']
  %s0 = inlined_call_operand.vmem [shape: bf16[32,32], index: 0, kind: input, shape index: {}]
  %s1 = inlined_call_operand.vmem [shape: bf16[32,32], index: 1, kind: input, shape index: {}]
  %s2 = inlined_call_operand.vmem [shape: bf16[32,32], index: 2, kind: input, shape index: {}]
  %s3 = inlined_call_operand.hbm [shape: f32[1,32], index: 3, kind: input, shape index: {}]
  %s4 = inlined_call_operand.vmem [shape: bf16[32,32], index: 4, kind: input, shape index: {}]
  %s5 = inlined_call_operand.hbm [shape: f32[1,32], index: 5, kind: input, shape index: {}]
  %s6 = inlined_call_operand.vmem [shape: bf16[32,32], index: 6, kind: output, shape index: {0}]
  %s7 = inlined_call_operand.vmem [shape: bf16[32,32], index: 7, kind: output, shape index: {1}]
  %8 = xla_tuple %s6, %s7
  %s9 = sld [smem:[#allocation0]]
  $region50: #{motip_forward.47} parent=0
    _
  %s11 = ssub.s32 1, %s9
  %s12 = scalar_select 0, %s11, %s9
  $region1: #{motip_forward.47} parent=0
    #allocation2 [shape = 'u8[512]{0}', space=vmem, size = 0x400, scoped, tag = 'input window, operand 3, single buffered']
    #allocation3 [shape = 's32[1]{0}', space=sflag, size = 0x4, scoped, tag = 'scoped memory for motip_forward.47']
    #allocation4 [shape = 'u8[512]{0}', space=vmem, size = 0x400, scoped, tag = 'input window, operand 5, single buffered']
    #allocation5 [shape = 's32[1]{0}', space=sflag, size = 0x4, scoped, tag = 'scoped memory for motip_forward.47']
    %13 = vsyncpa [#allocation3], 0
    %14 = vsyncpa [#allocation5], 0
    // Predicated region
    $region2: #{motip_forward.47} parent=1 // pred_check
      _
    $region3: #{motip_forward.47} parent=1 // pred_check_branch
      %16 = sbr.rel (0) target = $region5
    $region4: #{motip_forward.47} parent=1 // pred_region
      _
    $region5: #{motip_forward.47} parent=1 // pred_fallthru
      _
    // Predicated region
    $region6: #{motip_forward.47} parent=1 // pred_check
      _
    $region7: #{motip_forward.47} parent=1 // pred_check_branch
      %18 = sbr.rel (0) target = $region9
    $region8: #{motip_forward.47} parent=1 // pred_region
      _
    $region9: #{motip_forward.47} parent=1 // pred_fallthru
      _
    // Predicated region
    $region10: #{motip_forward.47} parent=1 // pred_check
      _
    $region11: #{motip_forward.47} parent=1 // pred_check_branch
      %20 = sbr.rel (0) target = $region13
    $region12: #{motip_forward.47} parent=1 // pred_region
      _
    $region13: #{motip_forward.47} parent=1 // pred_fallthru
      _
    // Predicated region
    $region14: #{motip_forward.47} parent=1 // pred_check
      _
    $region15: #{motip_forward.47} parent=1 // pred_check_branch
      %22 = sbr.rel (0) target = $region17
    $region16: #{motip_forward.47} parent=1 // pred_region
      %24 = vsyncadd [#allocation3], 0
      %s26 = sshll.u32 %s3, 4
      %s27 = int_to_ptr.hbm [resolvable:$true] %s26
      %s28 = sshll.u32 [#allocation2], 4
      %s29 = int_to_ptr.vmem [resolvable:$true] %s28
      %31 = dma.hbm_to_vmem [thread:$0]  %s27, 16, %s29, [#allocation3]
    $region17: #{motip_forward.47} parent=1 // pred_fallthru
      _
    // Predicated region
    $region18: #{motip_forward.47} parent=1 // pred_check
      _
    $region19: #{motip_forward.47} parent=1 // pred_check_branch
      %33 = sbr.rel (0) target = $region21
    $region20: #{motip_forward.47} parent=1 // pred_region
      _
    $region21: #{motip_forward.47} parent=1 // pred_fallthru
      _
    // Predicated region
    $region22: #{motip_forward.47} parent=1 // pred_check
      _
    $region23: #{motip_forward.47} parent=1 // pred_check_branch
      %35 = sbr.rel (0) target = $region25
    $region24: #{motip_forward.47} parent=1 // pred_region
      %37 = vsyncadd [#allocation5], 0
      %s39 = sshll.u32 %s5, 4
      %s40 = int_to_ptr.hbm [resolvable:$true] %s39
      %s41 = sshll.u32 [#allocation4], 4
      %s42 = int_to_ptr.vmem [resolvable:$true] %s41
      %44 = dma.hbm_to_vmem [thread:$0]  %s40, 16, %s42, [#allocation5]
    $region25: #{motip_forward.47} parent=1 // pred_fallthru
      _
    // Predicated region
    $region26: #{motip_forward.47} parent=1 // pred_check
      _
    $region27: #{motip_forward.47} parent=1 // pred_check_branch
      %46 = sbr.rel (0) target = $region29
    $region28: #{motip_forward.47} parent=1 // pred_region
      %48 = dma.done [#allocation3], 16
    $region29: #{motip_forward.47} parent=1 // pred_fallthru
      _
    // Predicated region
    $region30: #{motip_forward.47} parent=1 // pred_check
      _
    $region31: #{motip_forward.47} parent=1 // pred_check_branch
      %50 = sbr.rel (0) target = $region33
    $region32: #{motip_forward.47} parent=1 // pred_region
      %52 = dma.done [#allocation5], 16
    $region33: #{motip_forward.47} parent=1 // pred_fallthru
      _
    %v54 = vld [vmem:[%s0] sm:$0xf]
    %v55 = vld [vmem:[%s0 + $0x4] sm:$0xf]
    %v56 = vld [vmem:[%s0 + $0x8] sm:$0xf]
    %v57 = vld [vmem:[%s0 + $0xc] sm:$0xf]
    %v58 = vld [vmem:[%s1] sm:$0xf]
    %v59 = vld [vmem:[%s1 + $0x4] sm:$0xf]
    %v60 = vld [vmem:[%s1 + $0x8] sm:$0xf]
    %v61 = vld [vmem:[%s1 + $0xc] sm:$0xf]
    %v62 = vunpack.c.l.bf16 %v54
    %v63 = vunpack.c.l.bf16 %v55
    %v64 = vunpack.c.l.bf16 %v56
    %v65 = vunpack.c.l.bf16 %v57
    %v66 = vunpack.c.l.bf16 %v58
    %v67 = vunpack.c.l.bf16 %v59
    %v68 = vunpack.c.l.bf16 %v60
    %v69 = vunpack.c.l.bf16 %v61
    %v70 = vadd.f32 %v62, %v66
    %v71 = vadd.f32 %v63, %v67
    %v72 = vadd.f32 %v64, %v68
    %v73 = vadd.f32 %v65, %v69
    %v74 = vpack.c.bf16 %v71, %v70
    %v75 = vpack.c.bf16 %v73, %v72
    %v76 = vld [vmem:[%s2] sm:$0xf]
    %v77 = vld [vmem:[%s2 + $0x4] sm:$0xf]
    %v78 = vld [vmem:[%s2 + $0x8] sm:$0xf]
    %v79 = vld [vmem:[%s2 + $0xc] sm:$0xf]
    %v80 = vld [vmem:[#allocation2] sm:$0x1]
    %v82 = vperm.slane %v80, 0
    %v88 = vunpack.c.l.b16 %v76
    %v89 = vunpack.c.l.b16 %v77
    %v90 = vunpack.c.l.b16 %v78
    %v91 = vunpack.c.l.b16 %v79
    %v92 = vpack.c.b16 %v89, %v88
    %v93 = vpack.c.b16 %v91, %v90
    %vm96 = vcmask 261120
    %v98 = vsel %vm96, %v74, 0
    %v101 = vsel %vm96, %v75, 0
    %103 = vmatpush.bf16.msra.mxu0 0
    %104 = vmatpush.bf16.msra.mxu0 0
    %105 = vmatpush.bf16.msra.mxu0 0
    %106 = vmatpush.bf16.msra.mxu0 0
    %107 = vmatpush.bf16.msra.mxu0 0
    %108 = vmatpush.bf16.msra.mxu0 0
    %109 = vmatpush.bf16.msra.mxu0 %v93
    %110 = vmatpush.bf16.msra.mxu0 %v92
    %111 = vmatmul.bf16.gmra.mxu0 %v98
    %v112 = vpop.f32.mrf.mxu0
    %v113 = vadd.f32 %v82, %v112
    %v114 = vpop.f32.mrf.mxu0
    %v115 = vadd.f32 %v82, %v114
    %116 = vmatmul.bf16.gmra.mxu0 %v101
    %v117 = vpop.f32.mrf.mxu0
    %v118 = vadd.f32 %v82, %v117
    %v119 = vpop.f32.mrf.mxu0
    %v120 = vadd.f32 %v82, %v119
    %121 = vdwg.mxu0
    %v122 = vld [vmem:[%s4] sm:$0xf]
    %v123 = vld [vmem:[%s4 + $0x4] sm:$0xf]
    %v124 = vld [vmem:[%s4 + $0x8] sm:$0xf]
    %v125 = vld [vmem:[%s4 + $0xc] sm:$0xf]
    %v126 = vld [vmem:[#allocation4] sm:$0x1]
    %v128 = vperm.slane %v126, 0
    %v134 = vunpack.c.l.b16 %v54
    %v135 = vunpack.c.l.b16 %v55
    %v136 = vunpack.c.l.b16 %v56
    %v137 = vunpack.c.l.b16 %v57
    %v138 = vpack.c.b16 %v135, %v134
    %v139 = vpack.c.b16 %v137, %v136
    %v144 = vunpack.c.l.b16 %v122
    %v145 = vunpack.c.l.b16 %v123
    %v146 = vunpack.c.l.b16 %v124
    %v147 = vunpack.c.l.b16 %v125
    %v148 = vpack.c.b16 %v145, %v144
    %v149 = vpack.c.b16 %v147, %v146
    %v153 = vsel %vm96, %v138, 0
    %v156 = vsel %vm96, %v139, 0
    %158 = vmatpush.bf16.msra.mxu0 0
    %159 = vmatpush.bf16.msra.mxu0 0
    %160 = vmatpush.bf16.msra.mxu0 0
    %161 = vmatpush.bf16.msra.mxu0 0
    %162 = vmatpush.bf16.msra.mxu0 0
    %163 = vmatpush.bf16.msra.mxu0 0
    %164 = vmatpush.bf16.msra.mxu0 %v149
    %165 = vmatpush.bf16.msra.mxu0 %v148
    %166 = vmatmul.bf16.gmra.mxu0 %v153
    %v167 = vpop.f32.mrf.mxu0
    %v168 = vadd.f32 %v128, %v167
    %v169 = vpop.f32.mrf.mxu0
    %v170 = vadd.f32 %v128, %v169
    %171 = vmatmul.bf16.gmra.mxu0 %v156
    %v172 = vpop.f32.mrf.mxu0
    %v173 = vadd.f32 %v128, %v172
    %v174 = vpop.f32.mrf.mxu0
    %v175 = vadd.f32 %v128, %v174
    %176 = vdwg.mxu0
    %v177 = vpack.c.bf16 %v113, %v113
    %v178 = vpack.c.bf16 %v115, %v115
    %v179 = vpack.c.bf16 %v118, %v118
    %v180 = vpack.c.bf16 %v120, %v120
    %vm181 = vcmask 257024
    %182 = vst.msk [vmem:[%s6] sm:$0xf] %vm181, %v177
    %183 = vst.msk [vmem:[%s6 + $0x4] sm:$0xf] %vm181, %v178
    %184 = vst.msk [vmem:[%s6 + $0x8] sm:$0xf] %vm181, %v179
    %185 = vst.msk [vmem:[%s6 + $0xc] sm:$0xf] %vm181, %v180
    %v186 = vpack.c.bf16 %v168, %v168
    %v187 = vpack.c.bf16 %v170, %v170
    %v188 = vpack.c.bf16 %v173, %v173
    %v189 = vpack.c.bf16 %v175, %v175
    %190 = vst.msk [vmem:[%s7] sm:$0xf] %vm181, %v186
    %191 = vst.msk [vmem:[%s7 + $0x4] sm:$0xf] %vm181, %v187
    %192 = vst.msk [vmem:[%s7 + $0x8] sm:$0xf] %vm181, %v188
    %193 = vst.msk [vmem:[%s7 + $0xc] sm:$0xf] %vm181, %v189
    // Predicated region
    $region34: #{motip_forward.47} parent=1 // pred_check
      _
    $region35: #{motip_forward.47} parent=1 // pred_check_branch
      %195 = sbr.rel (0) target = $region37
    $region36: #{motip_forward.47} parent=1 // pred_region
      _
    $region37: #{motip_forward.47} parent=1 // pred_fallthru
      _
    // Predicated region
    $region38: #{motip_forward.47} parent=1 // pred_check
      _
    $region39: #{motip_forward.47} parent=1 // pred_check_branch
      %197 = sbr.rel (0) target = $region41
    $region40: #{motip_forward.47} parent=1 // pred_region
      _
    $region41: #{motip_forward.47} parent=1 // pred_fallthru
      _
    // Predicated region
    $region42: #{motip_forward.47} parent=1 // pred_check
      _
    $region43: #{motip_forward.47} parent=1 // pred_check_branch
      %199 = sbr.rel (0) target = $region45
    $region44: #{motip_forward.47} parent=1 // pred_region
      _
    $region45: #{motip_forward.47} parent=1 // pred_fallthru
      _
    // Predicated region
    $region46: #{motip_forward.47} parent=1 // pred_check
      _
    $region47: #{motip_forward.47} parent=1 // pred_check_branch
      %201 = sbr.rel (0) target = $region49
    $region48: #{motip_forward.47} parent=1 // pred_region
      _
    $region49: #{motip_forward.47} parent=1 // pred_fallthru
      _
    %202 = vsyncpa [#allocation3], 1
    %203 = vsyncpa [#allocation5], 1

// kernel: motip_forward.50
$region0: #{motip_forward.50}
  #allocation0 [shape = 'u32[]', space=smem, size = 0x4, offset = 0x4, fixed_abs, tag = 'smem constant byte address 0x4 - core index']
  #allocation1 [shape = 'u32[72,128]{1,0:T(1,128)}', space=vmem, size = 0x9000, scoped, tag = 'internal scratch']
  %s0 = inlined_call_operand.vmem [shape: bf16[16,32], index: 0, kind: input, shape index: {}]
  %s1 = inlined_call_operand.vmem [shape: bf16[32,64], index: 1, kind: input, shape index: {}]
  %s2 = inlined_call_operand.vmem [shape: f32[1,64], index: 2, kind: input, shape index: {}]
  %s3 = inlined_call_operand.vmem [shape: bf16[64,32], index: 3, kind: input, shape index: {}]
  %s4 = inlined_call_operand.vmem [shape: f32[1,32], index: 4, kind: input, shape index: {}]
  %s5 = inlined_call_operand.vmem [shape: f32[1,32], index: 5, kind: input, shape index: {}]
  %s6 = inlined_call_operand.vmem [shape: f32[1,32], index: 6, kind: input, shape index: {}]
  %s7 = inlined_call_operand.vmem [shape: bf16[16,32], index: 7, kind: output, shape index: {}]
  %s8 = sld [smem:[#allocation0]]
  $region38: #{motip_forward.50} parent=0
    _
  %s10 = ssub.s32 1, %s8
  %s11 = scalar_select 0, %s10, %s8
  // Predicated region
  $region2: #{motip_forward.50} parent=0 // pred_check
    _
  $region3: #{motip_forward.50} parent=0 // pred_check_branch
    %13 = sbr.rel (0) target = $region5
  $region4: #{motip_forward.50} parent=0 // pred_region
    _
  $region5: #{motip_forward.50} parent=0 // pred_fallthru
    _
  // Predicated region
  $region6: #{motip_forward.50} parent=0 // pred_check
    _
  $region7: #{motip_forward.50} parent=0 // pred_check_branch
    %15 = sbr.rel (0) target = $region9
  $region8: #{motip_forward.50} parent=0 // pred_region
    _
  $region9: #{motip_forward.50} parent=0 // pred_fallthru
    _
  // Predicated region
  $region10: #{motip_forward.50} parent=0 // pred_check
    _
  $region11: #{motip_forward.50} parent=0 // pred_check_branch
    %17 = sbr.rel (0) target = $region13
  $region12: #{motip_forward.50} parent=0 // pred_region
    _
  $region13: #{motip_forward.50} parent=0 // pred_fallthru
    _
  // Predicated region
  $region14: #{motip_forward.50} parent=0 // pred_check
    _
  $region15: #{motip_forward.50} parent=0 // pred_check_branch
    %19 = sbr.rel (0) target = $region17
  $region16: #{motip_forward.50} parent=0 // pred_region
    _
  $region17: #{motip_forward.50} parent=0 // pred_fallthru
    _
  // Predicated region
  $region18: #{motip_forward.50} parent=0 // pred_check
    _
  $region19: #{motip_forward.50} parent=0 // pred_check_branch
    %21 = sbr.rel (0) target = $region21
  $region20: #{motip_forward.50} parent=0 // pred_region
    _
  $region21: #{motip_forward.50} parent=0 // pred_fallthru
    _
  // Predicated region
  $region22: #{motip_forward.50} parent=0 // pred_check
    _
  $region23: #{motip_forward.50} parent=0 // pred_check_branch
    %23 = sbr.rel (0) target = $region25
  $region24: #{motip_forward.50} parent=0 // pred_region
    _
  $region25: #{motip_forward.50} parent=0 // pred_fallthru
    _
  // Predicated region
  $region26: #{motip_forward.50} parent=0 // pred_check
    _
  $region27: #{motip_forward.50} parent=0 // pred_check_branch
    %25 = sbr.rel (0) target = $region29
  $region28: #{motip_forward.50} parent=0 // pred_region
    _
  $region29: #{motip_forward.50} parent=0 // pred_fallthru
    _
  %v27 = vld [vmem:[%s0] sm:$0xf]
  %v28 = vld [vmem:[%s0 + $0x4] sm:$0xf]
  %v29 = vld [vmem:[%s1] sm:$0xf]
  %v30 = vld [vmem:[%s1 + $0x4] sm:$0xf]
  %v31 = vld [vmem:[%s1 + $0x8] sm:$0xf]
  %v32 = vld [vmem:[%s1 + $0xc] sm:$0xf]
  %v33 = vld [vmem:[%s2] sm:$0x1]
  %v35 = vperm.slane %v33, 0
  %v39 = vunpack.c.l.b16 %v27
  %v40 = vunpack.c.l.b16 %v28
  %v41 = vpack.c.b16 %v40, %v39
  %v46 = vunpack.c.l.b16 %v29
  %v47 = vunpack.c.l.b16 %v30
  %v48 = vunpack.c.l.b16 %v31
  %v49 = vunpack.c.l.b16 %v32
  %v50 = vpack.c.b16 %v47, %v46
  %v51 = vpack.c.b16 %v49, %v48
  %vm54 = vcmask 261120
  %v56 = vsel %vm54, %v41, 0
  %58 = vmatpush.bf16.msra.mxu0 0
  %59 = vmatpush.bf16.msra.mxu0 0
  %60 = vmatpush.bf16.msra.mxu0 0
  %61 = vmatpush.bf16.msra.mxu0 0
  %62 = vmatpush.bf16.msra.mxu0 0
  %63 = vmatpush.bf16.msra.mxu0 0
  %64 = vmatpush.bf16.msra.mxu0 %v51
  %65 = vmatpush.bf16.msra.mxu0 %v50
  %66 = vmatmul.bf16.gmra.mxu0 %v56
  %v67 = vpop.f32.mrf.mxu0
  %v68 = vadd.f32 %v35, %v67
  %v69 = vpop.f32.mrf.mxu0
  %v70 = vadd.f32 %v35, %v69
  %71 = vdwg.mxu0
  %v72 = vmax.f32 %v68, 0.0
  %v73 = vmax.f32 %v70, 0.0
  %v74 = vpack.c.bf16 %v73, %v72
  %v75 = vld [vmem:[%s3] sm:$0xf]
  %v76 = vld [vmem:[%s3 + $0x4] sm:$0xf]
  %v77 = vld [vmem:[%s3 + $0x8] sm:$0xf]
  %v78 = vld [vmem:[%s3 + $0xc] sm:$0xf]
  %v79 = vld [vmem:[%s3 + $0x10] sm:$0xf]
  %v80 = vld [vmem:[%s3 + $0x14] sm:$0xf]
  %v81 = vld [vmem:[%s3 + $0x18] sm:$0xf]
  %v82 = vld [vmem:[%s3 + $0x1c] sm:$0xf]
  %v83 = vld [vmem:[%s4] sm:$0x1]
  %v85 = vperm.slane %v83, 0
  %v95 = vunpack.c.l.b16 %v75
  %v96 = vunpack.c.l.b16 %v76
  %v97 = vunpack.c.l.b16 %v77
  %v98 = vunpack.c.l.b16 %v78
  %v99 = vunpack.c.l.b16 %v79
  %v100 = vunpack.c.l.b16 %v80
  %v101 = vunpack.c.l.b16 %v81
  %v102 = vunpack.c.l.b16 %v82
  %v103 = vpack.c.b16 %v96, %v95
  %v104 = vpack.c.b16 %v98, %v97
  %v105 = vpack.c.b16 %v100, %v99
  %v106 = vpack.c.b16 %v102, %v101
  %vm111 = vcmask 523264
  %v113 = vsel %vm111, %v74, 0
  %115 = vmatpush.bf16.msra.mxu0 0
  %116 = vmatpush.bf16.msra.mxu0 0
  %117 = vmatpush.bf16.msra.mxu0 0
  %118 = vmatpush.bf16.msra.mxu0 0
  %119 = vmatpush.bf16.msra.mxu0 %v106
  %120 = vmatpush.bf16.msra.mxu0 %v105
  %121 = vmatpush.bf16.msra.mxu0 %v104
  %122 = vmatpush.bf16.msra.mxu0 %v103
  %123 = vmatmul.bf16.gmra.mxu0 %v113
  %v124 = vpop.f32.mrf.mxu0
  %v125 = vadd.f32 %v85, %v124
  %v126 = vpop.f32.mrf.mxu0
  %v127 = vadd.f32 %v85, %v126
  %128 = vdwg.mxu0
  %v129 = vunpack.c.l.bf16 %v27
  %v130 = vunpack.c.l.bf16 %v28
  %v131 = vadd.f32 %v125, %v129
  %v132 = vadd.f32 %v127, %v130
  %v133 = vsel %vm54, %v131, 0.0
  %134 = vadd.xlane.f32.xlu0 %v133
  %v135 = vpop.xlane.xlu0 %134
  %v136 = vsel %vm54, %v132, 0.0
  %137 = vadd.xlane.f32.xlu0 %v136
  %v138 = vpop.xlane.xlu0 %137
  %v139 = vrcp.pop 32.0
  %v140 = vmul.f32 32.0, %v139
  %v141 = vsub.f32 1.0, %v140
  %v142 = vmul.f32 %v139, %v141
  %v143 = vadd.f32 %v139, %v142
  %vm144 = vweird.f32 %v139
  %v145 = vsel %vm144, %v139, %v143
  %v146 = vmul.f32 %v135, %v145
  %v147 = vmul.f32 %v138, %v145
  %v148 = vsub.f32 %v131, %v146
  %v149 = vsub.f32 %v132, %v147
  %v150 = vmul.f32 %v148, %v148
  %v151 = vmul.f32 %v149, %v149
  %v152 = vsel %vm54, %v150, 0.0
  %153 = vadd.xlane.f32.xlu0 %v152
  %v154 = vpop.xlane.xlu0 %153
  %v155 = vsel %vm54, %v151, 0.0
  %156 = vadd.xlane.f32.xlu0 %v155
  %v157 = vpop.xlane.xlu0 %156
  %v158 = vmul.f32 %v154, %v145
  %v159 = vmul.f32 %v157, %v145
  %v160 = vadd.f32 %v158, 1e-05
  %v161 = vadd.f32 %v159, 1e-05
  %v162 = vrsqrt.pop %v160
  %v163 = vmul.f32 %v162, %v160
  %v164 = vmul.f32 %v163, %v162
  %v165 = vmul.f32 0.5, %v164
  %v166 = vsub.f32 1.5, %v165
  %v167 = vmul.f32 %v162, %v166
  %vm168 = vweird.f32 %v160
  %vm169 = vweird.f32 %v162
  %vm170 = vmor %vm168, %vm169
  %v171 = vsel %vm170, %v162, %v167
  %v172 = vrsqrt.pop %v161
  %v173 = vmul.f32 %v172, %v161
  %v174 = vmul.f32 %v173, %v172
  %v175 = vmul.f32 0.5, %v174
  %v176 = vsub.f32 1.5, %v175
  %v177 = vmul.f32 %v172, %v176
  %vm178 = vweird.f32 %v161
  %vm179 = vweird.f32 %v172
  %vm180 = vmor %vm178, %vm179
  %v181 = vsel %vm180, %v172, %v177
  %v182 = vmul.f32 %v148, %v171
  %v183 = vmul.f32 %v149, %v181
  %v184 = vld [vmem:[%s5] sm:$0x1]
  %v186 = vperm.slane %v184, 0
  %v188 = vmul.f32 %v182, %v186
  %v189 = vmul.f32 %v183, %v186
  %v190 = vld [vmem:[%s6] sm:$0x1]
  %v192 = vperm.slane %v190, 0
  %v194 = vadd.f32 %v188, %v192
  %v195 = vadd.f32 %v189, %v192
  %v196 = vpack.c.bf16 %v194, %v194
  %v197 = vpack.c.bf16 %v195, %v195
  %vm198 = vcmask 257024
  %199 = vst.msk [vmem:[%s7] sm:$0xf] %vm198, %v196
  %200 = vst.msk [vmem:[%s7 + $0x4] sm:$0xf] %vm198, %v197
  // Predicated region
  $region30: #{motip_forward.50} parent=0 // pred_check
    _
  $region31: #{motip_forward.50} parent=0 // pred_check_branch
    %202 = sbr.rel (0) target = $region33
  $region32: #{motip_forward.50} parent=0 // pred_region
    _
  $region33: #{motip_forward.50} parent=0 // pred_fallthru
    _
  // Predicated region
  $region34: #{motip_forward.50} parent=0 // pred_check
    _
  $region35: #{motip_forward.50} parent=0 // pred_check_branch
    %204 = sbr.rel (0) target = $region37
  $region36: #{motip_forward.50} parent=0 // pred_region
    _
  $region37: #{motip_forward.50} parent=0 // pred_fallthru
    _

// kernel: motip_forward.51
$region0: #{motip_forward.51}
  #allocation0 [shape = 'u32[]', space=smem, size = 0x4, offset = 0x4, fixed_abs, tag = 'smem constant byte address 0x4 - core index']
  #allocation1 [shape = 'u32[72,128]{1,0:T(1,128)}', space=vmem, size = 0x9000, scoped, tag = 'internal scratch']
  %s0 = inlined_call_operand.vmem [shape: bf16[16,32], index: 0, kind: input, shape index: {}]
  %s1 = inlined_call_operand.vmem [shape: bf16[32,4], index: 1, kind: input, shape index: {}]
  %s2 = inlined_call_operand.vmem [shape: f32[1,4], index: 2, kind: input, shape index: {}]
  %s3 = inlined_call_operand.vmem [shape: bf16[32,32], index: 3, kind: input, shape index: {}]
  %s4 = inlined_call_operand.vmem [shape: f32[1,32], index: 4, kind: input, shape index: {}]
  %s5 = inlined_call_operand.vmem [shape: bf16[32,32], index: 5, kind: input, shape index: {}]
  %s6 = inlined_call_operand.vmem [shape: f32[1,32], index: 6, kind: input, shape index: {}]
  %s7 = inlined_call_operand.vmem [shape: bf16[32,4], index: 7, kind: input, shape index: {}]
  %s8 = inlined_call_operand.vmem [shape: f32[1,4], index: 8, kind: input, shape index: {}]
  %s9 = inlined_call_operand.vmem [shape: f32[16,4], index: 9, kind: output, shape index: {0}]
  %s10 = inlined_call_operand.vmem [shape: f32[16,4], index: 10, kind: output, shape index: {1}]
  %11 = xla_tuple %s9, %s10
  %s12 = sld [smem:[#allocation0]]
  $region54: #{motip_forward.51} parent=0
    _
  %s14 = ssub.s32 1, %s12
  %s15 = scalar_select 0, %s14, %s12
  // Predicated region
  $region2: #{motip_forward.51} parent=0 // pred_check
    _
  $region3: #{motip_forward.51} parent=0 // pred_check_branch
    %17 = sbr.rel (0) target = $region5
  $region4: #{motip_forward.51} parent=0 // pred_region
    _
  $region5: #{motip_forward.51} parent=0 // pred_fallthru
    _
  // Predicated region
  $region6: #{motip_forward.51} parent=0 // pred_check
    _
  $region7: #{motip_forward.51} parent=0 // pred_check_branch
    %19 = sbr.rel (0) target = $region9
  $region8: #{motip_forward.51} parent=0 // pred_region
    _
  $region9: #{motip_forward.51} parent=0 // pred_fallthru
    _
  // Predicated region
  $region10: #{motip_forward.51} parent=0 // pred_check
    _
  $region11: #{motip_forward.51} parent=0 // pred_check_branch
    %21 = sbr.rel (0) target = $region13
  $region12: #{motip_forward.51} parent=0 // pred_region
    _
  $region13: #{motip_forward.51} parent=0 // pred_fallthru
    _
  // Predicated region
  $region14: #{motip_forward.51} parent=0 // pred_check
    _
  $region15: #{motip_forward.51} parent=0 // pred_check_branch
    %23 = sbr.rel (0) target = $region17
  $region16: #{motip_forward.51} parent=0 // pred_region
    _
  $region17: #{motip_forward.51} parent=0 // pred_fallthru
    _
  // Predicated region
  $region18: #{motip_forward.51} parent=0 // pred_check
    _
  $region19: #{motip_forward.51} parent=0 // pred_check_branch
    %25 = sbr.rel (0) target = $region21
  $region20: #{motip_forward.51} parent=0 // pred_region
    _
  $region21: #{motip_forward.51} parent=0 // pred_fallthru
    _
  // Predicated region
  $region22: #{motip_forward.51} parent=0 // pred_check
    _
  $region23: #{motip_forward.51} parent=0 // pred_check_branch
    %27 = sbr.rel (0) target = $region25
  $region24: #{motip_forward.51} parent=0 // pred_region
    _
  $region25: #{motip_forward.51} parent=0 // pred_fallthru
    _
  // Predicated region
  $region26: #{motip_forward.51} parent=0 // pred_check
    _
  $region27: #{motip_forward.51} parent=0 // pred_check_branch
    %29 = sbr.rel (0) target = $region29
  $region28: #{motip_forward.51} parent=0 // pred_region
    _
  $region29: #{motip_forward.51} parent=0 // pred_fallthru
    _
  // Predicated region
  $region30: #{motip_forward.51} parent=0 // pred_check
    _
  $region31: #{motip_forward.51} parent=0 // pred_check_branch
    %31 = sbr.rel (0) target = $region33
  $region32: #{motip_forward.51} parent=0 // pred_region
    _
  $region33: #{motip_forward.51} parent=0 // pred_fallthru
    _
  // Predicated region
  $region34: #{motip_forward.51} parent=0 // pred_check
    _
  $region35: #{motip_forward.51} parent=0 // pred_check_branch
    %33 = sbr.rel (0) target = $region37
  $region36: #{motip_forward.51} parent=0 // pred_region
    _
  $region37: #{motip_forward.51} parent=0 // pred_fallthru
    _
  %v35 = vld [vmem:[%s0] sm:$0xf]
  %v36 = vld [vmem:[%s0 + $0x4] sm:$0xf]
  %v37 = vld [vmem:[%s1] sm:$0xf]
  %v38 = vld [vmem:[%s1 + $0x4] sm:$0xf]
  %v39 = vld [vmem:[%s1 + $0x8] sm:$0xf]
  %v40 = vld [vmem:[%s1 + $0xc] sm:$0xf]
  %v41 = vld [vmem:[%s2] sm:$0x1]
  %v43 = vperm.slane %v41, 0
  %v47 = vunpack.c.l.b16 %v35
  %v48 = vunpack.c.l.b16 %v36
  %v49 = vpack.c.b16 %v48, %v47
  %v54 = vunpack.c.l.b16 %v37
  %v55 = vunpack.c.l.b16 %v38
  %v56 = vunpack.c.l.b16 %v39
  %v57 = vunpack.c.l.b16 %v40
  %v58 = vpack.c.b16 %v55, %v54
  %v59 = vpack.c.b16 %v57, %v56
  %vm62 = vcmask 261120
  %v64 = vsel %vm62, %v49, 0
  %66 = vmatpush.bf16.msra.mxu0 0
  %67 = vmatpush.bf16.msra.mxu0 0
  %68 = vmatpush.bf16.msra.mxu0 0
  %69 = vmatpush.bf16.msra.mxu0 0
  %70 = vmatpush.bf16.msra.mxu0 0
  %71 = vmatpush.bf16.msra.mxu0 0
  %72 = vmatpush.bf16.msra.mxu0 %v59
  %73 = vmatpush.bf16.msra.mxu0 %v58
  %74 = vmatmul.bf16.gmra.mxu0 %v64
  %v75 = vpop.f32.mrf.mxu0
  %v76 = vadd.f32 %v43, %v75
  %v77 = vpop.f32.mrf.mxu0
  %v78 = vadd.f32 %v43, %v77
  %79 = vdwg.mxu0
  %vm80 = vcmask 31744
  %81 = vst.msk [vmem:[%s9] sm:$0xff] %vm80, %v76
  %82 = vst.msk [vmem:[%s9 + $0x8] sm:$0xff] %vm80, %v78
  %v83 = vld [vmem:[%s3] sm:$0xf]
  %v84 = vld [vmem:[%s3 + $0x4] sm:$0xf]
  %v85 = vld [vmem:[%s3 + $0x8] sm:$0xf]
  %v86 = vld [vmem:[%s3 + $0xc] sm:$0xf]
  %v87 = vld [vmem:[%s4] sm:$0x1]
  %v89 = vperm.slane %v87, 0
  %v95 = vunpack.c.l.b16 %v83
  %v96 = vunpack.c.l.b16 %v84
  %v97 = vunpack.c.l.b16 %v85
  %v98 = vunpack.c.l.b16 %v86
  %v99 = vpack.c.b16 %v96, %v95
  %v100 = vpack.c.b16 %v98, %v97
  %103 = vmatpush.bf16.msra.mxu0 0
  %104 = vmatpush.bf16.msra.mxu0 0
  %105 = vmatpush.bf16.msra.mxu0 0
  %106 = vmatpush.bf16.msra.mxu0 0
  %107 = vmatpush.bf16.msra.mxu0 0
  %108 = vmatpush.bf16.msra.mxu0 0
  %109 = vmatpush.bf16.msra.mxu0 %v100
  %110 = vmatpush.bf16.msra.mxu0 %v99
  %111 = vmatmul.bf16.gmra.mxu0 %v64
  %v112 = vpop.f32.mrf.mxu0
  %v113 = vadd.f32 %v89, %v112
  %v114 = vpop.f32.mrf.mxu0
  %v115 = vadd.f32 %v89, %v114
  %116 = vdwg.mxu0
  %v117 = vmax.f32 %v113, 0.0
  %v118 = vmax.f32 %v115, 0.0
  %v119 = vpack.c.bf16 %v118, %v117
  %v120 = vld [vmem:[%s5] sm:$0xf]
  %v121 = vld [vmem:[%s5 + $0x4] sm:$0xf]
  %v122 = vld [vmem:[%s5 + $0x8] sm:$0xf]
  %v123 = vld [vmem:[%s5 + $0xc] sm:$0xf]
  %v124 = vld [vmem:[%s6] sm:$0x1]
  %v126 = vperm.slane %v124, 0
  %v132 = vunpack.c.l.b16 %v120
  %v133 = vunpack.c.l.b16 %v121
  %v134 = vunpack.c.l.b16 %v122
  %v135 = vunpack.c.l.b16 %v123
  %v136 = vpack.c.b16 %v133, %v132
  %v137 = vpack.c.b16 %v135, %v134
  %v141 = vsel %vm62, %v119, 0
  %143 = vmatpush.bf16.msra.mxu0 0
  %144 = vmatpush.bf16.msra.mxu0 0
  %145 = vmatpush.bf16.msra.mxu0 0
  %146 = vmatpush.bf16.msra.mxu0 0
  %147 = vmatpush.bf16.msra.mxu0 0
  %148 = vmatpush.bf16.msra.mxu0 0
  %149 = vmatpush.bf16.msra.mxu0 %v137
  %150 = vmatpush.bf16.msra.mxu0 %v136
  %151 = vmatmul.bf16.gmra.mxu0 %v141
  %v152 = vpop.f32.mrf.mxu0
  %v153 = vadd.f32 %v126, %v152
  %v154 = vpop.f32.mrf.mxu0
  %v155 = vadd.f32 %v126, %v154
  %156 = vdwg.mxu0
  %v157 = vmax.f32 %v153, 0.0
  %v158 = vmax.f32 %v155, 0.0
  %v159 = vpack.c.bf16 %v158, %v157
  %v160 = vld [vmem:[%s7] sm:$0xf]
  %v161 = vld [vmem:[%s7 + $0x4] sm:$0xf]
  %v162 = vld [vmem:[%s7 + $0x8] sm:$0xf]
  %v163 = vld [vmem:[%s7 + $0xc] sm:$0xf]
  %v164 = vld [vmem:[%s8] sm:$0x1]
  %v166 = vperm.slane %v164, 0
  %v172 = vunpack.c.l.b16 %v160
  %v173 = vunpack.c.l.b16 %v161
  %v174 = vunpack.c.l.b16 %v162
  %v175 = vunpack.c.l.b16 %v163
  %v176 = vpack.c.b16 %v173, %v172
  %v177 = vpack.c.b16 %v175, %v174
  %v181 = vsel %vm62, %v159, 0
  %183 = vmatpush.bf16.msra.mxu0 0
  %184 = vmatpush.bf16.msra.mxu0 0
  %185 = vmatpush.bf16.msra.mxu0 0
  %186 = vmatpush.bf16.msra.mxu0 0
  %187 = vmatpush.bf16.msra.mxu0 0
  %188 = vmatpush.bf16.msra.mxu0 0
  %189 = vmatpush.bf16.msra.mxu0 %v177
  %190 = vmatpush.bf16.msra.mxu0 %v176
  %191 = vmatmul.bf16.gmra.mxu0 %v181
  %v192 = vpop.f32.mrf.mxu0
  %v193 = vadd.f32 %v166, %v192
  %v194 = vpop.f32.mrf.mxu0
  %v195 = vadd.f32 %v166, %v194
  %196 = vdwg.mxu0
  %v197 = vxor.u32 %v193, 2147483648
  %v198 = vxor.u32 %v195, 2147483648
  %v199 = vmul.f32 %v197, 1.442695
  %v200 = vpow.pop %v199
  %v201 = vmul.f32 %v198, 1.442695
  %v202 = vpow.pop %v201
  %v203 = vadd.f32 %v200, 1.0
  %v204 = vadd.f32 %v202, 1.0
  %v205 = vrcp.pop %v203
  %v206 = vmul.f32 %v203, %v205
  %v207 = vsub.f32 1.0, %v206
  %v208 = vmul.f32 %v205, %v207
  %v209 = vadd.f32 %v205, %v208
  %vm210 = vweird.f32 %v203
  %vm211 = vweird.f32 %v205
  %vm212 = vmor %vm210, %vm211
  %v213 = vsel %vm212, %v205, %v209
  %v214 = vand.u32 2147483647, %v203
  %vm215 = vcmp.eq.f32.partialorder %v214, 8.507059e+37
  %v216 = vand.u32 %v203, 2147483648
  %v217 = vor.u32 1.1754944e-38, %v216
  %v218 = vsel %vm215, %v217, %v213
  %v219 = vmul.f32 1.0, %v218
  %v220 = vrcp.pop %v204
  %v221 = vmul.f32 %v204, %v220
  %v222 = vsub.f32 1.0, %v221
  %v223 = vmul.f32 %v220, %v222
  %v224 = vadd.f32 %v220, %v223
  %vm225 = vweird.f32 %v204
  %vm226 = vweird.f32 %v220
  %vm227 = vmor %vm225, %vm226
  %v228 = vsel %vm227, %v220, %v224
  %v229 = vand.u32 2147483647, %v204
  %vm230 = vcmp.eq.f32.partialorder %v229, 8.507059e+37
  %v231 = vand.u32 %v204, 2147483648
  %v232 = vor.u32 1.1754944e-38, %v231
  %v233 = vsel %vm230, %v232, %v228
  %v234 = vmul.f32 1.0, %v233
  %235 = vst.msk [vmem:[%s10] sm:$0xff] %vm80, %v219
  %236 = vst.msk [vmem:[%s10 + $0x8] sm:$0xff] %vm80, %v234
  // Predicated region
  $region38: #{motip_forward.51} parent=0 // pred_check
    _
  $region39: #{motip_forward.51} parent=0 // pred_check_branch
    %238 = sbr.rel (0) target = $region41
  $region40: #{motip_forward.51} parent=0 // pred_region
    _
  $region41: #{motip_forward.51} parent=0 // pred_fallthru
    _
  // Predicated region
  $region42: #{motip_forward.51} parent=0 // pred_check
    _
  $region43: #{motip_forward.51} parent=0 // pred_check_branch
    %240 = sbr.rel (0) target = $region45
  $region44: #{motip_forward.51} parent=0 // pred_region
    _
  $region45: #{motip_forward.51} parent=0 // pred_fallthru
    _
  // Predicated region
  $region46: #{motip_forward.51} parent=0 // pred_check
    _
  $region47: #{motip_forward.51} parent=0 // pred_check_branch
    %242 = sbr.rel (0) target = $region49
  $region48: #{motip_forward.51} parent=0 // pred_region
    _
  $region49: #{motip_forward.51} parent=0 // pred_fallthru
    _
  // Predicated region
  $region50: #{motip_forward.51} parent=0 // pred_check
    _
  $region51: #{motip_forward.51} parent=0 // pred_check_branch
    %244 = sbr.rel (0) target = $region53
  $region52: #{motip_forward.51} parent=0 // pred_region
    _
  $region53: #{motip_forward.51} parent=0 // pred_fallthru
    _

</llo_original>
